<compile_context>
chip_gen: v7x
topology: tpu7x:2x2x1
jax: 0.10.0
libtpu: 0.0.40
codegen_flags: <defaults>
</compile_context>

<pallas_src>
import jax
import jax.numpy as jnp
from jax import lax
from jax.experimental import pallas as pl
from jax.experimental.pallas import tpu as pltpu


def _round_up(x, m):
    return ((x + m - 1) // m) * m


def _largest_divisor_le(n, cap):
    cap = int(max(1, min(cap, n)))
    for d in range(cap, 0, -1):
        if n % d == 0:
            return d
    return 1


# ----------------------------------------------------------------------------
# Pallas kernel
# ----------------------------------------------------------------------------
def skim_rnn_kernel(embed_ref, gd_ref,              # streamed per (b, t) block
                    wx_ref, bx_ref,                 # fused [wih_l|pad|wih_s|pad|wlin_x_diff]
                    whh_l_ref, whh_s_ref,
                    wlin_hc_ref,                    # [2H, 1] fused logit-diff weight
                    wcls_ref, bcls_ref,
                    out_ref,
                    xproj_ref, h_l_ref, c_l_ref, h_s_ref, c_s_ref):
    B, H = h_l_ref.shape          # batch block, large cell size
    Hs = h_s_ref.shape[1]         # small cell size
    TB = embed_ref.shape[0]       # Tc*B rows
    Tc = TB // B
    G, Gs = 4 * H, 4 * Hs
    Gp = _round_up(G, 128)        # lane-aligned segment starts
    Gsp = _round_up(Gs, 128)
    Lo = Gp + Gsp                 # logit-diff column offset

    t_chunk = pl.program_id(1)

    # ---- init carries at the start of each batch block's time sweep
    @pl.when(t_chunk == 0)
    def _init():
        h_l_ref[...] = jnp.zeros_like(h_l_ref)
        c_l_ref[...] = jnp.zeros_like(c_l_ref)
        h_s_ref[...] = jnp.zeros_like(h_s_ref)
        c_s_ref[...] = jnp.zeros_like(c_s_ref)

    # ---- hoisted input projections: one bf16 MXU matmul per time chunk
    #      columns: [large gates | pad | small gates | pad | skim-logit diff]
    xp_full = (jnp.dot(embed_ref[...], wx_ref[...],
                       preferred_element_type=jnp.float32)
               + bx_ref[...])
    xproj_ref[...] = xp_full
    # fold the per-step Gumbel-noise difference into the logit column once per
    # chunk so the serial loop only adds the h/c contribution
    xproj_ref[:, Lo:Lo + 1] = xp_full[:, Lo:Lo + 1] + gd_ref[...]

    whh_l = whh_l_ref[...]        # [H, 4H]   bf16
    whh_s = whh_s_ref[...]        # [Hs, 4Hs] bf16
    wlin_hc = wlin_hc_ref[...]    # [2H, 1]   bf16

    # hoisted constants (don't rebuild broadcasts per iteration)
    lane_id = lax.broadcasted_iota(jnp.int32, (B, H), 1)
    small_mask = lane_id < Hs
    zeros_tail = jnp.zeros((B, H - Hs), jnp.float32)

    def step(t, carry):
        h_l, c_l, h_s, c_s = carry
        row = pl.multiple_of(t * B, B)          # sublane-aligned start
        xp = xproj_ref[pl.ds(row, B), :]        # [B, Wf] f32

        # only the h-dependent matmuls remain on the per-step chain (bf16 MXU,
        # f32 accumulate; elementwise math stays f32)
        gates_l = xp[:, :G] + jnp.dot(h_l.astype(jnp.bfloat16), whh_l,
                                      preferred_element_type=jnp.float32)
        gates_s = xp[:, Gp:Gp + Gs] + jnp.dot(h_s.astype(jnp.bfloat16), whh_s,
                                              preferred_element_type=jnp.float32)

        i_l = jax.nn.sigmoid(gates_l[:, :H])
        f_l = jax.nn.sigmoid(gates_l[:, H:2 * H])
        g_l = jnp.tanh(gates_l[:, 2 * H:3 * H])
        o_l = jax.nn.sigmoid(gates_l[:, 3 * H:])
        c_l_new = f_l * c_l + i_l * g_l
        h_l_new = o_l * jnp.tanh(c_l_new)

        i_s = jax.nn.sigmoid(gates_s[:, :Hs])
        f_s = jax.nn.sigmoid(gates_s[:, Hs:2 * Hs])
        g_s = jnp.tanh(gates_s[:, 2 * Hs:3 * Hs])
        o_s = jax.nn.sigmoid(gates_s[:, 3 * Hs:])
        c_s_new = f_s * c_s + i_s * g_s
        h_s_new = o_s * jnp.tanh(c_s_new)

        # skim logit difference y1 - y0: x-part, bias and gumbel noise already
        # folded into xp[:, Lo]; add the fused h/c part with a single matmul.
        hc = jnp.concatenate([h_l_new, c_l_new], axis=-1).astype(jnp.bfloat16)
        d = xp[:, Lo:Lo + 1] + jnp.dot(hc, wlin_hc,
                                       preferred_element_type=jnp.float32)
        r1 = jax.nn.sigmoid(d)        # == softmax([y0, y1])[1] (temperature 1)
        r0 = 1.0 - r1

        # skim candidates: first Hs lanes from the small cell; tail from the
        # previous large h (for h) / the new large c (for c).
        h_s_pad = jnp.concatenate([h_s_new, zeros_tail], axis=-1)
        c_s_pad = jnp.concatenate([c_s_new, zeros_tail], axis=-1)
        skim_h = jnp.where(small_mask, h_s_pad, h_l)
        skim_c = jnp.where(small_mask, c_s_pad, c_l_new)

        h_l_out = r0 * h_l_new + r1 * skim_h
        c_l_out = r0 * c_l_new + r1 * skim_c
        return h_l_out, c_l_out, h_s_new, c_s_new

    carry0 = (h_l_ref[...], c_l_ref[...], h_s_ref[...], c_s_ref[...])
    unroll = Tc if Tc <= 8 else 8
    h_l_f, c_l_f, h_s_f, c_s_f = lax.fori_loop(0, Tc, step, carry0,
                                               unroll=unroll)

    h_l_ref[...] = h_l_f
    c_l_ref[...] = c_l_f
    h_s_ref[...] = h_s_f
    c_s_ref[...] = c_s_f

    # ---- classifier on the current large hidden state.  Written every chunk
    # into the same resident output block; the final time chunk's write is the
    # one that reaches HBM, so there is no garbage-writeback hazard.
    out_ref[...] = (jnp.dot(jax.nn.relu(h_l_f), wcls_ref[...],
                            preferred_element_type=jnp.float32)
                    + bcls_ref[...])


# ----------------------------------------------------------------------------
# Parameter construction (deterministic, mirrors the nn.Module __init__ shapes)
# ----------------------------------------------------------------------------
def make_params(key, vocab_size, d_model):
    H = d_model
    Hs = d_model // 8
    D = d_model
    ks = jax.random.split(key, 12)

    def unif(k, shape, bound):
        return jax.random.uniform(k, shape, jnp.float32, -bound, bound)

    # embedding (vocab_size + 1, d_model), padding_idx=-1 -> last row zero
    emb = jax.random.normal(ks[0], (vocab_size + 1, D), jnp.float32)
    emb = emb.at[vocab_size].set(0.0)

    kl = 1.0 / jnp.sqrt(H)
    ksm = 1.0 / jnp.sqrt(Hs)
    # LSTMCell weights, stored transposed (input-major), biases combined
    wih_l = unif(ks[1], (4 * H, D), kl).T          # [D, 4H]
    whh_l = unif(ks[2], (4 * H, H), kl).T          # [H, 4H]
    b_l = (unif(ks[3], (4 * H,), kl) + unif(ks[4], (4 * H,), kl)).reshape(1, 4 * H)

    wih_s = unif(ks[5], (4 * Hs, D), ksm).T        # [D, 4Hs]
    whh_s = unif(ks[6], (4 * Hs, Hs), ksm).T       # [Hs, 4Hs]
    b_s = (unif(ks[7], (4 * Hs,), ksm) + unif(ks[8], (4 * Hs,), ksm)).reshape(1, 4 * Hs)

    # linear: Linear(D + 2H, 2), split by input segment
    klin = 1.0 / jnp.sqrt(D + 2 * H)
    wlin = unif(ks[9], (2, D + 2 * H), klin).T     # [D+2H, 2]
    wlin_x, wlin_h, wlin_c = wlin[:D], wlin[D:D + H], wlin[D + H:]
    blin = unif(ks[10], (2,), klin).reshape(1, 2)

    # classifier: Linear(H, 2)
    kcls = 1.0 / jnp.sqrt(H)
    wcls = unif(ks[11], (2, H), kcls).T            # [H, 2]
    bcls = jnp.zeros((1, 2), jnp.float32)

    return dict(emb=emb, wih_l=wih_l, whh_l=whh_l, b_l=b_l,
                wih_s=wih_s, whh_s=whh_s, b_s=b_s,
                wlin_x=wlin_x, wlin_h=wlin_h, wlin_c=wlin_c, blin=blin,
                wcls=wcls, bcls=bcls)


# ----------------------------------------------------------------------------
# Wrapper
# ----------------------------------------------------------------------------
def _group_batch(x, n_b, b_blk):
    """[T, n_b*b_blk, F] -> [n_b, T*b_blk, F] (row = t*b_blk + i per group)."""
    T, _, F = x.shape
    return (x.reshape(T, n_b, b_blk, F)
             .transpose(1, 0, 2, 3)
             .reshape(n_b, T * b_blk, F))


def _skim_rnn_pallas(embed_tm, u, params, *, row_target=4096):
    T, B, D = embed_tm.shape
    H = params["whh_l"].shape[0]
    Hs = params["whh_s"].shape[0]
    G, Gs = 4 * H, 4 * Hs
    lane = 128
    Gp = _round_up(G, lane)
    Gsp = _round_up(Gs, lane)
    Wf = Gp + Gsp + 1                               # + logit-diff column

    diff = jnp.array([[-1.0], [1.0]], jnp.float32)  # col1 - col0

    # fused input-projection weight/bias with lane-aligned segments
    wx = jnp.zeros((D, Wf), jnp.float32)
    wx = wx.at[:, :G].set(params["wih_l"])
    wx = wx.at[:, Gp:Gp + Gs].set(params["wih_s"])
    wx = wx.at[:, Gp + Gsp:].set(params["wlin_x"] @ diff)
    bx = jnp.zeros((1, Wf), jnp.float32)
    bx = bx.at[:, :G].set(params["b_l"])
    bx = bx.at[:, Gp:Gp + Gs].set(params["b_s"])
    bx = bx.at[:, Gp + Gsp:].set(params["blin"] @ diff)

    # fused skim-logit (difference) weight for the h/c part: [2H, 1]
    wlin_hc = jnp.concatenate([params["wlin_h"], params["wlin_c"]], axis=0) @ diff

    # gumbel-noise difference, precomputed outside the serial loop
    eps = 1e-20
    g = -jnp.log(-jnp.log(u + eps) + eps)           # [T, B, 2]
    gd = g[..., 1:2] - g[..., 0:1]                  # [T, B, 1]

    # ---- batch blocking: MXU row granule (128), padded to the sublane quantum
    b_pad = _round_up(B, 8)
    b_blk = min(b_pad, 128)
    b_pad = _round_up(b_pad, b_blk)
    n_b = b_pad // b_blk
    if b_pad != B:
        embed_tm = jnp.pad(embed_tm, ((0, 0), (0, b_pad - B), (0, 0)))
        gd = jnp.pad(gd, ((0, 0), (0, b_pad - B), (0, 0)))

    # ---- per-chip VMEM budget -> time-chunk sizing
    try:
        vmem_cap = int(pltpu.get_tpu_info().vmem_capacity_bytes)
    except Exception:                                # pragma: no cover
        vmem_cap = 64 * 1024 * 1024                  # conservative (v7x)
    vmem_budget = max(32 * 1024 * 1024, (vmem_cap * 3) // 4)

    wfp = _round_up(Wf, lane)
    dp = _round_up(D, lane)
    bytes_per_row = (2 * dp * 2          # bf16 embed block, double-buffered
                     + 2 * lane * 4      # gumbel-diff block (lane-padded), dbl-buf
                     + wfp * 4)          # f32 xproj scratch
    weight_bytes = 2 * (dp * wfp * 2 + wfp * 4
                        + _round_up(G, lane) * H * 2
                        + _round_up(Gs, lane) * max(Hs, 8) * 2
                        + 2 * H * lane * 2 + H * lane * 4 + 2 * lane * 4)
    avail = vmem_budget - weight_bytes - (4 << 20)
    rows_cap = max(b_blk, avail // max(1, bytes_per_row))
    tc_cap = max(1, min(row_target, rows_cap) // b_blk)
    Tc = _largest_divisor_le(T, tc_cap)
    n_t = T // Tc

    # batch-grouped, time-major-within-group 2-D layout (plain-JAX layout glue)
    embed_g = _group_batch(embed_tm, n_b, b_blk).astype(jnp.bfloat16)
    gd_g = _group_batch(gd, n_b, b_blk)             # [n_b, T*b_blk, 1] f32

    args = (embed_g, gd_g,
            wx.astype(jnp.bfloat16), bx,
            params["whh_l"].astype(jnp.bfloat16),
            params["whh_s"].astype(jnp.bfloat16),
            wlin_hc.astype(jnp.bfloat16),
            params["wcls"], params["bcls"])

    def _build_call(single_buffer_weights):
        wkw = dict(pipeline_mode=pl.Buffered(1)) if single_buffer_weights else {}

        def wspec(shape):
            return pl.BlockSpec(shape, lambda b, t: (0, 0), **wkw)

        grid_spec = pltpu.PrefetchScalarGridSpec(
            num_scalar_prefetch=0,
            grid=(n_b, n_t),
            in_specs=[
                pl.BlockSpec((None, Tc * b_blk, D), lambda b, t: (b, t, 0)),
                pl.BlockSpec((None, Tc * b_blk, 1), lambda b, t: (b, t, 0)),
                wspec((D, Wf)),
                wspec((1, Wf)),
                wspec((H, G)),
                wspec((Hs, Gs)),
                wspec((2 * H, 1)),
                wspec((H, 2)),
                wspec((1, 2)),
            ],
            out_specs=pl.BlockSpec((b_blk, 2), lambda b, t: (b, 0)),
            scratch_shapes=[
                pltpu.VMEM((Tc * b_blk, Wf), jnp.float32),   # hoisted x-projections
                pltpu.VMEM((b_blk, H), jnp.float32),         # h_l carry
                pltpu.VMEM((b_blk, H), jnp.float32),         # c_l carry
                pltpu.VMEM((b_blk, Hs), jnp.float32),        # h_s carry
                pltpu.VMEM((b_blk, Hs), jnp.float32),        # c_s carry
            ],
        )
        return pl.pallas_call(
            skim_rnn_kernel,
            out_shape=jax.ShapeDtypeStruct((b_pad, 2), jnp.float32),
            grid_spec=grid_spec,
            compiler_params=pltpu.CompilerParams(
                dimension_semantics=("parallel", "arbitrary"),
                vmem_limit_bytes=int(vmem_budget)),
        )

    try:
        # single-buffer the never-changing weight blocks (halves their VMEM)
        logits_pad = jax.block_until_ready(_build_call(True)(*args))
    except Exception:
        # pipeline_mode=pl.Buffered(1) unsupported on this jax build ->
        # fall back to default double-buffered weight specs.
        logits_pad = _build_call(False)(*args)
    return logits_pad[:B]


def skim_rnn_forward(x_tokens, params, noise_key, *, row_target=4096):
    # x_tokens: [B, T, K] int32
    emb = params["emb"][x_tokens]                   # [B, T, K, D]  (glue gather)
    embed = emb.sum(axis=2)                         # [B, T, D]
    embed_tm = jnp.transpose(embed, (1, 0, 2)).astype(jnp.float32)   # [T, B, D]
    T, B, _ = embed_tm.shape
    u = jax.random.uniform(noise_key, (T, B, 2), jnp.float32)        # gumbel uniforms

    logits = _skim_rnn_pallas(embed_tm, u, params, row_target=row_target)
    return logits, u, embed_tm


# ----------------------------------------------------------------------------
# Pure-JAX reference mirroring the PyTorch loop (for validation).
# ----------------------------------------------------------------------------
def skim_rnn_reference(embed_tm, u, params):
    T, B, D = embed_tm.shape
    H = params["whh_l"].shape[0]
    Hs = params["whh_s"].shape[0]

    def cell(x, h, c, wih, whh, b, hid):
        g = x @ wih + h @ whh + b
        i, f, gg, o = (jax.nn.sigmoid(g[:, :hid]), jax.nn.sigmoid(g[:, hid:2 * hid]),
                       jnp.tanh(g[:, 2 * hid:3 * hid]), jax.nn.sigmoid(g[:, 3 * hid:]))
        c_new = f * c + i * gg
        return o * jnp.tanh(c_new), c_new

    h_l = jnp.zeros((B, H)); c_l = jnp.zeros((B, H))
    h_s = jnp.zeros((B, Hs)); c_s = jnp.zeros((B, Hs))
    for t in range(T):
        x_t = embed_tm[t]
        h_l_n, c_l_n = cell(x_t, h_l, c_l, params["wih_l"], params["whh_l"], params["b_l"], H)
        h_s, c_s = cell(x_t, h_s, c_s, params["wih_s"], params["whh_s"], params["b_s"], Hs)
        p_t = (x_t @ params["wlin_x"] + h_l_n @ params["wlin_h"]
               + c_l_n @ params["wlin_c"] + params["blin"])
        eps = 1e-20
        y = p_t - jnp.log(-jnp.log(u[t] + eps) + eps)
        r = jax.nn.softmax(y, axis=-1)
        skim_h = jnp.concatenate([h_s, h_l[:, Hs:]], axis=1)
        skim_c = jnp.concatenate([c_s, c_l_n[:, Hs:]], axis=1)
        h_l = r[:, 0:1] * h_l_n + r[:, 1:2] * skim_h
        c_l = r[:, 0:1] * c_l_n + r[:, 1:2] * skim_c
    return jax.nn.relu(h_l) @ params["wcls"] + params["bcls"]


if __name__ == "__main__":
    vocab_size = 50
    d_model = 32          # large cell 32, small cell 4
    B, T, K = 2, 8, 3     # batch, seq_len, num_cui_per_visit

    root = jax.random.PRNGKey(0)
    k_par, k_tok, k_noise = jax.random.split(root, 3)
    params = make_params(k_par, vocab_size, d_model)
    x_tokens = jax.random.randint(k_tok, (B, T, K), 0, vocab_size, dtype=jnp.int32)

    logits, u, embed_tm = skim_rnn_forward(x_tokens, params, k_noise)
    logits = jax.block_until_ready(logits)

    ref = skim_rnn_reference(embed_tm, u, params)
    assert logits.shape == (B, 2)
    # Kernel feeds bf16 operands to the MXU (f32 accumulate); reference is full
    # f32, so compare at bf16-quantization tolerance.
    assert jnp.allclose(logits, ref, atol=5e-2, rtol=5e-2), (logits, ref)
    print("KERNEL_OK")
</pallas_src>

<mosaic_0001>
module attributes {stable_mosaic.version = 11 : i64} {
  func.func @skim_rnn_kernel(%arg0: i32, %arg1: i32, %arg2: memref<1x64x32xbf16, #tpu.memory_space<vmem>>, %arg3: memref<1x64x1xf32, #tpu.memory_space<vmem>>, %arg4: memref<32x257xbf16, #tpu.memory_space<vmem>>, %arg5: memref<1x257xf32, #tpu.memory_space<vmem>>, %arg6: memref<32x128xbf16, #tpu.memory_space<vmem>>, %arg7: memref<4x16xbf16, #tpu.memory_space<vmem>>, %arg8: memref<64x1xbf16, #tpu.memory_space<vmem>>, %arg9: memref<32x2xf32, #tpu.memory_space<vmem>>, %arg10: memref<1x2xf32, #tpu.memory_space<vmem>>, %arg11: memref<8x2xf32, #tpu.memory_space<vmem>>, %arg12: memref<64x257xf32, #tpu.memory_space<vmem>>, %arg13: memref<8x32xf32, #tpu.memory_space<vmem>>, %arg14: memref<8x32xf32, #tpu.memory_space<vmem>>, %arg15: memref<8x4xf32, #tpu.memory_space<vmem>>, %arg16: memref<8x4xf32, #tpu.memory_space<vmem>>) attributes {dimension_semantics = [#tpu.dimension_semantics<parallel>, #tpu.dimension_semantics<arbitrary>], iteration_bounds = array<i64: 1, 1>, scalar_prefetch = 0 : i64, scratch_operands = 5 : i64, tpu.core_type = #tpu.core_type<tc>, window_params = [{transform_indices = @transform_0, window_bounds = array<i64: 1, 64, 32>}, {transform_indices = @transform_1, window_bounds = array<i64: 1, 64, 1>}, {pipeline_mode = #tpu.pipeline_mode<synchronous>, transform_indices = @transform_2, window_bounds = array<i64: 32, 257>}, {pipeline_mode = #tpu.pipeline_mode<synchronous>, transform_indices = @transform_3, window_bounds = array<i64: 1, 257>}, {pipeline_mode = #tpu.pipeline_mode<synchronous>, transform_indices = @transform_4, window_bounds = array<i64: 32, 128>}, {pipeline_mode = #tpu.pipeline_mode<synchronous>, transform_indices = @transform_5, window_bounds = array<i64: 4, 16>}, {pipeline_mode = #tpu.pipeline_mode<synchronous>, transform_indices = @transform_6, window_bounds = array<i64: 64, 1>}, {pipeline_mode = #tpu.pipeline_mode<synchronous>, transform_indices = @transform_7, window_bounds = array<i64: 32, 2>}, {pipeline_mode = #tpu.pipeline_mode<synchronous>, transform_indices = @transform_8, window_bounds = array<i64: 1, 2>}, {transform_indices = @transform_9, window_bounds = array<i64: 8, 2>}]} {
    %c0_i32 = arith.constant 0 : i32
    %0 = arith.cmpi eq, %arg1, %c0_i32 : i32
    %1 = arith.extui %0 : i1 to i32
    %c0_i32_0 = arith.constant 0 : i32
    %2 = arith.cmpi ne, %1, %c0_i32_0 : i32
    scf.if %2 {
      %cst_150 = arith.constant 0.000000e+00 : f32
      %743 = vector.broadcast %cst_150 : f32 to vector<8x32xf32>
      %c0_151 = arith.constant 0 : index
      %c0_152 = arith.constant 0 : index
      %744 = vector.load %arg13[%c0_151, %c0_152] : memref<8x32xf32, #tpu.memory_space<vmem>>, vector<8x32xf32>
      tpu.vector_store %arg13[%c0_151, %c0_152], %743 {strides = array<i32>} : memref<8x32xf32, #tpu.memory_space<vmem>>, vector<8x32xf32>,
      %cst_153 = arith.constant 0.000000e+00 : f32
      %745 = vector.broadcast %cst_153 : f32 to vector<8x32xf32>
      %c0_154 = arith.constant 0 : index
      %c0_155 = arith.constant 0 : index
      %746 = vector.load %arg14[%c0_154, %c0_155] : memref<8x32xf32, #tpu.memory_space<vmem>>, vector<8x32xf32>
      tpu.vector_store %arg14[%c0_154, %c0_155], %745 {strides = array<i32>} : memref<8x32xf32, #tpu.memory_space<vmem>>, vector<8x32xf32>,
      %cst_156 = arith.constant 0.000000e+00 : f32
      %747 = vector.broadcast %cst_156 : f32 to vector<8x4xf32>
      %c0_157 = arith.constant 0 : index
      %c0_158 = arith.constant 0 : index
      %748 = vector.load %arg15[%c0_157, %c0_158] : memref<8x4xf32, #tpu.memory_space<vmem>>, vector<8x4xf32>
      tpu.vector_store %arg15[%c0_157, %c0_158], %747 {strides = array<i32>} : memref<8x4xf32, #tpu.memory_space<vmem>>, vector<8x4xf32>,
      %cst_159 = arith.constant 0.000000e+00 : f32
      %749 = vector.broadcast %cst_159 : f32 to vector<8x4xf32>
      %c0_160 = arith.constant 0 : index
      %c0_161 = arith.constant 0 : index
      %750 = vector.load %arg16[%c0_160, %c0_161] : memref<8x4xf32, #tpu.memory_space<vmem>>, vector<8x4xf32>
      tpu.vector_store %arg16[%c0_160, %c0_161], %749 {strides = array<i32>} : memref<8x4xf32, #tpu.memory_space<vmem>>, vector<8x4xf32>,
    } else {
    }
    %c0 = arith.constant 0 : index
    %c0_1 = arith.constant 0 : index
    %c0_2 = arith.constant 0 : index
    %3 = vector.load %arg2[%c0, %c0_1, %c0_2] : memref<1x64x32xbf16, #tpu.memory_space<vmem>>, vector<1x64x32xbf16>
    %4 = vector.shape_cast %3 : vector<1x64x32xbf16> to vector<64x32xbf16>
    %c0_3 = arith.constant 0 : index
    %c0_4 = arith.constant 0 : index
    %5 = vector.load %arg4[%c0_3, %c0_4] : memref<32x257xbf16, #tpu.memory_space<vmem>>, vector<32x257xbf16>
    %cst = arith.constant dense<0.000000e+00> : vector<64x257xf32>
    %6 = tpu.matmul %4, %5, %cst {dimension_numbers = #tpu.dot_dimension_numbers<[1], [0], [0], [1], [0, 0, 1, 1], [], []>} : vector<64x32xbf16>, vector<32x257xbf16>, vector<64x257xf32> -> vector<64x257xf32>
    %c0_5 = arith.constant 0 : index
    %c0_6 = arith.constant 0 : index
    %7 = vector.load %arg5[%c0_5, %c0_6] : memref<1x257xf32, #tpu.memory_space<vmem>>, vector<1x257xf32>
    %8 = vector.broadcast %7 : vector<1x257xf32> to vector<64x257xf32>
    %9 = arith.addf %6, %8 : vector<64x257xf32>
    %c0_7 = arith.constant 0 : index
    %c0_8 = arith.constant 0 : index
    %10 = vector.load %arg12[%c0_7, %c0_8] : memref<64x257xf32, #tpu.memory_space<vmem>>, vector<64x257xf32>
    tpu.vector_store %arg12[%c0_7, %c0_8], %9 {strides = array<i32>} : memref<64x257xf32, #tpu.memory_space<vmem>>, vector<64x257xf32>,
    %11 = vector.extract_strided_slice %9 {offsets = [0, 256], sizes = [64, 1], strides = [1, 1]} : vector<64x257xf32> to vector<64x1xf32>
    %c0_9 = arith.constant 0 : index
    %c0_10 = arith.constant 0 : index
    %c0_11 = arith.constant 0 : index
    %12 = vector.load %arg3[%c0_9, %c0_10, %c0_11] : memref<1x64x1xf32, #tpu.memory_space<vmem>>, vector<1x64x1xf32>
    %13 = vector.shape_cast %12 : vector<1x64x1xf32> to vector<64x1xf32>
    %14 = arith.addf %11, %13 : vector<64x1xf32>
    %c0_12 = arith.constant 0 : index
    %c256 = arith.constant 256 : index
    %15 = vector.load %arg12[%c0_12, %c256] : memref<64x257xf32, #tpu.memory_space<vmem>>, vector<64x1xf32>
    tpu.vector_store %arg12[%c0_12, %c256], %14 {strides = array<i32>} : memref<64x257xf32, #tpu.memory_space<vmem>>, vector<64x1xf32>,
    %c0_13 = arith.constant 0 : index
    %c0_14 = arith.constant 0 : index
    %16 = vector.load %arg6[%c0_13, %c0_14] : memref<32x128xbf16, #tpu.memory_space<vmem>>, vector<32x128xbf16>
    %c0_15 = arith.constant 0 : index
    %c0_16 = arith.constant 0 : index
    %17 = vector.load %arg7[%c0_15, %c0_16] : memref<4x16xbf16, #tpu.memory_space<vmem>>, vector<4x16xbf16>
    %c0_17 = arith.constant 0 : index
    %c0_18 = arith.constant 0 : index
    %18 = vector.load %arg8[%c0_17, %c0_18] : memref<64x1xbf16, #tpu.memory_space<vmem>>, vector<64x1xbf16>
    %19 = tpu.iota {dimensions = array<i32: 1>} : vector<8x32xi32>
    %c4_i32 = arith.constant 4 : i32
    %20 = vector.broadcast %c4_i32 : i32 to vector<8x32xi32>
    %21 = arith.cmpi slt, %19, %20 : vector<8x32xi32>
    %cst_19 = arith.constant 0.000000e+00 : f32
    %22 = vector.broadcast %cst_19 : f32 to vector<8x28xf32>
    %c0_20 = arith.constant 0 : index
    %c0_21 = arith.constant 0 : index
    %23 = vector.load %arg13[%c0_20, %c0_21] : memref<8x32xf32, #tpu.memory_space<vmem>>, vector<8x32xf32>
    %c0_22 = arith.constant 0 : index
    %c0_23 = arith.constant 0 : index
    %24 = vector.load %arg14[%c0_22, %c0_23] : memref<8x32xf32, #tpu.memory_space<vmem>>, vector<8x32xf32>
    %c0_24 = arith.constant 0 : index
    %c0_25 = arith.constant 0 : index
    %25 = vector.load %arg15[%c0_24, %c0_25] : memref<8x4xf32, #tpu.memory_space<vmem>>, vector<8x4xf32>
    %c0_26 = arith.constant 0 : index
    %c0_27 = arith.constant 0 : index
    %26 = vector.load %arg16[%c0_26, %c0_27] : memref<8x4xf32, #tpu.memory_space<vmem>>, vector<8x4xf32>
    %c0_i32_28 = arith.constant 0 : i32
    %c8_i32 = arith.constant 8 : i32
    %27 = arith.muli %c0_i32_28, %c8_i32 : i32
    %28 = tpu.assume_multiple %27, 8 : i32
    %29 = arith.index_cast %28 : i32 to index
    %c0_29 = arith.constant 0 : index
    %30 = vector.load %arg12[%29, %c0_29] : memref<64x257xf32, #tpu.memory_space<vmem>>, vector<8x257xf32>
    %31 = vector.extract_strided_slice %30 {offsets = [0, 0], sizes = [8, 128], strides = [1, 1]} : vector<8x257xf32> to vector<8x128xf32>
    %32 = arith.truncf %23 : vector<8x32xf32> to vector<8x32xbf16>
    %cst_30 = arith.constant dense<0.000000e+00> : vector<8x128xf32>
    %33 = tpu.matmul %32, %16, %cst_30 {dimension_numbers = #tpu.dot_dimension_numbers<[1], [0], [0], [1], [0, 0, 1, 1], [], []>} : vector<8x32xbf16>, vector<32x128xbf16>, vector<8x128xf32> -> vector<8x128xf32>
    %34 = arith.addf %31, %33 : vector<8x128xf32>
    %35 = vector.extract_strided_slice %30 {offsets = [0, 128], sizes = [8, 16], strides = [1, 1]} : vector<8x257xf32> to vector<8x16xf32>
    %36 = arith.truncf %25 : vector<8x4xf32> to vector<8x4xbf16>
    %cst_31 = arith.constant dense<0.000000e+00> : vector<8x16xf32>
    %37 = tpu.matmul %36, %17, %cst_31 {dimension_numbers = #tpu.dot_dimension_numbers<[1], [0], [0], [1], [0, 0, 1, 1], [], []>} : vector<8x4xbf16>, vector<4x16xbf16>, vector<8x16xf32> -> vector<8x16xf32>
    %38 = arith.addf %35, %37 : vector<8x16xf32>
    %39 = vector.extract_strided_slice %34 {offsets = [0, 0], sizes = [8, 32], strides = [1, 1]} : vector<8x128xf32> to vector<8x32xf32>
    %40 = arith.negf %39 : vector<8x32xf32>
    %41 = math.exp %40 : vector<8x32xf32>
    %cst_32 = arith.constant 1.000000e+00 : f32
    %42 = vector.broadcast %cst_32 : f32 to vector<8x32xf32>
    %43 = arith.addf %42, %41 : vector<8x32xf32>
    %44 = arith.divf %42, %43 : vector<8x32xf32>
    %45 = vector.extract_strided_slice %34 {offsets = [0, 32], sizes = [8, 32], strides = [1, 1]} : vector<8x128xf32> to vector<8x32xf32>
    %46 = arith.negf %45 : vector<8x32xf32>
    %47 = math.exp %46 : vector<8x32xf32>
    %cst_33 = arith.constant 1.000000e+00 : f32
    %48 = vector.broadcast %cst_33 : f32 to vector<8x32xf32>
    %49 = arith.addf %48, %47 : vector<8x32xf32>
    %50 = arith.divf %48, %49 : vector<8x32xf32>
    %51 = vector.extract_strided_slice %34 {offsets = [0, 64], sizes = [8, 32], strides = [1, 1]} : vector<8x128xf32> to vector<8x32xf32>
    %52 = math.tanh %51 : vector<8x32xf32>
    %53 = vector.extract_strided_slice %34 {offsets = [0, 96], sizes = [8, 32], strides = [1, 1]} : vector<8x128xf32> to vector<8x32xf32>
    %54 = arith.negf %53 : vector<8x32xf32>
    %55 = math.exp %54 : vector<8x32xf32>
    %cst_34 = arith.constant 1.000000e+00 : f32
    %56 = vector.broadcast %cst_34 : f32 to vector<8x32xf32>
    %57 = arith.addf %56, %55 : vector<8x32xf32>
    %58 = arith.divf %56, %57 : vector<8x32xf32>
    %59 = arith.mulf %50, %24 : vector<8x32xf32>
    %60 = arith.mulf %44, %52 : vector<8x32xf32>
    %61 = arith.addf %59, %60 : vector<8x32xf32>
    %62 = math.tanh %61 : vector<8x32xf32>
    %63 = arith.mulf %58, %62 : vector<8x32xf32>
    %64 = vector.extract_strided_slice %38 {offsets = [0, 0], sizes = [8, 4], strides = [1, 1]} : vector<8x16xf32> to vector<8x4xf32>
    %65 = arith.negf %64 : vector<8x4xf32>
    %66 = math.exp %65 : vector<8x4xf32>
    %cst_35 = arith.constant 1.000000e+00 : f32
    %67 = vector.broadcast %cst_35 : f32 to vector<8x4xf32>
    %68 = arith.addf %67, %66 : vector<8x4xf32>
    %69 = arith.divf %67, %68 : vector<8x4xf32>
    %70 = vector.extract_strided_slice %38 {offsets = [0, 4], sizes = [8, 4], strides = [1, 1]} : vector<8x16xf32> to vector<8x4xf32>
    %71 = arith.negf %70 : vector<8x4xf32>
    %72 = math.exp %71 : vector<8x4xf32>
    %cst_36 = arith.constant 1.000000e+00 : f32
    %73 = vector.broadcast %cst_36 : f32 to vector<8x4xf32>
    %74 = arith.addf %73, %72 : vector<8x4xf32>
    %75 = arith.divf %73, %74 : vector<8x4xf32>
    %76 = vector.extract_strided_slice %38 {offsets = [0, 8], sizes = [8, 4], strides = [1, 1]} : vector<8x16xf32> to vector<8x4xf32>
    %77 = math.tanh %76 : vector<8x4xf32>
    %78 = vector.extract_strided_slice %38 {offsets = [0, 12], sizes = [8, 4], strides = [1, 1]} : vector<8x16xf32> to vector<8x4xf32>
    %79 = arith.negf %78 : vector<8x4xf32>
    %80 = math.exp %79 : vector<8x4xf32>
    %cst_37 = arith.constant 1.000000e+00 : f32
    %81 = vector.broadcast %cst_37 : f32 to vector<8x4xf32>
    %82 = arith.addf %81, %80 : vector<8x4xf32>
    %83 = arith.divf %81, %82 : vector<8x4xf32>
    %84 = arith.mulf %75, %26 : vector<8x4xf32>
    %85 = arith.mulf %69, %77 : vector<8x4xf32>
    %86 = arith.addf %84, %85 : vector<8x4xf32>
    %87 = math.tanh %86 : vector<8x4xf32>
    %88 = arith.mulf %83, %87 : vector<8x4xf32>
    %89 = tpu.concatenate %63, %61 in 1 : vector<8x32xf32>, vector<8x32xf32> -> vector<8x64xf32>
    %90 = arith.truncf %89 : vector<8x64xf32> to vector<8x64xbf16>
    %91 = vector.extract_strided_slice %30 {offsets = [0, 256], sizes = [8, 1], strides = [1, 1]} : vector<8x257xf32> to vector<8x1xf32>
    %cst_38 = arith.constant dense<0.000000e+00> : vector<8x1xf32>
    %92 = tpu.matmul %90, %18, %cst_38 {dimension_numbers = #tpu.dot_dimension_numbers<[1], [0], [0], [1], [0, 0, 1, 1], [], []>} : vector<8x64xbf16>, vector<64x1xbf16>, vector<8x1xf32> -> vector<8x1xf32>
    %93 = arith.addf %91, %92 : vector<8x1xf32>
    %94 = arith.negf %93 : vector<8x1xf32>
    %95 = math.exp %94 : vector<8x1xf32>
    %cst_39 = arith.constant 1.000000e+00 : f32
    %96 = vector.broadcast %cst_39 : f32 to vector<8x1xf32>
    %97 = arith.addf %96, %95 : vector<8x1xf32>
    %98 = arith.divf %96, %97 : vector<8x1xf32>
    %cst_40 = arith.constant 1.000000e+00 : f32
    %99 = vector.broadcast %cst_40 : f32 to vector<8x1xf32>
    %100 = arith.subf %99, %98 : vector<8x1xf32>
    %101 = tpu.concatenate %88, %22 in 1 : vector<8x4xf32>, vector<8x28xf32> -> vector<8x32xf32>
    %102 = tpu.concatenate %86, %22 in 1 : vector<8x4xf32>, vector<8x28xf32> -> vector<8x32xf32>
    %103 = arith.select %21, %101, %23 : vector<8x32xi1>, vector<8x32xf32>
    %104 = arith.select %21, %102, %61 : vector<8x32xi1>, vector<8x32xf32>
    %105 = vector.broadcast %100 : vector<8x1xf32> to vector<8x32xf32>
    %106 = arith.mulf %105, %63 : vector<8x32xf32>
    %107 = vector.broadcast %98 : vector<8x1xf32> to vector<8x32xf32>
    %108 = arith.mulf %107, %103 : vector<8x32xf32>
    %109 = arith.addf %106, %108 : vector<8x32xf32>
    %110 = vector.broadcast %100 : vector<8x1xf32> to vector<8x32xf32>
    %111 = arith.mulf %110, %61 : vector<8x32xf32>
    %112 = vector.broadcast %98 : vector<8x1xf32> to vector<8x32xf32>
    %113 = arith.mulf %112, %104 : vector<8x32xf32>
    %114 = arith.addf %111, %113 : vector<8x32xf32>
    %c1_i32 = arith.constant 1 : i32
    %c8_i32_41 = arith.constant 8 : i32
    %115 = arith.muli %c1_i32, %c8_i32_41 : i32
    %116 = tpu.assume_multiple %115, 8 : i32
    %117 = arith.index_cast %116 : i32 to index
    %c0_42 = arith.constant 0 : index
    %118 = vector.load %arg12[%117, %c0_42] : memref<64x257xf32, #tpu.memory_space<vmem>>, vector<8x257xf32>
    %119 = vector.extract_strided_slice %118 {offsets = [0, 0], sizes = [8, 128], strides = [1, 1]} : vector<8x257xf32> to vector<8x128xf32>
    %120 = arith.truncf %109 : vector<8x32xf32> to vector<8x32xbf16>
    %cst_43 = arith.constant dense<0.000000e+00> : vector<8x128xf32>
    %121 = tpu.matmul %120, %16, %cst_43 {dimension_numbers = #tpu.dot_dimension_numbers<[1], [0], [0], [1], [0, 0, 1, 1], [], []>} : vector<8x32xbf16>, vector<32x128xbf16>, vector<8x128xf32> -> vector<8x128xf32>
    %122 = arith.addf %119, %121 : vector<8x128xf32>
    %123 = vector.extract_strided_slice %118 {offsets = [0, 128], sizes = [8, 16], strides = [1, 1]} : vector<8x257xf32> to vector<8x16xf32>
    %124 = arith.truncf %88 : vector<8x4xf32> to vector<8x4xbf16>
    %cst_44 = arith.constant dense<0.000000e+00> : vector<8x16xf32>
    %125 = tpu.matmul %124, %17, %cst_44 {dimension_numbers = #tpu.dot_dimension_numbers<[1], [0], [0], [1], [0, 0, 1, 1], [], []>} : vector<8x4xbf16>, vector<4x16xbf16>, vector<8x16xf32> -> vector<8x16xf32>
    %126 = arith.addf %123, %125 : vector<8x16xf32>
    %127 = vector.extract_strided_slice %122 {offsets = [0, 0], sizes = [8, 32], strides = [1, 1]} : vector<8x128xf32> to vector<8x32xf32>
    %128 = arith.negf %127 : vector<8x32xf32>
    %129 = math.exp %128 : vector<8x32xf32>
    %cst_45 = arith.constant 1.000000e+00 : f32
    %130 = vector.broadcast %cst_45 : f32 to vector<8x32xf32>
    %131 = arith.addf %130, %129 : vector<8x32xf32>
    %132 = arith.divf %130, %131 : vector<8x32xf32>
    %133 = vector.extract_strided_slice %122 {offsets = [0, 32], sizes = [8, 32], strides = [1, 1]} : vector<8x128xf32> to vector<8x32xf32>
    %134 = arith.negf %133 : vector<8x32xf32>
    %135 = math.exp %134 : vector<8x32xf32>
    %cst_46 = arith.constant 1.000000e+00 : f32
    %136 = vector.broadcast %cst_46 : f32 to vector<8x32xf32>
    %137 = arith.addf %136, %135 : vector<8x32xf32>
    %138 = arith.divf %136, %137 : vector<8x32xf32>
    %139 = vector.extract_strided_slice %122 {offsets = [0, 64], sizes = [8, 32], strides = [1, 1]} : vector<8x128xf32> to vector<8x32xf32>
    %140 = math.tanh %139 : vector<8x32xf32>
    %141 = vector.extract_strided_slice %122 {offsets = [0, 96], sizes = [8, 32], strides = [1, 1]} : vector<8x128xf32> to vector<8x32xf32>
    %142 = arith.negf %141 : vector<8x32xf32>
    %143 = math.exp %142 : vector<8x32xf32>
    %cst_47 = arith.constant 1.000000e+00 : f32
    %144 = vector.broadcast %cst_47 : f32 to vector<8x32xf32>
    %145 = arith.addf %144, %143 : vector<8x32xf32>
    %146 = arith.divf %144, %145 : vector<8x32xf32>
    %147 = arith.mulf %138, %114 : vector<8x32xf32>
    %148 = arith.mulf %132, %140 : vector<8x32xf32>
    %149 = arith.addf %147, %148 : vector<8x32xf32>
    %150 = math.tanh %149 : vector<8x32xf32>
    %151 = arith.mulf %146, %150 : vector<8x32xf32>
    %152 = vector.extract_strided_slice %126 {offsets = [0, 0], sizes = [8, 4], strides = [1, 1]} : vector<8x16xf32> to vector<8x4xf32>
    %153 = arith.negf %152 : vector<8x4xf32>
    %154 = math.exp %153 : vector<8x4xf32>
    %cst_48 = arith.constant 1.000000e+00 : f32
    %155 = vector.broadcast %cst_48 : f32 to vector<8x4xf32>
    %156 = arith.addf %155, %154 : vector<8x4xf32>
    %157 = arith.divf %155, %156 : vector<8x4xf32>
    %158 = vector.extract_strided_slice %126 {offsets = [0, 4], sizes = [8, 4], strides = [1, 1]} : vector<8x16xf32> to vector<8x4xf32>
    %159 = arith.negf %158 : vector<8x4xf32>
    %160 = math.exp %159 : vector<8x4xf32>
    %cst_49 = arith.constant 1.000000e+00 : f32
    %161 = vector.broadcast %cst_49 : f32 to vector<8x4xf32>
    %162 = arith.addf %161, %160 : vector<8x4xf32>
    %163 = arith.divf %161, %162 : vector<8x4xf32>
    %164 = vector.extract_strided_slice %126 {offsets = [0, 8], sizes = [8, 4], strides = [1, 1]} : vector<8x16xf32> to vector<8x4xf32>
    %165 = math.tanh %164 : vector<8x4xf32>
    %166 = vector.extract_strided_slice %126 {offsets = [0, 12], sizes = [8, 4], strides = [1, 1]} : vector<8x16xf32> to vector<8x4xf32>
    %167 = arith.negf %166 : vector<8x4xf32>
    %168 = math.exp %167 : vector<8x4xf32>
    %cst_50 = arith.constant 1.000000e+00 : f32
    %169 = vector.broadcast %cst_50 : f32 to vector<8x4xf32>
    %170 = arith.addf %169, %168 : vector<8x4xf32>
    %171 = arith.divf %169, %170 : vector<8x4xf32>
    %172 = arith.mulf %163, %86 : vector<8x4xf32>
    %173 = arith.mulf %157, %165 : vector<8x4xf32>
    %174 = arith.addf %172, %173 : vector<8x4xf32>
    %175 = math.tanh %174 : vector<8x4xf32>
    %176 = arith.mulf %171, %175 : vector<8x4xf32>
    %177 = tpu.concatenate %151, %149 in 1 : vector<8x32xf32>, vector<8x32xf32> -> vector<8x64xf32>
    %178 = arith.truncf %177 : vector<8x64xf32> to vector<8x64xbf16>
    %179 = vector.extract_strided_slice %118 {offsets = [0, 256], sizes = [8, 1], strides = [1, 1]} : vector<8x257xf32> to vector<8x1xf32>
    %cst_51 = arith.constant dense<0.000000e+00> : vector<8x1xf32>
    %180 = tpu.matmul %178, %18, %cst_51 {dimension_numbers = #tpu.dot_dimension_numbers<[1], [0], [0], [1], [0, 0, 1, 1], [], []>} : vector<8x64xbf16>, vector<64x1xbf16>, vector<8x1xf32> -> vector<8x1xf32>
    %181 = arith.addf %179, %180 : vector<8x1xf32>
    %182 = arith.negf %181 : vector<8x1xf32>
    %183 = math.exp %182 : vector<8x1xf32>
    %cst_52 = arith.constant 1.000000e+00 : f32
    %184 = vector.broadcast %cst_52 : f32 to vector<8x1xf32>
    %185 = arith.addf %184, %183 : vector<8x1xf32>
    %186 = arith.divf %184, %185 : vector<8x1xf32>
    %cst_53 = arith.constant 1.000000e+00 : f32
    %187 = vector.broadcast %cst_53 : f32 to vector<8x1xf32>
    %188 = arith.subf %187, %186 : vector<8x1xf32>
    %189 = tpu.concatenate %176, %22 in 1 : vector<8x4xf32>, vector<8x28xf32> -> vector<8x32xf32>
    %190 = tpu.concatenate %174, %22 in 1 : vector<8x4xf32>, vector<8x28xf32> -> vector<8x32xf32>
    %191 = arith.select %21, %189, %109 : vector<8x32xi1>, vector<8x32xf32>
    %192 = arith.select %21, %190, %149 : vector<8x32xi1>, vector<8x32xf32>
    %193 = vector.broadcast %188 : vector<8x1xf32> to vector<8x32xf32>
    %194 = arith.mulf %193, %151 : vector<8x32xf32>
    %195 = vector.broadcast %186 : vector<8x1xf32> to vector<8x32xf32>
    %196 = arith.mulf %195, %191 : vector<8x32xf32>
    %197 = arith.addf %194, %196 : vector<8x32xf32>
    %198 = vector.broadcast %188 : vector<8x1xf32> to vector<8x32xf32>
    %199 = arith.mulf %198, %149 : vector<8x32xf32>
    %200 = vector.broadcast %186 : vector<8x1xf32> to vector<8x32xf32>
    %201 = arith.mulf %200, %192 : vector<8x32xf32>
    %202 = arith.addf %199, %201 : vector<8x32xf32>
    %c2_i32 = arith.constant 2 : i32
    %c8_i32_54 = arith.constant 8 : i32
    %203 = arith.muli %c2_i32, %c8_i32_54 : i32
    %204 = tpu.assume_multiple %203, 8 : i32
    %205 = arith.index_cast %204 : i32 to index
    %c0_55 = arith.constant 0 : index
    %206 = vector.load %arg12[%205, %c0_55] : memref<64x257xf32, #tpu.memory_space<vmem>>, vector<8x257xf32>
    %207 = vector.extract_strided_slice %206 {offsets = [0, 0], sizes = [8, 128], strides = [1, 1]} : vector<8x257xf32> to vector<8x128xf32>
    %208 = arith.truncf %197 : vector<8x32xf32> to vector<8x32xbf16>
    %cst_56 = arith.constant dense<0.000000e+00> : vector<8x128xf32>
    %209 = tpu.matmul %208, %16, %cst_56 {dimension_numbers = #tpu.dot_dimension_numbers<[1], [0], [0], [1], [0, 0, 1, 1], [], []>} : vector<8x32xbf16>, vector<32x128xbf16>, vector<8x128xf32> -> vector<8x128xf32>
    %210 = arith.addf %207, %209 : vector<8x128xf32>
    %211 = vector.extract_strided_slice %206 {offsets = [0, 128], sizes = [8, 16], strides = [1, 1]} : vector<8x257xf32> to vector<8x16xf32>
    %212 = arith.truncf %176 : vector<8x4xf32> to vector<8x4xbf16>
    %cst_57 = arith.constant dense<0.000000e+00> : vector<8x16xf32>
    %213 = tpu.matmul %212, %17, %cst_57 {dimension_numbers = #tpu.dot_dimension_numbers<[1], [0], [0], [1], [0, 0, 1, 1], [], []>} : vector<8x4xbf16>, vector<4x16xbf16>, vector<8x16xf32> -> vector<8x16xf32>
    %214 = arith.addf %211, %213 : vector<8x16xf32>
    %215 = vector.extract_strided_slice %210 {offsets = [0, 0], sizes = [8, 32], strides = [1, 1]} : vector<8x128xf32> to vector<8x32xf32>
    %216 = arith.negf %215 : vector<8x32xf32>
    %217 = math.exp %216 : vector<8x32xf32>
    %cst_58 = arith.constant 1.000000e+00 : f32
    %218 = vector.broadcast %cst_58 : f32 to vector<8x32xf32>
    %219 = arith.addf %218, %217 : vector<8x32xf32>
    %220 = arith.divf %218, %219 : vector<8x32xf32>
    %221 = vector.extract_strided_slice %210 {offsets = [0, 32], sizes = [8, 32], strides = [1, 1]} : vector<8x128xf32> to vector<8x32xf32>
    %222 = arith.negf %221 : vector<8x32xf32>
    %223 = math.exp %222 : vector<8x32xf32>
    %cst_59 = arith.constant 1.000000e+00 : f32
    %224 = vector.broadcast %cst_59 : f32 to vector<8x32xf32>
    %225 = arith.addf %224, %223 : vector<8x32xf32>
    %226 = arith.divf %224, %225 : vector<8x32xf32>
    %227 = vector.extract_strided_slice %210 {offsets = [0, 64], sizes = [8, 32], strides = [1, 1]} : vector<8x128xf32> to vector<8x32xf32>
    %228 = math.tanh %227 : vector<8x32xf32>
    %229 = vector.extract_strided_slice %210 {offsets = [0, 96], sizes = [8, 32], strides = [1, 1]} : vector<8x128xf32> to vector<8x32xf32>
    %230 = arith.negf %229 : vector<8x32xf32>
    %231 = math.exp %230 : vector<8x32xf32>
    %cst_60 = arith.constant 1.000000e+00 : f32
    %232 = vector.broadcast %cst_60 : f32 to vector<8x32xf32>
    %233 = arith.addf %232, %231 : vector<8x32xf32>
    %234 = arith.divf %232, %233 : vector<8x32xf32>
    %235 = arith.mulf %226, %202 : vector<8x32xf32>
    %236 = arith.mulf %220, %228 : vector<8x32xf32>
    %237 = arith.addf %235, %236 : vector<8x32xf32>
    %238 = math.tanh %237 : vector<8x32xf32>
    %239 = arith.mulf %234, %238 : vector<8x32xf32>
    %240 = vector.extract_strided_slice %214 {offsets = [0, 0], sizes = [8, 4], strides = [1, 1]} : vector<8x16xf32> to vector<8x4xf32>
    %241 = arith.negf %240 : vector<8x4xf32>
    %242 = math.exp %241 : vector<8x4xf32>
    %cst_61 = arith.constant 1.000000e+00 : f32
    %243 = vector.broadcast %cst_61 : f32 to vector<8x4xf32>
    %244 = arith.addf %243, %242 : vector<8x4xf32>
    %245 = arith.divf %243, %244 : vector<8x4xf32>
    %246 = vector.extract_strided_slice %214 {offsets = [0, 4], sizes = [8, 4], strides = [1, 1]} : vector<8x16xf32> to vector<8x4xf32>
    %247 = arith.negf %246 : vector<8x4xf32>
    %248 = math.exp %247 : vector<8x4xf32>
    %cst_62 = arith.constant 1.000000e+00 : f32
    %249 = vector.broadcast %cst_62 : f32 to vector<8x4xf32>
    %250 = arith.addf %249, %248 : vector<8x4xf32>
    %251 = arith.divf %249, %250 : vector<8x4xf32>
    %252 = vector.extract_strided_slice %214 {offsets = [0, 8], sizes = [8, 4], strides = [1, 1]} : vector<8x16xf32> to vector<8x4xf32>
    %253 = math.tanh %252 : vector<8x4xf32>
    %254 = vector.extract_strided_slice %214 {offsets = [0, 12], sizes = [8, 4], strides = [1, 1]} : vector<8x16xf32> to vector<8x4xf32>
    %255 = arith.negf %254 : vector<8x4xf32>
    %256 = math.exp %255 : vector<8x4xf32>
    %cst_63 = arith.constant 1.000000e+00 : f32
    %257 = vector.broadcast %cst_63 : f32 to vector<8x4xf32>
    %258 = arith.addf %257, %256 : vector<8x4xf32>
    %259 = arith.divf %257, %258 : vector<8x4xf32>
    %260 = arith.mulf %251, %174 : vector<8x4xf32>
    %261 = arith.mulf %245, %253 : vector<8x4xf32>
    %262 = arith.addf %260, %261 : vector<8x4xf32>
    %263 = math.tanh %262 : vector<8x4xf32>
    %264 = arith.mulf %259, %263 : vector<8x4xf32>
    %265 = tpu.concatenate %239, %237 in 1 : vector<8x32xf32>, vector<8x32xf32> -> vector<8x64xf32>
    %266 = arith.truncf %265 : vector<8x64xf32> to vector<8x64xbf16>
    %267 = vector.extract_strided_slice %206 {offsets = [0, 256], sizes = [8, 1], strides = [1, 1]} : vector<8x257xf32> to vector<8x1xf32>
    %cst_64 = arith.constant dense<0.000000e+00> : vector<8x1xf32>
    %268 = tpu.matmul %266, %18, %cst_64 {dimension_numbers = #tpu.dot_dimension_numbers<[1], [0], [0], [1], [0, 0, 1, 1], [], []>} : vector<8x64xbf16>, vector<64x1xbf16>, vector<8x1xf32> -> vector<8x1xf32>
    %269 = arith.addf %267, %268 : vector<8x1xf32>
    %270 = arith.negf %269 : vector<8x1xf32>
    %271 = math.exp %270 : vector<8x1xf32>
    %cst_65 = arith.constant 1.000000e+00 : f32
    %272 = vector.broadcast %cst_65 : f32 to vector<8x1xf32>
    %273 = arith.addf %272, %271 : vector<8x1xf32>
    %274 = arith.divf %272, %273 : vector<8x1xf32>
    %cst_66 = arith.constant 1.000000e+00 : f32
    %275 = vector.broadcast %cst_66 : f32 to vector<8x1xf32>
    %276 = arith.subf %275, %274 : vector<8x1xf32>
    %277 = tpu.concatenate %264, %22 in 1 : vector<8x4xf32>, vector<8x28xf32> -> vector<8x32xf32>
    %278 = tpu.concatenate %262, %22 in 1 : vector<8x4xf32>, vector<8x28xf32> -> vector<8x32xf32>
    %279 = arith.select %21, %277, %197 : vector<8x32xi1>, vector<8x32xf32>
    %280 = arith.select %21, %278, %237 : vector<8x32xi1>, vector<8x32xf32>
    %281 = vector.broadcast %276 : vector<8x1xf32> to vector<8x32xf32>
    %282 = arith.mulf %281, %239 : vector<8x32xf32>
    %283 = vector.broadcast %274 : vector<8x1xf32> to vector<8x32xf32>
    %284 = arith.mulf %283, %279 : vector<8x32xf32>
    %285 = arith.addf %282, %284 : vector<8x32xf32>
    %286 = vector.broadcast %276 : vector<8x1xf32> to vector<8x32xf32>
    %287 = arith.mulf %286, %237 : vector<8x32xf32>
    %288 = vector.broadcast %274 : vector<8x1xf32> to vector<8x32xf32>
    %289 = arith.mulf %288, %280 : vector<8x32xf32>
    %290 = arith.addf %287, %289 : vector<8x32xf32>
    %c3_i32 = arith.constant 3 : i32
    %c8_i32_67 = arith.constant 8 : i32
    %291 = arith.muli %c3_i32, %c8_i32_67 : i32
    %292 = tpu.assume_multiple %291, 8 : i32
    %293 = arith.index_cast %292 : i32 to index
    %c0_68 = arith.constant 0 : index
    %294 = vector.load %arg12[%293, %c0_68] : memref<64x257xf32, #tpu.memory_space<vmem>>, vector<8x257xf32>
    %295 = vector.extract_strided_slice %294 {offsets = [0, 0], sizes = [8, 128], strides = [1, 1]} : vector<8x257xf32> to vector<8x128xf32>
    %296 = arith.truncf %285 : vector<8x32xf32> to vector<8x32xbf16>
    %cst_69 = arith.constant dense<0.000000e+00> : vector<8x128xf32>
    %297 = tpu.matmul %296, %16, %cst_69 {dimension_numbers = #tpu.dot_dimension_numbers<[1], [0], [0], [1], [0, 0, 1, 1], [], []>} : vector<8x32xbf16>, vector<32x128xbf16>, vector<8x128xf32> -> vector<8x128xf32>
    %298 = arith.addf %295, %297 : vector<8x128xf32>
    %299 = vector.extract_strided_slice %294 {offsets = [0, 128], sizes = [8, 16], strides = [1, 1]} : vector<8x257xf32> to vector<8x16xf32>
    %300 = arith.truncf %264 : vector<8x4xf32> to vector<8x4xbf16>
    %cst_70 = arith.constant dense<0.000000e+00> : vector<8x16xf32>
    %301 = tpu.matmul %300, %17, %cst_70 {dimension_numbers = #tpu.dot_dimension_numbers<[1], [0], [0], [1], [0, 0, 1, 1], [], []>} : vector<8x4xbf16>, vector<4x16xbf16>, vector<8x16xf32> -> vector<8x16xf32>
    %302 = arith.addf %299, %301 : vector<8x16xf32>
    %303 = vector.extract_strided_slice %298 {offsets = [0, 0], sizes = [8, 32], strides = [1, 1]} : vector<8x128xf32> to vector<8x32xf32>
    %304 = arith.negf %303 : vector<8x32xf32>
    %305 = math.exp %304 : vector<8x32xf32>
    %cst_71 = arith.constant 1.000000e+00 : f32
    %306 = vector.broadcast %cst_71 : f32 to vector<8x32xf32>
    %307 = arith.addf %306, %305 : vector<8x32xf32>
    %308 = arith.divf %306, %307 : vector<8x32xf32>
    %309 = vector.extract_strided_slice %298 {offsets = [0, 32], sizes = [8, 32], strides = [1, 1]} : vector<8x128xf32> to vector<8x32xf32>
    %310 = arith.negf %309 : vector<8x32xf32>
    %311 = math.exp %310 : vector<8x32xf32>
    %cst_72 = arith.constant 1.000000e+00 : f32
    %312 = vector.broadcast %cst_72 : f32 to vector<8x32xf32>
    %313 = arith.addf %312, %311 : vector<8x32xf32>
    %314 = arith.divf %312, %313 : vector<8x32xf32>
    %315 = vector.extract_strided_slice %298 {offsets = [0, 64], sizes = [8, 32], strides = [1, 1]} : vector<8x128xf32> to vector<8x32xf32>
    %316 = math.tanh %315 : vector<8x32xf32>
    %317 = vector.extract_strided_slice %298 {offsets = [0, 96], sizes = [8, 32], strides = [1, 1]} : vector<8x128xf32> to vector<8x32xf32>
    %318 = arith.negf %317 : vector<8x32xf32>
    %319 = math.exp %318 : vector<8x32xf32>
    %cst_73 = arith.constant 1.000000e+00 : f32
    %320 = vector.broadcast %cst_73 : f32 to vector<8x32xf32>
    %321 = arith.addf %320, %319 : vector<8x32xf32>
    %322 = arith.divf %320, %321 : vector<8x32xf32>
    %323 = arith.mulf %314, %290 : vector<8x32xf32>
    %324 = arith.mulf %308, %316 : vector<8x32xf32>
    %325 = arith.addf %323, %324 : vector<8x32xf32>
    %326 = math.tanh %325 : vector<8x32xf32>
    %327 = arith.mulf %322, %326 : vector<8x32xf32>
    %328 = vector.extract_strided_slice %302 {offsets = [0, 0], sizes = [8, 4], strides = [1, 1]} : vector<8x16xf32> to vector<8x4xf32>
    %329 = arith.negf %328 : vector<8x4xf32>
    %330 = math.exp %329 : vector<8x4xf32>
    %cst_74 = arith.constant 1.000000e+00 : f32
    %331 = vector.broadcast %cst_74 : f32 to vector<8x4xf32>
    %332 = arith.addf %331, %330 : vector<8x4xf32>
    %333 = arith.divf %331, %332 : vector<8x4xf32>
    %334 = vector.extract_strided_slice %302 {offsets = [0, 4], sizes = [8, 4], strides = [1, 1]} : vector<8x16xf32> to vector<8x4xf32>
    %335 = arith.negf %334 : vector<8x4xf32>
    %336 = math.exp %335 : vector<8x4xf32>
    %cst_75 = arith.constant 1.000000e+00 : f32
    %337 = vector.broadcast %cst_75 : f32 to vector<8x4xf32>
    %338 = arith.addf %337, %336 : vector<8x4xf32>
    %339 = arith.divf %337, %338 : vector<8x4xf32>
    %340 = vector.extract_strided_slice %302 {offsets = [0, 8], sizes = [8, 4], strides = [1, 1]} : vector<8x16xf32> to vector<8x4xf32>
    %341 = math.tanh %340 : vector<8x4xf32>
    %342 = vector.extract_strided_slice %302 {offsets = [0, 12], sizes = [8, 4], strides = [1, 1]} : vector<8x16xf32> to vector<8x4xf32>
    %343 = arith.negf %342 : vector<8x4xf32>
    %344 = math.exp %343 : vector<8x4xf32>
    %cst_76 = arith.constant 1.000000e+00 : f32
    %345 = vector.broadcast %cst_76 : f32 to vector<8x4xf32>
    %346 = arith.addf %345, %344 : vector<8x4xf32>
    %347 = arith.divf %345, %346 : vector<8x4xf32>
    %348 = arith.mulf %339, %262 : vector<8x4xf32>
    %349 = arith.mulf %333, %341 : vector<8x4xf32>
    %350 = arith.addf %348, %349 : vector<8x4xf32>
    %351 = math.tanh %350 : vector<8x4xf32>
    %352 = arith.mulf %347, %351 : vector<8x4xf32>
    %353 = tpu.concatenate %327, %325 in 1 : vector<8x32xf32>, vector<8x32xf32> -> vector<8x64xf32>
    %354 = arith.truncf %353 : vector<8x64xf32> to vector<8x64xbf16>
    %355 = vector.extract_strided_slice %294 {offsets = [0, 256], sizes = [8, 1], strides = [1, 1]} : vector<8x257xf32> to vector<8x1xf32>
    %cst_77 = arith.constant dense<0.000000e+00> : vector<8x1xf32>
    %356 = tpu.matmul %354, %18, %cst_77 {dimension_numbers = #tpu.dot_dimension_numbers<[1], [0], [0], [1], [0, 0, 1, 1], [], []>} : vector<8x64xbf16>, vector<64x1xbf16>, vector<8x1xf32> -> vector<8x1xf32>
    %357 = arith.addf %355, %356 : vector<8x1xf32>
    %358 = arith.negf %357 : vector<8x1xf32>
    %359 = math.exp %358 : vector<8x1xf32>
    %cst_78 = arith.constant 1.000000e+00 : f32
    %360 = vector.broadcast %cst_78 : f32 to vector<8x1xf32>
    %361 = arith.addf %360, %359 : vector<8x1xf32>
    %362 = arith.divf %360, %361 : vector<8x1xf32>
    %cst_79 = arith.constant 1.000000e+00 : f32
    %363 = vector.broadcast %cst_79 : f32 to vector<8x1xf32>
    %364 = arith.subf %363, %362 : vector<8x1xf32>
    %365 = tpu.concatenate %352, %22 in 1 : vector<8x4xf32>, vector<8x28xf32> -> vector<8x32xf32>
    %366 = tpu.concatenate %350, %22 in 1 : vector<8x4xf32>, vector<8x28xf32> -> vector<8x32xf32>
    %367 = arith.select %21, %365, %285 : vector<8x32xi1>, vector<8x32xf32>
    %368 = arith.select %21, %366, %325 : vector<8x32xi1>, vector<8x32xf32>
    %369 = vector.broadcast %364 : vector<8x1xf32> to vector<8x32xf32>
    %370 = arith.mulf %369, %327 : vector<8x32xf32>
    %371 = vector.broadcast %362 : vector<8x1xf32> to vector<8x32xf32>
    %372 = arith.mulf %371, %367 : vector<8x32xf32>
    %373 = arith.addf %370, %372 : vector<8x32xf32>
    %374 = vector.broadcast %364 : vector<8x1xf32> to vector<8x32xf32>
    %375 = arith.mulf %374, %325 : vector<8x32xf32>
    %376 = vector.broadcast %362 : vector<8x1xf32> to vector<8x32xf32>
    %377 = arith.mulf %376, %368 : vector<8x32xf32>
    %378 = arith.addf %375, %377 : vector<8x32xf32>
    %c4_i32_80 = arith.constant 4 : i32
    %c8_i32_81 = arith.constant 8 : i32
    %379 = arith.muli %c4_i32_80, %c8_i32_81 : i32
    %380 = tpu.assume_multiple %379, 8 : i32
    %381 = arith.index_cast %380 : i32 to index
    %c0_82 = arith.constant 0 : index
    %382 = vector.load %arg12[%381, %c0_82] : memref<64x257xf32, #tpu.memory_space<vmem>>, vector<8x257xf32>
    %383 = vector.extract_strided_slice %382 {offsets = [0, 0], sizes = [8, 128], strides = [1, 1]} : vector<8x257xf32> to vector<8x128xf32>
    %384 = arith.truncf %373 : vector<8x32xf32> to vector<8x32xbf16>
    %cst_83 = arith.constant dense<0.000000e+00> : vector<8x128xf32>
    %385 = tpu.matmul %384, %16, %cst_83 {dimension_numbers = #tpu.dot_dimension_numbers<[1], [0], [0], [1], [0, 0, 1, 1], [], []>} : vector<8x32xbf16>, vector<32x128xbf16>, vector<8x128xf32> -> vector<8x128xf32>
    %386 = arith.addf %383, %385 : vector<8x128xf32>
    %387 = vector.extract_strided_slice %382 {offsets = [0, 128], sizes = [8, 16], strides = [1, 1]} : vector<8x257xf32> to vector<8x16xf32>
    %388 = arith.truncf %352 : vector<8x4xf32> to vector<8x4xbf16>
    %cst_84 = arith.constant dense<0.000000e+00> : vector<8x16xf32>
    %389 = tpu.matmul %388, %17, %cst_84 {dimension_numbers = #tpu.dot_dimension_numbers<[1], [0], [0], [1], [0, 0, 1, 1], [], []>} : vector<8x4xbf16>, vector<4x16xbf16>, vector<8x16xf32> -> vector<8x16xf32>
    %390 = arith.addf %387, %389 : vector<8x16xf32>
    %391 = vector.extract_strided_slice %386 {offsets = [0, 0], sizes = [8, 32], strides = [1, 1]} : vector<8x128xf32> to vector<8x32xf32>
    %392 = arith.negf %391 : vector<8x32xf32>
    %393 = math.exp %392 : vector<8x32xf32>
    %cst_85 = arith.constant 1.000000e+00 : f32
    %394 = vector.broadcast %cst_85 : f32 to vector<8x32xf32>
    %395 = arith.addf %394, %393 : vector<8x32xf32>
    %396 = arith.divf %394, %395 : vector<8x32xf32>
    %397 = vector.extract_strided_slice %386 {offsets = [0, 32], sizes = [8, 32], strides = [1, 1]} : vector<8x128xf32> to vector<8x32xf32>
    %398 = arith.negf %397 : vector<8x32xf32>
    %399 = math.exp %398 : vector<8x32xf32>
    %cst_86 = arith.constant 1.000000e+00 : f32
    %400 = vector.broadcast %cst_86 : f32 to vector<8x32xf32>
    %401 = arith.addf %400, %399 : vector<8x32xf32>
    %402 = arith.divf %400, %401 : vector<8x32xf32>
    %403 = vector.extract_strided_slice %386 {offsets = [0, 64], sizes = [8, 32], strides = [1, 1]} : vector<8x128xf32> to vector<8x32xf32>
    %404 = math.tanh %403 : vector<8x32xf32>
    %405 = vector.extract_strided_slice %386 {offsets = [0, 96], sizes = [8, 32], strides = [1, 1]} : vector<8x128xf32> to vector<8x32xf32>
    %406 = arith.negf %405 : vector<8x32xf32>
    %407 = math.exp %406 : vector<8x32xf32>
    %cst_87 = arith.constant 1.000000e+00 : f32
    %408 = vector.broadcast %cst_87 : f32 to vector<8x32xf32>
    %409 = arith.addf %408, %407 : vector<8x32xf32>
    %410 = arith.divf %408, %409 : vector<8x32xf32>
    %411 = arith.mulf %402, %378 : vector<8x32xf32>
    %412 = arith.mulf %396, %404 : vector<8x32xf32>
    %413 = arith.addf %411, %412 : vector<8x32xf32>
    %414 = math.tanh %413 : vector<8x32xf32>
    %415 = arith.mulf %410, %414 : vector<8x32xf32>
    %416 = vector.extract_strided_slice %390 {offsets = [0, 0], sizes = [8, 4], strides = [1, 1]} : vector<8x16xf32> to vector<8x4xf32>
    %417 = arith.negf %416 : vector<8x4xf32>
    %418 = math.exp %417 : vector<8x4xf32>
    %cst_88 = arith.constant 1.000000e+00 : f32
    %419 = vector.broadcast %cst_88 : f32 to vector<8x4xf32>
    %420 = arith.addf %419, %418 : vector<8x4xf32>
    %421 = arith.divf %419, %420 : vector<8x4xf32>
    %422 = vector.extract_strided_slice %390 {offsets = [0, 4], sizes = [8, 4], strides = [1, 1]} : vector<8x16xf32> to vector<8x4xf32>
    %423 = arith.negf %422 : vector<8x4xf32>
    %424 = math.exp %423 : vector<8x4xf32>
    %cst_89 = arith.constant 1.000000e+00 : f32
    %425 = vector.broadcast %cst_89 : f32 to vector<8x4xf32>
    %426 = arith.addf %425, %424 : vector<8x4xf32>
    %427 = arith.divf %425, %426 : vector<8x4xf32>
    %428 = vector.extract_strided_slice %390 {offsets = [0, 8], sizes = [8, 4], strides = [1, 1]} : vector<8x16xf32> to vector<8x4xf32>
    %429 = math.tanh %428 : vector<8x4xf32>
    %430 = vector.extract_strided_slice %390 {offsets = [0, 12], sizes = [8, 4], strides = [1, 1]} : vector<8x16xf32> to vector<8x4xf32>
    %431 = arith.negf %430 : vector<8x4xf32>
    %432 = math.exp %431 : vector<8x4xf32>
    %cst_90 = arith.constant 1.000000e+00 : f32
    %433 = vector.broadcast %cst_90 : f32 to vector<8x4xf32>
    %434 = arith.addf %433, %432 : vector<8x4xf32>
    %435 = arith.divf %433, %434 : vector<8x4xf32>
    %436 = arith.mulf %427, %350 : vector<8x4xf32>
    %437 = arith.mulf %421, %429 : vector<8x4xf32>
    %438 = arith.addf %436, %437 : vector<8x4xf32>
    %439 = math.tanh %438 : vector<8x4xf32>
    %440 = arith.mulf %435, %439 : vector<8x4xf32>
    %441 = tpu.concatenate %415, %413 in 1 : vector<8x32xf32>, vector<8x32xf32> -> vector<8x64xf32>
    %442 = arith.truncf %441 : vector<8x64xf32> to vector<8x64xbf16>
    %443 = vector.extract_strided_slice %382 {offsets = [0, 256], sizes = [8, 1], strides = [1, 1]} : vector<8x257xf32> to vector<8x1xf32>
    %cst_91 = arith.constant dense<0.000000e+00> : vector<8x1xf32>
    %444 = tpu.matmul %442, %18, %cst_91 {dimension_numbers = #tpu.dot_dimension_numbers<[1], [0], [0], [1], [0, 0, 1, 1], [], []>} : vector<8x64xbf16>, vector<64x1xbf16>, vector<8x1xf32> -> vector<8x1xf32>
    %445 = arith.addf %443, %444 : vector<8x1xf32>
    %446 = arith.negf %445 : vector<8x1xf32>
    %447 = math.exp %446 : vector<8x1xf32>
    %cst_92 = arith.constant 1.000000e+00 : f32
    %448 = vector.broadcast %cst_92 : f32 to vector<8x1xf32>
    %449 = arith.addf %448, %447 : vector<8x1xf32>
    %450 = arith.divf %448, %449 : vector<8x1xf32>
    %cst_93 = arith.constant 1.000000e+00 : f32
    %451 = vector.broadcast %cst_93 : f32 to vector<8x1xf32>
    %452 = arith.subf %451, %450 : vector<8x1xf32>
    %453 = tpu.concatenate %440, %22 in 1 : vector<8x4xf32>, vector<8x28xf32> -> vector<8x32xf32>
    %454 = tpu.concatenate %438, %22 in 1 : vector<8x4xf32>, vector<8x28xf32> -> vector<8x32xf32>
    %455 = arith.select %21, %453, %373 : vector<8x32xi1>, vector<8x32xf32>
    %456 = arith.select %21, %454, %413 : vector<8x32xi1>, vector<8x32xf32>
    %457 = vector.broadcast %452 : vector<8x1xf32> to vector<8x32xf32>
    %458 = arith.mulf %457, %415 : vector<8x32xf32>
    %459 = vector.broadcast %450 : vector<8x1xf32> to vector<8x32xf32>
    %460 = arith.mulf %459, %455 : vector<8x32xf32>
    %461 = arith.addf %458, %460 : vector<8x32xf32>
    %462 = vector.broadcast %452 : vector<8x1xf32> to vector<8x32xf32>
    %463 = arith.mulf %462, %413 : vector<8x32xf32>
    %464 = vector.broadcast %450 : vector<8x1xf32> to vector<8x32xf32>
    %465 = arith.mulf %464, %456 : vector<8x32xf32>
    %466 = arith.addf %463, %465 : vector<8x32xf32>
    %c5_i32 = arith.constant 5 : i32
    %c8_i32_94 = arith.constant 8 : i32
    %467 = arith.muli %c5_i32, %c8_i32_94 : i32
    %468 = tpu.assume_multiple %467, 8 : i32
    %469 = arith.index_cast %468 : i32 to index
    %c0_95 = arith.constant 0 : index
    %470 = vector.load %arg12[%469, %c0_95] : memref<64x257xf32, #tpu.memory_space<vmem>>, vector<8x257xf32>
    %471 = vector.extract_strided_slice %470 {offsets = [0, 0], sizes = [8, 128], strides = [1, 1]} : vector<8x257xf32> to vector<8x128xf32>
    %472 = arith.truncf %461 : vector<8x32xf32> to vector<8x32xbf16>
    %cst_96 = arith.constant dense<0.000000e+00> : vector<8x128xf32>
    %473 = tpu.matmul %472, %16, %cst_96 {dimension_numbers = #tpu.dot_dimension_numbers<[1], [0], [0], [1], [0, 0, 1, 1], [], []>} : vector<8x32xbf16>, vector<32x128xbf16>, vector<8x128xf32> -> vector<8x128xf32>
    %474 = arith.addf %471, %473 : vector<8x128xf32>
    %475 = vector.extract_strided_slice %470 {offsets = [0, 128], sizes = [8, 16], strides = [1, 1]} : vector<8x257xf32> to vector<8x16xf32>
    %476 = arith.truncf %440 : vector<8x4xf32> to vector<8x4xbf16>
    %cst_97 = arith.constant dense<0.000000e+00> : vector<8x16xf32>
    %477 = tpu.matmul %476, %17, %cst_97 {dimension_numbers = #tpu.dot_dimension_numbers<[1], [0], [0], [1], [0, 0, 1, 1], [], []>} : vector<8x4xbf16>, vector<4x16xbf16>, vector<8x16xf32> -> vector<8x16xf32>
    %478 = arith.addf %475, %477 : vector<8x16xf32>
    %479 = vector.extract_strided_slice %474 {offsets = [0, 0], sizes = [8, 32], strides = [1, 1]} : vector<8x128xf32> to vector<8x32xf32>
    %480 = arith.negf %479 : vector<8x32xf32>
    %481 = math.exp %480 : vector<8x32xf32>
    %cst_98 = arith.constant 1.000000e+00 : f32
    %482 = vector.broadcast %cst_98 : f32 to vector<8x32xf32>
    %483 = arith.addf %482, %481 : vector<8x32xf32>
    %484 = arith.divf %482, %483 : vector<8x32xf32>
    %485 = vector.extract_strided_slice %474 {offsets = [0, 32], sizes = [8, 32], strides = [1, 1]} : vector<8x128xf32> to vector<8x32xf32>
    %486 = arith.negf %485 : vector<8x32xf32>
    %487 = math.exp %486 : vector<8x32xf32>
    %cst_99 = arith.constant 1.000000e+00 : f32
    %488 = vector.broadcast %cst_99 : f32 to vector<8x32xf32>
    %489 = arith.addf %488, %487 : vector<8x32xf32>
    %490 = arith.divf %488, %489 : vector<8x32xf32>
    %491 = vector.extract_strided_slice %474 {offsets = [0, 64], sizes = [8, 32], strides = [1, 1]} : vector<8x128xf32> to vector<8x32xf32>
    %492 = math.tanh %491 : vector<8x32xf32>
    %493 = vector.extract_strided_slice %474 {offsets = [0, 96], sizes = [8, 32], strides = [1, 1]} : vector<8x128xf32> to vector<8x32xf32>
    %494 = arith.negf %493 : vector<8x32xf32>
    %495 = math.exp %494 : vector<8x32xf32>
    %cst_100 = arith.constant 1.000000e+00 : f32
    %496 = vector.broadcast %cst_100 : f32 to vector<8x32xf32>
    %497 = arith.addf %496, %495 : vector<8x32xf32>
    %498 = arith.divf %496, %497 : vector<8x32xf32>
    %499 = arith.mulf %490, %466 : vector<8x32xf32>
    %500 = arith.mulf %484, %492 : vector<8x32xf32>
    %501 = arith.addf %499, %500 : vector<8x32xf32>
    %502 = math.tanh %501 : vector<8x32xf32>
    %503 = arith.mulf %498, %502 : vector<8x32xf32>
    %504 = vector.extract_strided_slice %478 {offsets = [0, 0], sizes = [8, 4], strides = [1, 1]} : vector<8x16xf32> to vector<8x4xf32>
    %505 = arith.negf %504 : vector<8x4xf32>
    %506 = math.exp %505 : vector<8x4xf32>
    %cst_101 = arith.constant 1.000000e+00 : f32
    %507 = vector.broadcast %cst_101 : f32 to vector<8x4xf32>
    %508 = arith.addf %507, %506 : vector<8x4xf32>
    %509 = arith.divf %507, %508 : vector<8x4xf32>
    %510 = vector.extract_strided_slice %478 {offsets = [0, 4], sizes = [8, 4], strides = [1, 1]} : vector<8x16xf32> to vector<8x4xf32>
    %511 = arith.negf %510 : vector<8x4xf32>
    %512 = math.exp %511 : vector<8x4xf32>
    %cst_102 = arith.constant 1.000000e+00 : f32
    %513 = vector.broadcast %cst_102 : f32 to vector<8x4xf32>
    %514 = arith.addf %513, %512 : vector<8x4xf32>
    %515 = arith.divf %513, %514 : vector<8x4xf32>
    %516 = vector.extract_strided_slice %478 {offsets = [0, 8], sizes = [8, 4], strides = [1, 1]} : vector<8x16xf32> to vector<8x4xf32>
    %517 = math.tanh %516 : vector<8x4xf32>
    %518 = vector.extract_strided_slice %478 {offsets = [0, 12], sizes = [8, 4], strides = [1, 1]} : vector<8x16xf32> to vector<8x4xf32>
    %519 = arith.negf %518 : vector<8x4xf32>
    %520 = math.exp %519 : vector<8x4xf32>
    %cst_103 = arith.constant 1.000000e+00 : f32
    %521 = vector.broadcast %cst_103 : f32 to vector<8x4xf32>
    %522 = arith.addf %521, %520 : vector<8x4xf32>
    %523 = arith.divf %521, %522 : vector<8x4xf32>
    %524 = arith.mulf %515, %438 : vector<8x4xf32>
    %525 = arith.mulf %509, %517 : vector<8x4xf32>
    %526 = arith.addf %524, %525 : vector<8x4xf32>
    %527 = math.tanh %526 : vector<8x4xf32>
    %528 = arith.mulf %523, %527 : vector<8x4xf32>
    %529 = tpu.concatenate %503, %501 in 1 : vector<8x32xf32>, vector<8x32xf32> -> vector<8x64xf32>
    %530 = arith.truncf %529 : vector<8x64xf32> to vector<8x64xbf16>
    %531 = vector.extract_strided_slice %470 {offsets = [0, 256], sizes = [8, 1], strides = [1, 1]} : vector<8x257xf32> to vector<8x1xf32>
    %cst_104 = arith.constant dense<0.000000e+00> : vector<8x1xf32>
    %532 = tpu.matmul %530, %18, %cst_104 {dimension_numbers = #tpu.dot_dimension_numbers<[1], [0], [0], [1], [0, 0, 1, 1], [], []>} : vector<8x64xbf16>, vector<64x1xbf16>, vector<8x1xf32> -> vector<8x1xf32>
    %533 = arith.addf %531, %532 : vector<8x1xf32>
    %534 = arith.negf %533 : vector<8x1xf32>
    %535 = math.exp %534 : vector<8x1xf32>
    %cst_105 = arith.constant 1.000000e+00 : f32
    %536 = vector.broadcast %cst_105 : f32 to vector<8x1xf32>
    %537 = arith.addf %536, %535 : vector<8x1xf32>
    %538 = arith.divf %536, %537 : vector<8x1xf32>
    %cst_106 = arith.constant 1.000000e+00 : f32
    %539 = vector.broadcast %cst_106 : f32 to vector<8x1xf32>
    %540 = arith.subf %539, %538 : vector<8x1xf32>
    %541 = tpu.concatenate %528, %22 in 1 : vector<8x4xf32>, vector<8x28xf32> -> vector<8x32xf32>
    %542 = tpu.concatenate %526, %22 in 1 : vector<8x4xf32>, vector<8x28xf32> -> vector<8x32xf32>
    %543 = arith.select %21, %541, %461 : vector<8x32xi1>, vector<8x32xf32>
    %544 = arith.select %21, %542, %501 : vector<8x32xi1>, vector<8x32xf32>
    %545 = vector.broadcast %540 : vector<8x1xf32> to vector<8x32xf32>
    %546 = arith.mulf %545, %503 : vector<8x32xf32>
    %547 = vector.broadcast %538 : vector<8x1xf32> to vector<8x32xf32>
    %548 = arith.mulf %547, %543 : vector<8x32xf32>
    %549 = arith.addf %546, %548 : vector<8x32xf32>
    %550 = vector.broadcast %540 : vector<8x1xf32> to vector<8x32xf32>
    %551 = arith.mulf %550, %501 : vector<8x32xf32>
    %552 = vector.broadcast %538 : vector<8x1xf32> to vector<8x32xf32>
    %553 = arith.mulf %552, %544 : vector<8x32xf32>
    %554 = arith.addf %551, %553 : vector<8x32xf32>
    %c6_i32 = arith.constant 6 : i32
    %c8_i32_107 = arith.constant 8 : i32
    %555 = arith.muli %c6_i32, %c8_i32_107 : i32
    %556 = tpu.assume_multiple %555, 8 : i32
    %557 = arith.index_cast %556 : i32 to index
    %c0_108 = arith.constant 0 : index
    %558 = vector.load %arg12[%557, %c0_108] : memref<64x257xf32, #tpu.memory_space<vmem>>, vector<8x257xf32>
    %559 = vector.extract_strided_slice %558 {offsets = [0, 0], sizes = [8, 128], strides = [1, 1]} : vector<8x257xf32> to vector<8x128xf32>
    %560 = arith.truncf %549 : vector<8x32xf32> to vector<8x32xbf16>
    %cst_109 = arith.constant dense<0.000000e+00> : vector<8x128xf32>
    %561 = tpu.matmul %560, %16, %cst_109 {dimension_numbers = #tpu.dot_dimension_numbers<[1], [0], [0], [1], [0, 0, 1, 1], [], []>} : vector<8x32xbf16>, vector<32x128xbf16>, vector<8x128xf32> -> vector<8x128xf32>
    %562 = arith.addf %559, %561 : vector<8x128xf32>
    %563 = vector.extract_strided_slice %558 {offsets = [0, 128], sizes = [8, 16], strides = [1, 1]} : vector<8x257xf32> to vector<8x16xf32>
    %564 = arith.truncf %528 : vector<8x4xf32> to vector<8x4xbf16>
    %cst_110 = arith.constant dense<0.000000e+00> : vector<8x16xf32>
    %565 = tpu.matmul %564, %17, %cst_110 {dimension_numbers = #tpu.dot_dimension_numbers<[1], [0], [0], [1], [0, 0, 1, 1], [], []>} : vector<8x4xbf16>, vector<4x16xbf16>, vector<8x16xf32> -> vector<8x16xf32>
    %566 = arith.addf %563, %565 : vector<8x16xf32>
    %567 = vector.extract_strided_slice %562 {offsets = [0, 0], sizes = [8, 32], strides = [1, 1]} : vector<8x128xf32> to vector<8x32xf32>
    %568 = arith.negf %567 : vector<8x32xf32>
    %569 = math.exp %568 : vector<8x32xf32>
    %cst_111 = arith.constant 1.000000e+00 : f32
    %570 = vector.broadcast %cst_111 : f32 to vector<8x32xf32>
    %571 = arith.addf %570, %569 : vector<8x32xf32>
    %572 = arith.divf %570, %571 : vector<8x32xf32>
    %573 = vector.extract_strided_slice %562 {offsets = [0, 32], sizes = [8, 32], strides = [1, 1]} : vector<8x128xf32> to vector<8x32xf32>
    %574 = arith.negf %573 : vector<8x32xf32>
    %575 = math.exp %574 : vector<8x32xf32>
    %cst_112 = arith.constant 1.000000e+00 : f32
    %576 = vector.broadcast %cst_112 : f32 to vector<8x32xf32>
    %577 = arith.addf %576, %575 : vector<8x32xf32>
    %578 = arith.divf %576, %577 : vector<8x32xf32>
    %579 = vector.extract_strided_slice %562 {offsets = [0, 64], sizes = [8, 32], strides = [1, 1]} : vector<8x128xf32> to vector<8x32xf32>
    %580 = math.tanh %579 : vector<8x32xf32>
    %581 = vector.extract_strided_slice %562 {offsets = [0, 96], sizes = [8, 32], strides = [1, 1]} : vector<8x128xf32> to vector<8x32xf32>
    %582 = arith.negf %581 : vector<8x32xf32>
    %583 = math.exp %582 : vector<8x32xf32>
    %cst_113 = arith.constant 1.000000e+00 : f32
    %584 = vector.broadcast %cst_113 : f32 to vector<8x32xf32>
    %585 = arith.addf %584, %583 : vector<8x32xf32>
    %586 = arith.divf %584, %585 : vector<8x32xf32>
    %587 = arith.mulf %578, %554 : vector<8x32xf32>
    %588 = arith.mulf %572, %580 : vector<8x32xf32>
    %589 = arith.addf %587, %588 : vector<8x32xf32>
    %590 = math.tanh %589 : vector<8x32xf32>
    %591 = arith.mulf %586, %590 : vector<8x32xf32>
    %592 = vector.extract_strided_slice %566 {offsets = [0, 0], sizes = [8, 4], strides = [1, 1]} : vector<8x16xf32> to vector<8x4xf32>
    %593 = arith.negf %592 : vector<8x4xf32>
    %594 = math.exp %593 : vector<8x4xf32>
    %cst_114 = arith.constant 1.000000e+00 : f32
    %595 = vector.broadcast %cst_114 : f32 to vector<8x4xf32>
    %596 = arith.addf %595, %594 : vector<8x4xf32>
    %597 = arith.divf %595, %596 : vector<8x4xf32>
    %598 = vector.extract_strided_slice %566 {offsets = [0, 4], sizes = [8, 4], strides = [1, 1]} : vector<8x16xf32> to vector<8x4xf32>
    %599 = arith.negf %598 : vector<8x4xf32>
    %600 = math.exp %599 : vector<8x4xf32>
    %cst_115 = arith.constant 1.000000e+00 : f32
    %601 = vector.broadcast %cst_115 : f32 to vector<8x4xf32>
    %602 = arith.addf %601, %600 : vector<8x4xf32>
    %603 = arith.divf %601, %602 : vector<8x4xf32>
    %604 = vector.extract_strided_slice %566 {offsets = [0, 8], sizes = [8, 4], strides = [1, 1]} : vector<8x16xf32> to vector<8x4xf32>
    %605 = math.tanh %604 : vector<8x4xf32>
    %606 = vector.extract_strided_slice %566 {offsets = [0, 12], sizes = [8, 4], strides = [1, 1]} : vector<8x16xf32> to vector<8x4xf32>
    %607 = arith.negf %606 : vector<8x4xf32>
    %608 = math.exp %607 : vector<8x4xf32>
    %cst_116 = arith.constant 1.000000e+00 : f32
    %609 = vector.broadcast %cst_116 : f32 to vector<8x4xf32>
    %610 = arith.addf %609, %608 : vector<8x4xf32>
    %611 = arith.divf %609, %610 : vector<8x4xf32>
    %612 = arith.mulf %603, %526 : vector<8x4xf32>
    %613 = arith.mulf %597, %605 : vector<8x4xf32>
    %614 = arith.addf %612, %613 : vector<8x4xf32>
    %615 = math.tanh %614 : vector<8x4xf32>
    %616 = arith.mulf %611, %615 : vector<8x4xf32>
    %617 = tpu.concatenate %591, %589 in 1 : vector<8x32xf32>, vector<8x32xf32> -> vector<8x64xf32>
    %618 = arith.truncf %617 : vector<8x64xf32> to vector<8x64xbf16>
    %619 = vector.extract_strided_slice %558 {offsets = [0, 256], sizes = [8, 1], strides = [1, 1]} : vector<8x257xf32> to vector<8x1xf32>
    %cst_117 = arith.constant dense<0.000000e+00> : vector<8x1xf32>
    %620 = tpu.matmul %618, %18, %cst_117 {dimension_numbers = #tpu.dot_dimension_numbers<[1], [0], [0], [1], [0, 0, 1, 1], [], []>} : vector<8x64xbf16>, vector<64x1xbf16>, vector<8x1xf32> -> vector<8x1xf32>
    %621 = arith.addf %619, %620 : vector<8x1xf32>
    %622 = arith.negf %621 : vector<8x1xf32>
    %623 = math.exp %622 : vector<8x1xf32>
    %cst_118 = arith.constant 1.000000e+00 : f32
    %624 = vector.broadcast %cst_118 : f32 to vector<8x1xf32>
    %625 = arith.addf %624, %623 : vector<8x1xf32>
    %626 = arith.divf %624, %625 : vector<8x1xf32>
    %cst_119 = arith.constant 1.000000e+00 : f32
    %627 = vector.broadcast %cst_119 : f32 to vector<8x1xf32>
    %628 = arith.subf %627, %626 : vector<8x1xf32>
    %629 = tpu.concatenate %616, %22 in 1 : vector<8x4xf32>, vector<8x28xf32> -> vector<8x32xf32>
    %630 = tpu.concatenate %614, %22 in 1 : vector<8x4xf32>, vector<8x28xf32> -> vector<8x32xf32>
    %631 = arith.select %21, %629, %549 : vector<8x32xi1>, vector<8x32xf32>
    %632 = arith.select %21, %630, %589 : vector<8x32xi1>, vector<8x32xf32>
    %633 = vector.broadcast %628 : vector<8x1xf32> to vector<8x32xf32>
    %634 = arith.mulf %633, %591 : vector<8x32xf32>
    %635 = vector.broadcast %626 : vector<8x1xf32> to vector<8x32xf32>
    %636 = arith.mulf %635, %631 : vector<8x32xf32>
    %637 = arith.addf %634, %636 : vector<8x32xf32>
    %638 = vector.broadcast %628 : vector<8x1xf32> to vector<8x32xf32>
    %639 = arith.mulf %638, %589 : vector<8x32xf32>
    %640 = vector.broadcast %626 : vector<8x1xf32> to vector<8x32xf32>
    %641 = arith.mulf %640, %632 : vector<8x32xf32>
    %642 = arith.addf %639, %641 : vector<8x32xf32>
    %c7_i32 = arith.constant 7 : i32
    %c8_i32_120 = arith.constant 8 : i32
    %643 = arith.muli %c7_i32, %c8_i32_120 : i32
    %644 = tpu.assume_multiple %643, 8 : i32
    %645 = arith.index_cast %644 : i32 to index
    %c0_121 = arith.constant 0 : index
    %646 = vector.load %arg12[%645, %c0_121] : memref<64x257xf32, #tpu.memory_space<vmem>>, vector<8x257xf32>
    %647 = vector.extract_strided_slice %646 {offsets = [0, 0], sizes = [8, 128], strides = [1, 1]} : vector<8x257xf32> to vector<8x128xf32>
    %648 = arith.truncf %637 : vector<8x32xf32> to vector<8x32xbf16>
    %cst_122 = arith.constant dense<0.000000e+00> : vector<8x128xf32>
    %649 = tpu.matmul %648, %16, %cst_122 {dimension_numbers = #tpu.dot_dimension_numbers<[1], [0], [0], [1], [0, 0, 1, 1], [], []>} : vector<8x32xbf16>, vector<32x128xbf16>, vector<8x128xf32> -> vector<8x128xf32>
    %650 = arith.addf %647, %649 : vector<8x128xf32>
    %651 = vector.extract_strided_slice %646 {offsets = [0, 128], sizes = [8, 16], strides = [1, 1]} : vector<8x257xf32> to vector<8x16xf32>
    %652 = arith.truncf %616 : vector<8x4xf32> to vector<8x4xbf16>
    %cst_123 = arith.constant dense<0.000000e+00> : vector<8x16xf32>
    %653 = tpu.matmul %652, %17, %cst_123 {dimension_numbers = #tpu.dot_dimension_numbers<[1], [0], [0], [1], [0, 0, 1, 1], [], []>} : vector<8x4xbf16>, vector<4x16xbf16>, vector<8x16xf32> -> vector<8x16xf32>
    %654 = arith.addf %651, %653 : vector<8x16xf32>
    %655 = vector.extract_strided_slice %650 {offsets = [0, 0], sizes = [8, 32], strides = [1, 1]} : vector<8x128xf32> to vector<8x32xf32>
    %656 = arith.negf %655 : vector<8x32xf32>
    %657 = math.exp %656 : vector<8x32xf32>
    %cst_124 = arith.constant 1.000000e+00 : f32
    %658 = vector.broadcast %cst_124 : f32 to vector<8x32xf32>
    %659 = arith.addf %658, %657 : vector<8x32xf32>
    %660 = arith.divf %658, %659 : vector<8x32xf32>
    %661 = vector.extract_strided_slice %650 {offsets = [0, 32], sizes = [8, 32], strides = [1, 1]} : vector<8x128xf32> to vector<8x32xf32>
    %662 = arith.negf %661 : vector<8x32xf32>
    %663 = math.exp %662 : vector<8x32xf32>
    %cst_125 = arith.constant 1.000000e+00 : f32
    %664 = vector.broadcast %cst_125 : f32 to vector<8x32xf32>
    %665 = arith.addf %664, %663 : vector<8x32xf32>
    %666 = arith.divf %664, %665 : vector<8x32xf32>
    %667 = vector.extract_strided_slice %650 {offsets = [0, 64], sizes = [8, 32], strides = [1, 1]} : vector<8x128xf32> to vector<8x32xf32>
    %668 = math.tanh %667 : vector<8x32xf32>
    %669 = vector.extract_strided_slice %650 {offsets = [0, 96], sizes = [8, 32], strides = [1, 1]} : vector<8x128xf32> to vector<8x32xf32>
    %670 = arith.negf %669 : vector<8x32xf32>
    %671 = math.exp %670 : vector<8x32xf32>
    %cst_126 = arith.constant 1.000000e+00 : f32
    %672 = vector.broadcast %cst_126 : f32 to vector<8x32xf32>
    %673 = arith.addf %672, %671 : vector<8x32xf32>
    %674 = arith.divf %672, %673 : vector<8x32xf32>
    %675 = arith.mulf %666, %642 : vector<8x32xf32>
    %676 = arith.mulf %660, %668 : vector<8x32xf32>
    %677 = arith.addf %675, %676 : vector<8x32xf32>
    %678 = math.tanh %677 : vector<8x32xf32>
    %679 = arith.mulf %674, %678 : vector<8x32xf32>
    %680 = vector.extract_strided_slice %654 {offsets = [0, 0], sizes = [8, 4], strides = [1, 1]} : vector<8x16xf32> to vector<8x4xf32>
    %681 = arith.negf %680 : vector<8x4xf32>
    %682 = math.exp %681 : vector<8x4xf32>
    %cst_127 = arith.constant 1.000000e+00 : f32
    %683 = vector.broadcast %cst_127 : f32 to vector<8x4xf32>
    %684 = arith.addf %683, %682 : vector<8x4xf32>
    %685 = arith.divf %683, %684 : vector<8x4xf32>
    %686 = vector.extract_strided_slice %654 {offsets = [0, 4], sizes = [8, 4], strides = [1, 1]} : vector<8x16xf32> to vector<8x4xf32>
    %687 = arith.negf %686 : vector<8x4xf32>
    %688 = math.exp %687 : vector<8x4xf32>
    %cst_128 = arith.constant 1.000000e+00 : f32
    %689 = vector.broadcast %cst_128 : f32 to vector<8x4xf32>
    %690 = arith.addf %689, %688 : vector<8x4xf32>
    %691 = arith.divf %689, %690 : vector<8x4xf32>
    %692 = vector.extract_strided_slice %654 {offsets = [0, 8], sizes = [8, 4], strides = [1, 1]} : vector<8x16xf32> to vector<8x4xf32>
    %693 = math.tanh %692 : vector<8x4xf32>
    %694 = vector.extract_strided_slice %654 {offsets = [0, 12], sizes = [8, 4], strides = [1, 1]} : vector<8x16xf32> to vector<8x4xf32>
    %695 = arith.negf %694 : vector<8x4xf32>
    %696 = math.exp %695 : vector<8x4xf32>
    %cst_129 = arith.constant 1.000000e+00 : f32
    %697 = vector.broadcast %cst_129 : f32 to vector<8x4xf32>
    %698 = arith.addf %697, %696 : vector<8x4xf32>
    %699 = arith.divf %697, %698 : vector<8x4xf32>
    %700 = arith.mulf %691, %614 : vector<8x4xf32>
    %701 = arith.mulf %685, %693 : vector<8x4xf32>
    %702 = arith.addf %700, %701 : vector<8x4xf32>
    %703 = math.tanh %702 : vector<8x4xf32>
    %704 = arith.mulf %699, %703 : vector<8x4xf32>
    %705 = tpu.concatenate %679, %677 in 1 : vector<8x32xf32>, vector<8x32xf32> -> vector<8x64xf32>
    %706 = arith.truncf %705 : vector<8x64xf32> to vector<8x64xbf16>
    %707 = vector.extract_strided_slice %646 {offsets = [0, 256], sizes = [8, 1], strides = [1, 1]} : vector<8x257xf32> to vector<8x1xf32>
    %cst_130 = arith.constant dense<0.000000e+00> : vector<8x1xf32>
    %708 = tpu.matmul %706, %18, %cst_130 {dimension_numbers = #tpu.dot_dimension_numbers<[1], [0], [0], [1], [0, 0, 1, 1], [], []>} : vector<8x64xbf16>, vector<64x1xbf16>, vector<8x1xf32> -> vector<8x1xf32>
    %709 = arith.addf %707, %708 : vector<8x1xf32>
    %710 = arith.negf %709 : vector<8x1xf32>
    %711 = math.exp %710 : vector<8x1xf32>
    %cst_131 = arith.constant 1.000000e+00 : f32
    %712 = vector.broadcast %cst_131 : f32 to vector<8x1xf32>
    %713 = arith.addf %712, %711 : vector<8x1xf32>
    %714 = arith.divf %712, %713 : vector<8x1xf32>
    %cst_132 = arith.constant 1.000000e+00 : f32
    %715 = vector.broadcast %cst_132 : f32 to vector<8x1xf32>
    %716 = arith.subf %715, %714 : vector<8x1xf32>
    %717 = tpu.concatenate %704, %22 in 1 : vector<8x4xf32>, vector<8x28xf32> -> vector<8x32xf32>
    %718 = tpu.concatenate %702, %22 in 1 : vector<8x4xf32>, vector<8x28xf32> -> vector<8x32xf32>
    %719 = arith.select %21, %717, %637 : vector<8x32xi1>, vector<8x32xf32>
    %720 = arith.select %21, %718, %677 : vector<8x32xi1>, vector<8x32xf32>
    %721 = vector.broadcast %716 : vector<8x1xf32> to vector<8x32xf32>
    %722 = arith.mulf %721, %679 : vector<8x32xf32>
    %723 = vector.broadcast %714 : vector<8x1xf32> to vector<8x32xf32>
    %724 = arith.mulf %723, %719 : vector<8x32xf32>
    %725 = arith.addf %722, %724 : vector<8x32xf32>
    %726 = vector.broadcast %716 : vector<8x1xf32> to vector<8x32xf32>
    %727 = arith.mulf %726, %677 : vector<8x32xf32>
    %728 = vector.broadcast %714 : vector<8x1xf32> to vector<8x32xf32>
    %729 = arith.mulf %728, %720 : vector<8x32xf32>
    %730 = arith.addf %727, %729 : vector<8x32xf32>
    %c8_i32_133 = arith.constant 8 : i32
    %c0_134 = arith.constant 0 : index
    %c0_135 = arith.constant 0 : index
    %731 = vector.load %arg13[%c0_134, %c0_135] : memref<8x32xf32, #tpu.memory_space<vmem>>, vector<8x32xf32>
    tpu.vector_store %arg13[%c0_134, %c0_135], %725 {strides = array<i32>} : memref<8x32xf32, #tpu.memory_space<vmem>>, vector<8x32xf32>,
    %c0_136 = arith.constant 0 : index
    %c0_137 = arith.constant 0 : index
    %732 = vector.load %arg14[%c0_136, %c0_137] : memref<8x32xf32, #tpu.memory_space<vmem>>, vector<8x32xf32>
    tpu.vector_store %arg14[%c0_136, %c0_137], %730 {strides = array<i32>} : memref<8x32xf32, #tpu.memory_space<vmem>>, vector<8x32xf32>,
    %c0_138 = arith.constant 0 : index
    %c0_139 = arith.constant 0 : index
    %733 = vector.load %arg15[%c0_138, %c0_139] : memref<8x4xf32, #tpu.memory_space<vmem>>, vector<8x4xf32>
    tpu.vector_store %arg15[%c0_138, %c0_139], %704 {strides = array<i32>} : memref<8x4xf32, #tpu.memory_space<vmem>>, vector<8x4xf32>,
    %c0_140 = arith.constant 0 : index
    %c0_141 = arith.constant 0 : index
    %734 = vector.load %arg16[%c0_140, %c0_141] : memref<8x4xf32, #tpu.memory_space<vmem>>, vector<8x4xf32>
    tpu.vector_store %arg16[%c0_140, %c0_141], %702 {strides = array<i32>} : memref<8x4xf32, #tpu.memory_space<vmem>>, vector<8x4xf32>,
    %cst_142 = arith.constant 0.000000e+00 : f32
    %735 = vector.broadcast %cst_142 : f32 to vector<8x32xf32>
    %736 = arith.maximumf %725, %735 : vector<8x32xf32>
    %c0_143 = arith.constant 0 : index
    %c0_144 = arith.constant 0 : index
    %737 = vector.load %arg9[%c0_143, %c0_144] : memref<32x2xf32, #tpu.memory_space<vmem>>, vector<32x2xf32>
    %cst_145 = arith.constant dense<0.000000e+00> : vector<8x2xf32>
    %738 = tpu.matmul %736, %737, %cst_145 {dimension_numbers = #tpu.dot_dimension_numbers<[1], [0], [0], [1], [0, 0, 1, 1], [], []>} : vector<8x32xf32>, vector<32x2xf32>, vector<8x2xf32> -> vector<8x2xf32>
    %c0_146 = arith.constant 0 : index
    %c0_147 = arith.constant 0 : index
    %739 = vector.load %arg10[%c0_146, %c0_147] : memref<1x2xf32, #tpu.memory_space<vmem>>, vector<1x2xf32>
    %740 = vector.broadcast %739 : vector<1x2xf32> to vector<8x2xf32>
    %741 = arith.addf %738, %740 : vector<8x2xf32>
    %c0_148 = arith.constant 0 : index
    %c0_149 = arith.constant 0 : index
    %742 = vector.load %arg11[%c0_148, %c0_149] : memref<8x2xf32, #tpu.memory_space<vmem>>, vector<8x2xf32>
    tpu.vector_store %arg11[%c0_148, %c0_149], %741 {strides = array<i32>} : memref<8x2xf32, #tpu.memory_space<vmem>>, vector<8x2xf32>,
    return
  }
  func.func @transform_0(%arg0: i32, %arg1: i32) -> (i32, i32, i32) {
    %c0_i32 = arith.constant 0 : i32
    %c0_i32_0 = arith.constant 0 : i32
    return %arg0, %arg1, %c0_i32 : i32, i32, i32
  }
  func.func @transform_1(%arg0: i32, %arg1: i32) -> (i32, i32, i32) {
    %c0_i32 = arith.constant 0 : i32
    %c0_i32_0 = arith.constant 0 : i32
    return %arg0, %arg1, %c0_i32 : i32, i32, i32
  }
  func.func @transform_2(%arg0: i32, %arg1: i32) -> (i32, i32) {
    %c0_i32 = arith.constant 0 : i32
    %c0_i32_0 = arith.constant 0 : i32
    %c0_i32_1 = arith.constant 0 : i32
    return %c0_i32, %c0_i32_0 : i32, i32
  }
  func.func @transform_3(%arg0: i32, %arg1: i32) -> (i32, i32) {
    %c0_i32 = arith.constant 0 : i32
    %c0_i32_0 = arith.constant 0 : i32
    %c0_i32_1 = arith.constant 0 : i32
    return %c0_i32, %c0_i32_0 : i32, i32
  }
  func.func @transform_4(%arg0: i32, %arg1: i32) -> (i32, i32) {
    %c0_i32 = arith.constant 0 : i32
    %c0_i32_0 = arith.constant 0 : i32
    %c0_i32_1 = arith.constant 0 : i32
    return %c0_i32, %c0_i32_0 : i32, i32
  }
  func.func @transform_5(%arg0: i32, %arg1: i32) -> (i32, i32) {
    %c0_i32 = arith.constant 0 : i32
    %c0_i32_0 = arith.constant 0 : i32
    %c0_i32_1 = arith.constant 0 : i32
    return %c0_i32, %c0_i32_0 : i32, i32
  }
  func.func @transform_6(%arg0: i32, %arg1: i32) -> (i32, i32) {
    %c0_i32 = arith.constant 0 : i32
    %c0_i32_0 = arith.constant 0 : i32
    %c0_i32_1 = arith.constant 0 : i32
    return %c0_i32, %c0_i32_0 : i32, i32
  }
  func.func @transform_7(%arg0: i32, %arg1: i32) -> (i32, i32) {
    %c0_i32 = arith.constant 0 : i32
    %c0_i32_0 = arith.constant 0 : i32
    %c0_i32_1 = arith.constant 0 : i32
    return %c0_i32, %c0_i32_0 : i32, i32
  }
  func.func @transform_8(%arg0: i32, %arg1: i32) -> (i32, i32) {
    %c0_i32 = arith.constant 0 : i32
    %c0_i32_0 = arith.constant 0 : i32
    %c0_i32_1 = arith.constant 0 : i32
    return %c0_i32, %c0_i32_0 : i32, i32
  }
  func.func @transform_9(%arg0: i32, %arg1: i32) -> (i32, i32) {
    %c0_i32 = arith.constant 0 : i32
    %c0_i32_0 = arith.constant 0 : i32
    return %arg0, %c0_i32 : i32, i32
  }
}

module attributes {stable_mosaic.version = 11 : i64} {
  func.func @skim_rnn_kernel(%arg0: i32, %arg1: i32, %arg2: memref<1x64x32xbf16, #tpu.memory_space<vmem>>, %arg3: memref<1x64x1xf32, #tpu.memory_space<vmem>>, %arg4: memref<32x257xbf16, #tpu.memory_space<vmem>>, %arg5: memref<1x257xf32, #tpu.memory_space<vmem>>, %arg6: memref<32x128xbf16, #tpu.memory_space<vmem>>, %arg7: memref<4x16xbf16, #tpu.memory_space<vmem>>, %arg8: memref<64x1xbf16, #tpu.memory_space<vmem>>, %arg9: memref<32x2xf32, #tpu.memory_space<vmem>>, %arg10: memref<1x2xf32, #tpu.memory_space<vmem>>, %arg11: memref<8x2xf32, #tpu.memory_space<vmem>>, %arg12: memref<64x257xf32, #tpu.memory_space<vmem>>, %arg13: memref<8x32xf32, #tpu.memory_space<vmem>>, %arg14: memref<8x32xf32, #tpu.memory_space<vmem>>, %arg15: memref<8x4xf32, #tpu.memory_space<vmem>>, %arg16: memref<8x4xf32, #tpu.memory_space<vmem>>) attributes {dimension_semantics = [#tpu.dimension_semantics<parallel>, #tpu.dimension_semantics<arbitrary>], iteration_bounds = array<i64: 1, 1>, scalar_prefetch = 0 : i64, scratch_operands = 5 : i64, tpu.core_type = #tpu.core_type<tc>, window_params = [{transform_indices = @transform_0, window_bounds = array<i64: 1, 64, 32>}, {transform_indices = @transform_1, window_bounds = array<i64: 1, 64, 1>}, {pipeline_mode = #tpu.pipeline_mode<synchronous>, transform_indices = @transform_2, window_bounds = array<i64: 32, 257>}, {pipeline_mode = #tpu.pipeline_mode<synchronous>, transform_indices = @transform_3, window_bounds = array<i64: 1, 257>}, {pipeline_mode = #tpu.pipeline_mode<synchronous>, transform_indices = @transform_4, window_bounds = array<i64: 32, 128>}, {pipeline_mode = #tpu.pipeline_mode<synchronous>, transform_indices = @transform_5, window_bounds = array<i64: 4, 16>}, {pipeline_mode = #tpu.pipeline_mode<synchronous>, transform_indices = @transform_6, window_bounds = array<i64: 64, 1>}, {pipeline_mode = #tpu.pipeline_mode<synchronous>, transform_indices = @transform_7, window_bounds = array<i64: 32, 2>}, {pipeline_mode = #tpu.pipeline_mode<synchronous>, transform_indices = @transform_8, window_bounds = array<i64: 1, 2>}, {transform_indices = @transform_9, window_bounds = array<i64: 8, 2>}]} {
    %c0_i32 = arith.constant 0 : i32
    %0 = arith.cmpi eq, %arg1, %c0_i32 : i32
    %1 = arith.extui %0 : i1 to i32
    %c0_i32_0 = arith.constant 0 : i32
    %2 = arith.cmpi ne, %1, %c0_i32_0 : i32
    scf.if %2 {
      %cst_150 = arith.constant 0.000000e+00 : f32
      %743 = vector.broadcast %cst_150 : f32 to vector<8x32xf32>
      %c0_151 = arith.constant 0 : index
      %c0_152 = arith.constant 0 : index
      %744 = vector.load %arg13[%c0_151, %c0_152] : memref<8x32xf32, #tpu.memory_space<vmem>>, vector<8x32xf32>
      tpu.vector_store %arg13[%c0_151, %c0_152], %743 {strides = array<i32>} : memref<8x32xf32, #tpu.memory_space<vmem>>, vector<8x32xf32>,
      %cst_153 = arith.constant 0.000000e+00 : f32
      %745 = vector.broadcast %cst_153 : f32 to vector<8x32xf32>
      %c0_154 = arith.constant 0 : index
      %c0_155 = arith.constant 0 : index
      %746 = vector.load %arg14[%c0_154, %c0_155] : memref<8x32xf32, #tpu.memory_space<vmem>>, vector<8x32xf32>
      tpu.vector_store %arg14[%c0_154, %c0_155], %745 {strides = array<i32>} : memref<8x32xf32, #tpu.memory_space<vmem>>, vector<8x32xf32>,
      %cst_156 = arith.constant 0.000000e+00 : f32
      %747 = vector.broadcast %cst_156 : f32 to vector<8x4xf32>
      %c0_157 = arith.constant 0 : index
      %c0_158 = arith.constant 0 : index
      %748 = vector.load %arg15[%c0_157, %c0_158] : memref<8x4xf32, #tpu.memory_space<vmem>>, vector<8x4xf32>
      tpu.vector_store %arg15[%c0_157, %c0_158], %747 {strides = array<i32>} : memref<8x4xf32, #tpu.memory_space<vmem>>, vector<8x4xf32>,
      %cst_159 = arith.constant 0.000000e+00 : f32
      %749 = vector.broadcast %cst_159 : f32 to vector<8x4xf32>
      %c0_160 = arith.constant 0 : index
      %c0_161 = arith.constant 0 : index
      %750 = vector.load %arg16[%c0_160, %c0_161] : memref<8x4xf32, #tpu.memory_space<vmem>>, vector<8x4xf32>
      tpu.vector_store %arg16[%c0_160, %c0_161], %749 {strides = array<i32>} : memref<8x4xf32, #tpu.memory_space<vmem>>, vector<8x4xf32>,
    } else {
    }
    %c0 = arith.constant 0 : index
    %c0_1 = arith.constant 0 : index
    %c0_2 = arith.constant 0 : index
    %3 = vector.load %arg2[%c0, %c0_1, %c0_2] : memref<1x64x32xbf16, #tpu.memory_space<vmem>>, vector<1x64x32xbf16>
    %4 = vector.shape_cast %3 : vector<1x64x32xbf16> to vector<64x32xbf16>
    %c0_3 = arith.constant 0 : index
    %c0_4 = arith.constant 0 : index
    %5 = vector.load %arg4[%c0_3, %c0_4] : memref<32x257xbf16, #tpu.memory_space<vmem>>, vector<32x257xbf16>
    %cst = arith.constant dense<0.000000e+00> : vector<64x257xf32>
    %6 = tpu.matmul %4, %5, %cst {dimension_numbers = #tpu.dot_dimension_numbers<[1], [0], [0], [1], [0, 0, 1, 1], [], []>} : vector<64x32xbf16>, vector<32x257xbf16>, vector<64x257xf32> -> vector<64x257xf32>
    %c0_5 = arith.constant 0 : index
    %c0_6 = arith.constant 0 : index
    %7 = vector.load %arg5[%c0_5, %c0_6] : memref<1x257xf32, #tpu.memory_space<vmem>>, vector<1x257xf32>
    %8 = vector.broadcast %7 : vector<1x257xf32> to vector<64x257xf32>
    %9 = arith.addf %6, %8 : vector<64x257xf32>
    %c0_7 = arith.constant 0 : index
    %c0_8 = arith.constant 0 : index
    %10 = vector.load %arg12[%c0_7, %c0_8] : memref<64x257xf32, #tpu.memory_space<vmem>>, vector<64x257xf32>
    tpu.vector_store %arg12[%c0_7, %c0_8], %9 {strides = array<i32>} : memref<64x257xf32, #tpu.memory_space<vmem>>, vector<64x257xf32>,
    %11 = vector.extract_strided_slice %9 {offsets = [0, 256], sizes = [64, 1], strides = [1, 1]} : vector<64x257xf32> to vector<64x1xf32>
    %c0_9 = arith.constant 0 : index
    %c0_10 = arith.constant 0 : index
    %c0_11 = arith.constant 0 : index
    %12 = vector.load %arg3[%c0_9, %c0_10, %c0_11] : memref<1x64x1xf32, #tpu.memory_space<vmem>>, vector<1x64x1xf32>
    %13 = vector.shape_cast %12 : vector<1x64x1xf32> to vector<64x1xf32>
    %14 = arith.addf %11, %13 : vector<64x1xf32>
    %c0_12 = arith.constant 0 : index
    %c256 = arith.constant 256 : index
    %15 = vector.load %arg12[%c0_12, %c256] : memref<64x257xf32, #tpu.memory_space<vmem>>, vector<64x1xf32>
    tpu.vector_store %arg12[%c0_12, %c256], %14 {strides = array<i32>} : memref<64x257xf32, #tpu.memory_space<vmem>>, vector<64x1xf32>,
    %c0_13 = arith.constant 0 : index
    %c0_14 = arith.constant 0 : index
    %16 = vector.load %arg6[%c0_13, %c0_14] : memref<32x128xbf16, #tpu.memory_space<vmem>>, vector<32x128xbf16>
    %c0_15 = arith.constant 0 : index
    %c0_16 = arith.constant 0 : index
    %17 = vector.load %arg7[%c0_15, %c0_16] : memref<4x16xbf16, #tpu.memory_space<vmem>>, vector<4x16xbf16>
    %c0_17 = arith.constant 0 : index
    %c0_18 = arith.constant 0 : index
    %18 = vector.load %arg8[%c0_17, %c0_18] : memref<64x1xbf16, #tpu.memory_space<vmem>>, vector<64x1xbf16>
    %19 = tpu.iota {dimensions = array<i32: 1>} : vector<8x32xi32>
    %c4_i32 = arith.constant 4 : i32
    %20 = vector.broadcast %c4_i32 : i32 to vector<8x32xi32>
    %21 = arith.cmpi slt, %19, %20 : vector<8x32xi32>
    %cst_19 = arith.constant 0.000000e+00 : f32
    %22 = vector.broadcast %cst_19 : f32 to vector<8x28xf32>
    %c0_20 = arith.constant 0 : index
    %c0_21 = arith.constant 0 : index
    %23 = vector.load %arg13[%c0_20, %c0_21] : memref<8x32xf32, #tpu.memory_space<vmem>>, vector<8x32xf32>
    %c0_22 = arith.constant 0 : index
    %c0_23 = arith.constant 0 : index
    %24 = vector.load %arg14[%c0_22, %c0_23] : memref<8x32xf32, #tpu.memory_space<vmem>>, vector<8x32xf32>
    %c0_24 = arith.constant 0 : index
    %c0_25 = arith.constant 0 : index
    %25 = vector.load %arg15[%c0_24, %c0_25] : memref<8x4xf32, #tpu.memory_space<vmem>>, vector<8x4xf32>
    %c0_26 = arith.constant 0 : index
    %c0_27 = arith.constant 0 : index
    %26 = vector.load %arg16[%c0_26, %c0_27] : memref<8x4xf32, #tpu.memory_space<vmem>>, vector<8x4xf32>
    %c0_i32_28 = arith.constant 0 : i32
    %c8_i32 = arith.constant 8 : i32
    %27 = arith.muli %c0_i32_28, %c8_i32 : i32
    %28 = tpu.assume_multiple %27, 8 : i32
    %29 = arith.index_cast %28 : i32 to index
    %c0_29 = arith.constant 0 : index
    %30 = vector.load %arg12[%29, %c0_29] : memref<64x257xf32, #tpu.memory_space<vmem>>, vector<8x257xf32>
    %31 = vector.extract_strided_slice %30 {offsets = [0, 0], sizes = [8, 128], strides = [1, 1]} : vector<8x257xf32> to vector<8x128xf32>
    %32 = arith.truncf %23 : vector<8x32xf32> to vector<8x32xbf16>
    %cst_30 = arith.constant dense<0.000000e+00> : vector<8x128xf32>
    %33 = tpu.matmul %32, %16, %cst_30 {dimension_numbers = #tpu.dot_dimension_numbers<[1], [0], [0], [1], [0, 0, 1, 1], [], []>} : vector<8x32xbf16>, vector<32x128xbf16>, vector<8x128xf32> -> vector<8x128xf32>
    %34 = arith.addf %31, %33 : vector<8x128xf32>
    %35 = vector.extract_strided_slice %30 {offsets = [0, 128], sizes = [8, 16], strides = [1, 1]} : vector<8x257xf32> to vector<8x16xf32>
    %36 = arith.truncf %25 : vector<8x4xf32> to vector<8x4xbf16>
    %cst_31 = arith.constant dense<0.000000e+00> : vector<8x16xf32>
    %37 = tpu.matmul %36, %17, %cst_31 {dimension_numbers = #tpu.dot_dimension_numbers<[1], [0], [0], [1], [0, 0, 1, 1], [], []>} : vector<8x4xbf16>, vector<4x16xbf16>, vector<8x16xf32> -> vector<8x16xf32>
    %38 = arith.addf %35, %37 : vector<8x16xf32>
    %39 = vector.extract_strided_slice %34 {offsets = [0, 0], sizes = [8, 32], strides = [1, 1]} : vector<8x128xf32> to vector<8x32xf32>
    %40 = arith.negf %39 : vector<8x32xf32>
    %41 = math.exp %40 : vector<8x32xf32>
    %cst_32 = arith.constant 1.000000e+00 : f32
    %42 = vector.broadcast %cst_32 : f32 to vector<8x32xf32>
    %43 = arith.addf %42, %41 : vector<8x32xf32>
    %44 = arith.divf %42, %43 : vector<8x32xf32>
    %45 = vector.extract_strided_slice %34 {offsets = [0, 32], sizes = [8, 32], strides = [1, 1]} : vector<8x128xf32> to vector<8x32xf32>
    %46 = arith.negf %45 : vector<8x32xf32>
    %47 = math.exp %46 : vector<8x32xf32>
    %cst_33 = arith.constant 1.000000e+00 : f32
    %48 = vector.broadcast %cst_33 : f32 to vector<8x32xf32>
    %49 = arith.addf %48, %47 : vector<8x32xf32>
    %50 = arith.divf %48, %49 : vector<8x32xf32>
    %51 = vector.extract_strided_slice %34 {offsets = [0, 64], sizes = [8, 32], strides = [1, 1]} : vector<8x128xf32> to vector<8x32xf32>
    %52 = math.tanh %51 : vector<8x32xf32>
    %53 = vector.extract_strided_slice %34 {offsets = [0, 96], sizes = [8, 32], strides = [1, 1]} : vector<8x128xf32> to vector<8x32xf32>
    %54 = arith.negf %53 : vector<8x32xf32>
    %55 = math.exp %54 : vector<8x32xf32>
    %cst_34 = arith.constant 1.000000e+00 : f32
    %56 = vector.broadcast %cst_34 : f32 to vector<8x32xf32>
    %57 = arith.addf %56, %55 : vector<8x32xf32>
    %58 = arith.divf %56, %57 : vector<8x32xf32>
    %59 = arith.mulf %50, %24 : vector<8x32xf32>
    %60 = arith.mulf %44, %52 : vector<8x32xf32>
    %61 = arith.addf %59, %60 : vector<8x32xf32>
    %62 = math.tanh %61 : vector<8x32xf32>
    %63 = arith.mulf %58, %62 : vector<8x32xf32>
    %64 = vector.extract_strided_slice %38 {offsets = [0, 0], sizes = [8, 4], strides = [1, 1]} : vector<8x16xf32> to vector<8x4xf32>
    %65 = arith.negf %64 : vector<8x4xf32>
    %66 = math.exp %65 : vector<8x4xf32>
    %cst_35 = arith.constant 1.000000e+00 : f32
    %67 = vector.broadcast %cst_35 : f32 to vector<8x4xf32>
    %68 = arith.addf %67, %66 : vector<8x4xf32>
    %69 = arith.divf %67, %68 : vector<8x4xf32>
    %70 = vector.extract_strided_slice %38 {offsets = [0, 4], sizes = [8, 4], strides = [1, 1]} : vector<8x16xf32> to vector<8x4xf32>
    %71 = arith.negf %70 : vector<8x4xf32>
    %72 = math.exp %71 : vector<8x4xf32>
    %cst_36 = arith.constant 1.000000e+00 : f32
    %73 = vector.broadcast %cst_36 : f32 to vector<8x4xf32>
    %74 = arith.addf %73, %72 : vector<8x4xf32>
    %75 = arith.divf %73, %74 : vector<8x4xf32>
    %76 = vector.extract_strided_slice %38 {offsets = [0, 8], sizes = [8, 4], strides = [1, 1]} : vector<8x16xf32> to vector<8x4xf32>
    %77 = math.tanh %76 : vector<8x4xf32>
    %78 = vector.extract_strided_slice %38 {offsets = [0, 12], sizes = [8, 4], strides = [1, 1]} : vector<8x16xf32> to vector<8x4xf32>
    %79 = arith.negf %78 : vector<8x4xf32>
    %80 = math.exp %79 : vector<8x4xf32>
    %cst_37 = arith.constant 1.000000e+00 : f32
    %81 = vector.broadcast %cst_37 : f32 to vector<8x4xf32>
    %82 = arith.addf %81, %80 : vector<8x4xf32>
    %83 = arith.divf %81, %82 : vector<8x4xf32>
    %84 = arith.mulf %75, %26 : vector<8x4xf32>
    %85 = arith.mulf %69, %77 : vector<8x4xf32>
    %86 = arith.addf %84, %85 : vector<8x4xf32>
    %87 = math.tanh %86 : vector<8x4xf32>
    %88 = arith.mulf %83, %87 : vector<8x4xf32>
    %89 = tpu.concatenate %63, %61 in 1 : vector<8x32xf32>, vector<8x32xf32> -> vector<8x64xf32>
    %90 = arith.truncf %89 : vector<8x64xf32> to vector<8x64xbf16>
    %91 = vector.extract_strided_slice %30 {offsets = [0, 256], sizes = [8, 1], strides = [1, 1]} : vector<8x257xf32> to vector<8x1xf32>
    %cst_38 = arith.constant dense<0.000000e+00> : vector<8x1xf32>
    %92 = tpu.matmul %90, %18, %cst_38 {dimension_numbers = #tpu.dot_dimension_numbers<[1], [0], [0], [1], [0, 0, 1, 1], [], []>} : vector<8x64xbf16>, vector<64x1xbf16>, vector<8x1xf32> -> vector<8x1xf32>
    %93 = arith.addf %91, %92 : vector<8x1xf32>
    %94 = arith.negf %93 : vector<8x1xf32>
    %95 = math.exp %94 : vector<8x1xf32>
    %cst_39 = arith.constant 1.000000e+00 : f32
    %96 = vector.broadcast %cst_39 : f32 to vector<8x1xf32>
    %97 = arith.addf %96, %95 : vector<8x1xf32>
    %98 = arith.divf %96, %97 : vector<8x1xf32>
    %cst_40 = arith.constant 1.000000e+00 : f32
    %99 = vector.broadcast %cst_40 : f32 to vector<8x1xf32>
    %100 = arith.subf %99, %98 : vector<8x1xf32>
    %101 = tpu.concatenate %88, %22 in 1 : vector<8x4xf32>, vector<8x28xf32> -> vector<8x32xf32>
    %102 = tpu.concatenate %86, %22 in 1 : vector<8x4xf32>, vector<8x28xf32> -> vector<8x32xf32>
    %103 = arith.select %21, %101, %23 : vector<8x32xi1>, vector<8x32xf32>
    %104 = arith.select %21, %102, %61 : vector<8x32xi1>, vector<8x32xf32>
    %105 = vector.broadcast %100 : vector<8x1xf32> to vector<8x32xf32>
    %106 = arith.mulf %105, %63 : vector<8x32xf32>
    %107 = vector.broadcast %98 : vector<8x1xf32> to vector<8x32xf32>
    %108 = arith.mulf %107, %103 : vector<8x32xf32>
    %109 = arith.addf %106, %108 : vector<8x32xf32>
    %110 = vector.broadcast %100 : vector<8x1xf32> to vector<8x32xf32>
    %111 = arith.mulf %110, %61 : vector<8x32xf32>
    %112 = vector.broadcast %98 : vector<8x1xf32> to vector<8x32xf32>
    %113 = arith.mulf %112, %104 : vector<8x32xf32>
    %114 = arith.addf %111, %113 : vector<8x32xf32>
    %c1_i32 = arith.constant 1 : i32
    %c8_i32_41 = arith.constant 8 : i32
    %115 = arith.muli %c1_i32, %c8_i32_41 : i32
    %116 = tpu.assume_multiple %115, 8 : i32
    %117 = arith.index_cast %116 : i32 to index
    %c0_42 = arith.constant 0 : index
    %118 = vector.load %arg12[%117, %c0_42] : memref<64x257xf32, #tpu.memory_space<vmem>>, vector<8x257xf32>
    %119 = vector.extract_strided_slice %118 {offsets = [0, 0], sizes = [8, 128], strides = [1, 1]} : vector<8x257xf32> to vector<8x128xf32>
    %120 = arith.truncf %109 : vector<8x32xf32> to vector<8x32xbf16>
    %cst_43 = arith.constant dense<0.000000e+00> : vector<8x128xf32>
    %121 = tpu.matmul %120, %16, %cst_43 {dimension_numbers = #tpu.dot_dimension_numbers<[1], [0], [0], [1], [0, 0, 1, 1], [], []>} : vector<8x32xbf16>, vector<32x128xbf16>, vector<8x128xf32> -> vector<8x128xf32>
    %122 = arith.addf %119, %121 : vector<8x128xf32>
    %123 = vector.extract_strided_slice %118 {offsets = [0, 128], sizes = [8, 16], strides = [1, 1]} : vector<8x257xf32> to vector<8x16xf32>
    %124 = arith.truncf %88 : vector<8x4xf32> to vector<8x4xbf16>
    %cst_44 = arith.constant dense<0.000000e+00> : vector<8x16xf32>
    %125 = tpu.matmul %124, %17, %cst_44 {dimension_numbers = #tpu.dot_dimension_numbers<[1], [0], [0], [1], [0, 0, 1, 1], [], []>} : vector<8x4xbf16>, vector<4x16xbf16>, vector<8x16xf32> -> vector<8x16xf32>
    %126 = arith.addf %123, %125 : vector<8x16xf32>
    %127 = vector.extract_strided_slice %122 {offsets = [0, 0], sizes = [8, 32], strides = [1, 1]} : vector<8x128xf32> to vector<8x32xf32>
    %128 = arith.negf %127 : vector<8x32xf32>
    %129 = math.exp %128 : vector<8x32xf32>
    %cst_45 = arith.constant 1.000000e+00 : f32
    %130 = vector.broadcast %cst_45 : f32 to vector<8x32xf32>
    %131 = arith.addf %130, %129 : vector<8x32xf32>
    %132 = arith.divf %130, %131 : vector<8x32xf32>
    %133 = vector.extract_strided_slice %122 {offsets = [0, 32], sizes = [8, 32], strides = [1, 1]} : vector<8x128xf32> to vector<8x32xf32>
    %134 = arith.negf %133 : vector<8x32xf32>
    %135 = math.exp %134 : vector<8x32xf32>
    %cst_46 = arith.constant 1.000000e+00 : f32
    %136 = vector.broadcast %cst_46 : f32 to vector<8x32xf32>
    %137 = arith.addf %136, %135 : vector<8x32xf32>
    %138 = arith.divf %136, %137 : vector<8x32xf32>
    %139 = vector.extract_strided_slice %122 {offsets = [0, 64], sizes = [8, 32], strides = [1, 1]} : vector<8x128xf32> to vector<8x32xf32>
    %140 = math.tanh %139 : vector<8x32xf32>
    %141 = vector.extract_strided_slice %122 {offsets = [0, 96], sizes = [8, 32], strides = [1, 1]} : vector<8x128xf32> to vector<8x32xf32>
    %142 = arith.negf %141 : vector<8x32xf32>
    %143 = math.exp %142 : vector<8x32xf32>
    %cst_47 = arith.constant 1.000000e+00 : f32
    %144 = vector.broadcast %cst_47 : f32 to vector<8x32xf32>
    %145 = arith.addf %144, %143 : vector<8x32xf32>
    %146 = arith.divf %144, %145 : vector<8x32xf32>
    %147 = arith.mulf %138, %114 : vector<8x32xf32>
    %148 = arith.mulf %132, %140 : vector<8x32xf32>
    %149 = arith.addf %147, %148 : vector<8x32xf32>
    %150 = math.tanh %149 : vector<8x32xf32>
    %151 = arith.mulf %146, %150 : vector<8x32xf32>
    %152 = vector.extract_strided_slice %126 {offsets = [0, 0], sizes = [8, 4], strides = [1, 1]} : vector<8x16xf32> to vector<8x4xf32>
    %153 = arith.negf %152 : vector<8x4xf32>
    %154 = math.exp %153 : vector<8x4xf32>
    %cst_48 = arith.constant 1.000000e+00 : f32
    %155 = vector.broadcast %cst_48 : f32 to vector<8x4xf32>
    %156 = arith.addf %155, %154 : vector<8x4xf32>
    %157 = arith.divf %155, %156 : vector<8x4xf32>
    %158 = vector.extract_strided_slice %126 {offsets = [0, 4], sizes = [8, 4], strides = [1, 1]} : vector<8x16xf32> to vector<8x4xf32>
    %159 = arith.negf %158 : vector<8x4xf32>
    %160 = math.exp %159 : vector<8x4xf32>
    %cst_49 = arith.constant 1.000000e+00 : f32
    %161 = vector.broadcast %cst_49 : f32 to vector<8x4xf32>
    %162 = arith.addf %161, %160 : vector<8x4xf32>
    %163 = arith.divf %161, %162 : vector<8x4xf32>
    %164 = vector.extract_strided_slice %126 {offsets = [0, 8], sizes = [8, 4], strides = [1, 1]} : vector<8x16xf32> to vector<8x4xf32>
    %165 = math.tanh %164 : vector<8x4xf32>
    %166 = vector.extract_strided_slice %126 {offsets = [0, 12], sizes = [8, 4], strides = [1, 1]} : vector<8x16xf32> to vector<8x4xf32>
    %167 = arith.negf %166 : vector<8x4xf32>
    %168 = math.exp %167 : vector<8x4xf32>
    %cst_50 = arith.constant 1.000000e+00 : f32
    %169 = vector.broadcast %cst_50 : f32 to vector<8x4xf32>
    %170 = arith.addf %169, %168 : vector<8x4xf32>
    %171 = arith.divf %169, %170 : vector<8x4xf32>
    %172 = arith.mulf %163, %86 : vector<8x4xf32>
    %173 = arith.mulf %157, %165 : vector<8x4xf32>
    %174 = arith.addf %172, %173 : vector<8x4xf32>
    %175 = math.tanh %174 : vector<8x4xf32>
    %176 = arith.mulf %171, %175 : vector<8x4xf32>
    %177 = tpu.concatenate %151, %149 in 1 : vector<8x32xf32>, vector<8x32xf32> -> vector<8x64xf32>
    %178 = arith.truncf %177 : vector<8x64xf32> to vector<8x64xbf16>
    %179 = vector.extract_strided_slice %118 {offsets = [0, 256], sizes = [8, 1], strides = [1, 1]} : vector<8x257xf32> to vector<8x1xf32>
    %cst_51 = arith.constant dense<0.000000e+00> : vector<8x1xf32>
    %180 = tpu.matmul %178, %18, %cst_51 {dimension_numbers = #tpu.dot_dimension_numbers<[1], [0], [0], [1], [0, 0, 1, 1], [], []>} : vector<8x64xbf16>, vector<64x1xbf16>, vector<8x1xf32> -> vector<8x1xf32>
    %181 = arith.addf %179, %180 : vector<8x1xf32>
    %182 = arith.negf %181 : vector<8x1xf32>
    %183 = math.exp %182 : vector<8x1xf32>
    %cst_52 = arith.constant 1.000000e+00 : f32
    %184 = vector.broadcast %cst_52 : f32 to vector<8x1xf32>
    %185 = arith.addf %184, %183 : vector<8x1xf32>
    %186 = arith.divf %184, %185 : vector<8x1xf32>
    %cst_53 = arith.constant 1.000000e+00 : f32
    %187 = vector.broadcast %cst_53 : f32 to vector<8x1xf32>
    %188 = arith.subf %187, %186 : vector<8x1xf32>
    %189 = tpu.concatenate %176, %22 in 1 : vector<8x4xf32>, vector<8x28xf32> -> vector<8x32xf32>
    %190 = tpu.concatenate %174, %22 in 1 : vector<8x4xf32>, vector<8x28xf32> -> vector<8x32xf32>
    %191 = arith.select %21, %189, %109 : vector<8x32xi1>, vector<8x32xf32>
    %192 = arith.select %21, %190, %149 : vector<8x32xi1>, vector<8x32xf32>
    %193 = vector.broadcast %188 : vector<8x1xf32> to vector<8x32xf32>
    %194 = arith.mulf %193, %151 : vector<8x32xf32>
    %195 = vector.broadcast %186 : vector<8x1xf32> to vector<8x32xf32>
    %196 = arith.mulf %195, %191 : vector<8x32xf32>
    %197 = arith.addf %194, %196 : vector<8x32xf32>
    %198 = vector.broadcast %188 : vector<8x1xf32> to vector<8x32xf32>
    %199 = arith.mulf %198, %149 : vector<8x32xf32>
    %200 = vector.broadcast %186 : vector<8x1xf32> to vector<8x32xf32>
    %201 = arith.mulf %200, %192 : vector<8x32xf32>
    %202 = arith.addf %199, %201 : vector<8x32xf32>
    %c2_i32 = arith.constant 2 : i32
    %c8_i32_54 = arith.constant 8 : i32
    %203 = arith.muli %c2_i32, %c8_i32_54 : i32
    %204 = tpu.assume_multiple %203, 8 : i32
    %205 = arith.index_cast %204 : i32 to index
    %c0_55 = arith.constant 0 : index
    %206 = vector.load %arg12[%205, %c0_55] : memref<64x257xf32, #tpu.memory_space<vmem>>, vector<8x257xf32>
    %207 = vector.extract_strided_slice %206 {offsets = [0, 0], sizes = [8, 128], strides = [1, 1]} : vector<8x257xf32> to vector<8x128xf32>
    %208 = arith.truncf %197 : vector<8x32xf32> to vector<8x32xbf16>
    %cst_56 = arith.constant dense<0.000000e+00> : vector<8x128xf32>
    %209 = tpu.matmul %208, %16, %cst_56 {dimension_numbers = #tpu.dot_dimension_numbers<[1], [0], [0], [1], [0, 0, 1, 1], [], []>} : vector<8x32xbf16>, vector<32x128xbf16>, vector<8x128xf32> -> vector<8x128xf32>
    %210 = arith.addf %207, %209 : vector<8x128xf32>
    %211 = vector.extract_strided_slice %206 {offsets = [0, 128], sizes = [8, 16], strides = [1, 1]} : vector<8x257xf32> to vector<8x16xf32>
    %212 = arith.truncf %176 : vector<8x4xf32> to vector<8x4xbf16>
    %cst_57 = arith.constant dense<0.000000e+00> : vector<8x16xf32>
    %213 = tpu.matmul %212, %17, %cst_57 {dimension_numbers = #tpu.dot_dimension_numbers<[1], [0], [0], [1], [0, 0, 1, 1], [], []>} : vector<8x4xbf16>, vector<4x16xbf16>, vector<8x16xf32> -> vector<8x16xf32>
    %214 = arith.addf %211, %213 : vector<8x16xf32>
    %215 = vector.extract_strided_slice %210 {offsets = [0, 0], sizes = [8, 32], strides = [1, 1]} : vector<8x128xf32> to vector<8x32xf32>
    %216 = arith.negf %215 : vector<8x32xf32>
    %217 = math.exp %216 : vector<8x32xf32>
    %cst_58 = arith.constant 1.000000e+00 : f32
    %218 = vector.broadcast %cst_58 : f32 to vector<8x32xf32>
    %219 = arith.addf %218, %217 : vector<8x32xf32>
    %220 = arith.divf %218, %219 : vector<8x32xf32>
    %221 = vector.extract_strided_slice %210 {offsets = [0, 32], sizes = [8, 32], strides = [1, 1]} : vector<8x128xf32> to vector<8x32xf32>
    %222 = arith.negf %221 : vector<8x32xf32>
    %223 = math.exp %222 : vector<8x32xf32>
    %cst_59 = arith.constant 1.000000e+00 : f32
    %224 = vector.broadcast %cst_59 : f32 to vector<8x32xf32>
    %225 = arith.addf %224, %223 : vector<8x32xf32>
    %226 = arith.divf %224, %225 : vector<8x32xf32>
    %227 = vector.extract_strided_slice %210 {offsets = [0, 64], sizes = [8, 32], strides = [1, 1]} : vector<8x128xf32> to vector<8x32xf32>
    %228 = math.tanh %227 : vector<8x32xf32>
    %229 = vector.extract_strided_slice %210 {offsets = [0, 96], sizes = [8, 32], strides = [1, 1]} : vector<8x128xf32> to vector<8x32xf32>
    %230 = arith.negf %229 : vector<8x32xf32>
    %231 = math.exp %230 : vector<8x32xf32>
    %cst_60 = arith.constant 1.000000e+00 : f32
    %232 = vector.broadcast %cst_60 : f32 to vector<8x32xf32>
    %233 = arith.addf %232, %231 : vector<8x32xf32>
    %234 = arith.divf %232, %233 : vector<8x32xf32>
    %235 = arith.mulf %226, %202 : vector<8x32xf32>
    %236 = arith.mulf %220, %228 : vector<8x32xf32>
    %237 = arith.addf %235, %236 : vector<8x32xf32>
    %238 = math.tanh %237 : vector<8x32xf32>
    %239 = arith.mulf %234, %238 : vector<8x32xf32>
    %240 = vector.extract_strided_slice %214 {offsets = [0, 0], sizes = [8, 4], strides = [1, 1]} : vector<8x16xf32> to vector<8x4xf32>
    %241 = arith.negf %240 : vector<8x4xf32>
    %242 = math.exp %241 : vector<8x4xf32>
    %cst_61 = arith.constant 1.000000e+00 : f32
    %243 = vector.broadcast %cst_61 : f32 to vector<8x4xf32>
    %244 = arith.addf %243, %242 : vector<8x4xf32>
    %245 = arith.divf %243, %244 : vector<8x4xf32>
    %246 = vector.extract_strided_slice %214 {offsets = [0, 4], sizes = [8, 4], strides = [1, 1]} : vector<8x16xf32> to vector<8x4xf32>
    %247 = arith.negf %246 : vector<8x4xf32>
    %248 = math.exp %247 : vector<8x4xf32>
    %cst_62 = arith.constant 1.000000e+00 : f32
    %249 = vector.broadcast %cst_62 : f32 to vector<8x4xf32>
    %250 = arith.addf %249, %248 : vector<8x4xf32>
    %251 = arith.divf %249, %250 : vector<8x4xf32>
    %252 = vector.extract_strided_slice %214 {offsets = [0, 8], sizes = [8, 4], strides = [1, 1]} : vector<8x16xf32> to vector<8x4xf32>
    %253 = math.tanh %252 : vector<8x4xf32>
    %254 = vector.extract_strided_slice %214 {offsets = [0, 12], sizes = [8, 4], strides = [1, 1]} : vector<8x16xf32> to vector<8x4xf32>
    %255 = arith.negf %254 : vector<8x4xf32>
    %256 = math.exp %255 : vector<8x4xf32>
    %cst_63 = arith.constant 1.000000e+00 : f32
    %257 = vector.broadcast %cst_63 : f32 to vector<8x4xf32>
    %258 = arith.addf %257, %256 : vector<8x4xf32>
    %259 = arith.divf %257, %258 : vector<8x4xf32>
    %260 = arith.mulf %251, %174 : vector<8x4xf32>
    %261 = arith.mulf %245, %253 : vector<8x4xf32>
    %262 = arith.addf %260, %261 : vector<8x4xf32>
    %263 = math.tanh %262 : vector<8x4xf32>
    %264 = arith.mulf %259, %263 : vector<8x4xf32>
    %265 = tpu.concatenate %239, %237 in 1 : vector<8x32xf32>, vector<8x32xf32> -> vector<8x64xf32>
    %266 = arith.truncf %265 : vector<8x64xf32> to vector<8x64xbf16>
    %267 = vector.extract_strided_slice %206 {offsets = [0, 256], sizes = [8, 1], strides = [1, 1]} : vector<8x257xf32> to vector<8x1xf32>
    %cst_64 = arith.constant dense<0.000000e+00> : vector<8x1xf32>
    %268 = tpu.matmul %266, %18, %cst_64 {dimension_numbers = #tpu.dot_dimension_numbers<[1], [0], [0], [1], [0, 0, 1, 1], [], []>} : vector<8x64xbf16>, vector<64x1xbf16>, vector<8x1xf32> -> vector<8x1xf32>
    %269 = arith.addf %267, %268 : vector<8x1xf32>
    %270 = arith.negf %269 : vector<8x1xf32>
    %271 = math.exp %270 : vector<8x1xf32>
    %cst_65 = arith.constant 1.000000e+00 : f32
    %272 = vector.broadcast %cst_65 : f32 to vector<8x1xf32>
    %273 = arith.addf %272, %271 : vector<8x1xf32>
    %274 = arith.divf %272, %273 : vector<8x1xf32>
    %cst_66 = arith.constant 1.000000e+00 : f32
    %275 = vector.broadcast %cst_66 : f32 to vector<8x1xf32>
    %276 = arith.subf %275, %274 : vector<8x1xf32>
    %277 = tpu.concatenate %264, %22 in 1 : vector<8x4xf32>, vector<8x28xf32> -> vector<8x32xf32>
    %278 = tpu.concatenate %262, %22 in 1 : vector<8x4xf32>, vector<8x28xf32> -> vector<8x32xf32>
    %279 = arith.select %21, %277, %197 : vector<8x32xi1>, vector<8x32xf32>
    %280 = arith.select %21, %278, %237 : vector<8x32xi1>, vector<8x32xf32>
    %281 = vector.broadcast %276 : vector<8x1xf32> to vector<8x32xf32>
    %282 = arith.mulf %281, %239 : vector<8x32xf32>
    %283 = vector.broadcast %274 : vector<8x1xf32> to vector<8x32xf32>
    %284 = arith.mulf %283, %279 : vector<8x32xf32>
    %285 = arith.addf %282, %284 : vector<8x32xf32>
    %286 = vector.broadcast %276 : vector<8x1xf32> to vector<8x32xf32>
    %287 = arith.mulf %286, %237 : vector<8x32xf32>
    %288 = vector.broadcast %274 : vector<8x1xf32> to vector<8x32xf32>
    %289 = arith.mulf %288, %280 : vector<8x32xf32>
    %290 = arith.addf %287, %289 : vector<8x32xf32>
    %c3_i32 = arith.constant 3 : i32
    %c8_i32_67 = arith.constant 8 : i32
    %291 = arith.muli %c3_i32, %c8_i32_67 : i32
    %292 = tpu.assume_multiple %291, 8 : i32
    %293 = arith.index_cast %292 : i32 to index
    %c0_68 = arith.constant 0 : index
    %294 = vector.load %arg12[%293, %c0_68] : memref<64x257xf32, #tpu.memory_space<vmem>>, vector<8x257xf32>
    %295 = vector.extract_strided_slice %294 {offsets = [0, 0], sizes = [8, 128], strides = [1, 1]} : vector<8x257xf32> to vector<8x128xf32>
    %296 = arith.truncf %285 : vector<8x32xf32> to vector<8x32xbf16>
    %cst_69 = arith.constant dense<0.000000e+00> : vector<8x128xf32>
    %297 = tpu.matmul %296, %16, %cst_69 {dimension_numbers = #tpu.dot_dimension_numbers<[1], [0], [0], [1], [0, 0, 1, 1], [], []>} : vector<8x32xbf16>, vector<32x128xbf16>, vector<8x128xf32> -> vector<8x128xf32>
    %298 = arith.addf %295, %297 : vector<8x128xf32>
    %299 = vector.extract_strided_slice %294 {offsets = [0, 128], sizes = [8, 16], strides = [1, 1]} : vector<8x257xf32> to vector<8x16xf32>
    %300 = arith.truncf %264 : vector<8x4xf32> to vector<8x4xbf16>
    %cst_70 = arith.constant dense<0.000000e+00> : vector<8x16xf32>
    %301 = tpu.matmul %300, %17, %cst_70 {dimension_numbers = #tpu.dot_dimension_numbers<[1], [0], [0], [1], [0, 0, 1, 1], [], []>} : vector<8x4xbf16>, vector<4x16xbf16>, vector<8x16xf32> -> vector<8x16xf32>
    %302 = arith.addf %299, %301 : vector<8x16xf32>
    %303 = vector.extract_strided_slice %298 {offsets = [0, 0], sizes = [8, 32], strides = [1, 1]} : vector<8x128xf32> to vector<8x32xf32>
    %304 = arith.negf %303 : vector<8x32xf32>
    %305 = math.exp %304 : vector<8x32xf32>
    %cst_71 = arith.constant 1.000000e+00 : f32
    %306 = vector.broadcast %cst_71 : f32 to vector<8x32xf32>
    %307 = arith.addf %306, %305 : vector<8x32xf32>
    %308 = arith.divf %306, %307 : vector<8x32xf32>
    %309 = vector.extract_strided_slice %298 {offsets = [0, 32], sizes = [8, 32], strides = [1, 1]} : vector<8x128xf32> to vector<8x32xf32>
    %310 = arith.negf %309 : vector<8x32xf32>
    %311 = math.exp %310 : vector<8x32xf32>
    %cst_72 = arith.constant 1.000000e+00 : f32
    %312 = vector.broadcast %cst_72 : f32 to vector<8x32xf32>
    %313 = arith.addf %312, %311 : vector<8x32xf32>
    %314 = arith.divf %312, %313 : vector<8x32xf32>
    %315 = vector.extract_strided_slice %298 {offsets = [0, 64], sizes = [8, 32], strides = [1, 1]} : vector<8x128xf32> to vector<8x32xf32>
    %316 = math.tanh %315 : vector<8x32xf32>
    %317 = vector.extract_strided_slice %298 {offsets = [0, 96], sizes = [8, 32], strides = [1, 1]} : vector<8x128xf32> to vector<8x32xf32>
    %318 = arith.negf %317 : vector<8x32xf32>
    %319 = math.exp %318 : vector<8x32xf32>
    %cst_73 = arith.constant 1.000000e+00 : f32
    %320 = vector.broadcast %cst_73 : f32 to vector<8x32xf32>
    %321 = arith.addf %320, %319 : vector<8x32xf32>
    %322 = arith.divf %320, %321 : vector<8x32xf32>
    %323 = arith.mulf %314, %290 : vector<8x32xf32>
    %324 = arith.mulf %308, %316 : vector<8x32xf32>
    %325 = arith.addf %323, %324 : vector<8x32xf32>
    %326 = math.tanh %325 : vector<8x32xf32>
    %327 = arith.mulf %322, %326 : vector<8x32xf32>
    %328 = vector.extract_strided_slice %302 {offsets = [0, 0], sizes = [8, 4], strides = [1, 1]} : vector<8x16xf32> to vector<8x4xf32>
    %329 = arith.negf %328 : vector<8x4xf32>
    %330 = math.exp %329 : vector<8x4xf32>
    %cst_74 = arith.constant 1.000000e+00 : f32
    %331 = vector.broadcast %cst_74 : f32 to vector<8x4xf32>
    %332 = arith.addf %331, %330 : vector<8x4xf32>
    %333 = arith.divf %331, %332 : vector<8x4xf32>
    %334 = vector.extract_strided_slice %302 {offsets = [0, 4], sizes = [8, 4], strides = [1, 1]} : vector<8x16xf32> to vector<8x4xf32>
    %335 = arith.negf %334 : vector<8x4xf32>
    %336 = math.exp %335 : vector<8x4xf32>
    %cst_75 = arith.constant 1.000000e+00 : f32
    %337 = vector.broadcast %cst_75 : f32 to vector<8x4xf32>
    %338 = arith.addf %337, %336 : vector<8x4xf32>
    %339 = arith.divf %337, %338 : vector<8x4xf32>
    %340 = vector.extract_strided_slice %302 {offsets = [0, 8], sizes = [8, 4], strides = [1, 1]} : vector<8x16xf32> to vector<8x4xf32>
    %341 = math.tanh %340 : vector<8x4xf32>
    %342 = vector.extract_strided_slice %302 {offsets = [0, 12], sizes = [8, 4], strides = [1, 1]} : vector<8x16xf32> to vector<8x4xf32>
    %343 = arith.negf %342 : vector<8x4xf32>
    %344 = math.exp %343 : vector<8x4xf32>
    %cst_76 = arith.constant 1.000000e+00 : f32
    %345 = vector.broadcast %cst_76 : f32 to vector<8x4xf32>
    %346 = arith.addf %345, %344 : vector<8x4xf32>
    %347 = arith.divf %345, %346 : vector<8x4xf32>
    %348 = arith.mulf %339, %262 : vector<8x4xf32>
    %349 = arith.mulf %333, %341 : vector<8x4xf32>
    %350 = arith.addf %348, %349 : vector<8x4xf32>
    %351 = math.tanh %350 : vector<8x4xf32>
    %352 = arith.mulf %347, %351 : vector<8x4xf32>
    %353 = tpu.concatenate %327, %325 in 1 : vector<8x32xf32>, vector<8x32xf32> -> vector<8x64xf32>
    %354 = arith.truncf %353 : vector<8x64xf32> to vector<8x64xbf16>
    %355 = vector.extract_strided_slice %294 {offsets = [0, 256], sizes = [8, 1], strides = [1, 1]} : vector<8x257xf32> to vector<8x1xf32>
    %cst_77 = arith.constant dense<0.000000e+00> : vector<8x1xf32>
    %356 = tpu.matmul %354, %18, %cst_77 {dimension_numbers = #tpu.dot_dimension_numbers<[1], [0], [0], [1], [0, 0, 1, 1], [], []>} : vector<8x64xbf16>, vector<64x1xbf16>, vector<8x1xf32> -> vector<8x1xf32>
    %357 = arith.addf %355, %356 : vector<8x1xf32>
    %358 = arith.negf %357 : vector<8x1xf32>
    %359 = math.exp %358 : vector<8x1xf32>
    %cst_78 = arith.constant 1.000000e+00 : f32
    %360 = vector.broadcast %cst_78 : f32 to vector<8x1xf32>
    %361 = arith.addf %360, %359 : vector<8x1xf32>
    %362 = arith.divf %360, %361 : vector<8x1xf32>
    %cst_79 = arith.constant 1.000000e+00 : f32
    %363 = vector.broadcast %cst_79 : f32 to vector<8x1xf32>
    %364 = arith.subf %363, %362 : vector<8x1xf32>
    %365 = tpu.concatenate %352, %22 in 1 : vector<8x4xf32>, vector<8x28xf32> -> vector<8x32xf32>
    %366 = tpu.concatenate %350, %22 in 1 : vector<8x4xf32>, vector<8x28xf32> -> vector<8x32xf32>
    %367 = arith.select %21, %365, %285 : vector<8x32xi1>, vector<8x32xf32>
    %368 = arith.select %21, %366, %325 : vector<8x32xi1>, vector<8x32xf32>
    %369 = vector.broadcast %364 : vector<8x1xf32> to vector<8x32xf32>
    %370 = arith.mulf %369, %327 : vector<8x32xf32>
    %371 = vector.broadcast %362 : vector<8x1xf32> to vector<8x32xf32>
    %372 = arith.mulf %371, %367 : vector<8x32xf32>
    %373 = arith.addf %370, %372 : vector<8x32xf32>
    %374 = vector.broadcast %364 : vector<8x1xf32> to vector<8x32xf32>
    %375 = arith.mulf %374, %325 : vector<8x32xf32>
    %376 = vector.broadcast %362 : vector<8x1xf32> to vector<8x32xf32>
    %377 = arith.mulf %376, %368 : vector<8x32xf32>
    %378 = arith.addf %375, %377 : vector<8x32xf32>
    %c4_i32_80 = arith.constant 4 : i32
    %c8_i32_81 = arith.constant 8 : i32
    %379 = arith.muli %c4_i32_80, %c8_i32_81 : i32
    %380 = tpu.assume_multiple %379, 8 : i32
    %381 = arith.index_cast %380 : i32 to index
    %c0_82 = arith.constant 0 : index
    %382 = vector.load %arg12[%381, %c0_82] : memref<64x257xf32, #tpu.memory_space<vmem>>, vector<8x257xf32>
    %383 = vector.extract_strided_slice %382 {offsets = [0, 0], sizes = [8, 128], strides = [1, 1]} : vector<8x257xf32> to vector<8x128xf32>
    %384 = arith.truncf %373 : vector<8x32xf32> to vector<8x32xbf16>
    %cst_83 = arith.constant dense<0.000000e+00> : vector<8x128xf32>
    %385 = tpu.matmul %384, %16, %cst_83 {dimension_numbers = #tpu.dot_dimension_numbers<[1], [0], [0], [1], [0, 0, 1, 1], [], []>} : vector<8x32xbf16>, vector<32x128xbf16>, vector<8x128xf32> -> vector<8x128xf32>
    %386 = arith.addf %383, %385 : vector<8x128xf32>
    %387 = vector.extract_strided_slice %382 {offsets = [0, 128], sizes = [8, 16], strides = [1, 1]} : vector<8x257xf32> to vector<8x16xf32>
    %388 = arith.truncf %352 : vector<8x4xf32> to vector<8x4xbf16>
    %cst_84 = arith.constant dense<0.000000e+00> : vector<8x16xf32>
    %389 = tpu.matmul %388, %17, %cst_84 {dimension_numbers = #tpu.dot_dimension_numbers<[1], [0], [0], [1], [0, 0, 1, 1], [], []>} : vector<8x4xbf16>, vector<4x16xbf16>, vector<8x16xf32> -> vector<8x16xf32>
    %390 = arith.addf %387, %389 : vector<8x16xf32>
    %391 = vector.extract_strided_slice %386 {offsets = [0, 0], sizes = [8, 32], strides = [1, 1]} : vector<8x128xf32> to vector<8x32xf32>
    %392 = arith.negf %391 : vector<8x32xf32>
    %393 = math.exp %392 : vector<8x32xf32>
    %cst_85 = arith.constant 1.000000e+00 : f32
    %394 = vector.broadcast %cst_85 : f32 to vector<8x32xf32>
    %395 = arith.addf %394, %393 : vector<8x32xf32>
    %396 = arith.divf %394, %395 : vector<8x32xf32>
    %397 = vector.extract_strided_slice %386 {offsets = [0, 32], sizes = [8, 32], strides = [1, 1]} : vector<8x128xf32> to vector<8x32xf32>
    %398 = arith.negf %397 : vector<8x32xf32>
    %399 = math.exp %398 : vector<8x32xf32>
    %cst_86 = arith.constant 1.000000e+00 : f32
    %400 = vector.broadcast %cst_86 : f32 to vector<8x32xf32>
    %401 = arith.addf %400, %399 : vector<8x32xf32>
    %402 = arith.divf %400, %401 : vector<8x32xf32>
    %403 = vector.extract_strided_slice %386 {offsets = [0, 64], sizes = [8, 32], strides = [1, 1]} : vector<8x128xf32> to vector<8x32xf32>
    %404 = math.tanh %403 : vector<8x32xf32>
    %405 = vector.extract_strided_slice %386 {offsets = [0, 96], sizes = [8, 32], strides = [1, 1]} : vector<8x128xf32> to vector<8x32xf32>
    %406 = arith.negf %405 : vector<8x32xf32>
    %407 = math.exp %406 : vector<8x32xf32>
    %cst_87 = arith.constant 1.000000e+00 : f32
    %408 = vector.broadcast %cst_87 : f32 to vector<8x32xf32>
    %409 = arith.addf %408, %407 : vector<8x32xf32>
    %410 = arith.divf %408, %409 : vector<8x32xf32>
    %411 = arith.mulf %402, %378 : vector<8x32xf32>
    %412 = arith.mulf %396, %404 : vector<8x32xf32>
    %413 = arith.addf %411, %412 : vector<8x32xf32>
    %414 = math.tanh %413 : vector<8x32xf32>
    %415 = arith.mulf %410, %414 : vector<8x32xf32>
    %416 = vector.extract_strided_slice %390 {offsets = [0, 0], sizes = [8, 4], strides = [1, 1]} : vector<8x16xf32> to vector<8x4xf32>
    %417 = arith.negf %416 : vector<8x4xf32>
    %418 = math.exp %417 : vector<8x4xf32>
    %cst_88 = arith.constant 1.000000e+00 : f32
    %419 = vector.broadcast %cst_88 : f32 to vector<8x4xf32>
    %420 = arith.addf %419, %418 : vector<8x4xf32>
    %421 = arith.divf %419, %420 : vector<8x4xf32>
    %422 = vector.extract_strided_slice %390 {offsets = [0, 4], sizes = [8, 4], strides = [1, 1]} : vector<8x16xf32> to vector<8x4xf32>
    %423 = arith.negf %422 : vector<8x4xf32>
    %424 = math.exp %423 : vector<8x4xf32>
    %cst_89 = arith.constant 1.000000e+00 : f32
    %425 = vector.broadcast %cst_89 : f32 to vector<8x4xf32>
    %426 = arith.addf %425, %424 : vector<8x4xf32>
    %427 = arith.divf %425, %426 : vector<8x4xf32>
    %428 = vector.extract_strided_slice %390 {offsets = [0, 8], sizes = [8, 4], strides = [1, 1]} : vector<8x16xf32> to vector<8x4xf32>
    %429 = math.tanh %428 : vector<8x4xf32>
    %430 = vector.extract_strided_slice %390 {offsets = [0, 12], sizes = [8, 4], strides = [1, 1]} : vector<8x16xf32> to vector<8x4xf32>
    %431 = arith.negf %430 : vector<8x4xf32>
    %432 = math.exp %431 : vector<8x4xf32>
    %cst_90 = arith.constant 1.000000e+00 : f32
    %433 = vector.broadcast %cst_90 : f32 to vector<8x4xf32>
    %434 = arith.addf %433, %432 : vector<8x4xf32>
    %435 = arith.divf %433, %434 : vector<8x4xf32>
    %436 = arith.mulf %427, %350 : vector<8x4xf32>
    %437 = arith.mulf %421, %429 : vector<8x4xf32>
    %438 = arith.addf %436, %437 : vector<8x4xf32>
    %439 = math.tanh %438 : vector<8x4xf32>
    %440 = arith.mulf %435, %439 : vector<8x4xf32>
    %441 = tpu.concatenate %415, %413 in 1 : vector<8x32xf32>, vector<8x32xf32> -> vector<8x64xf32>
    %442 = arith.truncf %441 : vector<8x64xf32> to vector<8x64xbf16>
    %443 = vector.extract_strided_slice %382 {offsets = [0, 256], sizes = [8, 1], strides = [1, 1]} : vector<8x257xf32> to vector<8x1xf32>
    %cst_91 = arith.constant dense<0.000000e+00> : vector<8x1xf32>
    %444 = tpu.matmul %442, %18, %cst_91 {dimension_numbers = #tpu.dot_dimension_numbers<[1], [0], [0], [1], [0, 0, 1, 1], [], []>} : vector<8x64xbf16>, vector<64x1xbf16>, vector<8x1xf32> -> vector<8x1xf32>
    %445 = arith.addf %443, %444 : vector<8x1xf32>
    %446 = arith.negf %445 : vector<8x1xf32>
    %447 = math.exp %446 : vector<8x1xf32>
    %cst_92 = arith.constant 1.000000e+00 : f32
    %448 = vector.broadcast %cst_92 : f32 to vector<8x1xf32>
    %449 = arith.addf %448, %447 : vector<8x1xf32>
    %450 = arith.divf %448, %449 : vector<8x1xf32>
    %cst_93 = arith.constant 1.000000e+00 : f32
    %451 = vector.broadcast %cst_93 : f32 to vector<8x1xf32>
    %452 = arith.subf %451, %450 : vector<8x1xf32>
    %453 = tpu.concatenate %440, %22 in 1 : vector<8x4xf32>, vector<8x28xf32> -> vector<8x32xf32>
    %454 = tpu.concatenate %438, %22 in 1 : vector<8x4xf32>, vector<8x28xf32> -> vector<8x32xf32>
    %455 = arith.select %21, %453, %373 : vector<8x32xi1>, vector<8x32xf32>
    %456 = arith.select %21, %454, %413 : vector<8x32xi1>, vector<8x32xf32>
    %457 = vector.broadcast %452 : vector<8x1xf32> to vector<8x32xf32>
    %458 = arith.mulf %457, %415 : vector<8x32xf32>
    %459 = vector.broadcast %450 : vector<8x1xf32> to vector<8x32xf32>
    %460 = arith.mulf %459, %455 : vector<8x32xf32>
    %461 = arith.addf %458, %460 : vector<8x32xf32>
    %462 = vector.broadcast %452 : vector<8x1xf32> to vector<8x32xf32>
    %463 = arith.mulf %462, %413 : vector<8x32xf32>
    %464 = vector.broadcast %450 : vector<8x1xf32> to vector<8x32xf32>
    %465 = arith.mulf %464, %456 : vector<8x32xf32>
    %466 = arith.addf %463, %465 : vector<8x32xf32>
    %c5_i32 = arith.constant 5 : i32
    %c8_i32_94 = arith.constant 8 : i32
    %467 = arith.muli %c5_i32, %c8_i32_94 : i32
    %468 = tpu.assume_multiple %467, 8 : i32
    %469 = arith.index_cast %468 : i32 to index
    %c0_95 = arith.constant 0 : index
    %470 = vector.load %arg12[%469, %c0_95] : memref<64x257xf32, #tpu.memory_space<vmem>>, vector<8x257xf32>
    %471 = vector.extract_strided_slice %470 {offsets = [0, 0], sizes = [8, 128], strides = [1, 1]} : vector<8x257xf32> to vector<8x128xf32>
    %472 = arith.truncf %461 : vector<8x32xf32> to vector<8x32xbf16>
    %cst_96 = arith.constant dense<0.000000e+00> : vector<8x128xf32>
    %473 = tpu.matmul %472, %16, %cst_96 {dimension_numbers = #tpu.dot_dimension_numbers<[1], [0], [0], [1], [0, 0, 1, 1], [], []>} : vector<8x32xbf16>, vector<32x128xbf16>, vector<8x128xf32> -> vector<8x128xf32>
    %474 = arith.addf %471, %473 : vector<8x128xf32>
    %475 = vector.extract_strided_slice %470 {offsets = [0, 128], sizes = [8, 16], strides = [1, 1]} : vector<8x257xf32> to vector<8x16xf32>
    %476 = arith.truncf %440 : vector<8x4xf32> to vector<8x4xbf16>
    %cst_97 = arith.constant dense<0.000000e+00> : vector<8x16xf32>
    %477 = tpu.matmul %476, %17, %cst_97 {dimension_numbers = #tpu.dot_dimension_numbers<[1], [0], [0], [1], [0, 0, 1, 1], [], []>} : vector<8x4xbf16>, vector<4x16xbf16>, vector<8x16xf32> -> vector<8x16xf32>
    %478 = arith.addf %475, %477 : vector<8x16xf32>
    %479 = vector.extract_strided_slice %474 {offsets = [0, 0], sizes = [8, 32], strides = [1, 1]} : vector<8x128xf32> to vector<8x32xf32>
    %480 = arith.negf %479 : vector<8x32xf32>
    %481 = math.exp %480 : vector<8x32xf32>
    %cst_98 = arith.constant 1.000000e+00 : f32
    %482 = vector.broadcast %cst_98 : f32 to vector<8x32xf32>
    %483 = arith.addf %482, %481 : vector<8x32xf32>
    %484 = arith.divf %482, %483 : vector<8x32xf32>
    %485 = vector.extract_strided_slice %474 {offsets = [0, 32], sizes = [8, 32], strides = [1, 1]} : vector<8x128xf32> to vector<8x32xf32>
    %486 = arith.negf %485 : vector<8x32xf32>
    %487 = math.exp %486 : vector<8x32xf32>
    %cst_99 = arith.constant 1.000000e+00 : f32
    %488 = vector.broadcast %cst_99 : f32 to vector<8x32xf32>
    %489 = arith.addf %488, %487 : vector<8x32xf32>
    %490 = arith.divf %488, %489 : vector<8x32xf32>
    %491 = vector.extract_strided_slice %474 {offsets = [0, 64], sizes = [8, 32], strides = [1, 1]} : vector<8x128xf32> to vector<8x32xf32>
    %492 = math.tanh %491 : vector<8x32xf32>
    %493 = vector.extract_strided_slice %474 {offsets = [0, 96], sizes = [8, 32], strides = [1, 1]} : vector<8x128xf32> to vector<8x32xf32>
    %494 = arith.negf %493 : vector<8x32xf32>
    %495 = math.exp %494 : vector<8x32xf32>
    %cst_100 = arith.constant 1.000000e+00 : f32
    %496 = vector.broadcast %cst_100 : f32 to vector<8x32xf32>
    %497 = arith.addf %496, %495 : vector<8x32xf32>
    %498 = arith.divf %496, %497 : vector<8x32xf32>
    %499 = arith.mulf %490, %466 : vector<8x32xf32>
    %500 = arith.mulf %484, %492 : vector<8x32xf32>
    %501 = arith.addf %499, %500 : vector<8x32xf32>
    %502 = math.tanh %501 : vector<8x32xf32>
    %503 = arith.mulf %498, %502 : vector<8x32xf32>
    %504 = vector.extract_strided_slice %478 {offsets = [0, 0], sizes = [8, 4], strides = [1, 1]} : vector<8x16xf32> to vector<8x4xf32>
    %505 = arith.negf %504 : vector<8x4xf32>
    %506 = math.exp %505 : vector<8x4xf32>
    %cst_101 = arith.constant 1.000000e+00 : f32
    %507 = vector.broadcast %cst_101 : f32 to vector<8x4xf32>
    %508 = arith.addf %507, %506 : vector<8x4xf32>
    %509 = arith.divf %507, %508 : vector<8x4xf32>
    %510 = vector.extract_strided_slice %478 {offsets = [0, 4], sizes = [8, 4], strides = [1, 1]} : vector<8x16xf32> to vector<8x4xf32>
    %511 = arith.negf %510 : vector<8x4xf32>
    %512 = math.exp %511 : vector<8x4xf32>
    %cst_102 = arith.constant 1.000000e+00 : f32
    %513 = vector.broadcast %cst_102 : f32 to vector<8x4xf32>
    %514 = arith.addf %513, %512 : vector<8x4xf32>
    %515 = arith.divf %513, %514 : vector<8x4xf32>
    %516 = vector.extract_strided_slice %478 {offsets = [0, 8], sizes = [8, 4], strides = [1, 1]} : vector<8x16xf32> to vector<8x4xf32>
    %517 = math.tanh %516 : vector<8x4xf32>
    %518 = vector.extract_strided_slice %478 {offsets = [0, 12], sizes = [8, 4], strides = [1, 1]} : vector<8x16xf32> to vector<8x4xf32>
    %519 = arith.negf %518 : vector<8x4xf32>
    %520 = math.exp %519 : vector<8x4xf32>
    %cst_103 = arith.constant 1.000000e+00 : f32
    %521 = vector.broadcast %cst_103 : f32 to vector<8x4xf32>
    %522 = arith.addf %521, %520 : vector<8x4xf32>
    %523 = arith.divf %521, %522 : vector<8x4xf32>
    %524 = arith.mulf %515, %438 : vector<8x4xf32>
    %525 = arith.mulf %509, %517 : vector<8x4xf32>
    %526 = arith.addf %524, %525 : vector<8x4xf32>
    %527 = math.tanh %526 : vector<8x4xf32>
    %528 = arith.mulf %523, %527 : vector<8x4xf32>
    %529 = tpu.concatenate %503, %501 in 1 : vector<8x32xf32>, vector<8x32xf32> -> vector<8x64xf32>
    %530 = arith.truncf %529 : vector<8x64xf32> to vector<8x64xbf16>
    %531 = vector.extract_strided_slice %470 {offsets = [0, 256], sizes = [8, 1], strides = [1, 1]} : vector<8x257xf32> to vector<8x1xf32>
    %cst_104 = arith.constant dense<0.000000e+00> : vector<8x1xf32>
    %532 = tpu.matmul %530, %18, %cst_104 {dimension_numbers = #tpu.dot_dimension_numbers<[1], [0], [0], [1], [0, 0, 1, 1], [], []>} : vector<8x64xbf16>, vector<64x1xbf16>, vector<8x1xf32> -> vector<8x1xf32>
    %533 = arith.addf %531, %532 : vector<8x1xf32>
    %534 = arith.negf %533 : vector<8x1xf32>
    %535 = math.exp %534 : vector<8x1xf32>
    %cst_105 = arith.constant 1.000000e+00 : f32
    %536 = vector.broadcast %cst_105 : f32 to vector<8x1xf32>
    %537 = arith.addf %536, %535 : vector<8x1xf32>
    %538 = arith.divf %536, %537 : vector<8x1xf32>
    %cst_106 = arith.constant 1.000000e+00 : f32
    %539 = vector.broadcast %cst_106 : f32 to vector<8x1xf32>
    %540 = arith.subf %539, %538 : vector<8x1xf32>
    %541 = tpu.concatenate %528, %22 in 1 : vector<8x4xf32>, vector<8x28xf32> -> vector<8x32xf32>
    %542 = tpu.concatenate %526, %22 in 1 : vector<8x4xf32>, vector<8x28xf32> -> vector<8x32xf32>
    %543 = arith.select %21, %541, %461 : vector<8x32xi1>, vector<8x32xf32>
    %544 = arith.select %21, %542, %501 : vector<8x32xi1>, vector<8x32xf32>
    %545 = vector.broadcast %540 : vector<8x1xf32> to vector<8x32xf32>
    %546 = arith.mulf %545, %503 : vector<8x32xf32>
    %547 = vector.broadcast %538 : vector<8x1xf32> to vector<8x32xf32>
    %548 = arith.mulf %547, %543 : vector<8x32xf32>
    %549 = arith.addf %546, %548 : vector<8x32xf32>
    %550 = vector.broadcast %540 : vector<8x1xf32> to vector<8x32xf32>
    %551 = arith.mulf %550, %501 : vector<8x32xf32>
    %552 = vector.broadcast %538 : vector<8x1xf32> to vector<8x32xf32>
    %553 = arith.mulf %552, %544 : vector<8x32xf32>
    %554 = arith.addf %551, %553 : vector<8x32xf32>
    %c6_i32 = arith.constant 6 : i32
    %c8_i32_107 = arith.constant 8 : i32
    %555 = arith.muli %c6_i32, %c8_i32_107 : i32
    %556 = tpu.assume_multiple %555, 8 : i32
    %557 = arith.index_cast %556 : i32 to index
    %c0_108 = arith.constant 0 : index
    %558 = vector.load %arg12[%557, %c0_108] : memref<64x257xf32, #tpu.memory_space<vmem>>, vector<8x257xf32>
    %559 = vector.extract_strided_slice %558 {offsets = [0, 0], sizes = [8, 128], strides = [1, 1]} : vector<8x257xf32> to vector<8x128xf32>
    %560 = arith.truncf %549 : vector<8x32xf32> to vector<8x32xbf16>
    %cst_109 = arith.constant dense<0.000000e+00> : vector<8x128xf32>
    %561 = tpu.matmul %560, %16, %cst_109 {dimension_numbers = #tpu.dot_dimension_numbers<[1], [0], [0], [1], [0, 0, 1, 1], [], []>} : vector<8x32xbf16>, vector<32x128xbf16>, vector<8x128xf32> -> vector<8x128xf32>
    %562 = arith.addf %559, %561 : vector<8x128xf32>
    %563 = vector.extract_strided_slice %558 {offsets = [0, 128], sizes = [8, 16], strides = [1, 1]} : vector<8x257xf32> to vector<8x16xf32>
    %564 = arith.truncf %528 : vector<8x4xf32> to vector<8x4xbf16>
    %cst_110 = arith.constant dense<0.000000e+00> : vector<8x16xf32>
    %565 = tpu.matmul %564, %17, %cst_110 {dimension_numbers = #tpu.dot_dimension_numbers<[1], [0], [0], [1], [0, 0, 1, 1], [], []>} : vector<8x4xbf16>, vector<4x16xbf16>, vector<8x16xf32> -> vector<8x16xf32>
    %566 = arith.addf %563, %565 : vector<8x16xf32>
    %567 = vector.extract_strided_slice %562 {offsets = [0, 0], sizes = [8, 32], strides = [1, 1]} : vector<8x128xf32> to vector<8x32xf32>
    %568 = arith.negf %567 : vector<8x32xf32>
    %569 = math.exp %568 : vector<8x32xf32>
    %cst_111 = arith.constant 1.000000e+00 : f32
    %570 = vector.broadcast %cst_111 : f32 to vector<8x32xf32>
    %571 = arith.addf %570, %569 : vector<8x32xf32>
    %572 = arith.divf %570, %571 : vector<8x32xf32>
    %573 = vector.extract_strided_slice %562 {offsets = [0, 32], sizes = [8, 32], strides = [1, 1]} : vector<8x128xf32> to vector<8x32xf32>
    %574 = arith.negf %573 : vector<8x32xf32>
    %575 = math.exp %574 : vector<8x32xf32>
    %cst_112 = arith.constant 1.000000e+00 : f32
    %576 = vector.broadcast %cst_112 : f32 to vector<8x32xf32>
    %577 = arith.addf %576, %575 : vector<8x32xf32>
    %578 = arith.divf %576, %577 : vector<8x32xf32>
    %579 = vector.extract_strided_slice %562 {offsets = [0, 64], sizes = [8, 32], strides = [1, 1]} : vector<8x128xf32> to vector<8x32xf32>
    %580 = math.tanh %579 : vector<8x32xf32>
    %581 = vector.extract_strided_slice %562 {offsets = [0, 96], sizes = [8, 32], strides = [1, 1]} : vector<8x128xf32> to vector<8x32xf32>
    %582 = arith.negf %581 : vector<8x32xf32>
    %583 = math.exp %582 : vector<8x32xf32>
    %cst_113 = arith.constant 1.000000e+00 : f32
    %584 = vector.broadcast %cst_113 : f32 to vector<8x32xf32>
    %585 = arith.addf %584, %583 : vector<8x32xf32>
    %586 = arith.divf %584, %585 : vector<8x32xf32>
    %587 = arith.mulf %578, %554 : vector<8x32xf32>
    %588 = arith.mulf %572, %580 : vector<8x32xf32>
    %589 = arith.addf %587, %588 : vector<8x32xf32>
    %590 = math.tanh %589 : vector<8x32xf32>
    %591 = arith.mulf %586, %590 : vector<8x32xf32>
    %592 = vector.extract_strided_slice %566 {offsets = [0, 0], sizes = [8, 4], strides = [1, 1]} : vector<8x16xf32> to vector<8x4xf32>
    %593 = arith.negf %592 : vector<8x4xf32>
    %594 = math.exp %593 : vector<8x4xf32>
    %cst_114 = arith.constant 1.000000e+00 : f32
    %595 = vector.broadcast %cst_114 : f32 to vector<8x4xf32>
    %596 = arith.addf %595, %594 : vector<8x4xf32>
    %597 = arith.divf %595, %596 : vector<8x4xf32>
    %598 = vector.extract_strided_slice %566 {offsets = [0, 4], sizes = [8, 4], strides = [1, 1]} : vector<8x16xf32> to vector<8x4xf32>
    %599 = arith.negf %598 : vector<8x4xf32>
    %600 = math.exp %599 : vector<8x4xf32>
    %cst_115 = arith.constant 1.000000e+00 : f32
    %601 = vector.broadcast %cst_115 : f32 to vector<8x4xf32>
    %602 = arith.addf %601, %600 : vector<8x4xf32>
    %603 = arith.divf %601, %602 : vector<8x4xf32>
    %604 = vector.extract_strided_slice %566 {offsets = [0, 8], sizes = [8, 4], strides = [1, 1]} : vector<8x16xf32> to vector<8x4xf32>
    %605 = math.tanh %604 : vector<8x4xf32>
    %606 = vector.extract_strided_slice %566 {offsets = [0, 12], sizes = [8, 4], strides = [1, 1]} : vector<8x16xf32> to vector<8x4xf32>
    %607 = arith.negf %606 : vector<8x4xf32>
    %608 = math.exp %607 : vector<8x4xf32>
    %cst_116 = arith.constant 1.000000e+00 : f32
    %609 = vector.broadcast %cst_116 : f32 to vector<8x4xf32>
    %610 = arith.addf %609, %608 : vector<8x4xf32>
    %611 = arith.divf %609, %610 : vector<8x4xf32>
    %612 = arith.mulf %603, %526 : vector<8x4xf32>
    %613 = arith.mulf %597, %605 : vector<8x4xf32>
    %614 = arith.addf %612, %613 : vector<8x4xf32>
    %615 = math.tanh %614 : vector<8x4xf32>
    %616 = arith.mulf %611, %615 : vector<8x4xf32>
    %617 = tpu.concatenate %591, %589 in 1 : vector<8x32xf32>, vector<8x32xf32> -> vector<8x64xf32>
    %618 = arith.truncf %617 : vector<8x64xf32> to vector<8x64xbf16>
    %619 = vector.extract_strided_slice %558 {offsets = [0, 256], sizes = [8, 1], strides = [1, 1]} : vector<8x257xf32> to vector<8x1xf32>
    %cst_117 = arith.constant dense<0.000000e+00> : vector<8x1xf32>
    %620 = tpu.matmul %618, %18, %cst_117 {dimension_numbers = #tpu.dot_dimension_numbers<[1], [0], [0], [1], [0, 0, 1, 1], [], []>} : vector<8x64xbf16>, vector<64x1xbf16>, vector<8x1xf32> -> vector<8x1xf32>
    %621 = arith.addf %619, %620 : vector<8x1xf32>
    %622 = arith.negf %621 : vector<8x1xf32>
    %623 = math.exp %622 : vector<8x1xf32>
    %cst_118 = arith.constant 1.000000e+00 : f32
    %624 = vector.broadcast %cst_118 : f32 to vector<8x1xf32>
    %625 = arith.addf %624, %623 : vector<8x1xf32>
    %626 = arith.divf %624, %625 : vector<8x1xf32>
    %cst_119 = arith.constant 1.000000e+00 : f32
    %627 = vector.broadcast %cst_119 : f32 to vector<8x1xf32>
    %628 = arith.subf %627, %626 : vector<8x1xf32>
    %629 = tpu.concatenate %616, %22 in 1 : vector<8x4xf32>, vector<8x28xf32> -> vector<8x32xf32>
    %630 = tpu.concatenate %614, %22 in 1 : vector<8x4xf32>, vector<8x28xf32> -> vector<8x32xf32>
    %631 = arith.select %21, %629, %549 : vector<8x32xi1>, vector<8x32xf32>
    %632 = arith.select %21, %630, %589 : vector<8x32xi1>, vector<8x32xf32>
    %633 = vector.broadcast %628 : vector<8x1xf32> to vector<8x32xf32>
    %634 = arith.mulf %633, %591 : vector<8x32xf32>
    %635 = vector.broadcast %626 : vector<8x1xf32> to vector<8x32xf32>
    %636 = arith.mulf %635, %631 : vector<8x32xf32>
    %637 = arith.addf %634, %636 : vector<8x32xf32>
    %638 = vector.broadcast %628 : vector<8x1xf32> to vector<8x32xf32>
    %639 = arith.mulf %638, %589 : vector<8x32xf32>
    %640 = vector.broadcast %626 : vector<8x1xf32> to vector<8x32xf32>
    %641 = arith.mulf %640, %632 : vector<8x32xf32>
    %642 = arith.addf %639, %641 : vector<8x32xf32>
    %c7_i32 = arith.constant 7 : i32
    %c8_i32_120 = arith.constant 8 : i32
    %643 = arith.muli %c7_i32, %c8_i32_120 : i32
    %644 = tpu.assume_multiple %643, 8 : i32
    %645 = arith.index_cast %644 : i32 to index
    %c0_121 = arith.constant 0 : index
    %646 = vector.load %arg12[%645, %c0_121] : memref<64x257xf32, #tpu.memory_space<vmem>>, vector<8x257xf32>
    %647 = vector.extract_strided_slice %646 {offsets = [0, 0], sizes = [8, 128], strides = [1, 1]} : vector<8x257xf32> to vector<8x128xf32>
    %648 = arith.truncf %637 : vector<8x32xf32> to vector<8x32xbf16>
    %cst_122 = arith.constant dense<0.000000e+00> : vector<8x128xf32>
    %649 = tpu.matmul %648, %16, %cst_122 {dimension_numbers = #tpu.dot_dimension_numbers<[1], [0], [0], [1], [0, 0, 1, 1], [], []>} : vector<8x32xbf16>, vector<32x128xbf16>, vector<8x128xf32> -> vector<8x128xf32>
    %650 = arith.addf %647, %649 : vector<8x128xf32>
    %651 = vector.extract_strided_slice %646 {offsets = [0, 128], sizes = [8, 16], strides = [1, 1]} : vector<8x257xf32> to vector<8x16xf32>
    %652 = arith.truncf %616 : vector<8x4xf32> to vector<8x4xbf16>
    %cst_123 = arith.constant dense<0.000000e+00> : vector<8x16xf32>
    %653 = tpu.matmul %652, %17, %cst_123 {dimension_numbers = #tpu.dot_dimension_numbers<[1], [0], [0], [1], [0, 0, 1, 1], [], []>} : vector<8x4xbf16>, vector<4x16xbf16>, vector<8x16xf32> -> vector<8x16xf32>
    %654 = arith.addf %651, %653 : vector<8x16xf32>
    %655 = vector.extract_strided_slice %650 {offsets = [0, 0], sizes = [8, 32], strides = [1, 1]} : vector<8x128xf32> to vector<8x32xf32>
    %656 = arith.negf %655 : vector<8x32xf32>
    %657 = math.exp %656 : vector<8x32xf32>
    %cst_124 = arith.constant 1.000000e+00 : f32
    %658 = vector.broadcast %cst_124 : f32 to vector<8x32xf32>
    %659 = arith.addf %658, %657 : vector<8x32xf32>
    %660 = arith.divf %658, %659 : vector<8x32xf32>
    %661 = vector.extract_strided_slice %650 {offsets = [0, 32], sizes = [8, 32], strides = [1, 1]} : vector<8x128xf32> to vector<8x32xf32>
    %662 = arith.negf %661 : vector<8x32xf32>
    %663 = math.exp %662 : vector<8x32xf32>
    %cst_125 = arith.constant 1.000000e+00 : f32
    %664 = vector.broadcast %cst_125 : f32 to vector<8x32xf32>
    %665 = arith.addf %664, %663 : vector<8x32xf32>
    %666 = arith.divf %664, %665 : vector<8x32xf32>
    %667 = vector.extract_strided_slice %650 {offsets = [0, 64], sizes = [8, 32], strides = [1, 1]} : vector<8x128xf32> to vector<8x32xf32>
    %668 = math.tanh %667 : vector<8x32xf32>
    %669 = vector.extract_strided_slice %650 {offsets = [0, 96], sizes = [8, 32], strides = [1, 1]} : vector<8x128xf32> to vector<8x32xf32>
    %670 = arith.negf %669 : vector<8x32xf32>
    %671 = math.exp %670 : vector<8x32xf32>
    %cst_126 = arith.constant 1.000000e+00 : f32
    %672 = vector.broadcast %cst_126 : f32 to vector<8x32xf32>
    %673 = arith.addf %672, %671 : vector<8x32xf32>
    %674 = arith.divf %672, %673 : vector<8x32xf32>
    %675 = arith.mulf %666, %642 : vector<8x32xf32>
    %676 = arith.mulf %660, %668 : vector<8x32xf32>
    %677 = arith.addf %675, %676 : vector<8x32xf32>
    %678 = math.tanh %677 : vector<8x32xf32>
    %679 = arith.mulf %674, %678 : vector<8x32xf32>
    %680 = vector.extract_strided_slice %654 {offsets = [0, 0], sizes = [8, 4], strides = [1, 1]} : vector<8x16xf32> to vector<8x4xf32>
    %681 = arith.negf %680 : vector<8x4xf32>
    %682 = math.exp %681 : vector<8x4xf32>
    %cst_127 = arith.constant 1.000000e+00 : f32
    %683 = vector.broadcast %cst_127 : f32 to vector<8x4xf32>
    %684 = arith.addf %683, %682 : vector<8x4xf32>
    %685 = arith.divf %683, %684 : vector<8x4xf32>
    %686 = vector.extract_strided_slice %654 {offsets = [0, 4], sizes = [8, 4], strides = [1, 1]} : vector<8x16xf32> to vector<8x4xf32>
    %687 = arith.negf %686 : vector<8x4xf32>
    %688 = math.exp %687 : vector<8x4xf32>
    %cst_128 = arith.constant 1.000000e+00 : f32
    %689 = vector.broadcast %cst_128 : f32 to vector<8x4xf32>
    %690 = arith.addf %689, %688 : vector<8x4xf32>
    %691 = arith.divf %689, %690 : vector<8x4xf32>
    %692 = vector.extract_strided_slice %654 {offsets = [0, 8], sizes = [8, 4], strides = [1, 1]} : vector<8x16xf32> to vector<8x4xf32>
    %693 = math.tanh %692 : vector<8x4xf32>
    %694 = vector.extract_strided_slice %654 {offsets = [0, 12], sizes = [8, 4], strides = [1, 1]} : vector<8x16xf32> to vector<8x4xf32>
    %695 = arith.negf %694 : vector<8x4xf32>
    %696 = math.exp %695 : vector<8x4xf32>
    %cst_129 = arith.constant 1.000000e+00 : f32
    %697 = vector.broadcast %cst_129 : f32 to vector<8x4xf32>
    %698 = arith.addf %697, %696 : vector<8x4xf32>
    %699 = arith.divf %697, %698 : vector<8x4xf32>
    %700 = arith.mulf %691, %614 : vector<8x4xf32>
    %701 = arith.mulf %685, %693 : vector<8x4xf32>
    %702 = arith.addf %700, %701 : vector<8x4xf32>
    %703 = math.tanh %702 : vector<8x4xf32>
    %704 = arith.mulf %699, %703 : vector<8x4xf32>
    %705 = tpu.concatenate %679, %677 in 1 : vector<8x32xf32>, vector<8x32xf32> -> vector<8x64xf32>
    %706 = arith.truncf %705 : vector<8x64xf32> to vector<8x64xbf16>
    %707 = vector.extract_strided_slice %646 {offsets = [0, 256], sizes = [8, 1], strides = [1, 1]} : vector<8x257xf32> to vector<8x1xf32>
    %cst_130 = arith.constant dense<0.000000e+00> : vector<8x1xf32>
    %708 = tpu.matmul %706, %18, %cst_130 {dimension_numbers = #tpu.dot_dimension_numbers<[1], [0], [0], [1], [0, 0, 1, 1], [], []>} : vector<8x64xbf16>, vector<64x1xbf16>, vector<8x1xf32> -> vector<8x1xf32>
    %709 = arith.addf %707, %708 : vector<8x1xf32>
    %710 = arith.negf %709 : vector<8x1xf32>
    %711 = math.exp %710 : vector<8x1xf32>
    %cst_131 = arith.constant 1.000000e+00 : f32
    %712 = vector.broadcast %cst_131 : f32 to vector<8x1xf32>
    %713 = arith.addf %712, %711 : vector<8x1xf32>
    %714 = arith.divf %712, %713 : vector<8x1xf32>
    %cst_132 = arith.constant 1.000000e+00 : f32
    %715 = vector.broadcast %cst_132 : f32 to vector<8x1xf32>
    %716 = arith.subf %715, %714 : vector<8x1xf32>
    %717 = tpu.concatenate %704, %22 in 1 : vector<8x4xf32>, vector<8x28xf32> -> vector<8x32xf32>
    %718 = tpu.concatenate %702, %22 in 1 : vector<8x4xf32>, vector<8x28xf32> -> vector<8x32xf32>
    %719 = arith.select %21, %717, %637 : vector<8x32xi1>, vector<8x32xf32>
    %720 = arith.select %21, %718, %677 : vector<8x32xi1>, vector<8x32xf32>
    %721 = vector.broadcast %716 : vector<8x1xf32> to vector<8x32xf32>
    %722 = arith.mulf %721, %679 : vector<8x32xf32>
    %723 = vector.broadcast %714 : vector<8x1xf32> to vector<8x32xf32>
    %724 = arith.mulf %723, %719 : vector<8x32xf32>
    %725 = arith.addf %722, %724 : vector<8x32xf32>
    %726 = vector.broadcast %716 : vector<8x1xf32> to vector<8x32xf32>
    %727 = arith.mulf %726, %677 : vector<8x32xf32>
    %728 = vector.broadcast %714 : vector<8x1xf32> to vector<8x32xf32>
    %729 = arith.mulf %728, %720 : vector<8x32xf32>
    %730 = arith.addf %727, %729 : vector<8x32xf32>
    %c8_i32_133 = arith.constant 8 : i32
    %c0_134 = arith.constant 0 : index
    %c0_135 = arith.constant 0 : index
    %731 = vector.load %arg13[%c0_134, %c0_135] : memref<8x32xf32, #tpu.memory_space<vmem>>, vector<8x32xf32>
    tpu.vector_store %arg13[%c0_134, %c0_135], %725 {strides = array<i32>} : memref<8x32xf32, #tpu.memory_space<vmem>>, vector<8x32xf32>,
    %c0_136 = arith.constant 0 : index
    %c0_137 = arith.constant 0 : index
    %732 = vector.load %arg14[%c0_136, %c0_137] : memref<8x32xf32, #tpu.memory_space<vmem>>, vector<8x32xf32>
    tpu.vector_store %arg14[%c0_136, %c0_137], %730 {strides = array<i32>} : memref<8x32xf32, #tpu.memory_space<vmem>>, vector<8x32xf32>,
    %c0_138 = arith.constant 0 : index
    %c0_139 = arith.constant 0 : index
    %733 = vector.load %arg15[%c0_138, %c0_139] : memref<8x4xf32, #tpu.memory_space<vmem>>, vector<8x4xf32>
    tpu.vector_store %arg15[%c0_138, %c0_139], %704 {strides = array<i32>} : memref<8x4xf32, #tpu.memory_space<vmem>>, vector<8x4xf32>,
    %c0_140 = arith.constant 0 : index
    %c0_141 = arith.constant 0 : index
    %734 = vector.load %arg16[%c0_140, %c0_141] : memref<8x4xf32, #tpu.memory_space<vmem>>, vector<8x4xf32>
    tpu.vector_store %arg16[%c0_140, %c0_141], %702 {strides = array<i32>} : memref<8x4xf32, #tpu.memory_space<vmem>>, vector<8x4xf32>,
    %cst_142 = arith.constant 0.000000e+00 : f32
    %735 = vector.broadcast %cst_142 : f32 to vector<8x32xf32>
    %736 = arith.maximumf %725, %735 : vector<8x32xf32>
    %c0_143 = arith.constant 0 : index
    %c0_144 = arith.constant 0 : index
    %737 = vector.load %arg9[%c0_143, %c0_144] : memref<32x2xf32, #tpu.memory_space<vmem>>, vector<32x2xf32>
    %cst_145 = arith.constant dense<0.000000e+00> : vector<8x2xf32>
    %738 = tpu.matmul %736, %737, %cst_145 {dimension_numbers = #tpu.dot_dimension_numbers<[1], [0], [0], [1], [0, 0, 1, 1], [], []>} : vector<8x32xf32>, vector<32x2xf32>, vector<8x2xf32> -> vector<8x2xf32>
    %c0_146 = arith.constant 0 : index
    %c0_147 = arith.constant 0 : index
    %739 = vector.load %arg10[%c0_146, %c0_147] : memref<1x2xf32, #tpu.memory_space<vmem>>, vector<1x2xf32>
    %740 = vector.broadcast %739 : vector<1x2xf32> to vector<8x2xf32>
    %741 = arith.addf %738, %740 : vector<8x2xf32>
    %c0_148 = arith.constant 0 : index
    %c0_149 = arith.constant 0 : index
    %742 = vector.load %arg11[%c0_148, %c0_149] : memref<8x2xf32, #tpu.memory_space<vmem>>, vector<8x2xf32>
    tpu.vector_store %arg11[%c0_148, %c0_149], %741 {strides = array<i32>} : memref<8x2xf32, #tpu.memory_space<vmem>>, vector<8x2xf32>,
    return
  }
  func.func @transform_0(%arg0: i32, %arg1: i32) -> (i32, i32, i32) {
    %c0_i32 = arith.constant 0 : i32
    %c0_i32_0 = arith.constant 0 : i32
    return %arg0, %arg1, %c0_i32 : i32, i32, i32
  }
  func.func @transform_1(%arg0: i32, %arg1: i32) -> (i32, i32, i32) {
    %c0_i32 = arith.constant 0 : i32
    %c0_i32_0 = arith.constant 0 : i32
    return %arg0, %arg1, %c0_i32 : i32, i32, i32
  }
  func.func @transform_2(%arg0: i32, %arg1: i32) -> (i32, i32) {
    %c0_i32 = arith.constant 0 : i32
    %c0_i32_0 = arith.constant 0 : i32
    %c0_i32_1 = arith.constant 0 : i32
    return %c0_i32, %c0_i32_0 : i32, i32
  }
  func.func @transform_3(%arg0: i32, %arg1: i32) -> (i32, i32) {
    %c0_i32 = arith.constant 0 : i32
    %c0_i32_0 = arith.constant 0 : i32
    %c0_i32_1 = arith.constant 0 : i32
    return %c0_i32, %c0_i32_0 : i32, i32
  }
  func.func @transform_4(%arg0: i32, %arg1: i32) -> (i32, i32) {
    %c0_i32 = arith.constant 0 : i32
    %c0_i32_0 = arith.constant 0 : i32
    %c0_i32_1 = arith.constant 0 : i32
    return %c0_i32, %c0_i32_0 : i32, i32
  }
  func.func @transform_5(%arg0: i32, %arg1: i32) -> (i32, i32) {
    %c0_i32 = arith.constant 0 : i32
    %c0_i32_0 = arith.constant 0 : i32
    %c0_i32_1 = arith.constant 0 : i32
    return %c0_i32, %c0_i32_0 : i32, i32
  }
  func.func @transform_6(%arg0: i32, %arg1: i32) -> (i32, i32) {
    %c0_i32 = arith.constant 0 : i32
    %c0_i32_0 = arith.constant 0 : i32
    %c0_i32_1 = arith.constant 0 : i32
    return %c0_i32, %c0_i32_0 : i32, i32
  }
  func.func @transform_7(%arg0: i32, %arg1: i32) -> (i32, i32) {
    %c0_i32 = arith.constant 0 : i32
    %c0_i32_0 = arith.constant 0 : i32
    %c0_i32_1 = arith.constant 0 : i32
    return %c0_i32, %c0_i32_0 : i32, i32
  }
  func.func @transform_8(%arg0: i32, %arg1: i32) -> (i32, i32) {
    %c0_i32 = arith.constant 0 : i32
    %c0_i32_0 = arith.constant 0 : i32
    %c0_i32_1 = arith.constant 0 : i32
    return %c0_i32, %c0_i32_0 : i32, i32
  }
  func.func @transform_9(%arg0: i32, %arg1: i32) -> (i32, i32) {
    %c0_i32 = arith.constant 0 : i32
    %c0_i32_0 = arith.constant 0 : i32
    return %arg0, %c0_i32 : i32, i32
  }
}

</mosaic_0001>

<llo_original>
// kernel: tpu_custom_call.1
$region0: #{tpu_custom_call.1}
  #allocation0 [shape = 'u32[]', space=smem, size = 0x4, offset = 0x4, fixed_abs, tag = 'smem constant byte address 0x4 - core index']
  #allocation1 [shape = 'u32[144,128]{1,0:T(1,128)}', space=vmem, size = 0x12000, scoped, tag = 'internal scratch']
  #allocation2 [shape = 'f32[64,257]{1,0:T(8,128)}', space=vmem, size = 0x18000, scoped, tag = 'scratch operand']
  #allocation3 [shape = 'f32[8,32]{1,0:T(8,128)}', space=vmem, size = 0x1000, scoped, tag = 'scratch operand']
  #allocation4 [shape = 'f32[8,32]{1,0:T(8,128)}', space=vmem, size = 0x1000, scoped, tag = 'scratch operand']
  #allocation5 [shape = 'f32[8,4]{1,0:T(8,128)}', space=vmem, size = 0x1000, scoped, tag = 'scratch operand']
  #allocation6 [shape = 'f32[8,4]{1,0:T(8,128)}', space=vmem, size = 0x1000, scoped, tag = 'scratch operand']
  %s0 = inlined_call_operand.vmem [shape: bf16[1,64,32], index: 0, kind: input, shape index: {}]
  %s1 = inlined_call_operand.vmem [shape: f32[1,64,1], index: 1, kind: input, shape index: {}]
  %s2 = inlined_call_operand.vmem [shape: bf16[32,257], index: 2, kind: input, shape index: {}]
  %s3 = inlined_call_operand.vmem [shape: f32[1,257], index: 3, kind: input, shape index: {}]
  %s4 = inlined_call_operand.vmem [shape: bf16[32,128], index: 4, kind: input, shape index: {}]
  %s5 = inlined_call_operand.vmem [shape: bf16[4,16], index: 5, kind: input, shape index: {}]
  %s6 = inlined_call_operand.vmem [shape: bf16[64,1], index: 6, kind: input, shape index: {}]
  %s7 = inlined_call_operand.vmem [shape: f32[32,2], index: 7, kind: input, shape index: {}]
  %s8 = inlined_call_operand.vmem [shape: f32[1,2], index: 8, kind: input, shape index: {}]
  %s9 = inlined_call_operand.vmem [shape: f32[8,2], index: 9, kind: output, shape index: {}]
  %s10 = sld [smem:[#allocation0]]
  $region50: #{tpu_custom_call.1} parent=0
    _
  %s12 = ssub.s32 1, %s10
  %s13 = scalar_select 0, %s12, %s10
  // Predicated region
  $region2: #{tpu_custom_call.1} parent=0 // pred_check
    _
  $region3: #{tpu_custom_call.1} parent=0 // pred_check_branch
    %15 = sbr.rel (0) target = $region5
  $region4: #{tpu_custom_call.1} parent=0 // pred_region
    _
  $region5: #{tpu_custom_call.1} parent=0 // pred_fallthru
    _
  // Predicated region
  $region6: #{tpu_custom_call.1} parent=0 // pred_check
    _
  $region7: #{tpu_custom_call.1} parent=0 // pred_check_branch
    %17 = sbr.rel (0) target = $region9
  $region8: #{tpu_custom_call.1} parent=0 // pred_region
    _
  $region9: #{tpu_custom_call.1} parent=0 // pred_fallthru
    _
  // Predicated region
  $region10: #{tpu_custom_call.1} parent=0 // pred_check
    _
  $region11: #{tpu_custom_call.1} parent=0 // pred_check_branch
    %19 = sbr.rel (0) target = $region13
  $region12: #{tpu_custom_call.1} parent=0 // pred_region
    _
  $region13: #{tpu_custom_call.1} parent=0 // pred_fallthru
    _
  // Predicated region
  $region14: #{tpu_custom_call.1} parent=0 // pred_check
    _
  $region15: #{tpu_custom_call.1} parent=0 // pred_check_branch
    %21 = sbr.rel (0) target = $region17
  $region16: #{tpu_custom_call.1} parent=0 // pred_region
    _
  $region17: #{tpu_custom_call.1} parent=0 // pred_fallthru
    _
  // Predicated region
  $region18: #{tpu_custom_call.1} parent=0 // pred_check
    _
  $region19: #{tpu_custom_call.1} parent=0 // pred_check_branch
    %23 = sbr.rel (0) target = $region21
  $region20: #{tpu_custom_call.1} parent=0 // pred_region
    _
  $region21: #{tpu_custom_call.1} parent=0 // pred_fallthru
    _
  // Predicated region
  $region22: #{tpu_custom_call.1} parent=0 // pred_check
    _
  $region23: #{tpu_custom_call.1} parent=0 // pred_check_branch
    %25 = sbr.rel (0) target = $region25
  $region24: #{tpu_custom_call.1} parent=0 // pred_region
    _
  $region25: #{tpu_custom_call.1} parent=0 // pred_fallthru
    _
  // Predicated region
  $region26: #{tpu_custom_call.1} parent=0 // pred_check
    _
  $region27: #{tpu_custom_call.1} parent=0 // pred_check_branch
    %27 = sbr.rel (0) target = $region29
  $region28: #{tpu_custom_call.1} parent=0 // pred_region
    _
  $region29: #{tpu_custom_call.1} parent=0 // pred_fallthru
    _
  // Predicated region
  $region30: #{tpu_custom_call.1} parent=0 // pred_check
    _
  $region31: #{tpu_custom_call.1} parent=0 // pred_check_branch
    %29 = sbr.rel (0) target = $region33
  $region32: #{tpu_custom_call.1} parent=0 // pred_region
    _
  $region33: #{tpu_custom_call.1} parent=0 // pred_fallthru
    _
  // Predicated region
  $region34: #{tpu_custom_call.1} parent=0 // pred_check
    _
  $region35: #{tpu_custom_call.1} parent=0 // pred_check_branch
    %31 = sbr.rel (0) target = $region37
  $region36: #{tpu_custom_call.1} parent=0 // pred_region
    _
  $region37: #{tpu_custom_call.1} parent=0 // pred_fallthru
    _
  %p33 = scmp.eq.s32.totalorder 0, 0
  // Predicated region
  $region38: #{tpu_custom_call.1} parent=0 // pred_check
    %p34 = pneg %p33
  $region39: #{tpu_custom_call.1} parent=0 // pred_check_branch
    %36 = sbr.rel (%p34) target = $region41
  $region40: #{tpu_custom_call.1} parent=0 // pred_region
    %vm37 = vcmask 261120
    %38 = vst.msk [vmem:[#allocation3] sm:$0xff] %vm37, 0.0
    %39 = vst.msk [vmem:[#allocation4] sm:$0xff] %vm37, 0.0
    %vm40 = vcmask 31744
    %41 = vst.msk [vmem:[#allocation5] sm:$0xff] %vm40, 0.0
    %42 = vst.msk [vmem:[#allocation6] sm:$0xff] %vm40, 0.0
  $region41: #{tpu_custom_call.1} parent=0 // pred_fallthru
    _
  %v43 = vld [vmem:[%s0] sm:$0xf]
  %v44 = vld [vmem:[%s0 + $0x4] sm:$0xf]
  %v45 = vld [vmem:[%s0 + $0x8] sm:$0xf]
  %v46 = vld [vmem:[%s0 + $0xc] sm:$0xf]
  %v47 = vld [vmem:[%s0 + $0x10] sm:$0xf]
  %v48 = vld [vmem:[%s0 + $0x14] sm:$0xf]
  %v49 = vld [vmem:[%s0 + $0x18] sm:$0xf]
  %v50 = vld [vmem:[%s0 + $0x1c] sm:$0xf]
  %v51 = vld [vmem:[%s2] sm:$0xff]
  %v52 = vld [vmem:[%s2 + $0x8] sm:$0xf]
  %v53 = vld [vmem:[%s2 + $0xc] sm:$0xff]
  %v54 = vld [vmem:[%s2 + $0x14] sm:$0xf]
  %v55 = vld [vmem:[%s2 + $0x18] sm:$0xff]
  %v56 = vld [vmem:[%s2 + $0x20] sm:$0xf]
  %v57 = vld [vmem:[%s2 + $0x24] sm:$0xff]
  %v58 = vld [vmem:[%s2 + $0x2c] sm:$0xf]
  %v59 = vld [vmem:[%s3] sm:$0x7]
  %v61 = vlaneseq
  %v62 = vshrl.u32 %v61, 7
  %v63 = vsub.s32 0, %v62
  %v64 = vrot.slane %v59, %v63
  %v65 = vlaneseq
  %v66 = vshrl.u32 %v65, 7
  %v67 = vsub.s32 1, %v66
  %v68 = vrot.slane %v59, %v67
  %v69 = vlaneseq
  %v70 = vshrl.u32 %v69, 7
  %v71 = vsub.s32 2, %v70
  %v72 = vrot.slane %v59, %v71
  %v84 = vunpack.c.l.b16 %v43
  %v85 = vunpack.c.l.b16 %v44
  %v86 = vunpack.c.l.b16 %v45
  %v87 = vunpack.c.l.b16 %v46
  %v88 = vunpack.c.l.b16 %v47
  %v89 = vunpack.c.l.b16 %v48
  %v90 = vunpack.c.l.b16 %v49
  %v91 = vunpack.c.l.b16 %v50
  %v92 = vpack.c.b16 %v85, %v84
  %v93 = vpack.c.b16 %v87, %v86
  %v94 = vpack.c.b16 %v89, %v88
  %v95 = vpack.c.b16 %v91, %v90
  %v104 = vunpack.c.l.b16 %v51
  %v105 = vunpack.c.h.b16 %v51
  %v106 = vunpack.c.l.b16 %v52
  %v107 = vunpack.c.l.b16 %v53
  %v108 = vunpack.c.h.b16 %v53
  %v109 = vunpack.c.l.b16 %v54
  %v110 = vunpack.c.l.b16 %v55
  %v111 = vunpack.c.h.b16 %v55
  %v112 = vunpack.c.l.b16 %v56
  %v113 = vunpack.c.l.b16 %v57
  %v114 = vunpack.c.h.b16 %v57
  %v115 = vunpack.c.l.b16 %v58
  %v116 = vpack.c.b16 %v107, %v104
  %v117 = vpack.c.b16 %v108, %v105
  %v118 = vpack.c.b16 %v109, %v106
  %v119 = vpack.c.b16 %v113, %v110
  %v120 = vpack.c.b16 %v114, %v111
  %v121 = vpack.c.b16 %v115, %v112
  %vm128 = vcmask 261120
  %v130 = vsel %vm128, %v92, 0
  %v133 = vsel %vm128, %v93, 0
  %v136 = vsel %vm128, %v94, 0
  %v139 = vsel %vm128, %v95, 0
  %141 = vmatprep.subr.bf16.mxu0 %v117
  %142 = vmatpush1.bf16.msra.mxu0 %v116
  %143 = vmatprep.subr.bf16.mxu0 %v120
  %144 = vmatpush1.bf16.msra.mxu0 %v119
  %145 = vmatprep.subr.bf16.mxu0 0
  %146 = vmatpush1.bf16.msra.mxu0 0
  %147 = vmatprep.subr.bf16.mxu0 0
  %148 = vmatpush1.bf16.msra.mxu0 0
  %149 = vmatprep.subr.bf16.mxu0 0
  %150 = vmatpush1.bf16.msra.mxu0 0
  %151 = vmatprep.subr.bf16.mxu0 0
  %152 = vmatpush1.bf16.msra.mxu0 0
  %153 = vmatprep.subr.bf16.mxu0 0
  %154 = vmatpush1.bf16.msra.mxu0 0
  %155 = vmatprep.subr.bf16.mxu0 0
  %156 = vmatpush1.bf16.msra.mxu0 0
  %157 = vmatprep.subr.bf16.mxu0 0
  %158 = vmatpush1.bf16.msra.mxu0 0
  %159 = vmatprep.subr.bf16.mxu0 0
  %160 = vmatpush1.bf16.msra.mxu0 0
  %161 = vmatprep.subr.bf16.mxu0 0
  %162 = vmatpush1.bf16.msra.mxu0 0
  %163 = vmatprep.subr.bf16.mxu0 0
  %164 = vmatpush1.bf16.msra.mxu0 0
  %165 = vmatprep.subr.bf16.mxu0 0
  %166 = vmatpush1.bf16.msra.mxu0 0
  %167 = vmatprep.subr.bf16.mxu0 0
  %168 = vmatpush1.bf16.msra.mxu0 0
  %169 = vmatprep.subr.bf16.mxu0 0
  %170 = vmatpush1.bf16.msra.mxu0 0
  %171 = vmatprep.subr.bf16.mxu0 0
  %172 = vmatpush1.bf16.msra.mxu0 0
  %173 = vmatprep.mubr.bf16.mxu0 0
  %174 = vmatmul.mubr.bf16.gmra.mrb[0].mxu0 %v130
  %v175 = vpop.f32.mrb[0].mxu0
  %v176 = vadd.f32 %v64, %v175
  %v177 = vpop.f32.mrb[0].mxu0
  %v178 = vadd.f32 %v68, %v177
  %v179 = vpop.f32.mrb[0].mxu0
  %v180 = vadd.f32 %v64, %v179
  %v181 = vpop.f32.mrb[0].mxu0
  %v182 = vadd.f32 %v68, %v181
  %183 = vmatprep.mubr.bf16.mxu0 0
  %184 = vmatmul.mubr.bf16.gmra.mrb[0].mxu0 %v133
  %v185 = vpop.f32.mrb[0].mxu0
  %v186 = vadd.f32 %v64, %v185
  %v187 = vpop.f32.mrb[0].mxu0
  %v188 = vadd.f32 %v68, %v187
  %v189 = vpop.f32.mrb[0].mxu0
  %v190 = vadd.f32 %v64, %v189
  %v191 = vpop.f32.mrb[0].mxu0
  %v192 = vadd.f32 %v68, %v191
  %193 = vmatprep.mubr.bf16.mxu0 0
  %194 = vmatmul.mubr.bf16.gmra.mrb[0].mxu0 %v136
  %v195 = vpop.f32.mrb[0].mxu0
  %v196 = vadd.f32 %v64, %v195
  %v197 = vpop.f32.mrb[0].mxu0
  %v198 = vadd.f32 %v68, %v197
  %v199 = vpop.f32.mrb[0].mxu0
  %v200 = vadd.f32 %v64, %v199
  %v201 = vpop.f32.mrb[0].mxu0
  %v202 = vadd.f32 %v68, %v201
  %203 = vmatprep.mubr.bf16.mxu0 0
  %204 = vmatmul.mubr.bf16.gmra.mrb[0].mxu0 %v139
  %v205 = vpop.f32.mrb[0].mxu0
  %v206 = vadd.f32 %v64, %v205
  %v207 = vpop.f32.mrb[0].mxu0
  %v208 = vadd.f32 %v68, %v207
  %v209 = vpop.f32.mrb[0].mxu0
  %v210 = vadd.f32 %v64, %v209
  %v211 = vpop.f32.mrb[0].mxu0
  %v212 = vadd.f32 %v68, %v211
  %213 = vdwg.mxu0
  %214 = vmatprep.subr.bf16.mxu0 0
  %215 = vmatpush1.bf16.msra.mxu0 %v118
  %216 = vmatprep.subr.bf16.mxu0 0
  %217 = vmatpush1.bf16.msra.mxu0 %v121
  %218 = vmatprep.subr.bf16.mxu0 0
  %219 = vmatpush1.bf16.msra.mxu0 0
  %220 = vmatprep.subr.bf16.mxu0 0
  %221 = vmatpush1.bf16.msra.mxu0 0
  %222 = vmatprep.subr.bf16.mxu0 0
  %223 = vmatpush1.bf16.msra.mxu0 0
  %224 = vmatprep.subr.bf16.mxu0 0
  %225 = vmatpush1.bf16.msra.mxu0 0
  %226 = vmatprep.subr.bf16.mxu0 0
  %227 = vmatpush1.bf16.msra.mxu0 0
  %228 = vmatprep.subr.bf16.mxu0 0
  %229 = vmatpush1.bf16.msra.mxu0 0
  %230 = vmatprep.subr.bf16.mxu0 0
  %231 = vmatpush1.bf16.msra.mxu0 0
  %232 = vmatprep.subr.bf16.mxu0 0
  %233 = vmatpush1.bf16.msra.mxu0 0
  %234 = vmatprep.subr.bf16.mxu0 0
  %235 = vmatpush1.bf16.msra.mxu0 0
  %236 = vmatprep.subr.bf16.mxu0 0
  %237 = vmatpush1.bf16.msra.mxu0 0
  %238 = vmatprep.subr.bf16.mxu0 0
  %239 = vmatpush1.bf16.msra.mxu0 0
  %240 = vmatprep.subr.bf16.mxu0 0
  %241 = vmatpush1.bf16.msra.mxu0 0
  %242 = vmatprep.subr.bf16.mxu0 0
  %243 = vmatpush1.bf16.msra.mxu0 0
  %244 = vmatprep.subr.bf16.mxu0 0
  %245 = vmatpush1.bf16.msra.mxu0 0
  %246 = vmatprep.mubr.bf16.mxu0 0
  %247 = vmatmul.mubr.bf16.gmra.mrb[0].mxu0 %v130
  %v248 = vpop.f32.mrb[0].mxu0
  %v249 = vadd.f32 %v72, %v248
  %v250 = vpop.f32.mrb[0].mxu0
  %v251 = vpop.f32.mrb[0].mxu0
  %v252 = vadd.f32 %v72, %v251
  %v253 = vpop.f32.mrb[0].mxu0
  %254 = vmatprep.mubr.bf16.mxu0 0
  %255 = vmatmul.mubr.bf16.gmra.mrb[0].mxu0 %v133
  %v256 = vpop.f32.mrb[0].mxu0
  %v257 = vadd.f32 %v72, %v256
  %v258 = vpop.f32.mrb[0].mxu0
  %v259 = vpop.f32.mrb[0].mxu0
  %v260 = vadd.f32 %v72, %v259
  %v261 = vpop.f32.mrb[0].mxu0
  %262 = vmatprep.mubr.bf16.mxu0 0
  %263 = vmatmul.mubr.bf16.gmra.mrb[0].mxu0 %v136
  %v264 = vpop.f32.mrb[0].mxu0
  %v265 = vadd.f32 %v72, %v264
  %v266 = vpop.f32.mrb[0].mxu0
  %v267 = vpop.f32.mrb[0].mxu0
  %v268 = vadd.f32 %v72, %v267
  %v269 = vpop.f32.mrb[0].mxu0
  %270 = vmatprep.mubr.bf16.mxu0 0
  %271 = vmatmul.mubr.bf16.gmra.mrb[0].mxu0 %v139
  %v272 = vpop.f32.mrb[0].mxu0
  %v273 = vadd.f32 %v72, %v272
  %v274 = vpop.f32.mrb[0].mxu0
  %v275 = vpop.f32.mrb[0].mxu0
  %v276 = vadd.f32 %v72, %v275
  %v277 = vpop.f32.mrb[0].mxu0
  %278 = vdwg.mxu0
  %279 = vst [vmem:[#allocation2] sm:$0xff] %v176
  %280 = vst [vmem:[#allocation2 + $0x8] sm:$0xff] %v178
  %vm281 = vcmask 7168
  %282 = vst.msk [vmem:[#allocation2 + $0x10] sm:$0xff] %vm281, %v249
  %283 = vst [vmem:[#allocation2 + $0x18] sm:$0xff] %v180
  %284 = vst [vmem:[#allocation2 + $0x20] sm:$0xff] %v182
  %285 = vst.msk [vmem:[#allocation2 + $0x28] sm:$0xff] %vm281, %v252
  %286 = vst [vmem:[#allocation2 + $0x30] sm:$0xff] %v186
  %287 = vst [vmem:[#allocation2 + $0x38] sm:$0xff] %v188
  %288 = vst.msk [vmem:[#allocation2 + $0x40] sm:$0xff] %vm281, %v257
  %289 = vst [vmem:[#allocation2 + $0x48] sm:$0xff] %v190
  %290 = vst [vmem:[#allocation2 + $0x50] sm:$0xff] %v192
  %291 = vst.msk [vmem:[#allocation2 + $0x58] sm:$0xff] %vm281, %v260
  %292 = vst [vmem:[#allocation2 + $0x60] sm:$0xff] %v196
  %293 = vst [vmem:[#allocation2 + $0x68] sm:$0xff] %v198
  %294 = vst.msk [vmem:[#allocation2 + $0x70] sm:$0xff] %vm281, %v265
  %295 = vst [vmem:[#allocation2 + $0x78] sm:$0xff] %v200
  %296 = vst [vmem:[#allocation2 + $0x80] sm:$0xff] %v202
  %297 = vst.msk [vmem:[#allocation2 + $0x88] sm:$0xff] %vm281, %v268
  %298 = vst [vmem:[#allocation2 + $0x90] sm:$0xff] %v206
  %299 = vst [vmem:[#allocation2 + $0x98] sm:$0xff] %v208
  %300 = vst.msk [vmem:[#allocation2 + $0xa0] sm:$0xff] %vm281, %v273
  %301 = vst [vmem:[#allocation2 + $0xa8] sm:$0xff] %v210
  %302 = vst [vmem:[#allocation2 + $0xb0] sm:$0xff] %v212
  %303 = vst.msk [vmem:[#allocation2 + $0xb8] sm:$0xff] %vm281, %v276
  %v304 = vld [vmem:[%s1] sm:$0xff]
  %v305 = vld [vmem:[%s1 + $0x8] sm:$0xff]
  %v306 = vld [vmem:[%s1 + $0x10] sm:$0xff]
  %v307 = vld [vmem:[%s1 + $0x18] sm:$0xff]
  %v308 = vld [vmem:[%s1 + $0x20] sm:$0xff]
  %v309 = vld [vmem:[%s1 + $0x28] sm:$0xff]
  %v310 = vld [vmem:[%s1 + $0x30] sm:$0xff]
  %v311 = vld [vmem:[%s1 + $0x38] sm:$0xff]
  %v312 = vadd.f32 %v249, %v304
  %v313 = vadd.f32 %v252, %v305
  %v314 = vadd.f32 %v257, %v306
  %v315 = vadd.f32 %v260, %v307
  %v316 = vadd.f32 %v265, %v308
  %v317 = vadd.f32 %v268, %v309
  %v318 = vadd.f32 %v273, %v310
  %v319 = vadd.f32 %v276, %v311
  %320 = vst.msk [vmem:[#allocation2 + $0x10] sm:$0xff] %vm281, %v312
  %321 = vst.msk [vmem:[#allocation2 + $0x28] sm:$0xff] %vm281, %v313
  %322 = vst.msk [vmem:[#allocation2 + $0x40] sm:$0xff] %vm281, %v314
  %323 = vst.msk [vmem:[#allocation2 + $0x58] sm:$0xff] %vm281, %v315
  %324 = vst.msk [vmem:[#allocation2 + $0x70] sm:$0xff] %vm281, %v316
  %325 = vst.msk [vmem:[#allocation2 + $0x88] sm:$0xff] %vm281, %v317
  %326 = vst.msk [vmem:[#allocation2 + $0xa0] sm:$0xff] %vm281, %v318
  %327 = vst.msk [vmem:[#allocation2 + $0xb8] sm:$0xff] %vm281, %v319
  %v328 = vld [vmem:[%s4] sm:$0xf]
  %v329 = vld [vmem:[%s4 + $0x4] sm:$0xf]
  %v330 = vld [vmem:[%s4 + $0x8] sm:$0xf]
  %v331 = vld [vmem:[%s4 + $0xc] sm:$0xf]
  %v332 = vld [vmem:[%s5] sm:$0x3]
  %v333 = vld [vmem:[%s6] sm:$0xf]
  %v334 = vld [vmem:[%s6 + $0x4] sm:$0xf]
  %v335 = vld [vmem:[%s6 + $0x8] sm:$0xf]
  %v336 = vld [vmem:[%s6 + $0xc] sm:$0xf]
  %v337 = vld [vmem:[%s6 + $0x10] sm:$0xf]
  %v338 = vld [vmem:[%s6 + $0x14] sm:$0xf]
  %v339 = vld [vmem:[%s6 + $0x18] sm:$0xf]
  %v340 = vld [vmem:[%s6 + $0x1c] sm:$0xf]
  %v341 = vlaneseq
  %v342 = vand.u32 %v341, 127
  %vm343 = vcmp.lt.s32.totalorder %v342, 4
  %v344 = vld [vmem:[#allocation3] sm:$0xff]
  %v345 = vld [vmem:[#allocation4] sm:$0xff]
  %v346 = vld [vmem:[#allocation5] sm:$0xff]
  %v347 = vld [vmem:[#allocation6] sm:$0xff]
  %s348 = smul.u32 0, 3
  %s349 = smul.addr %s348, 8
  %s350 = scalar_lea.vmem [#allocation2], %s349
  %v351 = vld [vmem:[%s350] sm:$0xff]
  %v352 = vld [vmem:[%s350 + $0x8] sm:$0xff]
  %v353 = vld [vmem:[%s350 + $0x10] sm:$0xff]
  %v354 = vpack.c.bf16 %v344, %v344
  %v359 = vunpack.c.l.b16 %v328
  %v360 = vunpack.c.l.b16 %v329
  %v361 = vunpack.c.l.b16 %v330
  %v362 = vunpack.c.l.b16 %v331
  %v363 = vpack.c.b16 %v360, %v359
  %v364 = vpack.c.b16 %v362, %v361
  %v368 = vsel %vm128, %v354, 0
  %370 = vmatprep.subr.bf16.mxu0 0
  %371 = vmatpush1.bf16.msra.mxu0 %v363
  %372 = vmatprep.subr.bf16.mxu0 0
  %373 = vmatpush1.bf16.msra.mxu0 %v364
  %374 = vmatprep.subr.bf16.mxu0 0
  %375 = vmatpush1.bf16.msra.mxu0 0
  %376 = vmatprep.subr.bf16.mxu0 0
  %377 = vmatpush1.bf16.msra.mxu0 0
  %378 = vmatprep.subr.bf16.mxu0 0
  %379 = vmatpush1.bf16.msra.mxu0 0
  %380 = vmatprep.subr.bf16.mxu0 0
  %381 = vmatpush1.bf16.msra.mxu0 0
  %382 = vmatprep.subr.bf16.mxu0 0
  %383 = vmatpush1.bf16.msra.mxu0 0
  %384 = vmatprep.subr.bf16.mxu0 0
  %385 = vmatpush1.bf16.msra.mxu0 0
  %386 = vmatprep.subr.bf16.mxu0 0
  %387 = vmatpush1.bf16.msra.mxu0 0
  %388 = vmatprep.subr.bf16.mxu0 0
  %389 = vmatpush1.bf16.msra.mxu0 0
  %390 = vmatprep.subr.bf16.mxu0 0
  %391 = vmatpush1.bf16.msra.mxu0 0
  %392 = vmatprep.subr.bf16.mxu0 0
  %393 = vmatpush1.bf16.msra.mxu0 0
  %394 = vmatprep.subr.bf16.mxu0 0
  %395 = vmatpush1.bf16.msra.mxu0 0
  %396 = vmatprep.subr.bf16.mxu0 0
  %397 = vmatpush1.bf16.msra.mxu0 0
  %398 = vmatprep.subr.bf16.mxu0 0
  %399 = vmatpush1.bf16.msra.mxu0 0
  %400 = vmatprep.subr.bf16.mxu0 0
  %401 = vmatpush1.bf16.msra.mxu0 0
  %402 = vmatprep.mubr.bf16.mxu0 0
  %403 = vmatmul.mubr.bf16.gmra.mrb[0].mxu0 %v368
  %v404 = vpop.f32.mrb[0].mxu0
  %v405 = vadd.f32 0.0, %v404
  %v406 = vpop.f32.mrb[0].mxu0
  %v407 = vpop.f32.mrb[0].mxu0
  %v408 = vpop.f32.mrb[0].mxu0
  %409 = vdwg.mxu0
  %v410 = vadd.f32 %v351, %v405
  %v411 = vpack.c.bf16 %v346, %v346
  %vm412 = vcmask 31744
  %v414 = vsel %vm412, %v411, 0
  %vm416 = vcmask 1041408
  %v418 = vsel %vm416, %v332, 0
  %420 = vmatprep.subr.bf16.mxu0 0
  %421 = vmatpush1.bf16.msra.mxu0 %v418
  %422 = vmatprep.subr.bf16.mxu0 0
  %423 = vmatpush1.bf16.msra.mxu0 0
  %424 = vmatprep.subr.bf16.mxu0 0
  %425 = vmatpush1.bf16.msra.mxu0 0
  %426 = vmatprep.subr.bf16.mxu0 0
  %427 = vmatpush1.bf16.msra.mxu0 0
  %428 = vmatprep.subr.bf16.mxu0 0
  %429 = vmatpush1.bf16.msra.mxu0 0
  %430 = vmatprep.subr.bf16.mxu0 0
  %431 = vmatpush1.bf16.msra.mxu0 0
  %432 = vmatprep.subr.bf16.mxu0 0
  %433 = vmatpush1.bf16.msra.mxu0 0
  %434 = vmatprep.subr.bf16.mxu0 0
  %435 = vmatpush1.bf16.msra.mxu0 0
  %436 = vmatprep.subr.bf16.mxu0 0
  %437 = vmatpush1.bf16.msra.mxu0 0
  %438 = vmatprep.subr.bf16.mxu0 0
  %439 = vmatpush1.bf16.msra.mxu0 0
  %440 = vmatprep.subr.bf16.mxu0 0
  %441 = vmatpush1.bf16.msra.mxu0 0
  %442 = vmatprep.subr.bf16.mxu0 0
  %443 = vmatpush1.bf16.msra.mxu0 0
  %444 = vmatprep.subr.bf16.mxu0 0
  %445 = vmatpush1.bf16.msra.mxu0 0
  %446 = vmatprep.subr.bf16.mxu0 0
  %447 = vmatpush1.bf16.msra.mxu0 0
  %448 = vmatprep.subr.bf16.mxu0 0
  %449 = vmatpush1.bf16.msra.mxu0 0
  %450 = vmatprep.subr.bf16.mxu0 0
  %451 = vmatpush1.bf16.msra.mxu0 0
  %452 = vmatprep.mubr.bf16.mxu0 0
  %453 = vmatmul.mubr.bf16.gmra.mrb[0].mxu0 %v414
  %v454 = vpop.f32.mrb[0].mxu0
  %v455 = vadd.f32 0.0, %v454
  %v456 = vpop.f32.mrb[0].mxu0
  %v457 = vpop.f32.mrb[0].mxu0
  %v458 = vpop.f32.mrb[0].mxu0
  %459 = vdwg.mxu0
  %v460 = vadd.f32 %v352, %v455
  %v461 = vxor.u32 %v410, 2147483648
  %v462 = vmul.f32 %v461, 1.442695
  %v463 = vpow.pop %v462
  %v464 = vadd.f32 %v463, 1.0
  %v465 = vrcp.pop %v464
  %v466 = vmul.f32 1.0, %v465
  %v467 = vtanh.pop %v410
  %469 = vrot.lane.b32.xlu0 %v345, 32
  %v470 = vpop.permute.xlu0 %469
  %v472 = vmul.f32 %v466, %v470
  %474 = vrot.lane.b32.xlu0 %v467, 64
  %v475 = vpop.permute.xlu0 %474
  %v477 = vmul.f32 %v466, %v475
  %479 = vrot.lane.b32.xlu0 %v477, 32
  %v480 = vpop.permute.xlu0 %479
  %v482 = vadd.f32 %v472, %v480
  %v483 = vtanh.pop %v482
  %485 = vrot.lane.b32.xlu0 %v483, 64
  %v486 = vpop.permute.xlu0 %485
  %v488 = vmul.f32 %v466, %v486
  %v489 = vxor.u32 %v460, 2147483648
  %v490 = vmul.f32 %v489, 1.442695
  %v491 = vpow.pop %v490
  %v492 = vadd.f32 %v491, 1.0
  %v493 = vrcp.pop %v492
  %v494 = vmul.f32 1.0, %v493
  %v495 = vtanh.pop %v460
  %497 = vrot.lane.b32.xlu0 %v347, 4
  %v498 = vpop.permute.xlu0 %497
  %v500 = vmul.f32 %v494, %v498
  %502 = vrot.lane.b32.xlu0 %v495, 120
  %v503 = vpop.permute.xlu0 %502
  %v505 = vmul.f32 %v494, %v503
  %507 = vrot.lane.b32.xlu0 %v505, 4
  %v508 = vpop.permute.xlu0 %507
  %v510 = vadd.f32 %v500, %v508
  %v511 = vtanh.pop %v510
  %513 = vrot.lane.b32.xlu0 %v511, 8
  %v514 = vpop.permute.xlu0 %513
  %v516 = vmul.f32 %v494, %v514
  %518 = vrot.lane.b32.xlu0 %v488, 32
  %v519 = vpop.permute.xlu0 %518
  %v521 = vsel %vm128, %v519, %v482
  %v522 = vpack.c.bf16 %v521, %v521
  %v531 = vunpack.c.l.b16 %v333
  %v532 = vunpack.c.l.b16 %v334
  %v533 = vunpack.c.l.b16 %v335
  %v534 = vunpack.c.l.b16 %v336
  %v535 = vunpack.c.l.b16 %v337
  %v536 = vunpack.c.l.b16 %v338
  %v537 = vunpack.c.l.b16 %v339
  %v538 = vunpack.c.l.b16 %v340
  %v539 = vpack.c.b16 %v532, %v531
  %v540 = vpack.c.b16 %v534, %v533
  %v541 = vpack.c.b16 %v536, %v535
  %v542 = vpack.c.b16 %v538, %v537
  %vm547 = vcmask 523264
  %v549 = vsel %vm547, %v522, 0
  %551 = vmatprep.subr.bf16.mxu0 0
  %552 = vmatpush1.bf16.msra.mxu0 %v539
  %553 = vmatprep.subr.bf16.mxu0 0
  %554 = vmatpush1.bf16.msra.mxu0 %v540
  %555 = vmatprep.subr.bf16.mxu0 0
  %556 = vmatpush1.bf16.msra.mxu0 %v541
  %557 = vmatprep.subr.bf16.mxu0 0
  %558 = vmatpush1.bf16.msra.mxu0 %v542
  %559 = vmatprep.subr.bf16.mxu0 0
  %560 = vmatpush1.bf16.msra.mxu0 0
  %561 = vmatprep.subr.bf16.mxu0 0
  %562 = vmatpush1.bf16.msra.mxu0 0
  %563 = vmatprep.subr.bf16.mxu0 0
  %564 = vmatpush1.bf16.msra.mxu0 0
  %565 = vmatprep.subr.bf16.mxu0 0
  %566 = vmatpush1.bf16.msra.mxu0 0
  %567 = vmatprep.subr.bf16.mxu0 0
  %568 = vmatpush1.bf16.msra.mxu0 0
  %569 = vmatprep.subr.bf16.mxu0 0
  %570 = vmatpush1.bf16.msra.mxu0 0
  %571 = vmatprep.subr.bf16.mxu0 0
  %572 = vmatpush1.bf16.msra.mxu0 0
  %573 = vmatprep.subr.bf16.mxu0 0
  %574 = vmatpush1.bf16.msra.mxu0 0
  %575 = vmatprep.subr.bf16.mxu0 0
  %576 = vmatpush1.bf16.msra.mxu0 0
  %577 = vmatprep.subr.bf16.mxu0 0
  %578 = vmatpush1.bf16.msra.mxu0 0
  %579 = vmatprep.subr.bf16.mxu0 0
  %580 = vmatpush1.bf16.msra.mxu0 0
  %581 = vmatprep.subr.bf16.mxu0 0
  %582 = vmatpush1.bf16.msra.mxu0 0
  %583 = vmatprep.mubr.bf16.mxu0 0
  %584 = vmatmul.mubr.bf16.gmra.mrb[0].mxu0 %v549
  %v585 = vpop.f32.mrb[0].mxu0
  %v586 = vadd.f32 0.0, %v585
  %v587 = vpop.f32.mrb[0].mxu0
  %v588 = vpop.f32.mrb[0].mxu0
  %v589 = vpop.f32.mrb[0].mxu0
  %590 = vdwg.mxu0
  %v591 = vadd.f32 %v353, %v586
  %v592 = vxor.u32 %v591, 2147483648
  %v593 = vmul.f32 %v592, 1.442695
  %v594 = vpow.pop %v593
  %v595 = vadd.f32 %v594, 1.0
  %v596 = vrcp.pop %v595
  %v597 = vmul.f32 1.0, %v596
  %v598 = vsub.f32 1.0, %v597
  %600 = vrot.lane.b32.xlu0 %v516, 116
  %v601 = vpop.permute.xlu0 %600
  %v603 = vsel %vm412, %v601, 0.0
  %605 = vrot.lane.b32.xlu0 %v510, 124
  %v606 = vpop.permute.xlu0 %605
  %v608 = vsel %vm412, %v606, 0.0
  %v609 = vsel %vm343, %v603, %v344
  %611 = vrot.lane.b32.xlu0 %v482, 96
  %v612 = vpop.permute.xlu0 %611
  %v614 = vsel %vm343, %v608, %v612
  %616 = vset.pattern.permute.xlu0 0
  %617 = vperm.xlu0 %616, %v598
  %v618 = vpop.permute.xlu0 %617
  %v620 = vmul.f32 %v618, %v488
  %622 = vset.pattern.permute.xlu0 0
  %623 = vperm.xlu0 %622, %v597
  %v624 = vpop.permute.xlu0 %623
  %v626 = vmul.f32 %v624, %v609
  %628 = vrot.lane.b32.xlu0 %v626, 96
  %v629 = vpop.permute.xlu0 %628
  %v631 = vadd.f32 %v620, %v629
  %v632 = vmul.f32 %v618, %v482
  %v633 = vmul.f32 %v624, %v614
  %635 = vrot.lane.b32.xlu0 %v633, 32
  %v636 = vpop.permute.xlu0 %635
  %v638 = vadd.f32 %v632, %v636
  %s639 = smul.u32 1, 3
  %s640 = smul.addr %s639, 8
  %s641 = scalar_lea.vmem [#allocation2], %s640
  %v642 = vld [vmem:[%s641] sm:$0xff]
  %v643 = vld [vmem:[%s641 + $0x8] sm:$0xff]
  %v644 = vld [vmem:[%s641 + $0x10] sm:$0xff]
  %v645 = vpack.c.bf16 %v631, %v631
  %647 = vrot.lane.b32.xlu0 %v645, 32
  %v648 = vpop.permute.xlu0 %647
  %v650 = vsel %vm128, %v648, 0
  %652 = vmatprep.subr.bf16.mxu0 0
  %653 = vmatpush1.bf16.msra.mxu0 %v363
  %654 = vmatprep.subr.bf16.mxu0 0
  %655 = vmatpush1.bf16.msra.mxu0 %v364
  %656 = vmatprep.subr.bf16.mxu0 0
  %657 = vmatpush1.bf16.msra.mxu0 0
  %658 = vmatprep.subr.bf16.mxu0 0
  %659 = vmatpush1.bf16.msra.mxu0 0
  %660 = vmatprep.subr.bf16.mxu0 0
  %661 = vmatpush1.bf16.msra.mxu0 0
  %662 = vmatprep.subr.bf16.mxu0 0
  %663 = vmatpush1.bf16.msra.mxu0 0
  %664 = vmatprep.subr.bf16.mxu0 0
  %665 = vmatpush1.bf16.msra.mxu0 0
  %666 = vmatprep.subr.bf16.mxu0 0
  %667 = vmatpush1.bf16.msra.mxu0 0
  %668 = vmatprep.subr.bf16.mxu0 0
  %669 = vmatpush1.bf16.msra.mxu0 0
  %670 = vmatprep.subr.bf16.mxu0 0
  %671 = vmatpush1.bf16.msra.mxu0 0
  %672 = vmatprep.subr.bf16.mxu0 0
  %673 = vmatpush1.bf16.msra.mxu0 0
  %674 = vmatprep.subr.bf16.mxu0 0
  %675 = vmatpush1.bf16.msra.mxu0 0
  %676 = vmatprep.subr.bf16.mxu0 0
  %677 = vmatpush1.bf16.msra.mxu0 0
  %678 = vmatprep.subr.bf16.mxu0 0
  %679 = vmatpush1.bf16.msra.mxu0 0
  %680 = vmatprep.subr.bf16.mxu0 0
  %681 = vmatpush1.bf16.msra.mxu0 0
  %682 = vmatprep.subr.bf16.mxu0 0
  %683 = vmatpush1.bf16.msra.mxu0 0
  %684 = vmatprep.mubr.bf16.mxu0 0
  %685 = vmatmul.mubr.bf16.gmra.mrb[0].mxu0 %v650
  %v686 = vpop.f32.mrb[0].mxu0
  %v687 = vadd.f32 0.0, %v686
  %v688 = vpop.f32.mrb[0].mxu0
  %v689 = vpop.f32.mrb[0].mxu0
  %v690 = vpop.f32.mrb[0].mxu0
  %691 = vdwg.mxu0
  %v692 = vadd.f32 %v642, %v687
  %v693 = vpack.c.bf16 %v516, %v516
  %695 = vrot.lane.b32.xlu0 %v693, 116
  %v696 = vpop.permute.xlu0 %695
  %v698 = vsel %vm412, %v696, 0
  %700 = vmatprep.subr.bf16.mxu0 0
  %701 = vmatpush1.bf16.msra.mxu0 %v418
  %702 = vmatprep.subr.bf16.mxu0 0
  %703 = vmatpush1.bf16.msra.mxu0 0
  %704 = vmatprep.subr.bf16.mxu0 0
  %705 = vmatpush1.bf16.msra.mxu0 0
  %706 = vmatprep.subr.bf16.mxu0 0
  %707 = vmatpush1.bf16.msra.mxu0 0
  %708 = vmatprep.subr.bf16.mxu0 0
  %709 = vmatpush1.bf16.msra.mxu0 0
  %710 = vmatprep.subr.bf16.mxu0 0
  %711 = vmatpush1.bf16.msra.mxu0 0
  %712 = vmatprep.subr.bf16.mxu0 0
  %713 = vmatpush1.bf16.msra.mxu0 0
  %714 = vmatprep.subr.bf16.mxu0 0
  %715 = vmatpush1.bf16.msra.mxu0 0
  %716 = vmatprep.subr.bf16.mxu0 0
  %717 = vmatpush1.bf16.msra.mxu0 0
  %718 = vmatprep.subr.bf16.mxu0 0
  %719 = vmatpush1.bf16.msra.mxu0 0
  %720 = vmatprep.subr.bf16.mxu0 0
  %721 = vmatpush1.bf16.msra.mxu0 0
  %722 = vmatprep.subr.bf16.mxu0 0
  %723 = vmatpush1.bf16.msra.mxu0 0
  %724 = vmatprep.subr.bf16.mxu0 0
  %725 = vmatpush1.bf16.msra.mxu0 0
  %726 = vmatprep.subr.bf16.mxu0 0
  %727 = vmatpush1.bf16.msra.mxu0 0
  %728 = vmatprep.subr.bf16.mxu0 0
  %729 = vmatpush1.bf16.msra.mxu0 0
  %730 = vmatprep.subr.bf16.mxu0 0
  %731 = vmatpush1.bf16.msra.mxu0 0
  %732 = vmatprep.mubr.bf16.mxu0 0
  %733 = vmatmul.mubr.bf16.gmra.mrb[0].mxu0 %v698
  %v734 = vpop.f32.mrb[0].mxu0
  %v735 = vadd.f32 0.0, %v734
  %v736 = vpop.f32.mrb[0].mxu0
  %v737 = vpop.f32.mrb[0].mxu0
  %v738 = vpop.f32.mrb[0].mxu0
  %739 = vdwg.mxu0
  %v740 = vadd.f32 %v643, %v735
  %v741 = vxor.u32 %v692, 2147483648
  %v742 = vmul.f32 %v741, 1.442695
  %v743 = vpow.pop %v742
  %v744 = vadd.f32 %v743, 1.0
  %v745 = vrcp.pop %v744
  %v746 = vmul.f32 1.0, %v745
  %v747 = vtanh.pop %v692
  %v748 = vmul.f32 %v746, %v638
  %750 = vrot.lane.b32.xlu0 %v747, 64
  %v751 = vpop.permute.xlu0 %750
  %v753 = vmul.f32 %v746, %v751
  %755 = vrot.lane.b32.xlu0 %v753, 32
  %v756 = vpop.permute.xlu0 %755
  %v758 = vadd.f32 %v748, %v756
  %v759 = vtanh.pop %v758
  %761 = vrot.lane.b32.xlu0 %v759, 64
  %v762 = vpop.permute.xlu0 %761
  %v764 = vmul.f32 %v746, %v762
  %v765 = vxor.u32 %v740, 2147483648
  %v766 = vmul.f32 %v765, 1.442695
  %v767 = vpow.pop %v766
  %v768 = vadd.f32 %v767, 1.0
  %v769 = vrcp.pop %v768
  %v770 = vmul.f32 1.0, %v769
  %v771 = vtanh.pop %v740
  %v772 = vmul.f32 %v770, %v510
  %774 = vrot.lane.b32.xlu0 %v771, 120
  %v775 = vpop.permute.xlu0 %774
  %v777 = vmul.f32 %v770, %v775
  %779 = vrot.lane.b32.xlu0 %v777, 4
  %v780 = vpop.permute.xlu0 %779
  %v782 = vadd.f32 %v772, %v780
  %v783 = vtanh.pop %v782
  %785 = vrot.lane.b32.xlu0 %v783, 8
  %v786 = vpop.permute.xlu0 %785
  %v788 = vmul.f32 %v770, %v786
  %790 = vrot.lane.b32.xlu0 %v764, 32
  %v791 = vpop.permute.xlu0 %790
  %v793 = vsel %vm128, %v791, %v758
  %v794 = vpack.c.bf16 %v793, %v793
  %v796 = vsel %vm547, %v794, 0
  %798 = vmatprep.subr.bf16.mxu0 0
  %799 = vmatpush1.bf16.msra.mxu0 %v539
  %800 = vmatprep.subr.bf16.mxu0 0
  %801 = vmatpush1.bf16.msra.mxu0 %v540
  %802 = vmatprep.subr.bf16.mxu0 0
  %803 = vmatpush1.bf16.msra.mxu0 %v541
  %804 = vmatprep.subr.bf16.mxu0 0
  %805 = vmatpush1.bf16.msra.mxu0 %v542
  %806 = vmatprep.subr.bf16.mxu0 0
  %807 = vmatpush1.bf16.msra.mxu0 0
  %808 = vmatprep.subr.bf16.mxu0 0
  %809 = vmatpush1.bf16.msra.mxu0 0
  %810 = vmatprep.subr.bf16.mxu0 0
  %811 = vmatpush1.bf16.msra.mxu0 0
  %812 = vmatprep.subr.bf16.mxu0 0
  %813 = vmatpush1.bf16.msra.mxu0 0
  %814 = vmatprep.subr.bf16.mxu0 0
  %815 = vmatpush1.bf16.msra.mxu0 0
  %816 = vmatprep.subr.bf16.mxu0 0
  %817 = vmatpush1.bf16.msra.mxu0 0
  %818 = vmatprep.subr.bf16.mxu0 0
  %819 = vmatpush1.bf16.msra.mxu0 0
  %820 = vmatprep.subr.bf16.mxu0 0
  %821 = vmatpush1.bf16.msra.mxu0 0
  %822 = vmatprep.subr.bf16.mxu0 0
  %823 = vmatpush1.bf16.msra.mxu0 0
  %824 = vmatprep.subr.bf16.mxu0 0
  %825 = vmatpush1.bf16.msra.mxu0 0
  %826 = vmatprep.subr.bf16.mxu0 0
  %827 = vmatpush1.bf16.msra.mxu0 0
  %828 = vmatprep.subr.bf16.mxu0 0
  %829 = vmatpush1.bf16.msra.mxu0 0
  %830 = vmatprep.mubr.bf16.mxu0 0
  %831 = vmatmul.mubr.bf16.gmra.mrb[0].mxu0 %v796
  %v832 = vpop.f32.mrb[0].mxu0
  %v833 = vadd.f32 0.0, %v832
  %v834 = vpop.f32.mrb[0].mxu0
  %v835 = vpop.f32.mrb[0].mxu0
  %v836 = vpop.f32.mrb[0].mxu0
  %837 = vdwg.mxu0
  %v838 = vadd.f32 %v644, %v833
  %v839 = vxor.u32 %v838, 2147483648
  %v840 = vmul.f32 %v839, 1.442695
  %v841 = vpow.pop %v840
  %v842 = vadd.f32 %v841, 1.0
  %v843 = vrcp.pop %v842
  %v844 = vmul.f32 1.0, %v843
  %v845 = vsub.f32 1.0, %v844
  %847 = vrot.lane.b32.xlu0 %v788, 116
  %v848 = vpop.permute.xlu0 %847
  %v850 = vsel %vm412, %v848, 0.0
  %852 = vrot.lane.b32.xlu0 %v782, 124
  %v853 = vpop.permute.xlu0 %852
  %v855 = vsel %vm412, %v853, 0.0
  %857 = vrot.lane.b32.xlu0 %v631, 32
  %v858 = vpop.permute.xlu0 %857
  %v860 = vsel %vm343, %v850, %v858
  %862 = vrot.lane.b32.xlu0 %v758, 96
  %v863 = vpop.permute.xlu0 %862
  %v865 = vsel %vm343, %v855, %v863
  %867 = vset.pattern.permute.xlu0 0
  %868 = vperm.xlu0 %867, %v845
  %v869 = vpop.permute.xlu0 %868
  %v871 = vmul.f32 %v869, %v764
  %873 = vset.pattern.permute.xlu0 0
  %874 = vperm.xlu0 %873, %v844
  %v875 = vpop.permute.xlu0 %874
  %v877 = vmul.f32 %v875, %v860
  %879 = vrot.lane.b32.xlu0 %v877, 96
  %v880 = vpop.permute.xlu0 %879
  %v882 = vadd.f32 %v871, %v880
  %v883 = vmul.f32 %v869, %v758
  %v884 = vmul.f32 %v875, %v865
  %886 = vrot.lane.b32.xlu0 %v884, 32
  %v887 = vpop.permute.xlu0 %886
  %v889 = vadd.f32 %v883, %v887
  %s890 = smul.u32 2, 3
  %s891 = smul.addr %s890, 8
  %s892 = scalar_lea.vmem [#allocation2], %s891
  %v893 = vld [vmem:[%s892] sm:$0xff]
  %v894 = vld [vmem:[%s892 + $0x8] sm:$0xff]
  %v895 = vld [vmem:[%s892 + $0x10] sm:$0xff]
  %v896 = vpack.c.bf16 %v882, %v882
  %898 = vrot.lane.b32.xlu0 %v896, 32
  %v899 = vpop.permute.xlu0 %898
  %v901 = vsel %vm128, %v899, 0
  %903 = vmatprep.subr.bf16.mxu0 0
  %904 = vmatpush1.bf16.msra.mxu0 %v363
  %905 = vmatprep.subr.bf16.mxu0 0
  %906 = vmatpush1.bf16.msra.mxu0 %v364
  %907 = vmatprep.subr.bf16.mxu0 0
  %908 = vmatpush1.bf16.msra.mxu0 0
  %909 = vmatprep.subr.bf16.mxu0 0
  %910 = vmatpush1.bf16.msra.mxu0 0
  %911 = vmatprep.subr.bf16.mxu0 0
  %912 = vmatpush1.bf16.msra.mxu0 0
  %913 = vmatprep.subr.bf16.mxu0 0
  %914 = vmatpush1.bf16.msra.mxu0 0
  %915 = vmatprep.subr.bf16.mxu0 0
  %916 = vmatpush1.bf16.msra.mxu0 0
  %917 = vmatprep.subr.bf16.mxu0 0
  %918 = vmatpush1.bf16.msra.mxu0 0
  %919 = vmatprep.subr.bf16.mxu0 0
  %920 = vmatpush1.bf16.msra.mxu0 0
  %921 = vmatprep.subr.bf16.mxu0 0
  %922 = vmatpush1.bf16.msra.mxu0 0
  %923 = vmatprep.subr.bf16.mxu0 0
  %924 = vmatpush1.bf16.msra.mxu0 0
  %925 = vmatprep.subr.bf16.mxu0 0
  %926 = vmatpush1.bf16.msra.mxu0 0
  %927 = vmatprep.subr.bf16.mxu0 0
  %928 = vmatpush1.bf16.msra.mxu0 0
  %929 = vmatprep.subr.bf16.mxu0 0
  %930 = vmatpush1.bf16.msra.mxu0 0
  %931 = vmatprep.subr.bf16.mxu0 0
  %932 = vmatpush1.bf16.msra.mxu0 0
  %933 = vmatprep.subr.bf16.mxu0 0
  %934 = vmatpush1.bf16.msra.mxu0 0
  %935 = vmatprep.mubr.bf16.mxu0 0
  %936 = vmatmul.mubr.bf16.gmra.mrb[0].mxu0 %v901
  %v937 = vpop.f32.mrb[0].mxu0
  %v938 = vadd.f32 0.0, %v937
  %v939 = vpop.f32.mrb[0].mxu0
  %v940 = vpop.f32.mrb[0].mxu0
  %v941 = vpop.f32.mrb[0].mxu0
  %942 = vdwg.mxu0
  %v943 = vadd.f32 %v893, %v938
  %v944 = vpack.c.bf16 %v788, %v788
  %946 = vrot.lane.b32.xlu0 %v944, 116
  %v947 = vpop.permute.xlu0 %946
  %v949 = vsel %vm412, %v947, 0
  %951 = vmatprep.subr.bf16.mxu0 0
  %952 = vmatpush1.bf16.msra.mxu0 %v418
  %953 = vmatprep.subr.bf16.mxu0 0
  %954 = vmatpush1.bf16.msra.mxu0 0
  %955 = vmatprep.subr.bf16.mxu0 0
  %956 = vmatpush1.bf16.msra.mxu0 0
  %957 = vmatprep.subr.bf16.mxu0 0
  %958 = vmatpush1.bf16.msra.mxu0 0
  %959 = vmatprep.subr.bf16.mxu0 0
  %960 = vmatpush1.bf16.msra.mxu0 0
  %961 = vmatprep.subr.bf16.mxu0 0
  %962 = vmatpush1.bf16.msra.mxu0 0
  %963 = vmatprep.subr.bf16.mxu0 0
  %964 = vmatpush1.bf16.msra.mxu0 0
  %965 = vmatprep.subr.bf16.mxu0 0
  %966 = vmatpush1.bf16.msra.mxu0 0
  %967 = vmatprep.subr.bf16.mxu0 0
  %968 = vmatpush1.bf16.msra.mxu0 0
  %969 = vmatprep.subr.bf16.mxu0 0
  %970 = vmatpush1.bf16.msra.mxu0 0
  %971 = vmatprep.subr.bf16.mxu0 0
  %972 = vmatpush1.bf16.msra.mxu0 0
  %973 = vmatprep.subr.bf16.mxu0 0
  %974 = vmatpush1.bf16.msra.mxu0 0
  %975 = vmatprep.subr.bf16.mxu0 0
  %976 = vmatpush1.bf16.msra.mxu0 0
  %977 = vmatprep.subr.bf16.mxu0 0
  %978 = vmatpush1.bf16.msra.mxu0 0
  %979 = vmatprep.subr.bf16.mxu0 0
  %980 = vmatpush1.bf16.msra.mxu0 0
  %981 = vmatprep.subr.bf16.mxu0 0
  %982 = vmatpush1.bf16.msra.mxu0 0
  %983 = vmatprep.mubr.bf16.mxu0 0
  %984 = vmatmul.mubr.bf16.gmra.mrb[0].mxu0 %v949
  %v985 = vpop.f32.mrb[0].mxu0
  %v986 = vadd.f32 0.0, %v985
  %v987 = vpop.f32.mrb[0].mxu0
  %v988 = vpop.f32.mrb[0].mxu0
  %v989 = vpop.f32.mrb[0].mxu0
  %990 = vdwg.mxu0
  %v991 = vadd.f32 %v894, %v986
  %v992 = vxor.u32 %v943, 2147483648
  %v993 = vmul.f32 %v992, 1.442695
  %v994 = vpow.pop %v993
  %v995 = vadd.f32 %v994, 1.0
  %v996 = vrcp.pop %v995
  %v997 = vmul.f32 1.0, %v996
  %v998 = vtanh.pop %v943
  %v999 = vmul.f32 %v997, %v889
  %1001 = vrot.lane.b32.xlu0 %v998, 64
  %v1002 = vpop.permute.xlu0 %1001
  %v1004 = vmul.f32 %v997, %v1002
  %1006 = vrot.lane.b32.xlu0 %v1004, 32
  %v1007 = vpop.permute.xlu0 %1006
  %v1009 = vadd.f32 %v999, %v1007
  %v1010 = vtanh.pop %v1009
  %1012 = vrot.lane.b32.xlu0 %v1010, 64
  %v1013 = vpop.permute.xlu0 %1012
  %v1015 = vmul.f32 %v997, %v1013
  %v1016 = vxor.u32 %v991, 2147483648
  %v1017 = vmul.f32 %v1016, 1.442695
  %v1018 = vpow.pop %v1017
  %v1019 = vadd.f32 %v1018, 1.0
  %v1020 = vrcp.pop %v1019
  %v1021 = vmul.f32 1.0, %v1020
  %v1022 = vtanh.pop %v991
  %v1023 = vmul.f32 %v1021, %v782
  %1025 = vrot.lane.b32.xlu0 %v1022, 120
  %v1026 = vpop.permute.xlu0 %1025
  %v1028 = vmul.f32 %v1021, %v1026
  %1030 = vrot.lane.b32.xlu0 %v1028, 4
  %v1031 = vpop.permute.xlu0 %1030
  %v1033 = vadd.f32 %v1023, %v1031
  %v1034 = vtanh.pop %v1033
  %1036 = vrot.lane.b32.xlu0 %v1034, 8
  %v1037 = vpop.permute.xlu0 %1036
  %v1039 = vmul.f32 %v1021, %v1037
  %1041 = vrot.lane.b32.xlu0 %v1015, 32
  %v1042 = vpop.permute.xlu0 %1041
  %v1044 = vsel %vm128, %v1042, %v1009
  %v1045 = vpack.c.bf16 %v1044, %v1044
  %v1047 = vsel %vm547, %v1045, 0
  %1049 = vmatprep.subr.bf16.mxu0 0
  %1050 = vmatpush1.bf16.msra.mxu0 %v539
  %1051 = vmatprep.subr.bf16.mxu0 0
  %1052 = vmatpush1.bf16.msra.mxu0 %v540
  %1053 = vmatprep.subr.bf16.mxu0 0
  %1054 = vmatpush1.bf16.msra.mxu0 %v541
  %1055 = vmatprep.subr.bf16.mxu0 0
  %1056 = vmatpush1.bf16.msra.mxu0 %v542
  %1057 = vmatprep.subr.bf16.mxu0 0
  %1058 = vmatpush1.bf16.msra.mxu0 0
  %1059 = vmatprep.subr.bf16.mxu0 0
  %1060 = vmatpush1.bf16.msra.mxu0 0
  %1061 = vmatprep.subr.bf16.mxu0 0
  %1062 = vmatpush1.bf16.msra.mxu0 0
  %1063 = vmatprep.subr.bf16.mxu0 0
  %1064 = vmatpush1.bf16.msra.mxu0 0
  %1065 = vmatprep.subr.bf16.mxu0 0
  %1066 = vmatpush1.bf16.msra.mxu0 0
  %1067 = vmatprep.subr.bf16.mxu0 0
  %1068 = vmatpush1.bf16.msra.mxu0 0
  %1069 = vmatprep.subr.bf16.mxu0 0
  %1070 = vmatpush1.bf16.msra.mxu0 0
  %1071 = vmatprep.subr.bf16.mxu0 0
  %1072 = vmatpush1.bf16.msra.mxu0 0
  %1073 = vmatprep.subr.bf16.mxu0 0
  %1074 = vmatpush1.bf16.msra.mxu0 0
  %1075 = vmatprep.subr.bf16.mxu0 0
  %1076 = vmatpush1.bf16.msra.mxu0 0
  %1077 = vmatprep.subr.bf16.mxu0 0
  %1078 = vmatpush1.bf16.msra.mxu0 0
  %1079 = vmatprep.subr.bf16.mxu0 0
  %1080 = vmatpush1.bf16.msra.mxu0 0
  %1081 = vmatprep.mubr.bf16.mxu0 0
  %1082 = vmatmul.mubr.bf16.gmra.mrb[0].mxu0 %v1047
  %v1083 = vpop.f32.mrb[0].mxu0
  %v1084 = vadd.f32 0.0, %v1083
  %v1085 = vpop.f32.mrb[0].mxu0
  %v1086 = vpop.f32.mrb[0].mxu0
  %v1087 = vpop.f32.mrb[0].mxu0
  %1088 = vdwg.mxu0
  %v1089 = vadd.f32 %v895, %v1084
  %v1090 = vxor.u32 %v1089, 2147483648
  %v1091 = vmul.f32 %v1090, 1.442695
  %v1092 = vpow.pop %v1091
  %v1093 = vadd.f32 %v1092, 1.0
  %v1094 = vrcp.pop %v1093
  %v1095 = vmul.f32 1.0, %v1094
  %v1096 = vsub.f32 1.0, %v1095
  %1098 = vrot.lane.b32.xlu0 %v1039, 116
  %v1099 = vpop.permute.xlu0 %1098
  %v1101 = vsel %vm412, %v1099, 0.0
  %1103 = vrot.lane.b32.xlu0 %v1033, 124
  %v1104 = vpop.permute.xlu0 %1103
  %v1106 = vsel %vm412, %v1104, 0.0
  %1108 = vrot.lane.b32.xlu0 %v882, 32
  %v1109 = vpop.permute.xlu0 %1108
  %v1111 = vsel %vm343, %v1101, %v1109
  %1113 = vrot.lane.b32.xlu0 %v1009, 96
  %v1114 = vpop.permute.xlu0 %1113
  %v1116 = vsel %vm343, %v1106, %v1114
  %1118 = vset.pattern.permute.xlu0 0
  %1119 = vperm.xlu0 %1118, %v1096
  %v1120 = vpop.permute.xlu0 %1119
  %v1122 = vmul.f32 %v1120, %v1015
  %1124 = vset.pattern.permute.xlu0 0
  %1125 = vperm.xlu0 %1124, %v1095
  %v1126 = vpop.permute.xlu0 %1125
  %v1128 = vmul.f32 %v1126, %v1111
  %1130 = vrot.lane.b32.xlu0 %v1128, 96
  %v1131 = vpop.permute.xlu0 %1130
  %v1133 = vadd.f32 %v1122, %v1131
  %v1134 = vmul.f32 %v1120, %v1009
  %v1135 = vmul.f32 %v1126, %v1116
  %1137 = vrot.lane.b32.xlu0 %v1135, 32
  %v1138 = vpop.permute.xlu0 %1137
  %v1140 = vadd.f32 %v1134, %v1138
  %s1141 = smul.u32 3, 3
  %s1142 = smul.addr %s1141, 8
  %s1143 = scalar_lea.vmem [#allocation2], %s1142
  %v1144 = vld [vmem:[%s1143] sm:$0xff]
  %v1145 = vld [vmem:[%s1143 + $0x8] sm:$0xff]
  %v1146 = vld [vmem:[%s1143 + $0x10] sm:$0xff]
  %v1147 = vpack.c.bf16 %v1133, %v1133
  %1149 = vrot.lane.b32.xlu0 %v1147, 32
  %v1150 = vpop.permute.xlu0 %1149
  %v1152 = vsel %vm128, %v1150, 0
  %1154 = vmatprep.subr.bf16.mxu0 0
  %1155 = vmatpush1.bf16.msra.mxu0 %v363
  %1156 = vmatprep.subr.bf16.mxu0 0
  %1157 = vmatpush1.bf16.msra.mxu0 %v364
  %1158 = vmatprep.subr.bf16.mxu0 0
  %1159 = vmatpush1.bf16.msra.mxu0 0
  %1160 = vmatprep.subr.bf16.mxu0 0
  %1161 = vmatpush1.bf16.msra.mxu0 0
  %1162 = vmatprep.subr.bf16.mxu0 0
  %1163 = vmatpush1.bf16.msra.mxu0 0
  %1164 = vmatprep.subr.bf16.mxu0 0
  %1165 = vmatpush1.bf16.msra.mxu0 0
  %1166 = vmatprep.subr.bf16.mxu0 0
  %1167 = vmatpush1.bf16.msra.mxu0 0
  %1168 = vmatprep.subr.bf16.mxu0 0
  %1169 = vmatpush1.bf16.msra.mxu0 0
  %1170 = vmatprep.subr.bf16.mxu0 0
  %1171 = vmatpush1.bf16.msra.mxu0 0
  %1172 = vmatprep.subr.bf16.mxu0 0
  %1173 = vmatpush1.bf16.msra.mxu0 0
  %1174 = vmatprep.subr.bf16.mxu0 0
  %1175 = vmatpush1.bf16.msra.mxu0 0
  %1176 = vmatprep.subr.bf16.mxu0 0
  %1177 = vmatpush1.bf16.msra.mxu0 0
  %1178 = vmatprep.subr.bf16.mxu0 0
  %1179 = vmatpush1.bf16.msra.mxu0 0
  %1180 = vmatprep.subr.bf16.mxu0 0
  %1181 = vmatpush1.bf16.msra.mxu0 0
  %1182 = vmatprep.subr.bf16.mxu0 0
  %1183 = vmatpush1.bf16.msra.mxu0 0
  %1184 = vmatprep.subr.bf16.mxu0 0
  %1185 = vmatpush1.bf16.msra.mxu0 0
  %1186 = vmatprep.mubr.bf16.mxu0 0
  %1187 = vmatmul.mubr.bf16.gmra.mrb[0].mxu0 %v1152
  %v1188 = vpop.f32.mrb[0].mxu0
  %v1189 = vadd.f32 0.0, %v1188
  %v1190 = vpop.f32.mrb[0].mxu0
  %v1191 = vpop.f32.mrb[0].mxu0
  %v1192 = vpop.f32.mrb[0].mxu0
  %1193 = vdwg.mxu0
  %v1194 = vadd.f32 %v1144, %v1189
  %v1195 = vpack.c.bf16 %v1039, %v1039
  %1197 = vrot.lane.b32.xlu0 %v1195, 116
  %v1198 = vpop.permute.xlu0 %1197
  %v1200 = vsel %vm412, %v1198, 0
  %1202 = vmatprep.subr.bf16.mxu0 0
  %1203 = vmatpush1.bf16.msra.mxu0 %v418
  %1204 = vmatprep.subr.bf16.mxu0 0
  %1205 = vmatpush1.bf16.msra.mxu0 0
  %1206 = vmatprep.subr.bf16.mxu0 0
  %1207 = vmatpush1.bf16.msra.mxu0 0
  %1208 = vmatprep.subr.bf16.mxu0 0
  %1209 = vmatpush1.bf16.msra.mxu0 0
  %1210 = vmatprep.subr.bf16.mxu0 0
  %1211 = vmatpush1.bf16.msra.mxu0 0
  %1212 = vmatprep.subr.bf16.mxu0 0
  %1213 = vmatpush1.bf16.msra.mxu0 0
  %1214 = vmatprep.subr.bf16.mxu0 0
  %1215 = vmatpush1.bf16.msra.mxu0 0
  %1216 = vmatprep.subr.bf16.mxu0 0
  %1217 = vmatpush1.bf16.msra.mxu0 0
  %1218 = vmatprep.subr.bf16.mxu0 0
  %1219 = vmatpush1.bf16.msra.mxu0 0
  %1220 = vmatprep.subr.bf16.mxu0 0
  %1221 = vmatpush1.bf16.msra.mxu0 0
  %1222 = vmatprep.subr.bf16.mxu0 0
  %1223 = vmatpush1.bf16.msra.mxu0 0
  %1224 = vmatprep.subr.bf16.mxu0 0
  %1225 = vmatpush1.bf16.msra.mxu0 0
  %1226 = vmatprep.subr.bf16.mxu0 0
  %1227 = vmatpush1.bf16.msra.mxu0 0
  %1228 = vmatprep.subr.bf16.mxu0 0
  %1229 = vmatpush1.bf16.msra.mxu0 0
  %1230 = vmatprep.subr.bf16.mxu0 0
  %1231 = vmatpush1.bf16.msra.mxu0 0
  %1232 = vmatprep.subr.bf16.mxu0 0
  %1233 = vmatpush1.bf16.msra.mxu0 0
  %1234 = vmatprep.mubr.bf16.mxu0 0
  %1235 = vmatmul.mubr.bf16.gmra.mrb[0].mxu0 %v1200
  %v1236 = vpop.f32.mrb[0].mxu0
  %v1237 = vadd.f32 0.0, %v1236
  %v1238 = vpop.f32.mrb[0].mxu0
  %v1239 = vpop.f32.mrb[0].mxu0
  %v1240 = vpop.f32.mrb[0].mxu0
  %1241 = vdwg.mxu0
  %v1242 = vadd.f32 %v1145, %v1237
  %v1243 = vxor.u32 %v1194, 2147483648
  %v1244 = vmul.f32 %v1243, 1.442695
  %v1245 = vpow.pop %v1244
  %v1246 = vadd.f32 %v1245, 1.0
  %v1247 = vrcp.pop %v1246
  %v1248 = vmul.f32 1.0, %v1247
  %v1249 = vtanh.pop %v1194
  %v1250 = vmul.f32 %v1248, %v1140
  %1252 = vrot.lane.b32.xlu0 %v1249, 64
  %v1253 = vpop.permute.xlu0 %1252
  %v1255 = vmul.f32 %v1248, %v1253
  %1257 = vrot.lane.b32.xlu0 %v1255, 32
  %v1258 = vpop.permute.xlu0 %1257
  %v1260 = vadd.f32 %v1250, %v1258
  %v1261 = vtanh.pop %v1260
  %1263 = vrot.lane.b32.xlu0 %v1261, 64
  %v1264 = vpop.permute.xlu0 %1263
  %v1266 = vmul.f32 %v1248, %v1264
  %v1267 = vxor.u32 %v1242, 2147483648
  %v1268 = vmul.f32 %v1267, 1.442695
  %v1269 = vpow.pop %v1268
  %v1270 = vadd.f32 %v1269, 1.0
  %v1271 = vrcp.pop %v1270
  %v1272 = vmul.f32 1.0, %v1271
  %v1273 = vtanh.pop %v1242
  %v1274 = vmul.f32 %v1272, %v1033
  %1276 = vrot.lane.b32.xlu0 %v1273, 120
  %v1277 = vpop.permute.xlu0 %1276
  %v1279 = vmul.f32 %v1272, %v1277
  %1281 = vrot.lane.b32.xlu0 %v1279, 4
  %v1282 = vpop.permute.xlu0 %1281
  %v1284 = vadd.f32 %v1274, %v1282
  %v1285 = vtanh.pop %v1284
  %1287 = vrot.lane.b32.xlu0 %v1285, 8
  %v1288 = vpop.permute.xlu0 %1287
  %v1290 = vmul.f32 %v1272, %v1288
  %1292 = vrot.lane.b32.xlu0 %v1266, 32
  %v1293 = vpop.permute.xlu0 %1292
  %v1295 = vsel %vm128, %v1293, %v1260
  %v1296 = vpack.c.bf16 %v1295, %v1295
  %v1298 = vsel %vm547, %v1296, 0
  %1300 = vmatprep.subr.bf16.mxu0 0
  %1301 = vmatpush1.bf16.msra.mxu0 %v539
  %1302 = vmatprep.subr.bf16.mxu0 0
  %1303 = vmatpush1.bf16.msra.mxu0 %v540
  %1304 = vmatprep.subr.bf16.mxu0 0
  %1305 = vmatpush1.bf16.msra.mxu0 %v541
  %1306 = vmatprep.subr.bf16.mxu0 0
  %1307 = vmatpush1.bf16.msra.mxu0 %v542
  %1308 = vmatprep.subr.bf16.mxu0 0
  %1309 = vmatpush1.bf16.msra.mxu0 0
  %1310 = vmatprep.subr.bf16.mxu0 0
  %1311 = vmatpush1.bf16.msra.mxu0 0
  %1312 = vmatprep.subr.bf16.mxu0 0
  %1313 = vmatpush1.bf16.msra.mxu0 0
  %1314 = vmatprep.subr.bf16.mxu0 0
  %1315 = vmatpush1.bf16.msra.mxu0 0
  %1316 = vmatprep.subr.bf16.mxu0 0
  %1317 = vmatpush1.bf16.msra.mxu0 0
  %1318 = vmatprep.subr.bf16.mxu0 0
  %1319 = vmatpush1.bf16.msra.mxu0 0
  %1320 = vmatprep.subr.bf16.mxu0 0
  %1321 = vmatpush1.bf16.msra.mxu0 0
  %1322 = vmatprep.subr.bf16.mxu0 0
  %1323 = vmatpush1.bf16.msra.mxu0 0
  %1324 = vmatprep.subr.bf16.mxu0 0
  %1325 = vmatpush1.bf16.msra.mxu0 0
  %1326 = vmatprep.subr.bf16.mxu0 0
  %1327 = vmatpush1.bf16.msra.mxu0 0
  %1328 = vmatprep.subr.bf16.mxu0 0
  %1329 = vmatpush1.bf16.msra.mxu0 0
  %1330 = vmatprep.subr.bf16.mxu0 0
  %1331 = vmatpush1.bf16.msra.mxu0 0
  %1332 = vmatprep.mubr.bf16.mxu0 0
  %1333 = vmatmul.mubr.bf16.gmra.mrb[0].mxu0 %v1298
  %v1334 = vpop.f32.mrb[0].mxu0
  %v1335 = vadd.f32 0.0, %v1334
  %v1336 = vpop.f32.mrb[0].mxu0
  %v1337 = vpop.f32.mrb[0].mxu0
  %v1338 = vpop.f32.mrb[0].mxu0
  %1339 = vdwg.mxu0
  %v1340 = vadd.f32 %v1146, %v1335
  %v1341 = vxor.u32 %v1340, 2147483648
  %v1342 = vmul.f32 %v1341, 1.442695
  %v1343 = vpow.pop %v1342
  %v1344 = vadd.f32 %v1343, 1.0
  %v1345 = vrcp.pop %v1344
  %v1346 = vmul.f32 1.0, %v1345
  %v1347 = vsub.f32 1.0, %v1346
  %1349 = vrot.lane.b32.xlu0 %v1290, 116
  %v1350 = vpop.permute.xlu0 %1349
  %v1352 = vsel %vm412, %v1350, 0.0
  %1354 = vrot.lane.b32.xlu0 %v1284, 124
  %v1355 = vpop.permute.xlu0 %1354
  %v1357 = vsel %vm412, %v1355, 0.0
  %1359 = vrot.lane.b32.xlu0 %v1133, 32
  %v1360 = vpop.permute.xlu0 %1359
  %v1362 = vsel %vm343, %v1352, %v1360
  %1364 = vrot.lane.b32.xlu0 %v1260, 96
  %v1365 = vpop.permute.xlu0 %1364
  %v1367 = vsel %vm343, %v1357, %v1365
  %1369 = vset.pattern.permute.xlu0 0
  %1370 = vperm.xlu0 %1369, %v1347
  %v1371 = vpop.permute.xlu0 %1370
  %v1373 = vmul.f32 %v1371, %v1266
  %1375 = vset.pattern.permute.xlu0 0
  %1376 = vperm.xlu0 %1375, %v1346
  %v1377 = vpop.permute.xlu0 %1376
  %v1379 = vmul.f32 %v1377, %v1362
  %1381 = vrot.lane.b32.xlu0 %v1379, 96
  %v1382 = vpop.permute.xlu0 %1381
  %v1384 = vadd.f32 %v1373, %v1382
  %v1385 = vmul.f32 %v1371, %v1260
  %v1386 = vmul.f32 %v1377, %v1367
  %1388 = vrot.lane.b32.xlu0 %v1386, 32
  %v1389 = vpop.permute.xlu0 %1388
  %v1391 = vadd.f32 %v1385, %v1389
  %s1392 = smul.u32 4, 3
  %s1393 = smul.addr %s1392, 8
  %s1394 = scalar_lea.vmem [#allocation2], %s1393
  %v1395 = vld [vmem:[%s1394] sm:$0xff]
  %v1396 = vld [vmem:[%s1394 + $0x8] sm:$0xff]
  %v1397 = vld [vmem:[%s1394 + $0x10] sm:$0xff]
  %v1398 = vpack.c.bf16 %v1384, %v1384
  %1400 = vrot.lane.b32.xlu0 %v1398, 32
  %v1401 = vpop.permute.xlu0 %1400
  %v1403 = vsel %vm128, %v1401, 0
  %1405 = vmatprep.subr.bf16.mxu0 0
  %1406 = vmatpush1.bf16.msra.mxu0 %v363
  %1407 = vmatprep.subr.bf16.mxu0 0
  %1408 = vmatpush1.bf16.msra.mxu0 %v364
  %1409 = vmatprep.subr.bf16.mxu0 0
  %1410 = vmatpush1.bf16.msra.mxu0 0
  %1411 = vmatprep.subr.bf16.mxu0 0
  %1412 = vmatpush1.bf16.msra.mxu0 0
  %1413 = vmatprep.subr.bf16.mxu0 0
  %1414 = vmatpush1.bf16.msra.mxu0 0
  %1415 = vmatprep.subr.bf16.mxu0 0
  %1416 = vmatpush1.bf16.msra.mxu0 0
  %1417 = vmatprep.subr.bf16.mxu0 0
  %1418 = vmatpush1.bf16.msra.mxu0 0
  %1419 = vmatprep.subr.bf16.mxu0 0
  %1420 = vmatpush1.bf16.msra.mxu0 0
  %1421 = vmatprep.subr.bf16.mxu0 0
  %1422 = vmatpush1.bf16.msra.mxu0 0
  %1423 = vmatprep.subr.bf16.mxu0 0
  %1424 = vmatpush1.bf16.msra.mxu0 0
  %1425 = vmatprep.subr.bf16.mxu0 0
  %1426 = vmatpush1.bf16.msra.mxu0 0
  %1427 = vmatprep.subr.bf16.mxu0 0
  %1428 = vmatpush1.bf16.msra.mxu0 0
  %1429 = vmatprep.subr.bf16.mxu0 0
  %1430 = vmatpush1.bf16.msra.mxu0 0
  %1431 = vmatprep.subr.bf16.mxu0 0
  %1432 = vmatpush1.bf16.msra.mxu0 0
  %1433 = vmatprep.subr.bf16.mxu0 0
  %1434 = vmatpush1.bf16.msra.mxu0 0
  %1435 = vmatprep.subr.bf16.mxu0 0
  %1436 = vmatpush1.bf16.msra.mxu0 0
  %1437 = vmatprep.mubr.bf16.mxu0 0
  %1438 = vmatmul.mubr.bf16.gmra.mrb[0].mxu0 %v1403
  %v1439 = vpop.f32.mrb[0].mxu0
  %v1440 = vadd.f32 0.0, %v1439
  %v1441 = vpop.f32.mrb[0].mxu0
  %v1442 = vpop.f32.mrb[0].mxu0
  %v1443 = vpop.f32.mrb[0].mxu0
  %1444 = vdwg.mxu0
  %v1445 = vadd.f32 %v1395, %v1440
  %v1446 = vpack.c.bf16 %v1290, %v1290
  %1448 = vrot.lane.b32.xlu0 %v1446, 116
  %v1449 = vpop.permute.xlu0 %1448
  %v1451 = vsel %vm412, %v1449, 0
  %1453 = vmatprep.subr.bf16.mxu0 0
  %1454 = vmatpush1.bf16.msra.mxu0 %v418
  %1455 = vmatprep.subr.bf16.mxu0 0
  %1456 = vmatpush1.bf16.msra.mxu0 0
  %1457 = vmatprep.subr.bf16.mxu0 0
  %1458 = vmatpush1.bf16.msra.mxu0 0
  %1459 = vmatprep.subr.bf16.mxu0 0
  %1460 = vmatpush1.bf16.msra.mxu0 0
  %1461 = vmatprep.subr.bf16.mxu0 0
  %1462 = vmatpush1.bf16.msra.mxu0 0
  %1463 = vmatprep.subr.bf16.mxu0 0
  %1464 = vmatpush1.bf16.msra.mxu0 0
  %1465 = vmatprep.subr.bf16.mxu0 0
  %1466 = vmatpush1.bf16.msra.mxu0 0
  %1467 = vmatprep.subr.bf16.mxu0 0
  %1468 = vmatpush1.bf16.msra.mxu0 0
  %1469 = vmatprep.subr.bf16.mxu0 0
  %1470 = vmatpush1.bf16.msra.mxu0 0
  %1471 = vmatprep.subr.bf16.mxu0 0
  %1472 = vmatpush1.bf16.msra.mxu0 0
  %1473 = vmatprep.subr.bf16.mxu0 0
  %1474 = vmatpush1.bf16.msra.mxu0 0
  %1475 = vmatprep.subr.bf16.mxu0 0
  %1476 = vmatpush1.bf16.msra.mxu0 0
  %1477 = vmatprep.subr.bf16.mxu0 0
  %1478 = vmatpush1.bf16.msra.mxu0 0
  %1479 = vmatprep.subr.bf16.mxu0 0
  %1480 = vmatpush1.bf16.msra.mxu0 0
  %1481 = vmatprep.subr.bf16.mxu0 0
  %1482 = vmatpush1.bf16.msra.mxu0 0
  %1483 = vmatprep.subr.bf16.mxu0 0
  %1484 = vmatpush1.bf16.msra.mxu0 0
  %1485 = vmatprep.mubr.bf16.mxu0 0
  %1486 = vmatmul.mubr.bf16.gmra.mrb[0].mxu0 %v1451
  %v1487 = vpop.f32.mrb[0].mxu0
  %v1488 = vadd.f32 0.0, %v1487
  %v1489 = vpop.f32.mrb[0].mxu0
  %v1490 = vpop.f32.mrb[0].mxu0
  %v1491 = vpop.f32.mrb[0].mxu0
  %1492 = vdwg.mxu0
  %v1493 = vadd.f32 %v1396, %v1488
  %v1494 = vxor.u32 %v1445, 2147483648
  %v1495 = vmul.f32 %v1494, 1.442695
  %v1496 = vpow.pop %v1495
  %v1497 = vadd.f32 %v1496, 1.0
  %v1498 = vrcp.pop %v1497
  %v1499 = vmul.f32 1.0, %v1498
  %v1500 = vtanh.pop %v1445
  %v1501 = vmul.f32 %v1499, %v1391
  %1503 = vrot.lane.b32.xlu0 %v1500, 64
  %v1504 = vpop.permute.xlu0 %1503
  %v1506 = vmul.f32 %v1499, %v1504
  %1508 = vrot.lane.b32.xlu0 %v1506, 32
  %v1509 = vpop.permute.xlu0 %1508
  %v1511 = vadd.f32 %v1501, %v1509
  %v1512 = vtanh.pop %v1511
  %1514 = vrot.lane.b32.xlu0 %v1512, 64
  %v1515 = vpop.permute.xlu0 %1514
  %v1517 = vmul.f32 %v1499, %v1515
  %v1518 = vxor.u32 %v1493, 2147483648
  %v1519 = vmul.f32 %v1518, 1.442695
  %v1520 = vpow.pop %v1519
  %v1521 = vadd.f32 %v1520, 1.0
  %v1522 = vrcp.pop %v1521
  %v1523 = vmul.f32 1.0, %v1522
  %v1524 = vtanh.pop %v1493
  %v1525 = vmul.f32 %v1523, %v1284
  %1527 = vrot.lane.b32.xlu0 %v1524, 120
  %v1528 = vpop.permute.xlu0 %1527
  %v1530 = vmul.f32 %v1523, %v1528
  %1532 = vrot.lane.b32.xlu0 %v1530, 4
  %v1533 = vpop.permute.xlu0 %1532
  %v1535 = vadd.f32 %v1525, %v1533
  %v1536 = vtanh.pop %v1535
  %1538 = vrot.lane.b32.xlu0 %v1536, 8
  %v1539 = vpop.permute.xlu0 %1538
  %v1541 = vmul.f32 %v1523, %v1539
  %1543 = vrot.lane.b32.xlu0 %v1517, 32
  %v1544 = vpop.permute.xlu0 %1543
  %v1546 = vsel %vm128, %v1544, %v1511
  %v1547 = vpack.c.bf16 %v1546, %v1546
  %v1549 = vsel %vm547, %v1547, 0
  %1551 = vmatprep.subr.bf16.mxu0 0
  %1552 = vmatpush1.bf16.msra.mxu0 %v539
  %1553 = vmatprep.subr.bf16.mxu0 0
  %1554 = vmatpush1.bf16.msra.mxu0 %v540
  %1555 = vmatprep.subr.bf16.mxu0 0
  %1556 = vmatpush1.bf16.msra.mxu0 %v541
  %1557 = vmatprep.subr.bf16.mxu0 0
  %1558 = vmatpush1.bf16.msra.mxu0 %v542
  %1559 = vmatprep.subr.bf16.mxu0 0
  %1560 = vmatpush1.bf16.msra.mxu0 0
  %1561 = vmatprep.subr.bf16.mxu0 0
  %1562 = vmatpush1.bf16.msra.mxu0 0
  %1563 = vmatprep.subr.bf16.mxu0 0
  %1564 = vmatpush1.bf16.msra.mxu0 0
  %1565 = vmatprep.subr.bf16.mxu0 0
  %1566 = vmatpush1.bf16.msra.mxu0 0
  %1567 = vmatprep.subr.bf16.mxu0 0
  %1568 = vmatpush1.bf16.msra.mxu0 0
  %1569 = vmatprep.subr.bf16.mxu0 0
  %1570 = vmatpush1.bf16.msra.mxu0 0
  %1571 = vmatprep.subr.bf16.mxu0 0
  %1572 = vmatpush1.bf16.msra.mxu0 0
  %1573 = vmatprep.subr.bf16.mxu0 0
  %1574 = vmatpush1.bf16.msra.mxu0 0
  %1575 = vmatprep.subr.bf16.mxu0 0
  %1576 = vmatpush1.bf16.msra.mxu0 0
  %1577 = vmatprep.subr.bf16.mxu0 0
  %1578 = vmatpush1.bf16.msra.mxu0 0
  %1579 = vmatprep.subr.bf16.mxu0 0
  %1580 = vmatpush1.bf16.msra.mxu0 0
  %1581 = vmatprep.subr.bf16.mxu0 0
  %1582 = vmatpush1.bf16.msra.mxu0 0
  %1583 = vmatprep.mubr.bf16.mxu0 0
  %1584 = vmatmul.mubr.bf16.gmra.mrb[0].mxu0 %v1549
  %v1585 = vpop.f32.mrb[0].mxu0
  %v1586 = vadd.f32 0.0, %v1585
  %v1587 = vpop.f32.mrb[0].mxu0
  %v1588 = vpop.f32.mrb[0].mxu0
  %v1589 = vpop.f32.mrb[0].mxu0
  %1590 = vdwg.mxu0
  %v1591 = vadd.f32 %v1397, %v1586
  %v1592 = vxor.u32 %v1591, 2147483648
  %v1593 = vmul.f32 %v1592, 1.442695
  %v1594 = vpow.pop %v1593
  %v1595 = vadd.f32 %v1594, 1.0
  %v1596 = vrcp.pop %v1595
  %v1597 = vmul.f32 1.0, %v1596
  %v1598 = vsub.f32 1.0, %v1597
  %1600 = vrot.lane.b32.xlu0 %v1541, 116
  %v1601 = vpop.permute.xlu0 %1600
  %v1603 = vsel %vm412, %v1601, 0.0
  %1605 = vrot.lane.b32.xlu0 %v1535, 124
  %v1606 = vpop.permute.xlu0 %1605
  %v1608 = vsel %vm412, %v1606, 0.0
  %1610 = vrot.lane.b32.xlu0 %v1384, 32
  %v1611 = vpop.permute.xlu0 %1610
  %v1613 = vsel %vm343, %v1603, %v1611
  %1615 = vrot.lane.b32.xlu0 %v1511, 96
  %v1616 = vpop.permute.xlu0 %1615
  %v1618 = vsel %vm343, %v1608, %v1616
  %1620 = vset.pattern.permute.xlu0 0
  %1621 = vperm.xlu0 %1620, %v1598
  %v1622 = vpop.permute.xlu0 %1621
  %v1624 = vmul.f32 %v1622, %v1517
  %1626 = vset.pattern.permute.xlu0 0
  %1627 = vperm.xlu0 %1626, %v1597
  %v1628 = vpop.permute.xlu0 %1627
  %v1630 = vmul.f32 %v1628, %v1613
  %1632 = vrot.lane.b32.xlu0 %v1630, 96
  %v1633 = vpop.permute.xlu0 %1632
  %v1635 = vadd.f32 %v1624, %v1633
  %v1636 = vmul.f32 %v1622, %v1511
  %v1637 = vmul.f32 %v1628, %v1618
  %1639 = vrot.lane.b32.xlu0 %v1637, 32
  %v1640 = vpop.permute.xlu0 %1639
  %v1642 = vadd.f32 %v1636, %v1640
  %s1643 = smul.u32 5, 3
  %s1644 = smul.addr %s1643, 8
  %s1645 = scalar_lea.vmem [#allocation2], %s1644
  %v1646 = vld [vmem:[%s1645] sm:$0xff]
  %v1647 = vld [vmem:[%s1645 + $0x8] sm:$0xff]
  %v1648 = vld [vmem:[%s1645 + $0x10] sm:$0xff]
  %v1649 = vpack.c.bf16 %v1635, %v1635
  %1651 = vrot.lane.b32.xlu0 %v1649, 32
  %v1652 = vpop.permute.xlu0 %1651
  %v1654 = vsel %vm128, %v1652, 0
  %1656 = vmatprep.subr.bf16.mxu0 0
  %1657 = vmatpush1.bf16.msra.mxu0 %v363
  %1658 = vmatprep.subr.bf16.mxu0 0
  %1659 = vmatpush1.bf16.msra.mxu0 %v364
  %1660 = vmatprep.subr.bf16.mxu0 0
  %1661 = vmatpush1.bf16.msra.mxu0 0
  %1662 = vmatprep.subr.bf16.mxu0 0
  %1663 = vmatpush1.bf16.msra.mxu0 0
  %1664 = vmatprep.subr.bf16.mxu0 0
  %1665 = vmatpush1.bf16.msra.mxu0 0
  %1666 = vmatprep.subr.bf16.mxu0 0
  %1667 = vmatpush1.bf16.msra.mxu0 0
  %1668 = vmatprep.subr.bf16.mxu0 0
  %1669 = vmatpush1.bf16.msra.mxu0 0
  %1670 = vmatprep.subr.bf16.mxu0 0
  %1671 = vmatpush1.bf16.msra.mxu0 0
  %1672 = vmatprep.subr.bf16.mxu0 0
  %1673 = vmatpush1.bf16.msra.mxu0 0
  %1674 = vmatprep.subr.bf16.mxu0 0
  %1675 = vmatpush1.bf16.msra.mxu0 0
  %1676 = vmatprep.subr.bf16.mxu0 0
  %1677 = vmatpush1.bf16.msra.mxu0 0
  %1678 = vmatprep.subr.bf16.mxu0 0
  %1679 = vmatpush1.bf16.msra.mxu0 0
  %1680 = vmatprep.subr.bf16.mxu0 0
  %1681 = vmatpush1.bf16.msra.mxu0 0
  %1682 = vmatprep.subr.bf16.mxu0 0
  %1683 = vmatpush1.bf16.msra.mxu0 0
  %1684 = vmatprep.subr.bf16.mxu0 0
  %1685 = vmatpush1.bf16.msra.mxu0 0
  %1686 = vmatprep.subr.bf16.mxu0 0
  %1687 = vmatpush1.bf16.msra.mxu0 0
  %1688 = vmatprep.mubr.bf16.mxu0 0
  %1689 = vmatmul.mubr.bf16.gmra.mrb[0].mxu0 %v1654
  %v1690 = vpop.f32.mrb[0].mxu0
  %v1691 = vadd.f32 0.0, %v1690
  %v1692 = vpop.f32.mrb[0].mxu0
  %v1693 = vpop.f32.mrb[0].mxu0
  %v1694 = vpop.f32.mrb[0].mxu0
  %1695 = vdwg.mxu0
  %v1696 = vadd.f32 %v1646, %v1691
  %v1697 = vpack.c.bf16 %v1541, %v1541
  %1699 = vrot.lane.b32.xlu0 %v1697, 116
  %v1700 = vpop.permute.xlu0 %1699
  %v1702 = vsel %vm412, %v1700, 0
  %1704 = vmatprep.subr.bf16.mxu0 0
  %1705 = vmatpush1.bf16.msra.mxu0 %v418
  %1706 = vmatprep.subr.bf16.mxu0 0
  %1707 = vmatpush1.bf16.msra.mxu0 0
  %1708 = vmatprep.subr.bf16.mxu0 0
  %1709 = vmatpush1.bf16.msra.mxu0 0
  %1710 = vmatprep.subr.bf16.mxu0 0
  %1711 = vmatpush1.bf16.msra.mxu0 0
  %1712 = vmatprep.subr.bf16.mxu0 0
  %1713 = vmatpush1.bf16.msra.mxu0 0
  %1714 = vmatprep.subr.bf16.mxu0 0
  %1715 = vmatpush1.bf16.msra.mxu0 0
  %1716 = vmatprep.subr.bf16.mxu0 0
  %1717 = vmatpush1.bf16.msra.mxu0 0
  %1718 = vmatprep.subr.bf16.mxu0 0
  %1719 = vmatpush1.bf16.msra.mxu0 0
  %1720 = vmatprep.subr.bf16.mxu0 0
  %1721 = vmatpush1.bf16.msra.mxu0 0
  %1722 = vmatprep.subr.bf16.mxu0 0
  %1723 = vmatpush1.bf16.msra.mxu0 0
  %1724 = vmatprep.subr.bf16.mxu0 0
  %1725 = vmatpush1.bf16.msra.mxu0 0
  %1726 = vmatprep.subr.bf16.mxu0 0
  %1727 = vmatpush1.bf16.msra.mxu0 0
  %1728 = vmatprep.subr.bf16.mxu0 0
  %1729 = vmatpush1.bf16.msra.mxu0 0
  %1730 = vmatprep.subr.bf16.mxu0 0
  %1731 = vmatpush1.bf16.msra.mxu0 0
  %1732 = vmatprep.subr.bf16.mxu0 0
  %1733 = vmatpush1.bf16.msra.mxu0 0
  %1734 = vmatprep.subr.bf16.mxu0 0
  %1735 = vmatpush1.bf16.msra.mxu0 0
  %1736 = vmatprep.mubr.bf16.mxu0 0
  %1737 = vmatmul.mubr.bf16.gmra.mrb[0].mxu0 %v1702
  %v1738 = vpop.f32.mrb[0].mxu0
  %v1739 = vadd.f32 0.0, %v1738
  %v1740 = vpop.f32.mrb[0].mxu0
  %v1741 = vpop.f32.mrb[0].mxu0
  %v1742 = vpop.f32.mrb[0].mxu0
  %1743 = vdwg.mxu0
  %v1744 = vadd.f32 %v1647, %v1739
  %v1745 = vxor.u32 %v1696, 2147483648
  %v1746 = vmul.f32 %v1745, 1.442695
  %v1747 = vpow.pop %v1746
  %v1748 = vadd.f32 %v1747, 1.0
  %v1749 = vrcp.pop %v1748
  %v1750 = vmul.f32 1.0, %v1749
  %v1751 = vtanh.pop %v1696
  %v1752 = vmul.f32 %v1750, %v1642
  %1754 = vrot.lane.b32.xlu0 %v1751, 64
  %v1755 = vpop.permute.xlu0 %1754
  %v1757 = vmul.f32 %v1750, %v1755
  %1759 = vrot.lane.b32.xlu0 %v1757, 32
  %v1760 = vpop.permute.xlu0 %1759
  %v1762 = vadd.f32 %v1752, %v1760
  %v1763 = vtanh.pop %v1762
  %1765 = vrot.lane.b32.xlu0 %v1763, 64
  %v1766 = vpop.permute.xlu0 %1765
  %v1768 = vmul.f32 %v1750, %v1766
  %v1769 = vxor.u32 %v1744, 2147483648
  %v1770 = vmul.f32 %v1769, 1.442695
  %v1771 = vpow.pop %v1770
  %v1772 = vadd.f32 %v1771, 1.0
  %v1773 = vrcp.pop %v1772
  %v1774 = vmul.f32 1.0, %v1773
  %v1775 = vtanh.pop %v1744
  %v1776 = vmul.f32 %v1774, %v1535
  %1778 = vrot.lane.b32.xlu0 %v1775, 120
  %v1779 = vpop.permute.xlu0 %1778
  %v1781 = vmul.f32 %v1774, %v1779
  %1783 = vrot.lane.b32.xlu0 %v1781, 4
  %v1784 = vpop.permute.xlu0 %1783
  %v1786 = vadd.f32 %v1776, %v1784
  %v1787 = vtanh.pop %v1786
  %1789 = vrot.lane.b32.xlu0 %v1787, 8
  %v1790 = vpop.permute.xlu0 %1789
  %v1792 = vmul.f32 %v1774, %v1790
  %1794 = vrot.lane.b32.xlu0 %v1768, 32
  %v1795 = vpop.permute.xlu0 %1794
  %v1797 = vsel %vm128, %v1795, %v1762
  %v1798 = vpack.c.bf16 %v1797, %v1797
  %v1800 = vsel %vm547, %v1798, 0
  %1802 = vmatprep.subr.bf16.mxu0 0
  %1803 = vmatpush1.bf16.msra.mxu0 %v539
  %1804 = vmatprep.subr.bf16.mxu0 0
  %1805 = vmatpush1.bf16.msra.mxu0 %v540
  %1806 = vmatprep.subr.bf16.mxu0 0
  %1807 = vmatpush1.bf16.msra.mxu0 %v541
  %1808 = vmatprep.subr.bf16.mxu0 0
  %1809 = vmatpush1.bf16.msra.mxu0 %v542
  %1810 = vmatprep.subr.bf16.mxu0 0
  %1811 = vmatpush1.bf16.msra.mxu0 0
  %1812 = vmatprep.subr.bf16.mxu0 0
  %1813 = vmatpush1.bf16.msra.mxu0 0
  %1814 = vmatprep.subr.bf16.mxu0 0
  %1815 = vmatpush1.bf16.msra.mxu0 0
  %1816 = vmatprep.subr.bf16.mxu0 0
  %1817 = vmatpush1.bf16.msra.mxu0 0
  %1818 = vmatprep.subr.bf16.mxu0 0
  %1819 = vmatpush1.bf16.msra.mxu0 0
  %1820 = vmatprep.subr.bf16.mxu0 0
  %1821 = vmatpush1.bf16.msra.mxu0 0
  %1822 = vmatprep.subr.bf16.mxu0 0
  %1823 = vmatpush1.bf16.msra.mxu0 0
  %1824 = vmatprep.subr.bf16.mxu0 0
  %1825 = vmatpush1.bf16.msra.mxu0 0
  %1826 = vmatprep.subr.bf16.mxu0 0
  %1827 = vmatpush1.bf16.msra.mxu0 0
  %1828 = vmatprep.subr.bf16.mxu0 0
  %1829 = vmatpush1.bf16.msra.mxu0 0
  %1830 = vmatprep.subr.bf16.mxu0 0
  %1831 = vmatpush1.bf16.msra.mxu0 0
  %1832 = vmatprep.subr.bf16.mxu0 0
  %1833 = vmatpush1.bf16.msra.mxu0 0
  %1834 = vmatprep.mubr.bf16.mxu0 0
  %1835 = vmatmul.mubr.bf16.gmra.mrb[0].mxu0 %v1800
  %v1836 = vpop.f32.mrb[0].mxu0
  %v1837 = vadd.f32 0.0, %v1836
  %v1838 = vpop.f32.mrb[0].mxu0
  %v1839 = vpop.f32.mrb[0].mxu0
  %v1840 = vpop.f32.mrb[0].mxu0
  %1841 = vdwg.mxu0
  %v1842 = vadd.f32 %v1648, %v1837
  %v1843 = vxor.u32 %v1842, 2147483648
  %v1844 = vmul.f32 %v1843, 1.442695
  %v1845 = vpow.pop %v1844
  %v1846 = vadd.f32 %v1845, 1.0
  %v1847 = vrcp.pop %v1846
  %v1848 = vmul.f32 1.0, %v1847
  %v1849 = vsub.f32 1.0, %v1848
  %1851 = vrot.lane.b32.xlu0 %v1792, 116
  %v1852 = vpop.permute.xlu0 %1851
  %v1854 = vsel %vm412, %v1852, 0.0
  %1856 = vrot.lane.b32.xlu0 %v1786, 124
  %v1857 = vpop.permute.xlu0 %1856
  %v1859 = vsel %vm412, %v1857, 0.0
  %1861 = vrot.lane.b32.xlu0 %v1635, 32
  %v1862 = vpop.permute.xlu0 %1861
  %v1864 = vsel %vm343, %v1854, %v1862
  %1866 = vrot.lane.b32.xlu0 %v1762, 96
  %v1867 = vpop.permute.xlu0 %1866
  %v1869 = vsel %vm343, %v1859, %v1867
  %1871 = vset.pattern.permute.xlu0 0
  %1872 = vperm.xlu0 %1871, %v1849
  %v1873 = vpop.permute.xlu0 %1872
  %v1875 = vmul.f32 %v1873, %v1768
  %1877 = vset.pattern.permute.xlu0 0
  %1878 = vperm.xlu0 %1877, %v1848
  %v1879 = vpop.permute.xlu0 %1878
  %v1881 = vmul.f32 %v1879, %v1864
  %1883 = vrot.lane.b32.xlu0 %v1881, 96
  %v1884 = vpop.permute.xlu0 %1883
  %v1886 = vadd.f32 %v1875, %v1884
  %v1887 = vmul.f32 %v1873, %v1762
  %v1888 = vmul.f32 %v1879, %v1869
  %1890 = vrot.lane.b32.xlu0 %v1888, 32
  %v1891 = vpop.permute.xlu0 %1890
  %v1893 = vadd.f32 %v1887, %v1891
  %s1894 = smul.u32 6, 3
  %s1895 = smul.addr %s1894, 8
  %s1896 = scalar_lea.vmem [#allocation2], %s1895
  %v1897 = vld [vmem:[%s1896] sm:$0xff]
  %v1898 = vld [vmem:[%s1896 + $0x8] sm:$0xff]
  %v1899 = vld [vmem:[%s1896 + $0x10] sm:$0xff]
  %v1900 = vpack.c.bf16 %v1886, %v1886
  %1902 = vrot.lane.b32.xlu0 %v1900, 32
  %v1903 = vpop.permute.xlu0 %1902
  %v1905 = vsel %vm128, %v1903, 0
  %1907 = vmatprep.subr.bf16.mxu0 0
  %1908 = vmatpush1.bf16.msra.mxu0 %v363
  %1909 = vmatprep.subr.bf16.mxu0 0
  %1910 = vmatpush1.bf16.msra.mxu0 %v364
  %1911 = vmatprep.subr.bf16.mxu0 0
  %1912 = vmatpush1.bf16.msra.mxu0 0
  %1913 = vmatprep.subr.bf16.mxu0 0
  %1914 = vmatpush1.bf16.msra.mxu0 0
  %1915 = vmatprep.subr.bf16.mxu0 0
  %1916 = vmatpush1.bf16.msra.mxu0 0
  %1917 = vmatprep.subr.bf16.mxu0 0
  %1918 = vmatpush1.bf16.msra.mxu0 0
  %1919 = vmatprep.subr.bf16.mxu0 0
  %1920 = vmatpush1.bf16.msra.mxu0 0
  %1921 = vmatprep.subr.bf16.mxu0 0
  %1922 = vmatpush1.bf16.msra.mxu0 0
  %1923 = vmatprep.subr.bf16.mxu0 0
  %1924 = vmatpush1.bf16.msra.mxu0 0
  %1925 = vmatprep.subr.bf16.mxu0 0
  %1926 = vmatpush1.bf16.msra.mxu0 0
  %1927 = vmatprep.subr.bf16.mxu0 0
  %1928 = vmatpush1.bf16.msra.mxu0 0
  %1929 = vmatprep.subr.bf16.mxu0 0
  %1930 = vmatpush1.bf16.msra.mxu0 0
  %1931 = vmatprep.subr.bf16.mxu0 0
  %1932 = vmatpush1.bf16.msra.mxu0 0
  %1933 = vmatprep.subr.bf16.mxu0 0
  %1934 = vmatpush1.bf16.msra.mxu0 0
  %1935 = vmatprep.subr.bf16.mxu0 0
  %1936 = vmatpush1.bf16.msra.mxu0 0
  %1937 = vmatprep.subr.bf16.mxu0 0
  %1938 = vmatpush1.bf16.msra.mxu0 0
  %1939 = vmatprep.mubr.bf16.mxu0 0
  %1940 = vmatmul.mubr.bf16.gmra.mrb[0].mxu0 %v1905
  %v1941 = vpop.f32.mrb[0].mxu0
  %v1942 = vadd.f32 0.0, %v1941
  %v1943 = vpop.f32.mrb[0].mxu0
  %v1944 = vpop.f32.mrb[0].mxu0
  %v1945 = vpop.f32.mrb[0].mxu0
  %1946 = vdwg.mxu0
  %v1947 = vadd.f32 %v1897, %v1942
  %v1948 = vpack.c.bf16 %v1792, %v1792
  %1950 = vrot.lane.b32.xlu0 %v1948, 116
  %v1951 = vpop.permute.xlu0 %1950
  %v1953 = vsel %vm412, %v1951, 0
  %1955 = vmatprep.subr.bf16.mxu0 0
  %1956 = vmatpush1.bf16.msra.mxu0 %v418
  %1957 = vmatprep.subr.bf16.mxu0 0
  %1958 = vmatpush1.bf16.msra.mxu0 0
  %1959 = vmatprep.subr.bf16.mxu0 0
  %1960 = vmatpush1.bf16.msra.mxu0 0
  %1961 = vmatprep.subr.bf16.mxu0 0
  %1962 = vmatpush1.bf16.msra.mxu0 0
  %1963 = vmatprep.subr.bf16.mxu0 0
  %1964 = vmatpush1.bf16.msra.mxu0 0
  %1965 = vmatprep.subr.bf16.mxu0 0
  %1966 = vmatpush1.bf16.msra.mxu0 0
  %1967 = vmatprep.subr.bf16.mxu0 0
  %1968 = vmatpush1.bf16.msra.mxu0 0
  %1969 = vmatprep.subr.bf16.mxu0 0
  %1970 = vmatpush1.bf16.msra.mxu0 0
  %1971 = vmatprep.subr.bf16.mxu0 0
  %1972 = vmatpush1.bf16.msra.mxu0 0
  %1973 = vmatprep.subr.bf16.mxu0 0
  %1974 = vmatpush1.bf16.msra.mxu0 0
  %1975 = vmatprep.subr.bf16.mxu0 0
  %1976 = vmatpush1.bf16.msra.mxu0 0
  %1977 = vmatprep.subr.bf16.mxu0 0
  %1978 = vmatpush1.bf16.msra.mxu0 0
  %1979 = vmatprep.subr.bf16.mxu0 0
  %1980 = vmatpush1.bf16.msra.mxu0 0
  %1981 = vmatprep.subr.bf16.mxu0 0
  %1982 = vmatpush1.bf16.msra.mxu0 0
  %1983 = vmatprep.subr.bf16.mxu0 0
  %1984 = vmatpush1.bf16.msra.mxu0 0
  %1985 = vmatprep.subr.bf16.mxu0 0
  %1986 = vmatpush1.bf16.msra.mxu0 0
  %1987 = vmatprep.mubr.bf16.mxu0 0
  %1988 = vmatmul.mubr.bf16.gmra.mrb[0].mxu0 %v1953
  %v1989 = vpop.f32.mrb[0].mxu0
  %v1990 = vadd.f32 0.0, %v1989
  %v1991 = vpop.f32.mrb[0].mxu0
  %v1992 = vpop.f32.mrb[0].mxu0
  %v1993 = vpop.f32.mrb[0].mxu0
  %1994 = vdwg.mxu0
  %v1995 = vadd.f32 %v1898, %v1990
  %v1996 = vxor.u32 %v1947, 2147483648
  %v1997 = vmul.f32 %v1996, 1.442695
  %v1998 = vpow.pop %v1997
  %v1999 = vadd.f32 %v1998, 1.0
  %v2000 = vrcp.pop %v1999
  %v2001 = vmul.f32 1.0, %v2000
  %v2002 = vtanh.pop %v1947
  %v2003 = vmul.f32 %v2001, %v1893
  %2005 = vrot.lane.b32.xlu0 %v2002, 64
  %v2006 = vpop.permute.xlu0 %2005
  %v2008 = vmul.f32 %v2001, %v2006
  %2010 = vrot.lane.b32.xlu0 %v2008, 32
  %v2011 = vpop.permute.xlu0 %2010
  %v2013 = vadd.f32 %v2003, %v2011
  %v2014 = vtanh.pop %v2013
  %2016 = vrot.lane.b32.xlu0 %v2014, 64
  %v2017 = vpop.permute.xlu0 %2016
  %v2019 = vmul.f32 %v2001, %v2017
  %v2020 = vxor.u32 %v1995, 2147483648
  %v2021 = vmul.f32 %v2020, 1.442695
  %v2022 = vpow.pop %v2021
  %v2023 = vadd.f32 %v2022, 1.0
  %v2024 = vrcp.pop %v2023
  %v2025 = vmul.f32 1.0, %v2024
  %v2026 = vtanh.pop %v1995
  %v2027 = vmul.f32 %v2025, %v1786
  %2029 = vrot.lane.b32.xlu0 %v2026, 120
  %v2030 = vpop.permute.xlu0 %2029
  %v2032 = vmul.f32 %v2025, %v2030
  %2034 = vrot.lane.b32.xlu0 %v2032, 4
  %v2035 = vpop.permute.xlu0 %2034
  %v2037 = vadd.f32 %v2027, %v2035
  %v2038 = vtanh.pop %v2037
  %2040 = vrot.lane.b32.xlu0 %v2038, 8
  %v2041 = vpop.permute.xlu0 %2040
  %v2043 = vmul.f32 %v2025, %v2041
  %2045 = vrot.lane.b32.xlu0 %v2019, 32
  %v2046 = vpop.permute.xlu0 %2045
  %v2048 = vsel %vm128, %v2046, %v2013
  %v2049 = vpack.c.bf16 %v2048, %v2048
  %v2051 = vsel %vm547, %v2049, 0
  %2053 = vmatprep.subr.bf16.mxu0 0
  %2054 = vmatpush1.bf16.msra.mxu0 %v539
  %2055 = vmatprep.subr.bf16.mxu0 0
  %2056 = vmatpush1.bf16.msra.mxu0 %v540
  %2057 = vmatprep.subr.bf16.mxu0 0
  %2058 = vmatpush1.bf16.msra.mxu0 %v541
  %2059 = vmatprep.subr.bf16.mxu0 0
  %2060 = vmatpush1.bf16.msra.mxu0 %v542
  %2061 = vmatprep.subr.bf16.mxu0 0
  %2062 = vmatpush1.bf16.msra.mxu0 0
  %2063 = vmatprep.subr.bf16.mxu0 0
  %2064 = vmatpush1.bf16.msra.mxu0 0
  %2065 = vmatprep.subr.bf16.mxu0 0
  %2066 = vmatpush1.bf16.msra.mxu0 0
  %2067 = vmatprep.subr.bf16.mxu0 0
  %2068 = vmatpush1.bf16.msra.mxu0 0
  %2069 = vmatprep.subr.bf16.mxu0 0
  %2070 = vmatpush1.bf16.msra.mxu0 0
  %2071 = vmatprep.subr.bf16.mxu0 0
  %2072 = vmatpush1.bf16.msra.mxu0 0
  %2073 = vmatprep.subr.bf16.mxu0 0
  %2074 = vmatpush1.bf16.msra.mxu0 0
  %2075 = vmatprep.subr.bf16.mxu0 0
  %2076 = vmatpush1.bf16.msra.mxu0 0
  %2077 = vmatprep.subr.bf16.mxu0 0
  %2078 = vmatpush1.bf16.msra.mxu0 0
  %2079 = vmatprep.subr.bf16.mxu0 0
  %2080 = vmatpush1.bf16.msra.mxu0 0
  %2081 = vmatprep.subr.bf16.mxu0 0
  %2082 = vmatpush1.bf16.msra.mxu0 0
  %2083 = vmatprep.subr.bf16.mxu0 0
  %2084 = vmatpush1.bf16.msra.mxu0 0
  %2085 = vmatprep.mubr.bf16.mxu0 0
  %2086 = vmatmul.mubr.bf16.gmra.mrb[0].mxu0 %v2051
  %v2087 = vpop.f32.mrb[0].mxu0
  %v2088 = vadd.f32 0.0, %v2087
  %v2089 = vpop.f32.mrb[0].mxu0
  %v2090 = vpop.f32.mrb[0].mxu0
  %v2091 = vpop.f32.mrb[0].mxu0
  %2092 = vdwg.mxu0
  %v2093 = vadd.f32 %v1899, %v2088
  %v2094 = vxor.u32 %v2093, 2147483648
  %v2095 = vmul.f32 %v2094, 1.442695
  %v2096 = vpow.pop %v2095
  %v2097 = vadd.f32 %v2096, 1.0
  %v2098 = vrcp.pop %v2097
  %v2099 = vmul.f32 1.0, %v2098
  %v2100 = vsub.f32 1.0, %v2099
  %2102 = vrot.lane.b32.xlu0 %v2043, 116
  %v2103 = vpop.permute.xlu0 %2102
  %v2105 = vsel %vm412, %v2103, 0.0
  %2107 = vrot.lane.b32.xlu0 %v2037, 124
  %v2108 = vpop.permute.xlu0 %2107
  %v2110 = vsel %vm412, %v2108, 0.0
  %2112 = vrot.lane.b32.xlu0 %v1886, 32
  %v2113 = vpop.permute.xlu0 %2112
  %v2115 = vsel %vm343, %v2105, %v2113
  %2117 = vrot.lane.b32.xlu0 %v2013, 96
  %v2118 = vpop.permute.xlu0 %2117
  %v2120 = vsel %vm343, %v2110, %v2118
  %2122 = vset.pattern.permute.xlu0 0
  %2123 = vperm.xlu0 %2122, %v2100
  %v2124 = vpop.permute.xlu0 %2123
  %v2126 = vmul.f32 %v2124, %v2019
  %2128 = vset.pattern.permute.xlu0 0
  %2129 = vperm.xlu0 %2128, %v2099
  %v2130 = vpop.permute.xlu0 %2129
  %v2132 = vmul.f32 %v2130, %v2115
  %2134 = vrot.lane.b32.xlu0 %v2132, 96
  %v2135 = vpop.permute.xlu0 %2134
  %v2137 = vadd.f32 %v2126, %v2135
  %v2138 = vmul.f32 %v2124, %v2013
  %v2139 = vmul.f32 %v2130, %v2120
  %2141 = vrot.lane.b32.xlu0 %v2139, 32
  %v2142 = vpop.permute.xlu0 %2141
  %v2144 = vadd.f32 %v2138, %v2142
  %s2145 = smul.u32 7, 3
  %s2146 = smul.addr %s2145, 8
  %s2147 = scalar_lea.vmem [#allocation2], %s2146
  %v2148 = vld [vmem:[%s2147] sm:$0xff]
  %v2149 = vld [vmem:[%s2147 + $0x8] sm:$0xff]
  %v2150 = vld [vmem:[%s2147 + $0x10] sm:$0xff]
  %v2151 = vpack.c.bf16 %v2137, %v2137
  %2153 = vrot.lane.b32.xlu0 %v2151, 32
  %v2154 = vpop.permute.xlu0 %2153
  %v2156 = vsel %vm128, %v2154, 0
  %2158 = vmatprep.subr.bf16.mxu0 0
  %2159 = vmatpush1.bf16.msra.mxu0 %v363
  %2160 = vmatprep.subr.bf16.mxu0 0
  %2161 = vmatpush1.bf16.msra.mxu0 %v364
  %2162 = vmatprep.subr.bf16.mxu0 0
  %2163 = vmatpush1.bf16.msra.mxu0 0
  %2164 = vmatprep.subr.bf16.mxu0 0
  %2165 = vmatpush1.bf16.msra.mxu0 0
  %2166 = vmatprep.subr.bf16.mxu0 0
  %2167 = vmatpush1.bf16.msra.mxu0 0
  %2168 = vmatprep.subr.bf16.mxu0 0
  %2169 = vmatpush1.bf16.msra.mxu0 0
  %2170 = vmatprep.subr.bf16.mxu0 0
  %2171 = vmatpush1.bf16.msra.mxu0 0
  %2172 = vmatprep.subr.bf16.mxu0 0
  %2173 = vmatpush1.bf16.msra.mxu0 0
  %2174 = vmatprep.subr.bf16.mxu0 0
  %2175 = vmatpush1.bf16.msra.mxu0 0
  %2176 = vmatprep.subr.bf16.mxu0 0
  %2177 = vmatpush1.bf16.msra.mxu0 0
  %2178 = vmatprep.subr.bf16.mxu0 0
  %2179 = vmatpush1.bf16.msra.mxu0 0
  %2180 = vmatprep.subr.bf16.mxu0 0
  %2181 = vmatpush1.bf16.msra.mxu0 0
  %2182 = vmatprep.subr.bf16.mxu0 0
  %2183 = vmatpush1.bf16.msra.mxu0 0
  %2184 = vmatprep.subr.bf16.mxu0 0
  %2185 = vmatpush1.bf16.msra.mxu0 0
  %2186 = vmatprep.subr.bf16.mxu0 0
  %2187 = vmatpush1.bf16.msra.mxu0 0
  %2188 = vmatprep.subr.bf16.mxu0 0
  %2189 = vmatpush1.bf16.msra.mxu0 0
  %2190 = vmatprep.mubr.bf16.mxu0 0
  %2191 = vmatmul.mubr.bf16.gmra.mrb[0].mxu0 %v2156
  %v2192 = vpop.f32.mrb[0].mxu0
  %v2193 = vadd.f32 0.0, %v2192
  %v2194 = vpop.f32.mrb[0].mxu0
  %v2195 = vpop.f32.mrb[0].mxu0
  %v2196 = vpop.f32.mrb[0].mxu0
  %2197 = vdwg.mxu0
  %v2198 = vadd.f32 %v2148, %v2193
  %v2199 = vpack.c.bf16 %v2043, %v2043
  %2201 = vrot.lane.b32.xlu0 %v2199, 116
  %v2202 = vpop.permute.xlu0 %2201
  %v2204 = vsel %vm412, %v2202, 0
  %2206 = vmatprep.subr.bf16.mxu0 0
  %2207 = vmatpush1.bf16.msra.mxu0 %v418
  %2208 = vmatprep.subr.bf16.mxu0 0
  %2209 = vmatpush1.bf16.msra.mxu0 0
  %2210 = vmatprep.subr.bf16.mxu0 0
  %2211 = vmatpush1.bf16.msra.mxu0 0
  %2212 = vmatprep.subr.bf16.mxu0 0
  %2213 = vmatpush1.bf16.msra.mxu0 0
  %2214 = vmatprep.subr.bf16.mxu0 0
  %2215 = vmatpush1.bf16.msra.mxu0 0
  %2216 = vmatprep.subr.bf16.mxu0 0
  %2217 = vmatpush1.bf16.msra.mxu0 0
  %2218 = vmatprep.subr.bf16.mxu0 0
  %2219 = vmatpush1.bf16.msra.mxu0 0
  %2220 = vmatprep.subr.bf16.mxu0 0
  %2221 = vmatpush1.bf16.msra.mxu0 0
  %2222 = vmatprep.subr.bf16.mxu0 0
  %2223 = vmatpush1.bf16.msra.mxu0 0
  %2224 = vmatprep.subr.bf16.mxu0 0
  %2225 = vmatpush1.bf16.msra.mxu0 0
  %2226 = vmatprep.subr.bf16.mxu0 0
  %2227 = vmatpush1.bf16.msra.mxu0 0
  %2228 = vmatprep.subr.bf16.mxu0 0
  %2229 = vmatpush1.bf16.msra.mxu0 0
  %2230 = vmatprep.subr.bf16.mxu0 0
  %2231 = vmatpush1.bf16.msra.mxu0 0
  %2232 = vmatprep.subr.bf16.mxu0 0
  %2233 = vmatpush1.bf16.msra.mxu0 0
  %2234 = vmatprep.subr.bf16.mxu0 0
  %2235 = vmatpush1.bf16.msra.mxu0 0
  %2236 = vmatprep.subr.bf16.mxu0 0
  %2237 = vmatpush1.bf16.msra.mxu0 0
  %2238 = vmatprep.mubr.bf16.mxu0 0
  %2239 = vmatmul.mubr.bf16.gmra.mrb[0].mxu0 %v2204
  %v2240 = vpop.f32.mrb[0].mxu0
  %v2241 = vadd.f32 0.0, %v2240
  %v2242 = vpop.f32.mrb[0].mxu0
  %v2243 = vpop.f32.mrb[0].mxu0
  %v2244 = vpop.f32.mrb[0].mxu0
  %2245 = vdwg.mxu0
  %v2246 = vadd.f32 %v2149, %v2241
  %v2247 = vxor.u32 %v2198, 2147483648
  %v2248 = vmul.f32 %v2247, 1.442695
  %v2249 = vpow.pop %v2248
  %v2250 = vadd.f32 %v2249, 1.0
  %v2251 = vrcp.pop %v2250
  %v2252 = vmul.f32 1.0, %v2251
  %v2253 = vtanh.pop %v2198
  %v2254 = vmul.f32 %v2252, %v2144
  %2256 = vrot.lane.b32.xlu0 %v2253, 64
  %v2257 = vpop.permute.xlu0 %2256
  %v2259 = vmul.f32 %v2252, %v2257
  %2261 = vrot.lane.b32.xlu0 %v2259, 32
  %v2262 = vpop.permute.xlu0 %2261
  %v2264 = vadd.f32 %v2254, %v2262
  %v2265 = vtanh.pop %v2264
  %2267 = vrot.lane.b32.xlu0 %v2265, 64
  %v2268 = vpop.permute.xlu0 %2267
  %v2270 = vmul.f32 %v2252, %v2268
  %v2271 = vxor.u32 %v2246, 2147483648
  %v2272 = vmul.f32 %v2271, 1.442695
  %v2273 = vpow.pop %v2272
  %v2274 = vadd.f32 %v2273, 1.0
  %v2275 = vrcp.pop %v2274
  %v2276 = vmul.f32 1.0, %v2275
  %v2277 = vtanh.pop %v2246
  %v2278 = vmul.f32 %v2276, %v2037
  %2280 = vrot.lane.b32.xlu0 %v2277, 120
  %v2281 = vpop.permute.xlu0 %2280
  %v2283 = vmul.f32 %v2276, %v2281
  %2285 = vrot.lane.b32.xlu0 %v2283, 4
  %v2286 = vpop.permute.xlu0 %2285
  %v2288 = vadd.f32 %v2278, %v2286
  %v2289 = vtanh.pop %v2288
  %2291 = vrot.lane.b32.xlu0 %v2289, 8
  %v2292 = vpop.permute.xlu0 %2291
  %v2294 = vmul.f32 %v2276, %v2292
  %2296 = vrot.lane.b32.xlu0 %v2270, 32
  %v2297 = vpop.permute.xlu0 %2296
  %v2299 = vsel %vm128, %v2297, %v2264
  %v2300 = vpack.c.bf16 %v2299, %v2299
  %v2302 = vsel %vm547, %v2300, 0
  %2304 = vmatprep.subr.bf16.mxu0 0
  %2305 = vmatpush1.bf16.msra.mxu0 %v539
  %2306 = vmatprep.subr.bf16.mxu0 0
  %2307 = vmatpush1.bf16.msra.mxu0 %v540
  %2308 = vmatprep.subr.bf16.mxu0 0
  %2309 = vmatpush1.bf16.msra.mxu0 %v541
  %2310 = vmatprep.subr.bf16.mxu0 0
  %2311 = vmatpush1.bf16.msra.mxu0 %v542
  %2312 = vmatprep.subr.bf16.mxu0 0
  %2313 = vmatpush1.bf16.msra.mxu0 0
  %2314 = vmatprep.subr.bf16.mxu0 0
  %2315 = vmatpush1.bf16.msra.mxu0 0
  %2316 = vmatprep.subr.bf16.mxu0 0
  %2317 = vmatpush1.bf16.msra.mxu0 0
  %2318 = vmatprep.subr.bf16.mxu0 0
  %2319 = vmatpush1.bf16.msra.mxu0 0
  %2320 = vmatprep.subr.bf16.mxu0 0
  %2321 = vmatpush1.bf16.msra.mxu0 0
  %2322 = vmatprep.subr.bf16.mxu0 0
  %2323 = vmatpush1.bf16.msra.mxu0 0
  %2324 = vmatprep.subr.bf16.mxu0 0
  %2325 = vmatpush1.bf16.msra.mxu0 0
  %2326 = vmatprep.subr.bf16.mxu0 0
  %2327 = vmatpush1.bf16.msra.mxu0 0
  %2328 = vmatprep.subr.bf16.mxu0 0
  %2329 = vmatpush1.bf16.msra.mxu0 0
  %2330 = vmatprep.subr.bf16.mxu0 0
  %2331 = vmatpush1.bf16.msra.mxu0 0
  %2332 = vmatprep.subr.bf16.mxu0 0
  %2333 = vmatpush1.bf16.msra.mxu0 0
  %2334 = vmatprep.subr.bf16.mxu0 0
  %2335 = vmatpush1.bf16.msra.mxu0 0
  %2336 = vmatprep.mubr.bf16.mxu0 0
  %2337 = vmatmul.mubr.bf16.gmra.mrb[0].mxu0 %v2302
  %v2338 = vpop.f32.mrb[0].mxu0
  %v2339 = vadd.f32 0.0, %v2338
  %v2340 = vpop.f32.mrb[0].mxu0
  %v2341 = vpop.f32.mrb[0].mxu0
  %v2342 = vpop.f32.mrb[0].mxu0
  %2343 = vdwg.mxu0
  %v2344 = vadd.f32 %v2150, %v2339
  %v2345 = vxor.u32 %v2344, 2147483648
  %v2346 = vmul.f32 %v2345, 1.442695
  %v2347 = vpow.pop %v2346
  %v2348 = vadd.f32 %v2347, 1.0
  %v2349 = vrcp.pop %v2348
  %v2350 = vmul.f32 1.0, %v2349
  %v2351 = vsub.f32 1.0, %v2350
  %2353 = vrot.lane.b32.xlu0 %v2294, 116
  %v2354 = vpop.permute.xlu0 %2353
  %v2356 = vsel %vm412, %v2354, 0.0
  %2358 = vrot.lane.b32.xlu0 %v2288, 124
  %v2359 = vpop.permute.xlu0 %2358
  %v2361 = vsel %vm412, %v2359, 0.0
  %2363 = vrot.lane.b32.xlu0 %v2137, 32
  %v2364 = vpop.permute.xlu0 %2363
  %v2366 = vsel %vm343, %v2356, %v2364
  %2368 = vrot.lane.b32.xlu0 %v2264, 96
  %v2369 = vpop.permute.xlu0 %2368
  %v2371 = vsel %vm343, %v2361, %v2369
  %2373 = vset.pattern.permute.xlu0 0
  %2374 = vperm.xlu0 %2373, %v2351
  %v2375 = vpop.permute.xlu0 %2374
  %v2377 = vmul.f32 %v2375, %v2270
  %2379 = vset.pattern.permute.xlu0 0
  %2380 = vperm.xlu0 %2379, %v2350
  %v2381 = vpop.permute.xlu0 %2380
  %v2383 = vmul.f32 %v2381, %v2366
  %2385 = vrot.lane.b32.xlu0 %v2383, 96
  %v2386 = vpop.permute.xlu0 %2385
  %v2388 = vadd.f32 %v2377, %v2386
  %v2389 = vmul.f32 %v2375, %v2264
  %v2390 = vmul.f32 %v2381, %v2371
  %2392 = vrot.lane.b32.xlu0 %v2390, 32
  %v2393 = vpop.permute.xlu0 %2392
  %v2395 = vadd.f32 %v2389, %v2393
  %2397 = vrot.lane.b32.xlu0 %v2388, 32
  %v2398 = vpop.permute.xlu0 %2397
  %2400 = vst.msk [vmem:[#allocation3] sm:$0xff] %vm128, %v2398
  %2402 = vrot.lane.b32.xlu0 %v2395, 96
  %v2403 = vpop.permute.xlu0 %2402
  %2405 = vst.msk [vmem:[#allocation4] sm:$0xff] %vm128, %v2403
  %2406 = vst.msk [vmem:[#allocation5] sm:$0xff] %vm412, %v2354
  %2407 = vst.msk [vmem:[#allocation6] sm:$0xff] %vm412, %v2359
  %v2408 = vmax.f32 %v2388, 0.0
  %v2409 = vld [vmem:[%s7] sm:$0xff]
  %v2410 = vld [vmem:[%s7 + $0x8] sm:$0xff]
  %v2411 = vld [vmem:[%s7 + $0x10] sm:$0xff]
  %v2412 = vld [vmem:[%s7 + $0x18] sm:$0xff]
  %v2413 = vld [vmem:[%s8] sm:$0x1]
  %v2415 = vlaneseq
  %v2416 = vshrl.u32 %v2415, 7
  %v2417 = vsub.s32 0, %v2416
  %v2418 = vrot.slane %v2413, %v2417
  %2421 = vrot.lane.b32.xlu0 %v2408, 32
  %v2422 = vpop.permute.xlu0 %2421
  %v2423 = vsel %vm128, %v2422, 0
  %2425 = vmatprep.subr.mxu0 0.0
  %2426 = vmatpush1.msra.mxu0 %v2409
  %2427 = vmatprep.subr.mxu0 0.0
  %2428 = vmatpush1.msra.mxu0 %v2410
  %2429 = vmatprep.subr.mxu0 0.0
  %2430 = vmatpush1.msra.mxu0 %v2411
  %2431 = vmatprep.subr.mxu0 0.0
  %2432 = vmatpush1.msra.mxu0 %v2412
  %2433 = vmatprep.subr.mxu0 0.0
  %2434 = vmatpush1.msra.mxu0 0.0
  %2435 = vmatprep.subr.mxu0 0.0
  %2436 = vmatpush1.msra.mxu0 0.0
  %2437 = vmatprep.subr.mxu0 0.0
  %2438 = vmatpush1.msra.mxu0 0.0
  %2439 = vmatprep.subr.mxu0 0.0
  %2440 = vmatpush1.msra.mxu0 0.0
  %2441 = vmatprep.subr.mxu0 0.0
  %2442 = vmatpush1.msra.mxu0 0.0
  %2443 = vmatprep.subr.mxu0 0.0
  %2444 = vmatpush1.msra.mxu0 0.0
  %2445 = vmatprep.subr.mxu0 0.0
  %2446 = vmatpush1.msra.mxu0 0.0
  %2447 = vmatprep.subr.mxu0 0.0
  %2448 = vmatpush1.msra.mxu0 0.0
  %2449 = vmatprep.subr.mxu0 0.0
  %2450 = vmatpush1.msra.mxu0 0.0
  %2451 = vmatprep.subr.mxu0 0.0
  %2452 = vmatpush1.msra.mxu0 0.0
  %2453 = vmatprep.subr.mxu0 0.0
  %2454 = vmatpush1.msra.mxu0 0.0
  %2455 = vmatprep.subr.mxu0 0.0
  %2456 = vmatpush1.msra.mxu0 0.0
  %2457 = vmatprep.subr.mxu0 0.0
  %2458 = vmatpush1.msra.mxu0 0.0
  %2459 = vmatprep.subr.mxu0 0.0
  %2460 = vmatpush1.msra.mxu0 0.0
  %2461 = vmatprep.subr.mxu0 0.0
  %2462 = vmatpush1.msra.mxu0 0.0
  %2463 = vmatprep.subr.mxu0 0.0
  %2464 = vmatpush1.msra.mxu0 0.0
  %2465 = vmatprep.subr.mxu0 0.0
  %2466 = vmatpush1.msra.mxu0 0.0
  %2467 = vmatprep.subr.mxu0 0.0
  %2468 = vmatpush1.msra.mxu0 0.0
  %2469 = vmatprep.subr.mxu0 0.0
  %2470 = vmatpush1.msra.mxu0 0.0
  %2471 = vmatprep.subr.mxu0 0.0
  %2472 = vmatpush1.msra.mxu0 0.0
  %2473 = vmatprep.subr.mxu0 0.0
  %2474 = vmatpush1.msra.mxu0 0.0
  %2475 = vmatprep.subr.mxu0 0.0
  %2476 = vmatpush1.msra.mxu0 0.0
  %2477 = vmatprep.subr.mxu0 0.0
  %2478 = vmatpush1.msra.mxu0 0.0
  %2479 = vmatprep.subr.mxu0 0.0
  %2480 = vmatpush1.msra.mxu0 0.0
  %2481 = vmatprep.subr.mxu0 0.0
  %2482 = vmatpush1.msra.mxu0 0.0
  %2483 = vmatprep.subr.mxu0 0.0
  %2484 = vmatpush1.msra.mxu0 0.0
  %2485 = vmatprep.subr.mxu0 0.0
  %2486 = vmatpush1.msra.mxu0 0.0
  %2487 = vmatprep.subr.mxu0 0.0
  %2488 = vmatpush1.msra.mxu0 0.0
  %2489 = vmatprep.mubr.f32.mxu0 0.0
  %2490 = vmatmul.mubr.f32.gmra.mrb[0].mxu0 %v2423
  %v2491 = vpop.f32.mrb[0].mxu0
  %v2492 = vadd.f32 %v2418, %v2491
  %v2493 = vpop.f32.mrb[0].mxu0
  %2494 = vdwg.mxu0
  %vm2495 = vcmask 15360
  %2496 = vst.msk [vmem:[%s9] sm:$0xff] %vm2495, %v2492
  // Predicated region
  $region42: #{tpu_custom_call.1} parent=0 // pred_check
    _
  $region43: #{tpu_custom_call.1} parent=0 // pred_check_branch
    %2498 = sbr.rel (0) target = $region45
  $region44: #{tpu_custom_call.1} parent=0 // pred_region
    _
  $region45: #{tpu_custom_call.1} parent=0 // pred_fallthru
    _
  // Predicated region
  $region46: #{tpu_custom_call.1} parent=0 // pred_check
    _
  $region47: #{tpu_custom_call.1} parent=0 // pred_check_branch
    %2500 = sbr.rel (0) target = $region49
  $region48: #{tpu_custom_call.1} parent=0 // pred_region
    _
  $region49: #{tpu_custom_call.1} parent=0 // pred_fallthru
    _

// kernel: tpu_custom_call.1
$region0: #{tpu_custom_call.1}
  #allocation0 [shape = 'u32[]', space=smem, size = 0x4, offset = 0x4, fixed_abs, tag = 'smem constant byte address 0x4 - core index']
  #allocation1 [shape = 'u32[144,128]{1,0:T(1,128)}', space=vmem, size = 0x12000, scoped, tag = 'internal scratch']
  #allocation2 [shape = 'f32[64,257]{1,0:T(8,128)}', space=vmem, size = 0x18000, scoped, tag = 'scratch operand']
  #allocation3 [shape = 'f32[8,32]{1,0:T(8,128)}', space=vmem, size = 0x1000, scoped, tag = 'scratch operand']
  #allocation4 [shape = 'f32[8,32]{1,0:T(8,128)}', space=vmem, size = 0x1000, scoped, tag = 'scratch operand']
  #allocation5 [shape = 'f32[8,4]{1,0:T(8,128)}', space=vmem, size = 0x1000, scoped, tag = 'scratch operand']
  #allocation6 [shape = 'f32[8,4]{1,0:T(8,128)}', space=vmem, size = 0x1000, scoped, tag = 'scratch operand']
  %s0 = inlined_call_operand.vmem [shape: bf16[1,64,32], index: 0, kind: input, shape index: {}]
  %s1 = inlined_call_operand.vmem [shape: f32[1,64,1], index: 1, kind: input, shape index: {}]
  %s2 = inlined_call_operand.vmem [shape: bf16[32,257], index: 2, kind: input, shape index: {}]
  %s3 = inlined_call_operand.vmem [shape: f32[1,257], index: 3, kind: input, shape index: {}]
  %s4 = inlined_call_operand.vmem [shape: bf16[32,128], index: 4, kind: input, shape index: {}]
  %s5 = inlined_call_operand.vmem [shape: bf16[4,16], index: 5, kind: input, shape index: {}]
  %s6 = inlined_call_operand.vmem [shape: bf16[64,1], index: 6, kind: input, shape index: {}]
  %s7 = inlined_call_operand.vmem [shape: f32[32,2], index: 7, kind: input, shape index: {}]
  %s8 = inlined_call_operand.vmem [shape: f32[1,2], index: 8, kind: input, shape index: {}]
  %s9 = inlined_call_operand.vmem [shape: f32[8,2], index: 9, kind: output, shape index: {}]
  %s10 = sld [smem:[#allocation0]]
  $region50: #{tpu_custom_call.1} parent=0
    _
  %s12 = ssub.s32 1, %s10
  %s13 = scalar_select 0, %s12, %s10
  // Predicated region
  $region2: #{tpu_custom_call.1} parent=0 // pred_check
    _
  $region3: #{tpu_custom_call.1} parent=0 // pred_check_branch
    %15 = sbr.rel (0) target = $region5
  $region4: #{tpu_custom_call.1} parent=0 // pred_region
    _
  $region5: #{tpu_custom_call.1} parent=0 // pred_fallthru
    _
  // Predicated region
  $region6: #{tpu_custom_call.1} parent=0 // pred_check
    _
  $region7: #{tpu_custom_call.1} parent=0 // pred_check_branch
    %17 = sbr.rel (0) target = $region9
  $region8: #{tpu_custom_call.1} parent=0 // pred_region
    _
  $region9: #{tpu_custom_call.1} parent=0 // pred_fallthru
    _
  // Predicated region
  $region10: #{tpu_custom_call.1} parent=0 // pred_check
    _
  $region11: #{tpu_custom_call.1} parent=0 // pred_check_branch
    %19 = sbr.rel (0) target = $region13
  $region12: #{tpu_custom_call.1} parent=0 // pred_region
    _
  $region13: #{tpu_custom_call.1} parent=0 // pred_fallthru
    _
  // Predicated region
  $region14: #{tpu_custom_call.1} parent=0 // pred_check
    _
  $region15: #{tpu_custom_call.1} parent=0 // pred_check_branch
    %21 = sbr.rel (0) target = $region17
  $region16: #{tpu_custom_call.1} parent=0 // pred_region
    _
  $region17: #{tpu_custom_call.1} parent=0 // pred_fallthru
    _
  // Predicated region
  $region18: #{tpu_custom_call.1} parent=0 // pred_check
    _
  $region19: #{tpu_custom_call.1} parent=0 // pred_check_branch
    %23 = sbr.rel (0) target = $region21
  $region20: #{tpu_custom_call.1} parent=0 // pred_region
    _
  $region21: #{tpu_custom_call.1} parent=0 // pred_fallthru
    _
  // Predicated region
  $region22: #{tpu_custom_call.1} parent=0 // pred_check
    _
  $region23: #{tpu_custom_call.1} parent=0 // pred_check_branch
    %25 = sbr.rel (0) target = $region25
  $region24: #{tpu_custom_call.1} parent=0 // pred_region
    _
  $region25: #{tpu_custom_call.1} parent=0 // pred_fallthru
    _
  // Predicated region
  $region26: #{tpu_custom_call.1} parent=0 // pred_check
    _
  $region27: #{tpu_custom_call.1} parent=0 // pred_check_branch
    %27 = sbr.rel (0) target = $region29
  $region28: #{tpu_custom_call.1} parent=0 // pred_region
    _
  $region29: #{tpu_custom_call.1} parent=0 // pred_fallthru
    _
  // Predicated region
  $region30: #{tpu_custom_call.1} parent=0 // pred_check
    _
  $region31: #{tpu_custom_call.1} parent=0 // pred_check_branch
    %29 = sbr.rel (0) target = $region33
  $region32: #{tpu_custom_call.1} parent=0 // pred_region
    _
  $region33: #{tpu_custom_call.1} parent=0 // pred_fallthru
    _
  // Predicated region
  $region34: #{tpu_custom_call.1} parent=0 // pred_check
    _
  $region35: #{tpu_custom_call.1} parent=0 // pred_check_branch
    %31 = sbr.rel (0) target = $region37
  $region36: #{tpu_custom_call.1} parent=0 // pred_region
    _
  $region37: #{tpu_custom_call.1} parent=0 // pred_fallthru
    _
  %p33 = scmp.eq.s32.totalorder 0, 0
  // Predicated region
  $region38: #{tpu_custom_call.1} parent=0 // pred_check
    %p34 = pneg %p33
  $region39: #{tpu_custom_call.1} parent=0 // pred_check_branch
    %36 = sbr.rel (%p34) target = $region41
  $region40: #{tpu_custom_call.1} parent=0 // pred_region
    %vm37 = vcmask 261120
    %38 = vst.msk [vmem:[#allocation3] sm:$0xff] %vm37, 0.0
    %39 = vst.msk [vmem:[#allocation4] sm:$0xff] %vm37, 0.0
    %vm40 = vcmask 31744
    %41 = vst.msk [vmem:[#allocation5] sm:$0xff] %vm40, 0.0
    %42 = vst.msk [vmem:[#allocation6] sm:$0xff] %vm40, 0.0
  $region41: #{tpu_custom_call.1} parent=0 // pred_fallthru
    _
  %v43 = vld [vmem:[%s0] sm:$0xf]
  %v44 = vld [vmem:[%s0 + $0x4] sm:$0xf]
  %v45 = vld [vmem:[%s0 + $0x8] sm:$0xf]
  %v46 = vld [vmem:[%s0 + $0xc] sm:$0xf]
  %v47 = vld [vmem:[%s0 + $0x10] sm:$0xf]
  %v48 = vld [vmem:[%s0 + $0x14] sm:$0xf]
  %v49 = vld [vmem:[%s0 + $0x18] sm:$0xf]
  %v50 = vld [vmem:[%s0 + $0x1c] sm:$0xf]
  %v51 = vld [vmem:[%s2] sm:$0xff]
  %v52 = vld [vmem:[%s2 + $0x8] sm:$0xf]
  %v53 = vld [vmem:[%s2 + $0xc] sm:$0xff]
  %v54 = vld [vmem:[%s2 + $0x14] sm:$0xf]
  %v55 = vld [vmem:[%s2 + $0x18] sm:$0xff]
  %v56 = vld [vmem:[%s2 + $0x20] sm:$0xf]
  %v57 = vld [vmem:[%s2 + $0x24] sm:$0xff]
  %v58 = vld [vmem:[%s2 + $0x2c] sm:$0xf]
  %v59 = vld [vmem:[%s3] sm:$0x7]
  %v61 = vlaneseq
  %v62 = vshrl.u32 %v61, 7
  %v63 = vsub.s32 0, %v62
  %v64 = vrot.slane %v59, %v63
  %v65 = vlaneseq
  %v66 = vshrl.u32 %v65, 7
  %v67 = vsub.s32 1, %v66
  %v68 = vrot.slane %v59, %v67
  %v69 = vlaneseq
  %v70 = vshrl.u32 %v69, 7
  %v71 = vsub.s32 2, %v70
  %v72 = vrot.slane %v59, %v71
  %v84 = vunpack.c.l.b16 %v43
  %v85 = vunpack.c.l.b16 %v44
  %v86 = vunpack.c.l.b16 %v45
  %v87 = vunpack.c.l.b16 %v46
  %v88 = vunpack.c.l.b16 %v47
  %v89 = vunpack.c.l.b16 %v48
  %v90 = vunpack.c.l.b16 %v49
  %v91 = vunpack.c.l.b16 %v50
  %v92 = vpack.c.b16 %v85, %v84
  %v93 = vpack.c.b16 %v87, %v86
  %v94 = vpack.c.b16 %v89, %v88
  %v95 = vpack.c.b16 %v91, %v90
  %v104 = vunpack.c.l.b16 %v51
  %v105 = vunpack.c.h.b16 %v51
  %v106 = vunpack.c.l.b16 %v52
  %v107 = vunpack.c.l.b16 %v53
  %v108 = vunpack.c.h.b16 %v53
  %v109 = vunpack.c.l.b16 %v54
  %v110 = vunpack.c.l.b16 %v55
  %v111 = vunpack.c.h.b16 %v55
  %v112 = vunpack.c.l.b16 %v56
  %v113 = vunpack.c.l.b16 %v57
  %v114 = vunpack.c.h.b16 %v57
  %v115 = vunpack.c.l.b16 %v58
  %v116 = vpack.c.b16 %v107, %v104
  %v117 = vpack.c.b16 %v108, %v105
  %v118 = vpack.c.b16 %v109, %v106
  %v119 = vpack.c.b16 %v113, %v110
  %v120 = vpack.c.b16 %v114, %v111
  %v121 = vpack.c.b16 %v115, %v112
  %vm128 = vcmask 261120
  %v130 = vsel %vm128, %v92, 0
  %v133 = vsel %vm128, %v93, 0
  %v136 = vsel %vm128, %v94, 0
  %v139 = vsel %vm128, %v95, 0
  %141 = vmatprep.subr.bf16.mxu0 %v117
  %142 = vmatpush1.bf16.msra.mxu0 %v116
  %143 = vmatprep.subr.bf16.mxu0 %v120
  %144 = vmatpush1.bf16.msra.mxu0 %v119
  %145 = vmatprep.subr.bf16.mxu0 0
  %146 = vmatpush1.bf16.msra.mxu0 0
  %147 = vmatprep.subr.bf16.mxu0 0
  %148 = vmatpush1.bf16.msra.mxu0 0
  %149 = vmatprep.subr.bf16.mxu0 0
  %150 = vmatpush1.bf16.msra.mxu0 0
  %151 = vmatprep.subr.bf16.mxu0 0
  %152 = vmatpush1.bf16.msra.mxu0 0
  %153 = vmatprep.subr.bf16.mxu0 0
  %154 = vmatpush1.bf16.msra.mxu0 0
  %155 = vmatprep.subr.bf16.mxu0 0
  %156 = vmatpush1.bf16.msra.mxu0 0
  %157 = vmatprep.subr.bf16.mxu0 0
  %158 = vmatpush1.bf16.msra.mxu0 0
  %159 = vmatprep.subr.bf16.mxu0 0
  %160 = vmatpush1.bf16.msra.mxu0 0
  %161 = vmatprep.subr.bf16.mxu0 0
  %162 = vmatpush1.bf16.msra.mxu0 0
  %163 = vmatprep.subr.bf16.mxu0 0
  %164 = vmatpush1.bf16.msra.mxu0 0
  %165 = vmatprep.subr.bf16.mxu0 0
  %166 = vmatpush1.bf16.msra.mxu0 0
  %167 = vmatprep.subr.bf16.mxu0 0
  %168 = vmatpush1.bf16.msra.mxu0 0
  %169 = vmatprep.subr.bf16.mxu0 0
  %170 = vmatpush1.bf16.msra.mxu0 0
  %171 = vmatprep.subr.bf16.mxu0 0
  %172 = vmatpush1.bf16.msra.mxu0 0
  %173 = vmatprep.mubr.bf16.mxu0 0
  %174 = vmatmul.mubr.bf16.gmra.mrb[0].mxu0 %v130
  %v175 = vpop.f32.mrb[0].mxu0
  %v176 = vadd.f32 %v64, %v175
  %v177 = vpop.f32.mrb[0].mxu0
  %v178 = vadd.f32 %v68, %v177
  %v179 = vpop.f32.mrb[0].mxu0
  %v180 = vadd.f32 %v64, %v179
  %v181 = vpop.f32.mrb[0].mxu0
  %v182 = vadd.f32 %v68, %v181
  %183 = vmatprep.mubr.bf16.mxu0 0
  %184 = vmatmul.mubr.bf16.gmra.mrb[0].mxu0 %v133
  %v185 = vpop.f32.mrb[0].mxu0
  %v186 = vadd.f32 %v64, %v185
  %v187 = vpop.f32.mrb[0].mxu0
  %v188 = vadd.f32 %v68, %v187
  %v189 = vpop.f32.mrb[0].mxu0
  %v190 = vadd.f32 %v64, %v189
  %v191 = vpop.f32.mrb[0].mxu0
  %v192 = vadd.f32 %v68, %v191
  %193 = vmatprep.mubr.bf16.mxu0 0
  %194 = vmatmul.mubr.bf16.gmra.mrb[0].mxu0 %v136
  %v195 = vpop.f32.mrb[0].mxu0
  %v196 = vadd.f32 %v64, %v195
  %v197 = vpop.f32.mrb[0].mxu0
  %v198 = vadd.f32 %v68, %v197
  %v199 = vpop.f32.mrb[0].mxu0
  %v200 = vadd.f32 %v64, %v199
  %v201 = vpop.f32.mrb[0].mxu0
  %v202 = vadd.f32 %v68, %v201
  %203 = vmatprep.mubr.bf16.mxu0 0
  %204 = vmatmul.mubr.bf16.gmra.mrb[0].mxu0 %v139
  %v205 = vpop.f32.mrb[0].mxu0
  %v206 = vadd.f32 %v64, %v205
  %v207 = vpop.f32.mrb[0].mxu0
  %v208 = vadd.f32 %v68, %v207
  %v209 = vpop.f32.mrb[0].mxu0
  %v210 = vadd.f32 %v64, %v209
  %v211 = vpop.f32.mrb[0].mxu0
  %v212 = vadd.f32 %v68, %v211
  %213 = vdwg.mxu0
  %214 = vmatprep.subr.bf16.mxu0 0
  %215 = vmatpush1.bf16.msra.mxu0 %v118
  %216 = vmatprep.subr.bf16.mxu0 0
  %217 = vmatpush1.bf16.msra.mxu0 %v121
  %218 = vmatprep.subr.bf16.mxu0 0
  %219 = vmatpush1.bf16.msra.mxu0 0
  %220 = vmatprep.subr.bf16.mxu0 0
  %221 = vmatpush1.bf16.msra.mxu0 0
  %222 = vmatprep.subr.bf16.mxu0 0
  %223 = vmatpush1.bf16.msra.mxu0 0
  %224 = vmatprep.subr.bf16.mxu0 0
  %225 = vmatpush1.bf16.msra.mxu0 0
  %226 = vmatprep.subr.bf16.mxu0 0
  %227 = vmatpush1.bf16.msra.mxu0 0
  %228 = vmatprep.subr.bf16.mxu0 0
  %229 = vmatpush1.bf16.msra.mxu0 0
  %230 = vmatprep.subr.bf16.mxu0 0
  %231 = vmatpush1.bf16.msra.mxu0 0
  %232 = vmatprep.subr.bf16.mxu0 0
  %233 = vmatpush1.bf16.msra.mxu0 0
  %234 = vmatprep.subr.bf16.mxu0 0
  %235 = vmatpush1.bf16.msra.mxu0 0
  %236 = vmatprep.subr.bf16.mxu0 0
  %237 = vmatpush1.bf16.msra.mxu0 0
  %238 = vmatprep.subr.bf16.mxu0 0
  %239 = vmatpush1.bf16.msra.mxu0 0
  %240 = vmatprep.subr.bf16.mxu0 0
  %241 = vmatpush1.bf16.msra.mxu0 0
  %242 = vmatprep.subr.bf16.mxu0 0
  %243 = vmatpush1.bf16.msra.mxu0 0
  %244 = vmatprep.subr.bf16.mxu0 0
  %245 = vmatpush1.bf16.msra.mxu0 0
  %246 = vmatprep.mubr.bf16.mxu0 0
  %247 = vmatmul.mubr.bf16.gmra.mrb[0].mxu0 %v130
  %v248 = vpop.f32.mrb[0].mxu0
  %v249 = vadd.f32 %v72, %v248
  %v250 = vpop.f32.mrb[0].mxu0
  %v251 = vpop.f32.mrb[0].mxu0
  %v252 = vadd.f32 %v72, %v251
  %v253 = vpop.f32.mrb[0].mxu0
  %254 = vmatprep.mubr.bf16.mxu0 0
  %255 = vmatmul.mubr.bf16.gmra.mrb[0].mxu0 %v133
  %v256 = vpop.f32.mrb[0].mxu0
  %v257 = vadd.f32 %v72, %v256
  %v258 = vpop.f32.mrb[0].mxu0
  %v259 = vpop.f32.mrb[0].mxu0
  %v260 = vadd.f32 %v72, %v259
  %v261 = vpop.f32.mrb[0].mxu0
  %262 = vmatprep.mubr.bf16.mxu0 0
  %263 = vmatmul.mubr.bf16.gmra.mrb[0].mxu0 %v136
  %v264 = vpop.f32.mrb[0].mxu0
  %v265 = vadd.f32 %v72, %v264
  %v266 = vpop.f32.mrb[0].mxu0
  %v267 = vpop.f32.mrb[0].mxu0
  %v268 = vadd.f32 %v72, %v267
  %v269 = vpop.f32.mrb[0].mxu0
  %270 = vmatprep.mubr.bf16.mxu0 0
  %271 = vmatmul.mubr.bf16.gmra.mrb[0].mxu0 %v139
  %v272 = vpop.f32.mrb[0].mxu0
  %v273 = vadd.f32 %v72, %v272
  %v274 = vpop.f32.mrb[0].mxu0
  %v275 = vpop.f32.mrb[0].mxu0
  %v276 = vadd.f32 %v72, %v275
  %v277 = vpop.f32.mrb[0].mxu0
  %278 = vdwg.mxu0
  %279 = vst [vmem:[#allocation2] sm:$0xff] %v176
  %280 = vst [vmem:[#allocation2 + $0x8] sm:$0xff] %v178
  %vm281 = vcmask 7168
  %282 = vst.msk [vmem:[#allocation2 + $0x10] sm:$0xff] %vm281, %v249
  %283 = vst [vmem:[#allocation2 + $0x18] sm:$0xff] %v180
  %284 = vst [vmem:[#allocation2 + $0x20] sm:$0xff] %v182
  %285 = vst.msk [vmem:[#allocation2 + $0x28] sm:$0xff] %vm281, %v252
  %286 = vst [vmem:[#allocation2 + $0x30] sm:$0xff] %v186
  %287 = vst [vmem:[#allocation2 + $0x38] sm:$0xff] %v188
  %288 = vst.msk [vmem:[#allocation2 + $0x40] sm:$0xff] %vm281, %v257
  %289 = vst [vmem:[#allocation2 + $0x48] sm:$0xff] %v190
  %290 = vst [vmem:[#allocation2 + $0x50] sm:$0xff] %v192
  %291 = vst.msk [vmem:[#allocation2 + $0x58] sm:$0xff] %vm281, %v260
  %292 = vst [vmem:[#allocation2 + $0x60] sm:$0xff] %v196
  %293 = vst [vmem:[#allocation2 + $0x68] sm:$0xff] %v198
  %294 = vst.msk [vmem:[#allocation2 + $0x70] sm:$0xff] %vm281, %v265
  %295 = vst [vmem:[#allocation2 + $0x78] sm:$0xff] %v200
  %296 = vst [vmem:[#allocation2 + $0x80] sm:$0xff] %v202
  %297 = vst.msk [vmem:[#allocation2 + $0x88] sm:$0xff] %vm281, %v268
  %298 = vst [vmem:[#allocation2 + $0x90] sm:$0xff] %v206
  %299 = vst [vmem:[#allocation2 + $0x98] sm:$0xff] %v208
  %300 = vst.msk [vmem:[#allocation2 + $0xa0] sm:$0xff] %vm281, %v273
  %301 = vst [vmem:[#allocation2 + $0xa8] sm:$0xff] %v210
  %302 = vst [vmem:[#allocation2 + $0xb0] sm:$0xff] %v212
  %303 = vst.msk [vmem:[#allocation2 + $0xb8] sm:$0xff] %vm281, %v276
  %v304 = vld [vmem:[%s1] sm:$0xff]
  %v305 = vld [vmem:[%s1 + $0x8] sm:$0xff]
  %v306 = vld [vmem:[%s1 + $0x10] sm:$0xff]
  %v307 = vld [vmem:[%s1 + $0x18] sm:$0xff]
  %v308 = vld [vmem:[%s1 + $0x20] sm:$0xff]
  %v309 = vld [vmem:[%s1 + $0x28] sm:$0xff]
  %v310 = vld [vmem:[%s1 + $0x30] sm:$0xff]
  %v311 = vld [vmem:[%s1 + $0x38] sm:$0xff]
  %v312 = vadd.f32 %v249, %v304
  %v313 = vadd.f32 %v252, %v305
  %v314 = vadd.f32 %v257, %v306
  %v315 = vadd.f32 %v260, %v307
  %v316 = vadd.f32 %v265, %v308
  %v317 = vadd.f32 %v268, %v309
  %v318 = vadd.f32 %v273, %v310
  %v319 = vadd.f32 %v276, %v311
  %320 = vst.msk [vmem:[#allocation2 + $0x10] sm:$0xff] %vm281, %v312
  %321 = vst.msk [vmem:[#allocation2 + $0x28] sm:$0xff] %vm281, %v313
  %322 = vst.msk [vmem:[#allocation2 + $0x40] sm:$0xff] %vm281, %v314
  %323 = vst.msk [vmem:[#allocation2 + $0x58] sm:$0xff] %vm281, %v315
  %324 = vst.msk [vmem:[#allocation2 + $0x70] sm:$0xff] %vm281, %v316
  %325 = vst.msk [vmem:[#allocation2 + $0x88] sm:$0xff] %vm281, %v317
  %326 = vst.msk [vmem:[#allocation2 + $0xa0] sm:$0xff] %vm281, %v318
  %327 = vst.msk [vmem:[#allocation2 + $0xb8] sm:$0xff] %vm281, %v319
  %v328 = vld [vmem:[%s4] sm:$0xf]
  %v329 = vld [vmem:[%s4 + $0x4] sm:$0xf]
  %v330 = vld [vmem:[%s4 + $0x8] sm:$0xf]
  %v331 = vld [vmem:[%s4 + $0xc] sm:$0xf]
  %v332 = vld [vmem:[%s5] sm:$0x3]
  %v333 = vld [vmem:[%s6] sm:$0xf]
  %v334 = vld [vmem:[%s6 + $0x4] sm:$0xf]
  %v335 = vld [vmem:[%s6 + $0x8] sm:$0xf]
  %v336 = vld [vmem:[%s6 + $0xc] sm:$0xf]
  %v337 = vld [vmem:[%s6 + $0x10] sm:$0xf]
  %v338 = vld [vmem:[%s6 + $0x14] sm:$0xf]
  %v339 = vld [vmem:[%s6 + $0x18] sm:$0xf]
  %v340 = vld [vmem:[%s6 + $0x1c] sm:$0xf]
  %v341 = vlaneseq
  %v342 = vand.u32 %v341, 127
  %vm343 = vcmp.lt.s32.totalorder %v342, 4
  %v344 = vld [vmem:[#allocation3] sm:$0xff]
  %v345 = vld [vmem:[#allocation4] sm:$0xff]
  %v346 = vld [vmem:[#allocation5] sm:$0xff]
  %v347 = vld [vmem:[#allocation6] sm:$0xff]
  %s348 = smul.u32 0, 3
  %s349 = smul.addr %s348, 8
  %s350 = scalar_lea.vmem [#allocation2], %s349
  %v351 = vld [vmem:[%s350] sm:$0xff]
  %v352 = vld [vmem:[%s350 + $0x8] sm:$0xff]
  %v353 = vld [vmem:[%s350 + $0x10] sm:$0xff]
  %v354 = vpack.c.bf16 %v344, %v344
  %v359 = vunpack.c.l.b16 %v328
  %v360 = vunpack.c.l.b16 %v329
  %v361 = vunpack.c.l.b16 %v330
  %v362 = vunpack.c.l.b16 %v331
  %v363 = vpack.c.b16 %v360, %v359
  %v364 = vpack.c.b16 %v362, %v361
  %v368 = vsel %vm128, %v354, 0
  %370 = vmatprep.subr.bf16.mxu0 0
  %371 = vmatpush1.bf16.msra.mxu0 %v363
  %372 = vmatprep.subr.bf16.mxu0 0
  %373 = vmatpush1.bf16.msra.mxu0 %v364
  %374 = vmatprep.subr.bf16.mxu0 0
  %375 = vmatpush1.bf16.msra.mxu0 0
  %376 = vmatprep.subr.bf16.mxu0 0
  %377 = vmatpush1.bf16.msra.mxu0 0
  %378 = vmatprep.subr.bf16.mxu0 0
  %379 = vmatpush1.bf16.msra.mxu0 0
  %380 = vmatprep.subr.bf16.mxu0 0
  %381 = vmatpush1.bf16.msra.mxu0 0
  %382 = vmatprep.subr.bf16.mxu0 0
  %383 = vmatpush1.bf16.msra.mxu0 0
  %384 = vmatprep.subr.bf16.mxu0 0
  %385 = vmatpush1.bf16.msra.mxu0 0
  %386 = vmatprep.subr.bf16.mxu0 0
  %387 = vmatpush1.bf16.msra.mxu0 0
  %388 = vmatprep.subr.bf16.mxu0 0
  %389 = vmatpush1.bf16.msra.mxu0 0
  %390 = vmatprep.subr.bf16.mxu0 0
  %391 = vmatpush1.bf16.msra.mxu0 0
  %392 = vmatprep.subr.bf16.mxu0 0
  %393 = vmatpush1.bf16.msra.mxu0 0
  %394 = vmatprep.subr.bf16.mxu0 0
  %395 = vmatpush1.bf16.msra.mxu0 0
  %396 = vmatprep.subr.bf16.mxu0 0
  %397 = vmatpush1.bf16.msra.mxu0 0
  %398 = vmatprep.subr.bf16.mxu0 0
  %399 = vmatpush1.bf16.msra.mxu0 0
  %400 = vmatprep.subr.bf16.mxu0 0
  %401 = vmatpush1.bf16.msra.mxu0 0
  %402 = vmatprep.mubr.bf16.mxu0 0
  %403 = vmatmul.mubr.bf16.gmra.mrb[0].mxu0 %v368
  %v404 = vpop.f32.mrb[0].mxu0
  %v405 = vadd.f32 0.0, %v404
  %v406 = vpop.f32.mrb[0].mxu0
  %v407 = vpop.f32.mrb[0].mxu0
  %v408 = vpop.f32.mrb[0].mxu0
  %409 = vdwg.mxu0
  %v410 = vadd.f32 %v351, %v405
  %v411 = vpack.c.bf16 %v346, %v346
  %vm412 = vcmask 31744
  %v414 = vsel %vm412, %v411, 0
  %vm416 = vcmask 1041408
  %v418 = vsel %vm416, %v332, 0
  %420 = vmatprep.subr.bf16.mxu0 0
  %421 = vmatpush1.bf16.msra.mxu0 %v418
  %422 = vmatprep.subr.bf16.mxu0 0
  %423 = vmatpush1.bf16.msra.mxu0 0
  %424 = vmatprep.subr.bf16.mxu0 0
  %425 = vmatpush1.bf16.msra.mxu0 0
  %426 = vmatprep.subr.bf16.mxu0 0
  %427 = vmatpush1.bf16.msra.mxu0 0
  %428 = vmatprep.subr.bf16.mxu0 0
  %429 = vmatpush1.bf16.msra.mxu0 0
  %430 = vmatprep.subr.bf16.mxu0 0
  %431 = vmatpush1.bf16.msra.mxu0 0
  %432 = vmatprep.subr.bf16.mxu0 0
  %433 = vmatpush1.bf16.msra.mxu0 0
  %434 = vmatprep.subr.bf16.mxu0 0
  %435 = vmatpush1.bf16.msra.mxu0 0
  %436 = vmatprep.subr.bf16.mxu0 0
  %437 = vmatpush1.bf16.msra.mxu0 0
  %438 = vmatprep.subr.bf16.mxu0 0
  %439 = vmatpush1.bf16.msra.mxu0 0
  %440 = vmatprep.subr.bf16.mxu0 0
  %441 = vmatpush1.bf16.msra.mxu0 0
  %442 = vmatprep.subr.bf16.mxu0 0
  %443 = vmatpush1.bf16.msra.mxu0 0
  %444 = vmatprep.subr.bf16.mxu0 0
  %445 = vmatpush1.bf16.msra.mxu0 0
  %446 = vmatprep.subr.bf16.mxu0 0
  %447 = vmatpush1.bf16.msra.mxu0 0
  %448 = vmatprep.subr.bf16.mxu0 0
  %449 = vmatpush1.bf16.msra.mxu0 0
  %450 = vmatprep.subr.bf16.mxu0 0
  %451 = vmatpush1.bf16.msra.mxu0 0
  %452 = vmatprep.mubr.bf16.mxu0 0
  %453 = vmatmul.mubr.bf16.gmra.mrb[0].mxu0 %v414
  %v454 = vpop.f32.mrb[0].mxu0
  %v455 = vadd.f32 0.0, %v454
  %v456 = vpop.f32.mrb[0].mxu0
  %v457 = vpop.f32.mrb[0].mxu0
  %v458 = vpop.f32.mrb[0].mxu0
  %459 = vdwg.mxu0
  %v460 = vadd.f32 %v352, %v455
  %v461 = vxor.u32 %v410, 2147483648
  %v462 = vmul.f32 %v461, 1.442695
  %v463 = vpow.pop %v462
  %v464 = vadd.f32 %v463, 1.0
  %v465 = vrcp.pop %v464
  %v466 = vmul.f32 1.0, %v465
  %v467 = vtanh.pop %v410
  %469 = vrot.lane.b32.xlu0 %v345, 32
  %v470 = vpop.permute.xlu0 %469
  %v472 = vmul.f32 %v466, %v470
  %474 = vrot.lane.b32.xlu0 %v467, 64
  %v475 = vpop.permute.xlu0 %474
  %v477 = vmul.f32 %v466, %v475
  %479 = vrot.lane.b32.xlu0 %v477, 32
  %v480 = vpop.permute.xlu0 %479
  %v482 = vadd.f32 %v472, %v480
  %v483 = vtanh.pop %v482
  %485 = vrot.lane.b32.xlu0 %v483, 64
  %v486 = vpop.permute.xlu0 %485
  %v488 = vmul.f32 %v466, %v486
  %v489 = vxor.u32 %v460, 2147483648
  %v490 = vmul.f32 %v489, 1.442695
  %v491 = vpow.pop %v490
  %v492 = vadd.f32 %v491, 1.0
  %v493 = vrcp.pop %v492
  %v494 = vmul.f32 1.0, %v493
  %v495 = vtanh.pop %v460
  %497 = vrot.lane.b32.xlu0 %v347, 4
  %v498 = vpop.permute.xlu0 %497
  %v500 = vmul.f32 %v494, %v498
  %502 = vrot.lane.b32.xlu0 %v495, 120
  %v503 = vpop.permute.xlu0 %502
  %v505 = vmul.f32 %v494, %v503
  %507 = vrot.lane.b32.xlu0 %v505, 4
  %v508 = vpop.permute.xlu0 %507
  %v510 = vadd.f32 %v500, %v508
  %v511 = vtanh.pop %v510
  %513 = vrot.lane.b32.xlu0 %v511, 8
  %v514 = vpop.permute.xlu0 %513
  %v516 = vmul.f32 %v494, %v514
  %518 = vrot.lane.b32.xlu0 %v488, 32
  %v519 = vpop.permute.xlu0 %518
  %v521 = vsel %vm128, %v519, %v482
  %v522 = vpack.c.bf16 %v521, %v521
  %v531 = vunpack.c.l.b16 %v333
  %v532 = vunpack.c.l.b16 %v334
  %v533 = vunpack.c.l.b16 %v335
  %v534 = vunpack.c.l.b16 %v336
  %v535 = vunpack.c.l.b16 %v337
  %v536 = vunpack.c.l.b16 %v338
  %v537 = vunpack.c.l.b16 %v339
  %v538 = vunpack.c.l.b16 %v340
  %v539 = vpack.c.b16 %v532, %v531
  %v540 = vpack.c.b16 %v534, %v533
  %v541 = vpack.c.b16 %v536, %v535
  %v542 = vpack.c.b16 %v538, %v537
  %vm547 = vcmask 523264
  %v549 = vsel %vm547, %v522, 0
  %551 = vmatprep.subr.bf16.mxu0 0
  %552 = vmatpush1.bf16.msra.mxu0 %v539
  %553 = vmatprep.subr.bf16.mxu0 0
  %554 = vmatpush1.bf16.msra.mxu0 %v540
  %555 = vmatprep.subr.bf16.mxu0 0
  %556 = vmatpush1.bf16.msra.mxu0 %v541
  %557 = vmatprep.subr.bf16.mxu0 0
  %558 = vmatpush1.bf16.msra.mxu0 %v542
  %559 = vmatprep.subr.bf16.mxu0 0
  %560 = vmatpush1.bf16.msra.mxu0 0
  %561 = vmatprep.subr.bf16.mxu0 0
  %562 = vmatpush1.bf16.msra.mxu0 0
  %563 = vmatprep.subr.bf16.mxu0 0
  %564 = vmatpush1.bf16.msra.mxu0 0
  %565 = vmatprep.subr.bf16.mxu0 0
  %566 = vmatpush1.bf16.msra.mxu0 0
  %567 = vmatprep.subr.bf16.mxu0 0
  %568 = vmatpush1.bf16.msra.mxu0 0
  %569 = vmatprep.subr.bf16.mxu0 0
  %570 = vmatpush1.bf16.msra.mxu0 0
  %571 = vmatprep.subr.bf16.mxu0 0
  %572 = vmatpush1.bf16.msra.mxu0 0
  %573 = vmatprep.subr.bf16.mxu0 0
  %574 = vmatpush1.bf16.msra.mxu0 0
  %575 = vmatprep.subr.bf16.mxu0 0
  %576 = vmatpush1.bf16.msra.mxu0 0
  %577 = vmatprep.subr.bf16.mxu0 0
  %578 = vmatpush1.bf16.msra.mxu0 0
  %579 = vmatprep.subr.bf16.mxu0 0
  %580 = vmatpush1.bf16.msra.mxu0 0
  %581 = vmatprep.subr.bf16.mxu0 0
  %582 = vmatpush1.bf16.msra.mxu0 0
  %583 = vmatprep.mubr.bf16.mxu0 0
  %584 = vmatmul.mubr.bf16.gmra.mrb[0].mxu0 %v549
  %v585 = vpop.f32.mrb[0].mxu0
  %v586 = vadd.f32 0.0, %v585
  %v587 = vpop.f32.mrb[0].mxu0
  %v588 = vpop.f32.mrb[0].mxu0
  %v589 = vpop.f32.mrb[0].mxu0
  %590 = vdwg.mxu0
  %v591 = vadd.f32 %v353, %v586
  %v592 = vxor.u32 %v591, 2147483648
  %v593 = vmul.f32 %v592, 1.442695
  %v594 = vpow.pop %v593
  %v595 = vadd.f32 %v594, 1.0
  %v596 = vrcp.pop %v595
  %v597 = vmul.f32 1.0, %v596
  %v598 = vsub.f32 1.0, %v597
  %600 = vrot.lane.b32.xlu0 %v516, 116
  %v601 = vpop.permute.xlu0 %600
  %v603 = vsel %vm412, %v601, 0.0
  %605 = vrot.lane.b32.xlu0 %v510, 124
  %v606 = vpop.permute.xlu0 %605
  %v608 = vsel %vm412, %v606, 0.0
  %v609 = vsel %vm343, %v603, %v344
  %611 = vrot.lane.b32.xlu0 %v482, 96
  %v612 = vpop.permute.xlu0 %611
  %v614 = vsel %vm343, %v608, %v612
  %616 = vset.pattern.permute.xlu0 0
  %617 = vperm.xlu0 %616, %v598
  %v618 = vpop.permute.xlu0 %617
  %v620 = vmul.f32 %v618, %v488
  %622 = vset.pattern.permute.xlu0 0
  %623 = vperm.xlu0 %622, %v597
  %v624 = vpop.permute.xlu0 %623
  %v626 = vmul.f32 %v624, %v609
  %628 = vrot.lane.b32.xlu0 %v626, 96
  %v629 = vpop.permute.xlu0 %628
  %v631 = vadd.f32 %v620, %v629
  %v632 = vmul.f32 %v618, %v482
  %v633 = vmul.f32 %v624, %v614
  %635 = vrot.lane.b32.xlu0 %v633, 32
  %v636 = vpop.permute.xlu0 %635
  %v638 = vadd.f32 %v632, %v636
  %s639 = smul.u32 1, 3
  %s640 = smul.addr %s639, 8
  %s641 = scalar_lea.vmem [#allocation2], %s640
  %v642 = vld [vmem:[%s641] sm:$0xff]
  %v643 = vld [vmem:[%s641 + $0x8] sm:$0xff]
  %v644 = vld [vmem:[%s641 + $0x10] sm:$0xff]
  %v645 = vpack.c.bf16 %v631, %v631
  %647 = vrot.lane.b32.xlu0 %v645, 32
  %v648 = vpop.permute.xlu0 %647
  %v650 = vsel %vm128, %v648, 0
  %652 = vmatprep.subr.bf16.mxu0 0
  %653 = vmatpush1.bf16.msra.mxu0 %v363
  %654 = vmatprep.subr.bf16.mxu0 0
  %655 = vmatpush1.bf16.msra.mxu0 %v364
  %656 = vmatprep.subr.bf16.mxu0 0
  %657 = vmatpush1.bf16.msra.mxu0 0
  %658 = vmatprep.subr.bf16.mxu0 0
  %659 = vmatpush1.bf16.msra.mxu0 0
  %660 = vmatprep.subr.bf16.mxu0 0
  %661 = vmatpush1.bf16.msra.mxu0 0
  %662 = vmatprep.subr.bf16.mxu0 0
  %663 = vmatpush1.bf16.msra.mxu0 0
  %664 = vmatprep.subr.bf16.mxu0 0
  %665 = vmatpush1.bf16.msra.mxu0 0
  %666 = vmatprep.subr.bf16.mxu0 0
  %667 = vmatpush1.bf16.msra.mxu0 0
  %668 = vmatprep.subr.bf16.mxu0 0
  %669 = vmatpush1.bf16.msra.mxu0 0
  %670 = vmatprep.subr.bf16.mxu0 0
  %671 = vmatpush1.bf16.msra.mxu0 0
  %672 = vmatprep.subr.bf16.mxu0 0
  %673 = vmatpush1.bf16.msra.mxu0 0
  %674 = vmatprep.subr.bf16.mxu0 0
  %675 = vmatpush1.bf16.msra.mxu0 0
  %676 = vmatprep.subr.bf16.mxu0 0
  %677 = vmatpush1.bf16.msra.mxu0 0
  %678 = vmatprep.subr.bf16.mxu0 0
  %679 = vmatpush1.bf16.msra.mxu0 0
  %680 = vmatprep.subr.bf16.mxu0 0
  %681 = vmatpush1.bf16.msra.mxu0 0
  %682 = vmatprep.subr.bf16.mxu0 0
  %683 = vmatpush1.bf16.msra.mxu0 0
  %684 = vmatprep.mubr.bf16.mxu0 0
  %685 = vmatmul.mubr.bf16.gmra.mrb[0].mxu0 %v650
  %v686 = vpop.f32.mrb[0].mxu0
  %v687 = vadd.f32 0.0, %v686
  %v688 = vpop.f32.mrb[0].mxu0
  %v689 = vpop.f32.mrb[0].mxu0
  %v690 = vpop.f32.mrb[0].mxu0
  %691 = vdwg.mxu0
  %v692 = vadd.f32 %v642, %v687
  %v693 = vpack.c.bf16 %v516, %v516
  %695 = vrot.lane.b32.xlu0 %v693, 116
  %v696 = vpop.permute.xlu0 %695
  %v698 = vsel %vm412, %v696, 0
  %700 = vmatprep.subr.bf16.mxu0 0
  %701 = vmatpush1.bf16.msra.mxu0 %v418
  %702 = vmatprep.subr.bf16.mxu0 0
  %703 = vmatpush1.bf16.msra.mxu0 0
  %704 = vmatprep.subr.bf16.mxu0 0
  %705 = vmatpush1.bf16.msra.mxu0 0
  %706 = vmatprep.subr.bf16.mxu0 0
  %707 = vmatpush1.bf16.msra.mxu0 0
  %708 = vmatprep.subr.bf16.mxu0 0
  %709 = vmatpush1.bf16.msra.mxu0 0
  %710 = vmatprep.subr.bf16.mxu0 0
  %711 = vmatpush1.bf16.msra.mxu0 0
  %712 = vmatprep.subr.bf16.mxu0 0
  %713 = vmatpush1.bf16.msra.mxu0 0
  %714 = vmatprep.subr.bf16.mxu0 0
  %715 = vmatpush1.bf16.msra.mxu0 0
  %716 = vmatprep.subr.bf16.mxu0 0
  %717 = vmatpush1.bf16.msra.mxu0 0
  %718 = vmatprep.subr.bf16.mxu0 0
  %719 = vmatpush1.bf16.msra.mxu0 0
  %720 = vmatprep.subr.bf16.mxu0 0
  %721 = vmatpush1.bf16.msra.mxu0 0
  %722 = vmatprep.subr.bf16.mxu0 0
  %723 = vmatpush1.bf16.msra.mxu0 0
  %724 = vmatprep.subr.bf16.mxu0 0
  %725 = vmatpush1.bf16.msra.mxu0 0
  %726 = vmatprep.subr.bf16.mxu0 0
  %727 = vmatpush1.bf16.msra.mxu0 0
  %728 = vmatprep.subr.bf16.mxu0 0
  %729 = vmatpush1.bf16.msra.mxu0 0
  %730 = vmatprep.subr.bf16.mxu0 0
  %731 = vmatpush1.bf16.msra.mxu0 0
  %732 = vmatprep.mubr.bf16.mxu0 0
  %733 = vmatmul.mubr.bf16.gmra.mrb[0].mxu0 %v698
  %v734 = vpop.f32.mrb[0].mxu0
  %v735 = vadd.f32 0.0, %v734
  %v736 = vpop.f32.mrb[0].mxu0
  %v737 = vpop.f32.mrb[0].mxu0
  %v738 = vpop.f32.mrb[0].mxu0
  %739 = vdwg.mxu0
  %v740 = vadd.f32 %v643, %v735
  %v741 = vxor.u32 %v692, 2147483648
  %v742 = vmul.f32 %v741, 1.442695
  %v743 = vpow.pop %v742
  %v744 = vadd.f32 %v743, 1.0
  %v745 = vrcp.pop %v744
  %v746 = vmul.f32 1.0, %v745
  %v747 = vtanh.pop %v692
  %v748 = vmul.f32 %v746, %v638
  %750 = vrot.lane.b32.xlu0 %v747, 64
  %v751 = vpop.permute.xlu0 %750
  %v753 = vmul.f32 %v746, %v751
  %755 = vrot.lane.b32.xlu0 %v753, 32
  %v756 = vpop.permute.xlu0 %755
  %v758 = vadd.f32 %v748, %v756
  %v759 = vtanh.pop %v758
  %761 = vrot.lane.b32.xlu0 %v759, 64
  %v762 = vpop.permute.xlu0 %761
  %v764 = vmul.f32 %v746, %v762
  %v765 = vxor.u32 %v740, 2147483648
  %v766 = vmul.f32 %v765, 1.442695
  %v767 = vpow.pop %v766
  %v768 = vadd.f32 %v767, 1.0
  %v769 = vrcp.pop %v768
  %v770 = vmul.f32 1.0, %v769
  %v771 = vtanh.pop %v740
  %v772 = vmul.f32 %v770, %v510
  %774 = vrot.lane.b32.xlu0 %v771, 120
  %v775 = vpop.permute.xlu0 %774
  %v777 = vmul.f32 %v770, %v775
  %779 = vrot.lane.b32.xlu0 %v777, 4
  %v780 = vpop.permute.xlu0 %779
  %v782 = vadd.f32 %v772, %v780
  %v783 = vtanh.pop %v782
  %785 = vrot.lane.b32.xlu0 %v783, 8
  %v786 = vpop.permute.xlu0 %785
  %v788 = vmul.f32 %v770, %v786
  %790 = vrot.lane.b32.xlu0 %v764, 32
  %v791 = vpop.permute.xlu0 %790
  %v793 = vsel %vm128, %v791, %v758
  %v794 = vpack.c.bf16 %v793, %v793
  %v796 = vsel %vm547, %v794, 0
  %798 = vmatprep.subr.bf16.mxu0 0
  %799 = vmatpush1.bf16.msra.mxu0 %v539
  %800 = vmatprep.subr.bf16.mxu0 0
  %801 = vmatpush1.bf16.msra.mxu0 %v540
  %802 = vmatprep.subr.bf16.mxu0 0
  %803 = vmatpush1.bf16.msra.mxu0 %v541
  %804 = vmatprep.subr.bf16.mxu0 0
  %805 = vmatpush1.bf16.msra.mxu0 %v542
  %806 = vmatprep.subr.bf16.mxu0 0
  %807 = vmatpush1.bf16.msra.mxu0 0
  %808 = vmatprep.subr.bf16.mxu0 0
  %809 = vmatpush1.bf16.msra.mxu0 0
  %810 = vmatprep.subr.bf16.mxu0 0
  %811 = vmatpush1.bf16.msra.mxu0 0
  %812 = vmatprep.subr.bf16.mxu0 0
  %813 = vmatpush1.bf16.msra.mxu0 0
  %814 = vmatprep.subr.bf16.mxu0 0
  %815 = vmatpush1.bf16.msra.mxu0 0
  %816 = vmatprep.subr.bf16.mxu0 0
  %817 = vmatpush1.bf16.msra.mxu0 0
  %818 = vmatprep.subr.bf16.mxu0 0
  %819 = vmatpush1.bf16.msra.mxu0 0
  %820 = vmatprep.subr.bf16.mxu0 0
  %821 = vmatpush1.bf16.msra.mxu0 0
  %822 = vmatprep.subr.bf16.mxu0 0
  %823 = vmatpush1.bf16.msra.mxu0 0
  %824 = vmatprep.subr.bf16.mxu0 0
  %825 = vmatpush1.bf16.msra.mxu0 0
  %826 = vmatprep.subr.bf16.mxu0 0
  %827 = vmatpush1.bf16.msra.mxu0 0
  %828 = vmatprep.subr.bf16.mxu0 0
  %829 = vmatpush1.bf16.msra.mxu0 0
  %830 = vmatprep.mubr.bf16.mxu0 0
  %831 = vmatmul.mubr.bf16.gmra.mrb[0].mxu0 %v796
  %v832 = vpop.f32.mrb[0].mxu0
  %v833 = vadd.f32 0.0, %v832
  %v834 = vpop.f32.mrb[0].mxu0
  %v835 = vpop.f32.mrb[0].mxu0
  %v836 = vpop.f32.mrb[0].mxu0
  %837 = vdwg.mxu0
  %v838 = vadd.f32 %v644, %v833
  %v839 = vxor.u32 %v838, 2147483648
  %v840 = vmul.f32 %v839, 1.442695
  %v841 = vpow.pop %v840
  %v842 = vadd.f32 %v841, 1.0
  %v843 = vrcp.pop %v842
  %v844 = vmul.f32 1.0, %v843
  %v845 = vsub.f32 1.0, %v844
  %847 = vrot.lane.b32.xlu0 %v788, 116
  %v848 = vpop.permute.xlu0 %847
  %v850 = vsel %vm412, %v848, 0.0
  %852 = vrot.lane.b32.xlu0 %v782, 124
  %v853 = vpop.permute.xlu0 %852
  %v855 = vsel %vm412, %v853, 0.0
  %857 = vrot.lane.b32.xlu0 %v631, 32
  %v858 = vpop.permute.xlu0 %857
  %v860 = vsel %vm343, %v850, %v858
  %862 = vrot.lane.b32.xlu0 %v758, 96
  %v863 = vpop.permute.xlu0 %862
  %v865 = vsel %vm343, %v855, %v863
  %867 = vset.pattern.permute.xlu0 0
  %868 = vperm.xlu0 %867, %v845
  %v869 = vpop.permute.xlu0 %868
  %v871 = vmul.f32 %v869, %v764
  %873 = vset.pattern.permute.xlu0 0
  %874 = vperm.xlu0 %873, %v844
  %v875 = vpop.permute.xlu0 %874
  %v877 = vmul.f32 %v875, %v860
  %879 = vrot.lane.b32.xlu0 %v877, 96
  %v880 = vpop.permute.xlu0 %879
  %v882 = vadd.f32 %v871, %v880
  %v883 = vmul.f32 %v869, %v758
  %v884 = vmul.f32 %v875, %v865
  %886 = vrot.lane.b32.xlu0 %v884, 32
  %v887 = vpop.permute.xlu0 %886
  %v889 = vadd.f32 %v883, %v887
  %s890 = smul.u32 2, 3
  %s891 = smul.addr %s890, 8
  %s892 = scalar_lea.vmem [#allocation2], %s891
  %v893 = vld [vmem:[%s892] sm:$0xff]
  %v894 = vld [vmem:[%s892 + $0x8] sm:$0xff]
  %v895 = vld [vmem:[%s892 + $0x10] sm:$0xff]
  %v896 = vpack.c.bf16 %v882, %v882
  %898 = vrot.lane.b32.xlu0 %v896, 32
  %v899 = vpop.permute.xlu0 %898
  %v901 = vsel %vm128, %v899, 0
  %903 = vmatprep.subr.bf16.mxu0 0
  %904 = vmatpush1.bf16.msra.mxu0 %v363
  %905 = vmatprep.subr.bf16.mxu0 0
  %906 = vmatpush1.bf16.msra.mxu0 %v364
  %907 = vmatprep.subr.bf16.mxu0 0
  %908 = vmatpush1.bf16.msra.mxu0 0
  %909 = vmatprep.subr.bf16.mxu0 0
  %910 = vmatpush1.bf16.msra.mxu0 0
  %911 = vmatprep.subr.bf16.mxu0 0
  %912 = vmatpush1.bf16.msra.mxu0 0
  %913 = vmatprep.subr.bf16.mxu0 0
  %914 = vmatpush1.bf16.msra.mxu0 0
  %915 = vmatprep.subr.bf16.mxu0 0
  %916 = vmatpush1.bf16.msra.mxu0 0
  %917 = vmatprep.subr.bf16.mxu0 0
  %918 = vmatpush1.bf16.msra.mxu0 0
  %919 = vmatprep.subr.bf16.mxu0 0
  %920 = vmatpush1.bf16.msra.mxu0 0
  %921 = vmatprep.subr.bf16.mxu0 0
  %922 = vmatpush1.bf16.msra.mxu0 0
  %923 = vmatprep.subr.bf16.mxu0 0
  %924 = vmatpush1.bf16.msra.mxu0 0
  %925 = vmatprep.subr.bf16.mxu0 0
  %926 = vmatpush1.bf16.msra.mxu0 0
  %927 = vmatprep.subr.bf16.mxu0 0
  %928 = vmatpush1.bf16.msra.mxu0 0
  %929 = vmatprep.subr.bf16.mxu0 0
  %930 = vmatpush1.bf16.msra.mxu0 0
  %931 = vmatprep.subr.bf16.mxu0 0
  %932 = vmatpush1.bf16.msra.mxu0 0
  %933 = vmatprep.subr.bf16.mxu0 0
  %934 = vmatpush1.bf16.msra.mxu0 0
  %935 = vmatprep.mubr.bf16.mxu0 0
  %936 = vmatmul.mubr.bf16.gmra.mrb[0].mxu0 %v901
  %v937 = vpop.f32.mrb[0].mxu0
  %v938 = vadd.f32 0.0, %v937
  %v939 = vpop.f32.mrb[0].mxu0
  %v940 = vpop.f32.mrb[0].mxu0
  %v941 = vpop.f32.mrb[0].mxu0
  %942 = vdwg.mxu0
  %v943 = vadd.f32 %v893, %v938
  %v944 = vpack.c.bf16 %v788, %v788
  %946 = vrot.lane.b32.xlu0 %v944, 116
  %v947 = vpop.permute.xlu0 %946
  %v949 = vsel %vm412, %v947, 0
  %951 = vmatprep.subr.bf16.mxu0 0
  %952 = vmatpush1.bf16.msra.mxu0 %v418
  %953 = vmatprep.subr.bf16.mxu0 0
  %954 = vmatpush1.bf16.msra.mxu0 0
  %955 = vmatprep.subr.bf16.mxu0 0
  %956 = vmatpush1.bf16.msra.mxu0 0
  %957 = vmatprep.subr.bf16.mxu0 0
  %958 = vmatpush1.bf16.msra.mxu0 0
  %959 = vmatprep.subr.bf16.mxu0 0
  %960 = vmatpush1.bf16.msra.mxu0 0
  %961 = vmatprep.subr.bf16.mxu0 0
  %962 = vmatpush1.bf16.msra.mxu0 0
  %963 = vmatprep.subr.bf16.mxu0 0
  %964 = vmatpush1.bf16.msra.mxu0 0
  %965 = vmatprep.subr.bf16.mxu0 0
  %966 = vmatpush1.bf16.msra.mxu0 0
  %967 = vmatprep.subr.bf16.mxu0 0
  %968 = vmatpush1.bf16.msra.mxu0 0
  %969 = vmatprep.subr.bf16.mxu0 0
  %970 = vmatpush1.bf16.msra.mxu0 0
  %971 = vmatprep.subr.bf16.mxu0 0
  %972 = vmatpush1.bf16.msra.mxu0 0
  %973 = vmatprep.subr.bf16.mxu0 0
  %974 = vmatpush1.bf16.msra.mxu0 0
  %975 = vmatprep.subr.bf16.mxu0 0
  %976 = vmatpush1.bf16.msra.mxu0 0
  %977 = vmatprep.subr.bf16.mxu0 0
  %978 = vmatpush1.bf16.msra.mxu0 0
  %979 = vmatprep.subr.bf16.mxu0 0
  %980 = vmatpush1.bf16.msra.mxu0 0
  %981 = vmatprep.subr.bf16.mxu0 0
  %982 = vmatpush1.bf16.msra.mxu0 0
  %983 = vmatprep.mubr.bf16.mxu0 0
  %984 = vmatmul.mubr.bf16.gmra.mrb[0].mxu0 %v949
  %v985 = vpop.f32.mrb[0].mxu0
  %v986 = vadd.f32 0.0, %v985
  %v987 = vpop.f32.mrb[0].mxu0
  %v988 = vpop.f32.mrb[0].mxu0
  %v989 = vpop.f32.mrb[0].mxu0
  %990 = vdwg.mxu0
  %v991 = vadd.f32 %v894, %v986
  %v992 = vxor.u32 %v943, 2147483648
  %v993 = vmul.f32 %v992, 1.442695
  %v994 = vpow.pop %v993
  %v995 = vadd.f32 %v994, 1.0
  %v996 = vrcp.pop %v995
  %v997 = vmul.f32 1.0, %v996
  %v998 = vtanh.pop %v943
  %v999 = vmul.f32 %v997, %v889
  %1001 = vrot.lane.b32.xlu0 %v998, 64
  %v1002 = vpop.permute.xlu0 %1001
  %v1004 = vmul.f32 %v997, %v1002
  %1006 = vrot.lane.b32.xlu0 %v1004, 32
  %v1007 = vpop.permute.xlu0 %1006
  %v1009 = vadd.f32 %v999, %v1007
  %v1010 = vtanh.pop %v1009
  %1012 = vrot.lane.b32.xlu0 %v1010, 64
  %v1013 = vpop.permute.xlu0 %1012
  %v1015 = vmul.f32 %v997, %v1013
  %v1016 = vxor.u32 %v991, 2147483648
  %v1017 = vmul.f32 %v1016, 1.442695
  %v1018 = vpow.pop %v1017
  %v1019 = vadd.f32 %v1018, 1.0
  %v1020 = vrcp.pop %v1019
  %v1021 = vmul.f32 1.0, %v1020
  %v1022 = vtanh.pop %v991
  %v1023 = vmul.f32 %v1021, %v782
  %1025 = vrot.lane.b32.xlu0 %v1022, 120
  %v1026 = vpop.permute.xlu0 %1025
  %v1028 = vmul.f32 %v1021, %v1026
  %1030 = vrot.lane.b32.xlu0 %v1028, 4
  %v1031 = vpop.permute.xlu0 %1030
  %v1033 = vadd.f32 %v1023, %v1031
  %v1034 = vtanh.pop %v1033
  %1036 = vrot.lane.b32.xlu0 %v1034, 8
  %v1037 = vpop.permute.xlu0 %1036
  %v1039 = vmul.f32 %v1021, %v1037
  %1041 = vrot.lane.b32.xlu0 %v1015, 32
  %v1042 = vpop.permute.xlu0 %1041
  %v1044 = vsel %vm128, %v1042, %v1009
  %v1045 = vpack.c.bf16 %v1044, %v1044
  %v1047 = vsel %vm547, %v1045, 0
  %1049 = vmatprep.subr.bf16.mxu0 0
  %1050 = vmatpush1.bf16.msra.mxu0 %v539
  %1051 = vmatprep.subr.bf16.mxu0 0
  %1052 = vmatpush1.bf16.msra.mxu0 %v540
  %1053 = vmatprep.subr.bf16.mxu0 0
  %1054 = vmatpush1.bf16.msra.mxu0 %v541
  %1055 = vmatprep.subr.bf16.mxu0 0
  %1056 = vmatpush1.bf16.msra.mxu0 %v542
  %1057 = vmatprep.subr.bf16.mxu0 0
  %1058 = vmatpush1.bf16.msra.mxu0 0
  %1059 = vmatprep.subr.bf16.mxu0 0
  %1060 = vmatpush1.bf16.msra.mxu0 0
  %1061 = vmatprep.subr.bf16.mxu0 0
  %1062 = vmatpush1.bf16.msra.mxu0 0
  %1063 = vmatprep.subr.bf16.mxu0 0
  %1064 = vmatpush1.bf16.msra.mxu0 0
  %1065 = vmatprep.subr.bf16.mxu0 0
  %1066 = vmatpush1.bf16.msra.mxu0 0
  %1067 = vmatprep.subr.bf16.mxu0 0
  %1068 = vmatpush1.bf16.msra.mxu0 0
  %1069 = vmatprep.subr.bf16.mxu0 0
  %1070 = vmatpush1.bf16.msra.mxu0 0
  %1071 = vmatprep.subr.bf16.mxu0 0
  %1072 = vmatpush1.bf16.msra.mxu0 0
  %1073 = vmatprep.subr.bf16.mxu0 0
  %1074 = vmatpush1.bf16.msra.mxu0 0
  %1075 = vmatprep.subr.bf16.mxu0 0
  %1076 = vmatpush1.bf16.msra.mxu0 0
  %1077 = vmatprep.subr.bf16.mxu0 0
  %1078 = vmatpush1.bf16.msra.mxu0 0
  %1079 = vmatprep.subr.bf16.mxu0 0
  %1080 = vmatpush1.bf16.msra.mxu0 0
  %1081 = vmatprep.mubr.bf16.mxu0 0
  %1082 = vmatmul.mubr.bf16.gmra.mrb[0].mxu0 %v1047
  %v1083 = vpop.f32.mrb[0].mxu0
  %v1084 = vadd.f32 0.0, %v1083
  %v1085 = vpop.f32.mrb[0].mxu0
  %v1086 = vpop.f32.mrb[0].mxu0
  %v1087 = vpop.f32.mrb[0].mxu0
  %1088 = vdwg.mxu0
  %v1089 = vadd.f32 %v895, %v1084
  %v1090 = vxor.u32 %v1089, 2147483648
  %v1091 = vmul.f32 %v1090, 1.442695
  %v1092 = vpow.pop %v1091
  %v1093 = vadd.f32 %v1092, 1.0
  %v1094 = vrcp.pop %v1093
  %v1095 = vmul.f32 1.0, %v1094
  %v1096 = vsub.f32 1.0, %v1095
  %1098 = vrot.lane.b32.xlu0 %v1039, 116
  %v1099 = vpop.permute.xlu0 %1098
  %v1101 = vsel %vm412, %v1099, 0.0
  %1103 = vrot.lane.b32.xlu0 %v1033, 124
  %v1104 = vpop.permute.xlu0 %1103
  %v1106 = vsel %vm412, %v1104, 0.0
  %1108 = vrot.lane.b32.xlu0 %v882, 32
  %v1109 = vpop.permute.xlu0 %1108
  %v1111 = vsel %vm343, %v1101, %v1109
  %1113 = vrot.lane.b32.xlu0 %v1009, 96
  %v1114 = vpop.permute.xlu0 %1113
  %v1116 = vsel %vm343, %v1106, %v1114
  %1118 = vset.pattern.permute.xlu0 0
  %1119 = vperm.xlu0 %1118, %v1096
  %v1120 = vpop.permute.xlu0 %1119
  %v1122 = vmul.f32 %v1120, %v1015
  %1124 = vset.pattern.permute.xlu0 0
  %1125 = vperm.xlu0 %1124, %v1095
  %v1126 = vpop.permute.xlu0 %1125
  %v1128 = vmul.f32 %v1126, %v1111
  %1130 = vrot.lane.b32.xlu0 %v1128, 96
  %v1131 = vpop.permute.xlu0 %1130
  %v1133 = vadd.f32 %v1122, %v1131
  %v1134 = vmul.f32 %v1120, %v1009
  %v1135 = vmul.f32 %v1126, %v1116
  %1137 = vrot.lane.b32.xlu0 %v1135, 32
  %v1138 = vpop.permute.xlu0 %1137
  %v1140 = vadd.f32 %v1134, %v1138
  %s1141 = smul.u32 3, 3
  %s1142 = smul.addr %s1141, 8
  %s1143 = scalar_lea.vmem [#allocation2], %s1142
  %v1144 = vld [vmem:[%s1143] sm:$0xff]
  %v1145 = vld [vmem:[%s1143 + $0x8] sm:$0xff]
  %v1146 = vld [vmem:[%s1143 + $0x10] sm:$0xff]
  %v1147 = vpack.c.bf16 %v1133, %v1133
  %1149 = vrot.lane.b32.xlu0 %v1147, 32
  %v1150 = vpop.permute.xlu0 %1149
  %v1152 = vsel %vm128, %v1150, 0
  %1154 = vmatprep.subr.bf16.mxu0 0
  %1155 = vmatpush1.bf16.msra.mxu0 %v363
  %1156 = vmatprep.subr.bf16.mxu0 0
  %1157 = vmatpush1.bf16.msra.mxu0 %v364
  %1158 = vmatprep.subr.bf16.mxu0 0
  %1159 = vmatpush1.bf16.msra.mxu0 0
  %1160 = vmatprep.subr.bf16.mxu0 0
  %1161 = vmatpush1.bf16.msra.mxu0 0
  %1162 = vmatprep.subr.bf16.mxu0 0
  %1163 = vmatpush1.bf16.msra.mxu0 0
  %1164 = vmatprep.subr.bf16.mxu0 0
  %1165 = vmatpush1.bf16.msra.mxu0 0
  %1166 = vmatprep.subr.bf16.mxu0 0
  %1167 = vmatpush1.bf16.msra.mxu0 0
  %1168 = vmatprep.subr.bf16.mxu0 0
  %1169 = vmatpush1.bf16.msra.mxu0 0
  %1170 = vmatprep.subr.bf16.mxu0 0
  %1171 = vmatpush1.bf16.msra.mxu0 0
  %1172 = vmatprep.subr.bf16.mxu0 0
  %1173 = vmatpush1.bf16.msra.mxu0 0
  %1174 = vmatprep.subr.bf16.mxu0 0
  %1175 = vmatpush1.bf16.msra.mxu0 0
  %1176 = vmatprep.subr.bf16.mxu0 0
  %1177 = vmatpush1.bf16.msra.mxu0 0
  %1178 = vmatprep.subr.bf16.mxu0 0
  %1179 = vmatpush1.bf16.msra.mxu0 0
  %1180 = vmatprep.subr.bf16.mxu0 0
  %1181 = vmatpush1.bf16.msra.mxu0 0
  %1182 = vmatprep.subr.bf16.mxu0 0
  %1183 = vmatpush1.bf16.msra.mxu0 0
  %1184 = vmatprep.subr.bf16.mxu0 0
  %1185 = vmatpush1.bf16.msra.mxu0 0
  %1186 = vmatprep.mubr.bf16.mxu0 0
  %1187 = vmatmul.mubr.bf16.gmra.mrb[0].mxu0 %v1152
  %v1188 = vpop.f32.mrb[0].mxu0
  %v1189 = vadd.f32 0.0, %v1188
  %v1190 = vpop.f32.mrb[0].mxu0
  %v1191 = vpop.f32.mrb[0].mxu0
  %v1192 = vpop.f32.mrb[0].mxu0
  %1193 = vdwg.mxu0
  %v1194 = vadd.f32 %v1144, %v1189
  %v1195 = vpack.c.bf16 %v1039, %v1039
  %1197 = vrot.lane.b32.xlu0 %v1195, 116
  %v1198 = vpop.permute.xlu0 %1197
  %v1200 = vsel %vm412, %v1198, 0
  %1202 = vmatprep.subr.bf16.mxu0 0
  %1203 = vmatpush1.bf16.msra.mxu0 %v418
  %1204 = vmatprep.subr.bf16.mxu0 0
  %1205 = vmatpush1.bf16.msra.mxu0 0
  %1206 = vmatprep.subr.bf16.mxu0 0
  %1207 = vmatpush1.bf16.msra.mxu0 0
  %1208 = vmatprep.subr.bf16.mxu0 0
  %1209 = vmatpush1.bf16.msra.mxu0 0
  %1210 = vmatprep.subr.bf16.mxu0 0
  %1211 = vmatpush1.bf16.msra.mxu0 0
  %1212 = vmatprep.subr.bf16.mxu0 0
  %1213 = vmatpush1.bf16.msra.mxu0 0
  %1214 = vmatprep.subr.bf16.mxu0 0
  %1215 = vmatpush1.bf16.msra.mxu0 0
  %1216 = vmatprep.subr.bf16.mxu0 0
  %1217 = vmatpush1.bf16.msra.mxu0 0
  %1218 = vmatprep.subr.bf16.mxu0 0
  %1219 = vmatpush1.bf16.msra.mxu0 0
  %1220 = vmatprep.subr.bf16.mxu0 0
  %1221 = vmatpush1.bf16.msra.mxu0 0
  %1222 = vmatprep.subr.bf16.mxu0 0
  %1223 = vmatpush1.bf16.msra.mxu0 0
  %1224 = vmatprep.subr.bf16.mxu0 0
  %1225 = vmatpush1.bf16.msra.mxu0 0
  %1226 = vmatprep.subr.bf16.mxu0 0
  %1227 = vmatpush1.bf16.msra.mxu0 0
  %1228 = vmatprep.subr.bf16.mxu0 0
  %1229 = vmatpush1.bf16.msra.mxu0 0
  %1230 = vmatprep.subr.bf16.mxu0 0
  %1231 = vmatpush1.bf16.msra.mxu0 0
  %1232 = vmatprep.subr.bf16.mxu0 0
  %1233 = vmatpush1.bf16.msra.mxu0 0
  %1234 = vmatprep.mubr.bf16.mxu0 0
  %1235 = vmatmul.mubr.bf16.gmra.mrb[0].mxu0 %v1200
  %v1236 = vpop.f32.mrb[0].mxu0
  %v1237 = vadd.f32 0.0, %v1236
  %v1238 = vpop.f32.mrb[0].mxu0
  %v1239 = vpop.f32.mrb[0].mxu0
  %v1240 = vpop.f32.mrb[0].mxu0
  %1241 = vdwg.mxu0
  %v1242 = vadd.f32 %v1145, %v1237
  %v1243 = vxor.u32 %v1194, 2147483648
  %v1244 = vmul.f32 %v1243, 1.442695
  %v1245 = vpow.pop %v1244
  %v1246 = vadd.f32 %v1245, 1.0
  %v1247 = vrcp.pop %v1246
  %v1248 = vmul.f32 1.0, %v1247
  %v1249 = vtanh.pop %v1194
  %v1250 = vmul.f32 %v1248, %v1140
  %1252 = vrot.lane.b32.xlu0 %v1249, 64
  %v1253 = vpop.permute.xlu0 %1252
  %v1255 = vmul.f32 %v1248, %v1253
  %1257 = vrot.lane.b32.xlu0 %v1255, 32
  %v1258 = vpop.permute.xlu0 %1257
  %v1260 = vadd.f32 %v1250, %v1258
  %v1261 = vtanh.pop %v1260
  %1263 = vrot.lane.b32.xlu0 %v1261, 64
  %v1264 = vpop.permute.xlu0 %1263
  %v1266 = vmul.f32 %v1248, %v1264
  %v1267 = vxor.u32 %v1242, 2147483648
  %v1268 = vmul.f32 %v1267, 1.442695
  %v1269 = vpow.pop %v1268
  %v1270 = vadd.f32 %v1269, 1.0
  %v1271 = vrcp.pop %v1270
  %v1272 = vmul.f32 1.0, %v1271
  %v1273 = vtanh.pop %v1242
  %v1274 = vmul.f32 %v1272, %v1033
  %1276 = vrot.lane.b32.xlu0 %v1273, 120
  %v1277 = vpop.permute.xlu0 %1276
  %v1279 = vmul.f32 %v1272, %v1277
  %1281 = vrot.lane.b32.xlu0 %v1279, 4
  %v1282 = vpop.permute.xlu0 %1281
  %v1284 = vadd.f32 %v1274, %v1282
  %v1285 = vtanh.pop %v1284
  %1287 = vrot.lane.b32.xlu0 %v1285, 8
  %v1288 = vpop.permute.xlu0 %1287
  %v1290 = vmul.f32 %v1272, %v1288
  %1292 = vrot.lane.b32.xlu0 %v1266, 32
  %v1293 = vpop.permute.xlu0 %1292
  %v1295 = vsel %vm128, %v1293, %v1260
  %v1296 = vpack.c.bf16 %v1295, %v1295
  %v1298 = vsel %vm547, %v1296, 0
  %1300 = vmatprep.subr.bf16.mxu0 0
  %1301 = vmatpush1.bf16.msra.mxu0 %v539
  %1302 = vmatprep.subr.bf16.mxu0 0
  %1303 = vmatpush1.bf16.msra.mxu0 %v540
  %1304 = vmatprep.subr.bf16.mxu0 0
  %1305 = vmatpush1.bf16.msra.mxu0 %v541
  %1306 = vmatprep.subr.bf16.mxu0 0
  %1307 = vmatpush1.bf16.msra.mxu0 %v542
  %1308 = vmatprep.subr.bf16.mxu0 0
  %1309 = vmatpush1.bf16.msra.mxu0 0
  %1310 = vmatprep.subr.bf16.mxu0 0
  %1311 = vmatpush1.bf16.msra.mxu0 0
  %1312 = vmatprep.subr.bf16.mxu0 0
  %1313 = vmatpush1.bf16.msra.mxu0 0
  %1314 = vmatprep.subr.bf16.mxu0 0
  %1315 = vmatpush1.bf16.msra.mxu0 0
  %1316 = vmatprep.subr.bf16.mxu0 0
  %1317 = vmatpush1.bf16.msra.mxu0 0
  %1318 = vmatprep.subr.bf16.mxu0 0
  %1319 = vmatpush1.bf16.msra.mxu0 0
  %1320 = vmatprep.subr.bf16.mxu0 0
  %1321 = vmatpush1.bf16.msra.mxu0 0
  %1322 = vmatprep.subr.bf16.mxu0 0
  %1323 = vmatpush1.bf16.msra.mxu0 0
  %1324 = vmatprep.subr.bf16.mxu0 0
  %1325 = vmatpush1.bf16.msra.mxu0 0
  %1326 = vmatprep.subr.bf16.mxu0 0
  %1327 = vmatpush1.bf16.msra.mxu0 0
  %1328 = vmatprep.subr.bf16.mxu0 0
  %1329 = vmatpush1.bf16.msra.mxu0 0
  %1330 = vmatprep.subr.bf16.mxu0 0
  %1331 = vmatpush1.bf16.msra.mxu0 0
  %1332 = vmatprep.mubr.bf16.mxu0 0
  %1333 = vmatmul.mubr.bf16.gmra.mrb[0].mxu0 %v1298
  %v1334 = vpop.f32.mrb[0].mxu0
  %v1335 = vadd.f32 0.0, %v1334
  %v1336 = vpop.f32.mrb[0].mxu0
  %v1337 = vpop.f32.mrb[0].mxu0
  %v1338 = vpop.f32.mrb[0].mxu0
  %1339 = vdwg.mxu0
  %v1340 = vadd.f32 %v1146, %v1335
  %v1341 = vxor.u32 %v1340, 2147483648
  %v1342 = vmul.f32 %v1341, 1.442695
  %v1343 = vpow.pop %v1342
  %v1344 = vadd.f32 %v1343, 1.0
  %v1345 = vrcp.pop %v1344
  %v1346 = vmul.f32 1.0, %v1345
  %v1347 = vsub.f32 1.0, %v1346
  %1349 = vrot.lane.b32.xlu0 %v1290, 116
  %v1350 = vpop.permute.xlu0 %1349
  %v1352 = vsel %vm412, %v1350, 0.0
  %1354 = vrot.lane.b32.xlu0 %v1284, 124
  %v1355 = vpop.permute.xlu0 %1354
  %v1357 = vsel %vm412, %v1355, 0.0
  %1359 = vrot.lane.b32.xlu0 %v1133, 32
  %v1360 = vpop.permute.xlu0 %1359
  %v1362 = vsel %vm343, %v1352, %v1360
  %1364 = vrot.lane.b32.xlu0 %v1260, 96
  %v1365 = vpop.permute.xlu0 %1364
  %v1367 = vsel %vm343, %v1357, %v1365
  %1369 = vset.pattern.permute.xlu0 0
  %1370 = vperm.xlu0 %1369, %v1347
  %v1371 = vpop.permute.xlu0 %1370
  %v1373 = vmul.f32 %v1371, %v1266
  %1375 = vset.pattern.permute.xlu0 0
  %1376 = vperm.xlu0 %1375, %v1346
  %v1377 = vpop.permute.xlu0 %1376
  %v1379 = vmul.f32 %v1377, %v1362
  %1381 = vrot.lane.b32.xlu0 %v1379, 96
  %v1382 = vpop.permute.xlu0 %1381
  %v1384 = vadd.f32 %v1373, %v1382
  %v1385 = vmul.f32 %v1371, %v1260
  %v1386 = vmul.f32 %v1377, %v1367
  %1388 = vrot.lane.b32.xlu0 %v1386, 32
  %v1389 = vpop.permute.xlu0 %1388
  %v1391 = vadd.f32 %v1385, %v1389
  %s1392 = smul.u32 4, 3
  %s1393 = smul.addr %s1392, 8
  %s1394 = scalar_lea.vmem [#allocation2], %s1393
  %v1395 = vld [vmem:[%s1394] sm:$0xff]
  %v1396 = vld [vmem:[%s1394 + $0x8] sm:$0xff]
  %v1397 = vld [vmem:[%s1394 + $0x10] sm:$0xff]
  %v1398 = vpack.c.bf16 %v1384, %v1384
  %1400 = vrot.lane.b32.xlu0 %v1398, 32
  %v1401 = vpop.permute.xlu0 %1400
  %v1403 = vsel %vm128, %v1401, 0
  %1405 = vmatprep.subr.bf16.mxu0 0
  %1406 = vmatpush1.bf16.msra.mxu0 %v363
  %1407 = vmatprep.subr.bf16.mxu0 0
  %1408 = vmatpush1.bf16.msra.mxu0 %v364
  %1409 = vmatprep.subr.bf16.mxu0 0
  %1410 = vmatpush1.bf16.msra.mxu0 0
  %1411 = vmatprep.subr.bf16.mxu0 0
  %1412 = vmatpush1.bf16.msra.mxu0 0
  %1413 = vmatprep.subr.bf16.mxu0 0
  %1414 = vmatpush1.bf16.msra.mxu0 0
  %1415 = vmatprep.subr.bf16.mxu0 0
  %1416 = vmatpush1.bf16.msra.mxu0 0
  %1417 = vmatprep.subr.bf16.mxu0 0
  %1418 = vmatpush1.bf16.msra.mxu0 0
  %1419 = vmatprep.subr.bf16.mxu0 0
  %1420 = vmatpush1.bf16.msra.mxu0 0
  %1421 = vmatprep.subr.bf16.mxu0 0
  %1422 = vmatpush1.bf16.msra.mxu0 0
  %1423 = vmatprep.subr.bf16.mxu0 0
  %1424 = vmatpush1.bf16.msra.mxu0 0
  %1425 = vmatprep.subr.bf16.mxu0 0
  %1426 = vmatpush1.bf16.msra.mxu0 0
  %1427 = vmatprep.subr.bf16.mxu0 0
  %1428 = vmatpush1.bf16.msra.mxu0 0
  %1429 = vmatprep.subr.bf16.mxu0 0
  %1430 = vmatpush1.bf16.msra.mxu0 0
  %1431 = vmatprep.subr.bf16.mxu0 0
  %1432 = vmatpush1.bf16.msra.mxu0 0
  %1433 = vmatprep.subr.bf16.mxu0 0
  %1434 = vmatpush1.bf16.msra.mxu0 0
  %1435 = vmatprep.subr.bf16.mxu0 0
  %1436 = vmatpush1.bf16.msra.mxu0 0
  %1437 = vmatprep.mubr.bf16.mxu0 0
  %1438 = vmatmul.mubr.bf16.gmra.mrb[0].mxu0 %v1403
  %v1439 = vpop.f32.mrb[0].mxu0
  %v1440 = vadd.f32 0.0, %v1439
  %v1441 = vpop.f32.mrb[0].mxu0
  %v1442 = vpop.f32.mrb[0].mxu0
  %v1443 = vpop.f32.mrb[0].mxu0
  %1444 = vdwg.mxu0
  %v1445 = vadd.f32 %v1395, %v1440
  %v1446 = vpack.c.bf16 %v1290, %v1290
  %1448 = vrot.lane.b32.xlu0 %v1446, 116
  %v1449 = vpop.permute.xlu0 %1448
  %v1451 = vsel %vm412, %v1449, 0
  %1453 = vmatprep.subr.bf16.mxu0 0
  %1454 = vmatpush1.bf16.msra.mxu0 %v418
  %1455 = vmatprep.subr.bf16.mxu0 0
  %1456 = vmatpush1.bf16.msra.mxu0 0
  %1457 = vmatprep.subr.bf16.mxu0 0
  %1458 = vmatpush1.bf16.msra.mxu0 0
  %1459 = vmatprep.subr.bf16.mxu0 0
  %1460 = vmatpush1.bf16.msra.mxu0 0
  %1461 = vmatprep.subr.bf16.mxu0 0
  %1462 = vmatpush1.bf16.msra.mxu0 0
  %1463 = vmatprep.subr.bf16.mxu0 0
  %1464 = vmatpush1.bf16.msra.mxu0 0
  %1465 = vmatprep.subr.bf16.mxu0 0
  %1466 = vmatpush1.bf16.msra.mxu0 0
  %1467 = vmatprep.subr.bf16.mxu0 0
  %1468 = vmatpush1.bf16.msra.mxu0 0
  %1469 = vmatprep.subr.bf16.mxu0 0
  %1470 = vmatpush1.bf16.msra.mxu0 0
  %1471 = vmatprep.subr.bf16.mxu0 0
  %1472 = vmatpush1.bf16.msra.mxu0 0
  %1473 = vmatprep.subr.bf16.mxu0 0
  %1474 = vmatpush1.bf16.msra.mxu0 0
  %1475 = vmatprep.subr.bf16.mxu0 0
  %1476 = vmatpush1.bf16.msra.mxu0 0
  %1477 = vmatprep.subr.bf16.mxu0 0
  %1478 = vmatpush1.bf16.msra.mxu0 0
  %1479 = vmatprep.subr.bf16.mxu0 0
  %1480 = vmatpush1.bf16.msra.mxu0 0
  %1481 = vmatprep.subr.bf16.mxu0 0
  %1482 = vmatpush1.bf16.msra.mxu0 0
  %1483 = vmatprep.subr.bf16.mxu0 0
  %1484 = vmatpush1.bf16.msra.mxu0 0
  %1485 = vmatprep.mubr.bf16.mxu0 0
  %1486 = vmatmul.mubr.bf16.gmra.mrb[0].mxu0 %v1451
  %v1487 = vpop.f32.mrb[0].mxu0
  %v1488 = vadd.f32 0.0, %v1487
  %v1489 = vpop.f32.mrb[0].mxu0
  %v1490 = vpop.f32.mrb[0].mxu0
  %v1491 = vpop.f32.mrb[0].mxu0
  %1492 = vdwg.mxu0
  %v1493 = vadd.f32 %v1396, %v1488
  %v1494 = vxor.u32 %v1445, 2147483648
  %v1495 = vmul.f32 %v1494, 1.442695
  %v1496 = vpow.pop %v1495
  %v1497 = vadd.f32 %v1496, 1.0
  %v1498 = vrcp.pop %v1497
  %v1499 = vmul.f32 1.0, %v1498
  %v1500 = vtanh.pop %v1445
  %v1501 = vmul.f32 %v1499, %v1391
  %1503 = vrot.lane.b32.xlu0 %v1500, 64
  %v1504 = vpop.permute.xlu0 %1503
  %v1506 = vmul.f32 %v1499, %v1504
  %1508 = vrot.lane.b32.xlu0 %v1506, 32
  %v1509 = vpop.permute.xlu0 %1508
  %v1511 = vadd.f32 %v1501, %v1509
  %v1512 = vtanh.pop %v1511
  %1514 = vrot.lane.b32.xlu0 %v1512, 64
  %v1515 = vpop.permute.xlu0 %1514
  %v1517 = vmul.f32 %v1499, %v1515
  %v1518 = vxor.u32 %v1493, 2147483648
  %v1519 = vmul.f32 %v1518, 1.442695
  %v1520 = vpow.pop %v1519
  %v1521 = vadd.f32 %v1520, 1.0
  %v1522 = vrcp.pop %v1521
  %v1523 = vmul.f32 1.0, %v1522
  %v1524 = vtanh.pop %v1493
  %v1525 = vmul.f32 %v1523, %v1284
  %1527 = vrot.lane.b32.xlu0 %v1524, 120
  %v1528 = vpop.permute.xlu0 %1527
  %v1530 = vmul.f32 %v1523, %v1528
  %1532 = vrot.lane.b32.xlu0 %v1530, 4
  %v1533 = vpop.permute.xlu0 %1532
  %v1535 = vadd.f32 %v1525, %v1533
  %v1536 = vtanh.pop %v1535
  %1538 = vrot.lane.b32.xlu0 %v1536, 8
  %v1539 = vpop.permute.xlu0 %1538
  %v1541 = vmul.f32 %v1523, %v1539
  %1543 = vrot.lane.b32.xlu0 %v1517, 32
  %v1544 = vpop.permute.xlu0 %1543
  %v1546 = vsel %vm128, %v1544, %v1511
  %v1547 = vpack.c.bf16 %v1546, %v1546
  %v1549 = vsel %vm547, %v1547, 0
  %1551 = vmatprep.subr.bf16.mxu0 0
  %1552 = vmatpush1.bf16.msra.mxu0 %v539
  %1553 = vmatprep.subr.bf16.mxu0 0
  %1554 = vmatpush1.bf16.msra.mxu0 %v540
  %1555 = vmatprep.subr.bf16.mxu0 0
  %1556 = vmatpush1.bf16.msra.mxu0 %v541
  %1557 = vmatprep.subr.bf16.mxu0 0
  %1558 = vmatpush1.bf16.msra.mxu0 %v542
  %1559 = vmatprep.subr.bf16.mxu0 0
  %1560 = vmatpush1.bf16.msra.mxu0 0
  %1561 = vmatprep.subr.bf16.mxu0 0
  %1562 = vmatpush1.bf16.msra.mxu0 0
  %1563 = vmatprep.subr.bf16.mxu0 0
  %1564 = vmatpush1.bf16.msra.mxu0 0
  %1565 = vmatprep.subr.bf16.mxu0 0
  %1566 = vmatpush1.bf16.msra.mxu0 0
  %1567 = vmatprep.subr.bf16.mxu0 0
  %1568 = vmatpush1.bf16.msra.mxu0 0
  %1569 = vmatprep.subr.bf16.mxu0 0
  %1570 = vmatpush1.bf16.msra.mxu0 0
  %1571 = vmatprep.subr.bf16.mxu0 0
  %1572 = vmatpush1.bf16.msra.mxu0 0
  %1573 = vmatprep.subr.bf16.mxu0 0
  %1574 = vmatpush1.bf16.msra.mxu0 0
  %1575 = vmatprep.subr.bf16.mxu0 0
  %1576 = vmatpush1.bf16.msra.mxu0 0
  %1577 = vmatprep.subr.bf16.mxu0 0
  %1578 = vmatpush1.bf16.msra.mxu0 0
  %1579 = vmatprep.subr.bf16.mxu0 0
  %1580 = vmatpush1.bf16.msra.mxu0 0
  %1581 = vmatprep.subr.bf16.mxu0 0
  %1582 = vmatpush1.bf16.msra.mxu0 0
  %1583 = vmatprep.mubr.bf16.mxu0 0
  %1584 = vmatmul.mubr.bf16.gmra.mrb[0].mxu0 %v1549
  %v1585 = vpop.f32.mrb[0].mxu0
  %v1586 = vadd.f32 0.0, %v1585
  %v1587 = vpop.f32.mrb[0].mxu0
  %v1588 = vpop.f32.mrb[0].mxu0
  %v1589 = vpop.f32.mrb[0].mxu0
  %1590 = vdwg.mxu0
  %v1591 = vadd.f32 %v1397, %v1586
  %v1592 = vxor.u32 %v1591, 2147483648
  %v1593 = vmul.f32 %v1592, 1.442695
  %v1594 = vpow.pop %v1593
  %v1595 = vadd.f32 %v1594, 1.0
  %v1596 = vrcp.pop %v1595
  %v1597 = vmul.f32 1.0, %v1596
  %v1598 = vsub.f32 1.0, %v1597
  %1600 = vrot.lane.b32.xlu0 %v1541, 116
  %v1601 = vpop.permute.xlu0 %1600
  %v1603 = vsel %vm412, %v1601, 0.0
  %1605 = vrot.lane.b32.xlu0 %v1535, 124
  %v1606 = vpop.permute.xlu0 %1605
  %v1608 = vsel %vm412, %v1606, 0.0
  %1610 = vrot.lane.b32.xlu0 %v1384, 32
  %v1611 = vpop.permute.xlu0 %1610
  %v1613 = vsel %vm343, %v1603, %v1611
  %1615 = vrot.lane.b32.xlu0 %v1511, 96
  %v1616 = vpop.permute.xlu0 %1615
  %v1618 = vsel %vm343, %v1608, %v1616
  %1620 = vset.pattern.permute.xlu0 0
  %1621 = vperm.xlu0 %1620, %v1598
  %v1622 = vpop.permute.xlu0 %1621
  %v1624 = vmul.f32 %v1622, %v1517
  %1626 = vset.pattern.permute.xlu0 0
  %1627 = vperm.xlu0 %1626, %v1597
  %v1628 = vpop.permute.xlu0 %1627
  %v1630 = vmul.f32 %v1628, %v1613
  %1632 = vrot.lane.b32.xlu0 %v1630, 96
  %v1633 = vpop.permute.xlu0 %1632
  %v1635 = vadd.f32 %v1624, %v1633
  %v1636 = vmul.f32 %v1622, %v1511
  %v1637 = vmul.f32 %v1628, %v1618
  %1639 = vrot.lane.b32.xlu0 %v1637, 32
  %v1640 = vpop.permute.xlu0 %1639
  %v1642 = vadd.f32 %v1636, %v1640
  %s1643 = smul.u32 5, 3
  %s1644 = smul.addr %s1643, 8
  %s1645 = scalar_lea.vmem [#allocation2], %s1644
  %v1646 = vld [vmem:[%s1645] sm:$0xff]
  %v1647 = vld [vmem:[%s1645 + $0x8] sm:$0xff]
  %v1648 = vld [vmem:[%s1645 + $0x10] sm:$0xff]
  %v1649 = vpack.c.bf16 %v1635, %v1635
  %1651 = vrot.lane.b32.xlu0 %v1649, 32
  %v1652 = vpop.permute.xlu0 %1651
  %v1654 = vsel %vm128, %v1652, 0
  %1656 = vmatprep.subr.bf16.mxu0 0
  %1657 = vmatpush1.bf16.msra.mxu0 %v363
  %1658 = vmatprep.subr.bf16.mxu0 0
  %1659 = vmatpush1.bf16.msra.mxu0 %v364
  %1660 = vmatprep.subr.bf16.mxu0 0
  %1661 = vmatpush1.bf16.msra.mxu0 0
  %1662 = vmatprep.subr.bf16.mxu0 0
  %1663 = vmatpush1.bf16.msra.mxu0 0
  %1664 = vmatprep.subr.bf16.mxu0 0
  %1665 = vmatpush1.bf16.msra.mxu0 0
  %1666 = vmatprep.subr.bf16.mxu0 0
  %1667 = vmatpush1.bf16.msra.mxu0 0
  %1668 = vmatprep.subr.bf16.mxu0 0
  %1669 = vmatpush1.bf16.msra.mxu0 0
  %1670 = vmatprep.subr.bf16.mxu0 0
  %1671 = vmatpush1.bf16.msra.mxu0 0
  %1672 = vmatprep.subr.bf16.mxu0 0
  %1673 = vmatpush1.bf16.msra.mxu0 0
  %1674 = vmatprep.subr.bf16.mxu0 0
  %1675 = vmatpush1.bf16.msra.mxu0 0
  %1676 = vmatprep.subr.bf16.mxu0 0
  %1677 = vmatpush1.bf16.msra.mxu0 0
  %1678 = vmatprep.subr.bf16.mxu0 0
  %1679 = vmatpush1.bf16.msra.mxu0 0
  %1680 = vmatprep.subr.bf16.mxu0 0
  %1681 = vmatpush1.bf16.msra.mxu0 0
  %1682 = vmatprep.subr.bf16.mxu0 0
  %1683 = vmatpush1.bf16.msra.mxu0 0
  %1684 = vmatprep.subr.bf16.mxu0 0
  %1685 = vmatpush1.bf16.msra.mxu0 0
  %1686 = vmatprep.subr.bf16.mxu0 0
  %1687 = vmatpush1.bf16.msra.mxu0 0
  %1688 = vmatprep.mubr.bf16.mxu0 0
  %1689 = vmatmul.mubr.bf16.gmra.mrb[0].mxu0 %v1654
  %v1690 = vpop.f32.mrb[0].mxu0
  %v1691 = vadd.f32 0.0, %v1690
  %v1692 = vpop.f32.mrb[0].mxu0
  %v1693 = vpop.f32.mrb[0].mxu0
  %v1694 = vpop.f32.mrb[0].mxu0
  %1695 = vdwg.mxu0
  %v1696 = vadd.f32 %v1646, %v1691
  %v1697 = vpack.c.bf16 %v1541, %v1541
  %1699 = vrot.lane.b32.xlu0 %v1697, 116
  %v1700 = vpop.permute.xlu0 %1699
  %v1702 = vsel %vm412, %v1700, 0
  %1704 = vmatprep.subr.bf16.mxu0 0
  %1705 = vmatpush1.bf16.msra.mxu0 %v418
  %1706 = vmatprep.subr.bf16.mxu0 0
  %1707 = vmatpush1.bf16.msra.mxu0 0
  %1708 = vmatprep.subr.bf16.mxu0 0
  %1709 = vmatpush1.bf16.msra.mxu0 0
  %1710 = vmatprep.subr.bf16.mxu0 0
  %1711 = vmatpush1.bf16.msra.mxu0 0
  %1712 = vmatprep.subr.bf16.mxu0 0
  %1713 = vmatpush1.bf16.msra.mxu0 0
  %1714 = vmatprep.subr.bf16.mxu0 0
  %1715 = vmatpush1.bf16.msra.mxu0 0
  %1716 = vmatprep.subr.bf16.mxu0 0
  %1717 = vmatpush1.bf16.msra.mxu0 0
  %1718 = vmatprep.subr.bf16.mxu0 0
  %1719 = vmatpush1.bf16.msra.mxu0 0
  %1720 = vmatprep.subr.bf16.mxu0 0
  %1721 = vmatpush1.bf16.msra.mxu0 0
  %1722 = vmatprep.subr.bf16.mxu0 0
  %1723 = vmatpush1.bf16.msra.mxu0 0
  %1724 = vmatprep.subr.bf16.mxu0 0
  %1725 = vmatpush1.bf16.msra.mxu0 0
  %1726 = vmatprep.subr.bf16.mxu0 0
  %1727 = vmatpush1.bf16.msra.mxu0 0
  %1728 = vmatprep.subr.bf16.mxu0 0
  %1729 = vmatpush1.bf16.msra.mxu0 0
  %1730 = vmatprep.subr.bf16.mxu0 0
  %1731 = vmatpush1.bf16.msra.mxu0 0
  %1732 = vmatprep.subr.bf16.mxu0 0
  %1733 = vmatpush1.bf16.msra.mxu0 0
  %1734 = vmatprep.subr.bf16.mxu0 0
  %1735 = vmatpush1.bf16.msra.mxu0 0
  %1736 = vmatprep.mubr.bf16.mxu0 0
  %1737 = vmatmul.mubr.bf16.gmra.mrb[0].mxu0 %v1702
  %v1738 = vpop.f32.mrb[0].mxu0
  %v1739 = vadd.f32 0.0, %v1738
  %v1740 = vpop.f32.mrb[0].mxu0
  %v1741 = vpop.f32.mrb[0].mxu0
  %v1742 = vpop.f32.mrb[0].mxu0
  %1743 = vdwg.mxu0
  %v1744 = vadd.f32 %v1647, %v1739
  %v1745 = vxor.u32 %v1696, 2147483648
  %v1746 = vmul.f32 %v1745, 1.442695
  %v1747 = vpow.pop %v1746
  %v1748 = vadd.f32 %v1747, 1.0
  %v1749 = vrcp.pop %v1748
  %v1750 = vmul.f32 1.0, %v1749
  %v1751 = vtanh.pop %v1696
  %v1752 = vmul.f32 %v1750, %v1642
  %1754 = vrot.lane.b32.xlu0 %v1751, 64
  %v1755 = vpop.permute.xlu0 %1754
  %v1757 = vmul.f32 %v1750, %v1755
  %1759 = vrot.lane.b32.xlu0 %v1757, 32
  %v1760 = vpop.permute.xlu0 %1759
  %v1762 = vadd.f32 %v1752, %v1760
  %v1763 = vtanh.pop %v1762
  %1765 = vrot.lane.b32.xlu0 %v1763, 64
  %v1766 = vpop.permute.xlu0 %1765
  %v1768 = vmul.f32 %v1750, %v1766
  %v1769 = vxor.u32 %v1744, 2147483648
  %v1770 = vmul.f32 %v1769, 1.442695
  %v1771 = vpow.pop %v1770
  %v1772 = vadd.f32 %v1771, 1.0
  %v1773 = vrcp.pop %v1772
  %v1774 = vmul.f32 1.0, %v1773
  %v1775 = vtanh.pop %v1744
  %v1776 = vmul.f32 %v1774, %v1535
  %1778 = vrot.lane.b32.xlu0 %v1775, 120
  %v1779 = vpop.permute.xlu0 %1778
  %v1781 = vmul.f32 %v1774, %v1779
  %1783 = vrot.lane.b32.xlu0 %v1781, 4
  %v1784 = vpop.permute.xlu0 %1783
  %v1786 = vadd.f32 %v1776, %v1784
  %v1787 = vtanh.pop %v1786
  %1789 = vrot.lane.b32.xlu0 %v1787, 8
  %v1790 = vpop.permute.xlu0 %1789
  %v1792 = vmul.f32 %v1774, %v1790
  %1794 = vrot.lane.b32.xlu0 %v1768, 32
  %v1795 = vpop.permute.xlu0 %1794
  %v1797 = vsel %vm128, %v1795, %v1762
  %v1798 = vpack.c.bf16 %v1797, %v1797
  %v1800 = vsel %vm547, %v1798, 0
  %1802 = vmatprep.subr.bf16.mxu0 0
  %1803 = vmatpush1.bf16.msra.mxu0 %v539
  %1804 = vmatprep.subr.bf16.mxu0 0
  %1805 = vmatpush1.bf16.msra.mxu0 %v540
  %1806 = vmatprep.subr.bf16.mxu0 0
  %1807 = vmatpush1.bf16.msra.mxu0 %v541
  %1808 = vmatprep.subr.bf16.mxu0 0
  %1809 = vmatpush1.bf16.msra.mxu0 %v542
  %1810 = vmatprep.subr.bf16.mxu0 0
  %1811 = vmatpush1.bf16.msra.mxu0 0
  %1812 = vmatprep.subr.bf16.mxu0 0
  %1813 = vmatpush1.bf16.msra.mxu0 0
  %1814 = vmatprep.subr.bf16.mxu0 0
  %1815 = vmatpush1.bf16.msra.mxu0 0
  %1816 = vmatprep.subr.bf16.mxu0 0
  %1817 = vmatpush1.bf16.msra.mxu0 0
  %1818 = vmatprep.subr.bf16.mxu0 0
  %1819 = vmatpush1.bf16.msra.mxu0 0
  %1820 = vmatprep.subr.bf16.mxu0 0
  %1821 = vmatpush1.bf16.msra.mxu0 0
  %1822 = vmatprep.subr.bf16.mxu0 0
  %1823 = vmatpush1.bf16.msra.mxu0 0
  %1824 = vmatprep.subr.bf16.mxu0 0
  %1825 = vmatpush1.bf16.msra.mxu0 0
  %1826 = vmatprep.subr.bf16.mxu0 0
  %1827 = vmatpush1.bf16.msra.mxu0 0
  %1828 = vmatprep.subr.bf16.mxu0 0
  %1829 = vmatpush1.bf16.msra.mxu0 0
  %1830 = vmatprep.subr.bf16.mxu0 0
  %1831 = vmatpush1.bf16.msra.mxu0 0
  %1832 = vmatprep.subr.bf16.mxu0 0
  %1833 = vmatpush1.bf16.msra.mxu0 0
  %1834 = vmatprep.mubr.bf16.mxu0 0
  %1835 = vmatmul.mubr.bf16.gmra.mrb[0].mxu0 %v1800
  %v1836 = vpop.f32.mrb[0].mxu0
  %v1837 = vadd.f32 0.0, %v1836
  %v1838 = vpop.f32.mrb[0].mxu0
  %v1839 = vpop.f32.mrb[0].mxu0
  %v1840 = vpop.f32.mrb[0].mxu0
  %1841 = vdwg.mxu0
  %v1842 = vadd.f32 %v1648, %v1837
  %v1843 = vxor.u32 %v1842, 2147483648
  %v1844 = vmul.f32 %v1843, 1.442695
  %v1845 = vpow.pop %v1844
  %v1846 = vadd.f32 %v1845, 1.0
  %v1847 = vrcp.pop %v1846
  %v1848 = vmul.f32 1.0, %v1847
  %v1849 = vsub.f32 1.0, %v1848
  %1851 = vrot.lane.b32.xlu0 %v1792, 116
  %v1852 = vpop.permute.xlu0 %1851
  %v1854 = vsel %vm412, %v1852, 0.0
  %1856 = vrot.lane.b32.xlu0 %v1786, 124
  %v1857 = vpop.permute.xlu0 %1856
  %v1859 = vsel %vm412, %v1857, 0.0
  %1861 = vrot.lane.b32.xlu0 %v1635, 32
  %v1862 = vpop.permute.xlu0 %1861
  %v1864 = vsel %vm343, %v1854, %v1862
  %1866 = vrot.lane.b32.xlu0 %v1762, 96
  %v1867 = vpop.permute.xlu0 %1866
  %v1869 = vsel %vm343, %v1859, %v1867
  %1871 = vset.pattern.permute.xlu0 0
  %1872 = vperm.xlu0 %1871, %v1849
  %v1873 = vpop.permute.xlu0 %1872
  %v1875 = vmul.f32 %v1873, %v1768
  %1877 = vset.pattern.permute.xlu0 0
  %1878 = vperm.xlu0 %1877, %v1848
  %v1879 = vpop.permute.xlu0 %1878
  %v1881 = vmul.f32 %v1879, %v1864
  %1883 = vrot.lane.b32.xlu0 %v1881, 96
  %v1884 = vpop.permute.xlu0 %1883
  %v1886 = vadd.f32 %v1875, %v1884
  %v1887 = vmul.f32 %v1873, %v1762
  %v1888 = vmul.f32 %v1879, %v1869
  %1890 = vrot.lane.b32.xlu0 %v1888, 32
  %v1891 = vpop.permute.xlu0 %1890
  %v1893 = vadd.f32 %v1887, %v1891
  %s1894 = smul.u32 6, 3
  %s1895 = smul.addr %s1894, 8
  %s1896 = scalar_lea.vmem [#allocation2], %s1895
  %v1897 = vld [vmem:[%s1896] sm:$0xff]
  %v1898 = vld [vmem:[%s1896 + $0x8] sm:$0xff]
  %v1899 = vld [vmem:[%s1896 + $0x10] sm:$0xff]
  %v1900 = vpack.c.bf16 %v1886, %v1886
  %1902 = vrot.lane.b32.xlu0 %v1900, 32
  %v1903 = vpop.permute.xlu0 %1902
  %v1905 = vsel %vm128, %v1903, 0
  %1907 = vmatprep.subr.bf16.mxu0 0
  %1908 = vmatpush1.bf16.msra.mxu0 %v363
  %1909 = vmatprep.subr.bf16.mxu0 0
  %1910 = vmatpush1.bf16.msra.mxu0 %v364
  %1911 = vmatprep.subr.bf16.mxu0 0
  %1912 = vmatpush1.bf16.msra.mxu0 0
  %1913 = vmatprep.subr.bf16.mxu0 0
  %1914 = vmatpush1.bf16.msra.mxu0 0
  %1915 = vmatprep.subr.bf16.mxu0 0
  %1916 = vmatpush1.bf16.msra.mxu0 0
  %1917 = vmatprep.subr.bf16.mxu0 0
  %1918 = vmatpush1.bf16.msra.mxu0 0
  %1919 = vmatprep.subr.bf16.mxu0 0
  %1920 = vmatpush1.bf16.msra.mxu0 0
  %1921 = vmatprep.subr.bf16.mxu0 0
  %1922 = vmatpush1.bf16.msra.mxu0 0
  %1923 = vmatprep.subr.bf16.mxu0 0
  %1924 = vmatpush1.bf16.msra.mxu0 0
  %1925 = vmatprep.subr.bf16.mxu0 0
  %1926 = vmatpush1.bf16.msra.mxu0 0
  %1927 = vmatprep.subr.bf16.mxu0 0
  %1928 = vmatpush1.bf16.msra.mxu0 0
  %1929 = vmatprep.subr.bf16.mxu0 0
  %1930 = vmatpush1.bf16.msra.mxu0 0
  %1931 = vmatprep.subr.bf16.mxu0 0
  %1932 = vmatpush1.bf16.msra.mxu0 0
  %1933 = vmatprep.subr.bf16.mxu0 0
  %1934 = vmatpush1.bf16.msra.mxu0 0
  %1935 = vmatprep.subr.bf16.mxu0 0
  %1936 = vmatpush1.bf16.msra.mxu0 0
  %1937 = vmatprep.subr.bf16.mxu0 0
  %1938 = vmatpush1.bf16.msra.mxu0 0
  %1939 = vmatprep.mubr.bf16.mxu0 0
  %1940 = vmatmul.mubr.bf16.gmra.mrb[0].mxu0 %v1905
  %v1941 = vpop.f32.mrb[0].mxu0
  %v1942 = vadd.f32 0.0, %v1941
  %v1943 = vpop.f32.mrb[0].mxu0
  %v1944 = vpop.f32.mrb[0].mxu0
  %v1945 = vpop.f32.mrb[0].mxu0
  %1946 = vdwg.mxu0
  %v1947 = vadd.f32 %v1897, %v1942
  %v1948 = vpack.c.bf16 %v1792, %v1792
  %1950 = vrot.lane.b32.xlu0 %v1948, 116
  %v1951 = vpop.permute.xlu0 %1950
  %v1953 = vsel %vm412, %v1951, 0
  %1955 = vmatprep.subr.bf16.mxu0 0
  %1956 = vmatpush1.bf16.msra.mxu0 %v418
  %1957 = vmatprep.subr.bf16.mxu0 0
  %1958 = vmatpush1.bf16.msra.mxu0 0
  %1959 = vmatprep.subr.bf16.mxu0 0
  %1960 = vmatpush1.bf16.msra.mxu0 0
  %1961 = vmatprep.subr.bf16.mxu0 0
  %1962 = vmatpush1.bf16.msra.mxu0 0
  %1963 = vmatprep.subr.bf16.mxu0 0
  %1964 = vmatpush1.bf16.msra.mxu0 0
  %1965 = vmatprep.subr.bf16.mxu0 0
  %1966 = vmatpush1.bf16.msra.mxu0 0
  %1967 = vmatprep.subr.bf16.mxu0 0
  %1968 = vmatpush1.bf16.msra.mxu0 0
  %1969 = vmatprep.subr.bf16.mxu0 0
  %1970 = vmatpush1.bf16.msra.mxu0 0
  %1971 = vmatprep.subr.bf16.mxu0 0
  %1972 = vmatpush1.bf16.msra.mxu0 0
  %1973 = vmatprep.subr.bf16.mxu0 0
  %1974 = vmatpush1.bf16.msra.mxu0 0
  %1975 = vmatprep.subr.bf16.mxu0 0
  %1976 = vmatpush1.bf16.msra.mxu0 0
  %1977 = vmatprep.subr.bf16.mxu0 0
  %1978 = vmatpush1.bf16.msra.mxu0 0
  %1979 = vmatprep.subr.bf16.mxu0 0
  %1980 = vmatpush1.bf16.msra.mxu0 0
  %1981 = vmatprep.subr.bf16.mxu0 0
  %1982 = vmatpush1.bf16.msra.mxu0 0
  %1983 = vmatprep.subr.bf16.mxu0 0
  %1984 = vmatpush1.bf16.msra.mxu0 0
  %1985 = vmatprep.subr.bf16.mxu0 0
  %1986 = vmatpush1.bf16.msra.mxu0 0
  %1987 = vmatprep.mubr.bf16.mxu0 0
  %1988 = vmatmul.mubr.bf16.gmra.mrb[0].mxu0 %v1953
  %v1989 = vpop.f32.mrb[0].mxu0
  %v1990 = vadd.f32 0.0, %v1989
  %v1991 = vpop.f32.mrb[0].mxu0
  %v1992 = vpop.f32.mrb[0].mxu0
  %v1993 = vpop.f32.mrb[0].mxu0
  %1994 = vdwg.mxu0
  %v1995 = vadd.f32 %v1898, %v1990
  %v1996 = vxor.u32 %v1947, 2147483648
  %v1997 = vmul.f32 %v1996, 1.442695
  %v1998 = vpow.pop %v1997
  %v1999 = vadd.f32 %v1998, 1.0
  %v2000 = vrcp.pop %v1999
  %v2001 = vmul.f32 1.0, %v2000
  %v2002 = vtanh.pop %v1947
  %v2003 = vmul.f32 %v2001, %v1893
  %2005 = vrot.lane.b32.xlu0 %v2002, 64
  %v2006 = vpop.permute.xlu0 %2005
  %v2008 = vmul.f32 %v2001, %v2006
  %2010 = vrot.lane.b32.xlu0 %v2008, 32
  %v2011 = vpop.permute.xlu0 %2010
  %v2013 = vadd.f32 %v2003, %v2011
  %v2014 = vtanh.pop %v2013
  %2016 = vrot.lane.b32.xlu0 %v2014, 64
  %v2017 = vpop.permute.xlu0 %2016
  %v2019 = vmul.f32 %v2001, %v2017
  %v2020 = vxor.u32 %v1995, 2147483648
  %v2021 = vmul.f32 %v2020, 1.442695
  %v2022 = vpow.pop %v2021
  %v2023 = vadd.f32 %v2022, 1.0
  %v2024 = vrcp.pop %v2023
  %v2025 = vmul.f32 1.0, %v2024
  %v2026 = vtanh.pop %v1995
  %v2027 = vmul.f32 %v2025, %v1786
  %2029 = vrot.lane.b32.xlu0 %v2026, 120
  %v2030 = vpop.permute.xlu0 %2029
  %v2032 = vmul.f32 %v2025, %v2030
  %2034 = vrot.lane.b32.xlu0 %v2032, 4
  %v2035 = vpop.permute.xlu0 %2034
  %v2037 = vadd.f32 %v2027, %v2035
  %v2038 = vtanh.pop %v2037
  %2040 = vrot.lane.b32.xlu0 %v2038, 8
  %v2041 = vpop.permute.xlu0 %2040
  %v2043 = vmul.f32 %v2025, %v2041
  %2045 = vrot.lane.b32.xlu0 %v2019, 32
  %v2046 = vpop.permute.xlu0 %2045
  %v2048 = vsel %vm128, %v2046, %v2013
  %v2049 = vpack.c.bf16 %v2048, %v2048
  %v2051 = vsel %vm547, %v2049, 0
  %2053 = vmatprep.subr.bf16.mxu0 0
  %2054 = vmatpush1.bf16.msra.mxu0 %v539
  %2055 = vmatprep.subr.bf16.mxu0 0
  %2056 = vmatpush1.bf16.msra.mxu0 %v540
  %2057 = vmatprep.subr.bf16.mxu0 0
  %2058 = vmatpush1.bf16.msra.mxu0 %v541
  %2059 = vmatprep.subr.bf16.mxu0 0
  %2060 = vmatpush1.bf16.msra.mxu0 %v542
  %2061 = vmatprep.subr.bf16.mxu0 0
  %2062 = vmatpush1.bf16.msra.mxu0 0
  %2063 = vmatprep.subr.bf16.mxu0 0
  %2064 = vmatpush1.bf16.msra.mxu0 0
  %2065 = vmatprep.subr.bf16.mxu0 0
  %2066 = vmatpush1.bf16.msra.mxu0 0
  %2067 = vmatprep.subr.bf16.mxu0 0
  %2068 = vmatpush1.bf16.msra.mxu0 0
  %2069 = vmatprep.subr.bf16.mxu0 0
  %2070 = vmatpush1.bf16.msra.mxu0 0
  %2071 = vmatprep.subr.bf16.mxu0 0
  %2072 = vmatpush1.bf16.msra.mxu0 0
  %2073 = vmatprep.subr.bf16.mxu0 0
  %2074 = vmatpush1.bf16.msra.mxu0 0
  %2075 = vmatprep.subr.bf16.mxu0 0
  %2076 = vmatpush1.bf16.msra.mxu0 0
  %2077 = vmatprep.subr.bf16.mxu0 0
  %2078 = vmatpush1.bf16.msra.mxu0 0
  %2079 = vmatprep.subr.bf16.mxu0 0
  %2080 = vmatpush1.bf16.msra.mxu0 0
  %2081 = vmatprep.subr.bf16.mxu0 0
  %2082 = vmatpush1.bf16.msra.mxu0 0
  %2083 = vmatprep.subr.bf16.mxu0 0
  %2084 = vmatpush1.bf16.msra.mxu0 0
  %2085 = vmatprep.mubr.bf16.mxu0 0
  %2086 = vmatmul.mubr.bf16.gmra.mrb[0].mxu0 %v2051
  %v2087 = vpop.f32.mrb[0].mxu0
  %v2088 = vadd.f32 0.0, %v2087
  %v2089 = vpop.f32.mrb[0].mxu0
  %v2090 = vpop.f32.mrb[0].mxu0
  %v2091 = vpop.f32.mrb[0].mxu0
  %2092 = vdwg.mxu0
  %v2093 = vadd.f32 %v1899, %v2088
  %v2094 = vxor.u32 %v2093, 2147483648
  %v2095 = vmul.f32 %v2094, 1.442695
  %v2096 = vpow.pop %v2095
  %v2097 = vadd.f32 %v2096, 1.0
  %v2098 = vrcp.pop %v2097
  %v2099 = vmul.f32 1.0, %v2098
  %v2100 = vsub.f32 1.0, %v2099
  %2102 = vrot.lane.b32.xlu0 %v2043, 116
  %v2103 = vpop.permute.xlu0 %2102
  %v2105 = vsel %vm412, %v2103, 0.0
  %2107 = vrot.lane.b32.xlu0 %v2037, 124
  %v2108 = vpop.permute.xlu0 %2107
  %v2110 = vsel %vm412, %v2108, 0.0
  %2112 = vrot.lane.b32.xlu0 %v1886, 32
  %v2113 = vpop.permute.xlu0 %2112
  %v2115 = vsel %vm343, %v2105, %v2113
  %2117 = vrot.lane.b32.xlu0 %v2013, 96
  %v2118 = vpop.permute.xlu0 %2117
  %v2120 = vsel %vm343, %v2110, %v2118
  %2122 = vset.pattern.permute.xlu0 0
  %2123 = vperm.xlu0 %2122, %v2100
  %v2124 = vpop.permute.xlu0 %2123
  %v2126 = vmul.f32 %v2124, %v2019
  %2128 = vset.pattern.permute.xlu0 0
  %2129 = vperm.xlu0 %2128, %v2099
  %v2130 = vpop.permute.xlu0 %2129
  %v2132 = vmul.f32 %v2130, %v2115
  %2134 = vrot.lane.b32.xlu0 %v2132, 96
  %v2135 = vpop.permute.xlu0 %2134
  %v2137 = vadd.f32 %v2126, %v2135
  %v2138 = vmul.f32 %v2124, %v2013
  %v2139 = vmul.f32 %v2130, %v2120
  %2141 = vrot.lane.b32.xlu0 %v2139, 32
  %v2142 = vpop.permute.xlu0 %2141
  %v2144 = vadd.f32 %v2138, %v2142
  %s2145 = smul.u32 7, 3
  %s2146 = smul.addr %s2145, 8
  %s2147 = scalar_lea.vmem [#allocation2], %s2146
  %v2148 = vld [vmem:[%s2147] sm:$0xff]
  %v2149 = vld [vmem:[%s2147 + $0x8] sm:$0xff]
  %v2150 = vld [vmem:[%s2147 + $0x10] sm:$0xff]
  %v2151 = vpack.c.bf16 %v2137, %v2137
  %2153 = vrot.lane.b32.xlu0 %v2151, 32
  %v2154 = vpop.permute.xlu0 %2153
  %v2156 = vsel %vm128, %v2154, 0
  %2158 = vmatprep.subr.bf16.mxu0 0
  %2159 = vmatpush1.bf16.msra.mxu0 %v363
  %2160 = vmatprep.subr.bf16.mxu0 0
  %2161 = vmatpush1.bf16.msra.mxu0 %v364
  %2162 = vmatprep.subr.bf16.mxu0 0
  %2163 = vmatpush1.bf16.msra.mxu0 0
  %2164 = vmatprep.subr.bf16.mxu0 0
  %2165 = vmatpush1.bf16.msra.mxu0 0
  %2166 = vmatprep.subr.bf16.mxu0 0
  %2167 = vmatpush1.bf16.msra.mxu0 0
  %2168 = vmatprep.subr.bf16.mxu0 0
  %2169 = vmatpush1.bf16.msra.mxu0 0
  %2170 = vmatprep.subr.bf16.mxu0 0
  %2171 = vmatpush1.bf16.msra.mxu0 0
  %2172 = vmatprep.subr.bf16.mxu0 0
  %2173 = vmatpush1.bf16.msra.mxu0 0
  %2174 = vmatprep.subr.bf16.mxu0 0
  %2175 = vmatpush1.bf16.msra.mxu0 0
  %2176 = vmatprep.subr.bf16.mxu0 0
  %2177 = vmatpush1.bf16.msra.mxu0 0
  %2178 = vmatprep.subr.bf16.mxu0 0
  %2179 = vmatpush1.bf16.msra.mxu0 0
  %2180 = vmatprep.subr.bf16.mxu0 0
  %2181 = vmatpush1.bf16.msra.mxu0 0
  %2182 = vmatprep.subr.bf16.mxu0 0
  %2183 = vmatpush1.bf16.msra.mxu0 0
  %2184 = vmatprep.subr.bf16.mxu0 0
  %2185 = vmatpush1.bf16.msra.mxu0 0
  %2186 = vmatprep.subr.bf16.mxu0 0
  %2187 = vmatpush1.bf16.msra.mxu0 0
  %2188 = vmatprep.subr.bf16.mxu0 0
  %2189 = vmatpush1.bf16.msra.mxu0 0
  %2190 = vmatprep.mubr.bf16.mxu0 0
  %2191 = vmatmul.mubr.bf16.gmra.mrb[0].mxu0 %v2156
  %v2192 = vpop.f32.mrb[0].mxu0
  %v2193 = vadd.f32 0.0, %v2192
  %v2194 = vpop.f32.mrb[0].mxu0
  %v2195 = vpop.f32.mrb[0].mxu0
  %v2196 = vpop.f32.mrb[0].mxu0
  %2197 = vdwg.mxu0
  %v2198 = vadd.f32 %v2148, %v2193
  %v2199 = vpack.c.bf16 %v2043, %v2043
  %2201 = vrot.lane.b32.xlu0 %v2199, 116
  %v2202 = vpop.permute.xlu0 %2201
  %v2204 = vsel %vm412, %v2202, 0
  %2206 = vmatprep.subr.bf16.mxu0 0
  %2207 = vmatpush1.bf16.msra.mxu0 %v418
  %2208 = vmatprep.subr.bf16.mxu0 0
  %2209 = vmatpush1.bf16.msra.mxu0 0
  %2210 = vmatprep.subr.bf16.mxu0 0
  %2211 = vmatpush1.bf16.msra.mxu0 0
  %2212 = vmatprep.subr.bf16.mxu0 0
  %2213 = vmatpush1.bf16.msra.mxu0 0
  %2214 = vmatprep.subr.bf16.mxu0 0
  %2215 = vmatpush1.bf16.msra.mxu0 0
  %2216 = vmatprep.subr.bf16.mxu0 0
  %2217 = vmatpush1.bf16.msra.mxu0 0
  %2218 = vmatprep.subr.bf16.mxu0 0
  %2219 = vmatpush1.bf16.msra.mxu0 0
  %2220 = vmatprep.subr.bf16.mxu0 0
  %2221 = vmatpush1.bf16.msra.mxu0 0
  %2222 = vmatprep.subr.bf16.mxu0 0
  %2223 = vmatpush1.bf16.msra.mxu0 0
  %2224 = vmatprep.subr.bf16.mxu0 0
  %2225 = vmatpush1.bf16.msra.mxu0 0
  %2226 = vmatprep.subr.bf16.mxu0 0
  %2227 = vmatpush1.bf16.msra.mxu0 0
  %2228 = vmatprep.subr.bf16.mxu0 0
  %2229 = vmatpush1.bf16.msra.mxu0 0
  %2230 = vmatprep.subr.bf16.mxu0 0
  %2231 = vmatpush1.bf16.msra.mxu0 0
  %2232 = vmatprep.subr.bf16.mxu0 0
  %2233 = vmatpush1.bf16.msra.mxu0 0
  %2234 = vmatprep.subr.bf16.mxu0 0
  %2235 = vmatpush1.bf16.msra.mxu0 0
  %2236 = vmatprep.subr.bf16.mxu0 0
  %2237 = vmatpush1.bf16.msra.mxu0 0
  %2238 = vmatprep.mubr.bf16.mxu0 0
  %2239 = vmatmul.mubr.bf16.gmra.mrb[0].mxu0 %v2204
  %v2240 = vpop.f32.mrb[0].mxu0
  %v2241 = vadd.f32 0.0, %v2240
  %v2242 = vpop.f32.mrb[0].mxu0
  %v2243 = vpop.f32.mrb[0].mxu0
  %v2244 = vpop.f32.mrb[0].mxu0
  %2245 = vdwg.mxu0
  %v2246 = vadd.f32 %v2149, %v2241
  %v2247 = vxor.u32 %v2198, 2147483648
  %v2248 = vmul.f32 %v2247, 1.442695
  %v2249 = vpow.pop %v2248
  %v2250 = vadd.f32 %v2249, 1.0
  %v2251 = vrcp.pop %v2250
  %v2252 = vmul.f32 1.0, %v2251
  %v2253 = vtanh.pop %v2198
  %v2254 = vmul.f32 %v2252, %v2144
  %2256 = vrot.lane.b32.xlu0 %v2253, 64
  %v2257 = vpop.permute.xlu0 %2256
  %v2259 = vmul.f32 %v2252, %v2257
  %2261 = vrot.lane.b32.xlu0 %v2259, 32
  %v2262 = vpop.permute.xlu0 %2261
  %v2264 = vadd.f32 %v2254, %v2262
  %v2265 = vtanh.pop %v2264
  %2267 = vrot.lane.b32.xlu0 %v2265, 64
  %v2268 = vpop.permute.xlu0 %2267
  %v2270 = vmul.f32 %v2252, %v2268
  %v2271 = vxor.u32 %v2246, 2147483648
  %v2272 = vmul.f32 %v2271, 1.442695
  %v2273 = vpow.pop %v2272
  %v2274 = vadd.f32 %v2273, 1.0
  %v2275 = vrcp.pop %v2274
  %v2276 = vmul.f32 1.0, %v2275
  %v2277 = vtanh.pop %v2246
  %v2278 = vmul.f32 %v2276, %v2037
  %2280 = vrot.lane.b32.xlu0 %v2277, 120
  %v2281 = vpop.permute.xlu0 %2280
  %v2283 = vmul.f32 %v2276, %v2281
  %2285 = vrot.lane.b32.xlu0 %v2283, 4
  %v2286 = vpop.permute.xlu0 %2285
  %v2288 = vadd.f32 %v2278, %v2286
  %v2289 = vtanh.pop %v2288
  %2291 = vrot.lane.b32.xlu0 %v2289, 8
  %v2292 = vpop.permute.xlu0 %2291
  %v2294 = vmul.f32 %v2276, %v2292
  %2296 = vrot.lane.b32.xlu0 %v2270, 32
  %v2297 = vpop.permute.xlu0 %2296
  %v2299 = vsel %vm128, %v2297, %v2264
  %v2300 = vpack.c.bf16 %v2299, %v2299
  %v2302 = vsel %vm547, %v2300, 0
  %2304 = vmatprep.subr.bf16.mxu0 0
  %2305 = vmatpush1.bf16.msra.mxu0 %v539
  %2306 = vmatprep.subr.bf16.mxu0 0
  %2307 = vmatpush1.bf16.msra.mxu0 %v540
  %2308 = vmatprep.subr.bf16.mxu0 0
  %2309 = vmatpush1.bf16.msra.mxu0 %v541
  %2310 = vmatprep.subr.bf16.mxu0 0
  %2311 = vmatpush1.bf16.msra.mxu0 %v542
  %2312 = vmatprep.subr.bf16.mxu0 0
  %2313 = vmatpush1.bf16.msra.mxu0 0
  %2314 = vmatprep.subr.bf16.mxu0 0
  %2315 = vmatpush1.bf16.msra.mxu0 0
  %2316 = vmatprep.subr.bf16.mxu0 0
  %2317 = vmatpush1.bf16.msra.mxu0 0
  %2318 = vmatprep.subr.bf16.mxu0 0
  %2319 = vmatpush1.bf16.msra.mxu0 0
  %2320 = vmatprep.subr.bf16.mxu0 0
  %2321 = vmatpush1.bf16.msra.mxu0 0
  %2322 = vmatprep.subr.bf16.mxu0 0
  %2323 = vmatpush1.bf16.msra.mxu0 0
  %2324 = vmatprep.subr.bf16.mxu0 0
  %2325 = vmatpush1.bf16.msra.mxu0 0
  %2326 = vmatprep.subr.bf16.mxu0 0
  %2327 = vmatpush1.bf16.msra.mxu0 0
  %2328 = vmatprep.subr.bf16.mxu0 0
  %2329 = vmatpush1.bf16.msra.mxu0 0
  %2330 = vmatprep.subr.bf16.mxu0 0
  %2331 = vmatpush1.bf16.msra.mxu0 0
  %2332 = vmatprep.subr.bf16.mxu0 0
  %2333 = vmatpush1.bf16.msra.mxu0 0
  %2334 = vmatprep.subr.bf16.mxu0 0
  %2335 = vmatpush1.bf16.msra.mxu0 0
  %2336 = vmatprep.mubr.bf16.mxu0 0
  %2337 = vmatmul.mubr.bf16.gmra.mrb[0].mxu0 %v2302
  %v2338 = vpop.f32.mrb[0].mxu0
  %v2339 = vadd.f32 0.0, %v2338
  %v2340 = vpop.f32.mrb[0].mxu0
  %v2341 = vpop.f32.mrb[0].mxu0
  %v2342 = vpop.f32.mrb[0].mxu0
  %2343 = vdwg.mxu0
  %v2344 = vadd.f32 %v2150, %v2339
  %v2345 = vxor.u32 %v2344, 2147483648
  %v2346 = vmul.f32 %v2345, 1.442695
  %v2347 = vpow.pop %v2346
  %v2348 = vadd.f32 %v2347, 1.0
  %v2349 = vrcp.pop %v2348
  %v2350 = vmul.f32 1.0, %v2349
  %v2351 = vsub.f32 1.0, %v2350
  %2353 = vrot.lane.b32.xlu0 %v2294, 116
  %v2354 = vpop.permute.xlu0 %2353
  %v2356 = vsel %vm412, %v2354, 0.0
  %2358 = vrot.lane.b32.xlu0 %v2288, 124
  %v2359 = vpop.permute.xlu0 %2358
  %v2361 = vsel %vm412, %v2359, 0.0
  %2363 = vrot.lane.b32.xlu0 %v2137, 32
  %v2364 = vpop.permute.xlu0 %2363
  %v2366 = vsel %vm343, %v2356, %v2364
  %2368 = vrot.lane.b32.xlu0 %v2264, 96
  %v2369 = vpop.permute.xlu0 %2368
  %v2371 = vsel %vm343, %v2361, %v2369
  %2373 = vset.pattern.permute.xlu0 0
  %2374 = vperm.xlu0 %2373, %v2351
  %v2375 = vpop.permute.xlu0 %2374
  %v2377 = vmul.f32 %v2375, %v2270
  %2379 = vset.pattern.permute.xlu0 0
  %2380 = vperm.xlu0 %2379, %v2350
  %v2381 = vpop.permute.xlu0 %2380
  %v2383 = vmul.f32 %v2381, %v2366
  %2385 = vrot.lane.b32.xlu0 %v2383, 96
  %v2386 = vpop.permute.xlu0 %2385
  %v2388 = vadd.f32 %v2377, %v2386
  %v2389 = vmul.f32 %v2375, %v2264
  %v2390 = vmul.f32 %v2381, %v2371
  %2392 = vrot.lane.b32.xlu0 %v2390, 32
  %v2393 = vpop.permute.xlu0 %2392
  %v2395 = vadd.f32 %v2389, %v2393
  %2397 = vrot.lane.b32.xlu0 %v2388, 32
  %v2398 = vpop.permute.xlu0 %2397
  %2400 = vst.msk [vmem:[#allocation3] sm:$0xff] %vm128, %v2398
  %2402 = vrot.lane.b32.xlu0 %v2395, 96
  %v2403 = vpop.permute.xlu0 %2402
  %2405 = vst.msk [vmem:[#allocation4] sm:$0xff] %vm128, %v2403
  %2406 = vst.msk [vmem:[#allocation5] sm:$0xff] %vm412, %v2354
  %2407 = vst.msk [vmem:[#allocation6] sm:$0xff] %vm412, %v2359
  %v2408 = vmax.f32 %v2388, 0.0
  %v2409 = vld [vmem:[%s7] sm:$0xff]
  %v2410 = vld [vmem:[%s7 + $0x8] sm:$0xff]
  %v2411 = vld [vmem:[%s7 + $0x10] sm:$0xff]
  %v2412 = vld [vmem:[%s7 + $0x18] sm:$0xff]
  %v2413 = vld [vmem:[%s8] sm:$0x1]
  %v2415 = vlaneseq
  %v2416 = vshrl.u32 %v2415, 7
  %v2417 = vsub.s32 0, %v2416
  %v2418 = vrot.slane %v2413, %v2417
  %2421 = vrot.lane.b32.xlu0 %v2408, 32
  %v2422 = vpop.permute.xlu0 %2421
  %v2423 = vsel %vm128, %v2422, 0
  %2425 = vmatprep.subr.mxu0 0.0
  %2426 = vmatpush1.msra.mxu0 %v2409
  %2427 = vmatprep.subr.mxu0 0.0
  %2428 = vmatpush1.msra.mxu0 %v2410
  %2429 = vmatprep.subr.mxu0 0.0
  %2430 = vmatpush1.msra.mxu0 %v2411
  %2431 = vmatprep.subr.mxu0 0.0
  %2432 = vmatpush1.msra.mxu0 %v2412
  %2433 = vmatprep.subr.mxu0 0.0
  %2434 = vmatpush1.msra.mxu0 0.0
  %2435 = vmatprep.subr.mxu0 0.0
  %2436 = vmatpush1.msra.mxu0 0.0
  %2437 = vmatprep.subr.mxu0 0.0
  %2438 = vmatpush1.msra.mxu0 0.0
  %2439 = vmatprep.subr.mxu0 0.0
  %2440 = vmatpush1.msra.mxu0 0.0
  %2441 = vmatprep.subr.mxu0 0.0
  %2442 = vmatpush1.msra.mxu0 0.0
  %2443 = vmatprep.subr.mxu0 0.0
  %2444 = vmatpush1.msra.mxu0 0.0
  %2445 = vmatprep.subr.mxu0 0.0
  %2446 = vmatpush1.msra.mxu0 0.0
  %2447 = vmatprep.subr.mxu0 0.0
  %2448 = vmatpush1.msra.mxu0 0.0
  %2449 = vmatprep.subr.mxu0 0.0
  %2450 = vmatpush1.msra.mxu0 0.0
  %2451 = vmatprep.subr.mxu0 0.0
  %2452 = vmatpush1.msra.mxu0 0.0
  %2453 = vmatprep.subr.mxu0 0.0
  %2454 = vmatpush1.msra.mxu0 0.0
  %2455 = vmatprep.subr.mxu0 0.0
  %2456 = vmatpush1.msra.mxu0 0.0
  %2457 = vmatprep.subr.mxu0 0.0
  %2458 = vmatpush1.msra.mxu0 0.0
  %2459 = vmatprep.subr.mxu0 0.0
  %2460 = vmatpush1.msra.mxu0 0.0
  %2461 = vmatprep.subr.mxu0 0.0
  %2462 = vmatpush1.msra.mxu0 0.0
  %2463 = vmatprep.subr.mxu0 0.0
  %2464 = vmatpush1.msra.mxu0 0.0
  %2465 = vmatprep.subr.mxu0 0.0
  %2466 = vmatpush1.msra.mxu0 0.0
  %2467 = vmatprep.subr.mxu0 0.0
  %2468 = vmatpush1.msra.mxu0 0.0
  %2469 = vmatprep.subr.mxu0 0.0
  %2470 = vmatpush1.msra.mxu0 0.0
  %2471 = vmatprep.subr.mxu0 0.0
  %2472 = vmatpush1.msra.mxu0 0.0
  %2473 = vmatprep.subr.mxu0 0.0
  %2474 = vmatpush1.msra.mxu0 0.0
  %2475 = vmatprep.subr.mxu0 0.0
  %2476 = vmatpush1.msra.mxu0 0.0
  %2477 = vmatprep.subr.mxu0 0.0
  %2478 = vmatpush1.msra.mxu0 0.0
  %2479 = vmatprep.subr.mxu0 0.0
  %2480 = vmatpush1.msra.mxu0 0.0
  %2481 = vmatprep.subr.mxu0 0.0
  %2482 = vmatpush1.msra.mxu0 0.0
  %2483 = vmatprep.subr.mxu0 0.0
  %2484 = vmatpush1.msra.mxu0 0.0
  %2485 = vmatprep.subr.mxu0 0.0
  %2486 = vmatpush1.msra.mxu0 0.0
  %2487 = vmatprep.subr.mxu0 0.0
  %2488 = vmatpush1.msra.mxu0 0.0
  %2489 = vmatprep.mubr.f32.mxu0 0.0
  %2490 = vmatmul.mubr.f32.gmra.mrb[0].mxu0 %v2423
  %v2491 = vpop.f32.mrb[0].mxu0
  %v2492 = vadd.f32 %v2418, %v2491
  %v2493 = vpop.f32.mrb[0].mxu0
  %2494 = vdwg.mxu0
  %vm2495 = vcmask 15360
  %2496 = vst.msk [vmem:[%s9] sm:$0xff] %vm2495, %v2492
  // Predicated region
  $region42: #{tpu_custom_call.1} parent=0 // pred_check
    _
  $region43: #{tpu_custom_call.1} parent=0 // pred_check_branch
    %2498 = sbr.rel (0) target = $region45
  $region44: #{tpu_custom_call.1} parent=0 // pred_region
    _
  $region45: #{tpu_custom_call.1} parent=0 // pred_fallthru
    _
  // Predicated region
  $region46: #{tpu_custom_call.1} parent=0 // pred_check
    _
  $region47: #{tpu_custom_call.1} parent=0 // pred_check_branch
    %2500 = sbr.rel (0) target = $region49
  $region48: #{tpu_custom_call.1} parent=0 // pred_region
    _
  $region49: #{tpu_custom_call.1} parent=0 // pred_fallthru
    _

</llo_original>
